<compile_context>
chip_gen: v6e
topology: v6e:2x2x1
jax: 0.10.0
libtpu: 0.0.40
codegen_flags: <defaults>
</compile_context>

<pallas_src>
import functools

import jax
import jax.numpy as jnp
from jax.experimental import pallas as pl
from jax.experimental.pallas import tpu as pltpu

NFEAT = 512          # resnet12 nFeat (hard-coded 512 in the PyTorch views)
FEAT_H = FEAT_W = 6  # hard-coded 6x6 feature maps
HW = FEAT_H * FEAT_W
NUM_CLASSES = 64
SCALE_CLS = 7.0


# ----------------------------------------------------------------------------------
# Generic Pallas tiled batched matmul with optional fused bias + ReLU epilogue.
#   (G, M, K) @ (G, K, N) -> (G, M, N), f32 accumulation on the MXU.
# K is never tiled (all matmuls here have K <= 512) so there is no accumulator
# scratch; M / N edge blocks are handled by Pallas masking (no pad / slice copies).
# ----------------------------------------------------------------------------------
def _mm_kernel(a_ref, b_ref, o_ref, *, relu):
    acc = jnp.dot(a_ref[0], b_ref[0], preferred_element_type=jnp.float32)
    if relu:
        acc = jnp.maximum(acc, 0.0)
    o_ref[0] = acc.astype(o_ref.dtype)


def _mm_bias_kernel(a_ref, b_ref, bias_ref, o_ref, *, relu):
    acc = jnp.dot(a_ref[0], b_ref[0], preferred_element_type=jnp.float32)
    acc = acc + bias_ref[...].astype(jnp.float32)
    if relu:
        acc = jnp.maximum(acc, 0.0)
    o_ref[0] = acc.astype(o_ref.dtype)


def pallas_bmm(a, b, bias=None, relu=False, out_dtype=jnp.float32):
    G, M, K = a.shape
    Gb, Kb, N = b.shape
    assert G == Gb and K == Kb
    assert K <= 1024, "single K-block kernel (all model matmuls have K <= 512)"
    TM = M if M <= 256 else 256           # 256 is sublane-aligned for f32/bf16
    TN = N if N <= 2048 else 512          # full-extent N blocks when they fit VMEM
    grid = (G, pl.cdiv(M, TM), pl.cdiv(N, TN))

    in_specs = [
        pl.BlockSpec((1, TM, K), lambda g, i, j: (g, i, 0)),
        pl.BlockSpec((1, K, TN), lambda g, i, j: (g, 0, j)),
    ]
    args = [a, b]
    if bias is not None:
        in_specs.append(pl.BlockSpec((1, TN), lambda g, i, j: (0, j)))
        args.append(bias.reshape(1, N).astype(jnp.float32))
        kernel = functools.partial(_mm_bias_kernel, relu=relu)
    else:
        kernel = functools.partial(_mm_kernel, relu=relu)

    return pl.pallas_call(
        kernel,
        out_shape=jax.ShapeDtypeStruct((G, M, N), out_dtype),
        grid_spec=pltpu.PrefetchScalarGridSpec(
            num_scalar_prefetch=0,
            grid=grid,
            in_specs=in_specs,
            out_specs=pl.BlockSpec((1, TM, TN), lambda g, i, j: (g, i, j)),
        ),
        compiler_params=pltpu.CompilerParams(
            dimension_semantics=("parallel", "parallel", "parallel")),
    )(*args)


# ----------------------------------------------------------------------------------
# Small helpers
# ----------------------------------------------------------------------------------
def l2_normalize(x, axis, eps=1e-12):
    n = jnp.sqrt(jnp.sum(x * x, axis=axis, keepdims=True))
    return x / jnp.maximum(n, eps)


def init_params(key):
    k = jax.random.split(key, 5)
    return {
        "base_w": 0.05 * jax.random.normal(k[0], (NFEAT, 3, 3, 3), jnp.float32),
        "base_b": 0.01 * jax.random.normal(k[1], (NFEAT,), jnp.float32),
        "cam_w1": 0.10 * jax.random.normal(k[2], (6, 36), jnp.float32),
        "cam_b1": jnp.zeros((6,), jnp.float32),
        "cam_w2": 0.10 * jax.random.normal(k[3], (36, 6), jnp.float32),
        "cam_b2": jnp.zeros((36,), jnp.float32),
        "cls_w": 0.05 * jax.random.normal(k[4], (NUM_CLASSES, NFEAT), jnp.float32),
        "cls_b": jnp.zeros((NUM_CLASSES,), jnp.float32),
    }


# ----------------------------------------------------------------------------------
# Backbone stand-in: 3x3 stride-2 conv + ReLU via im2col + Pallas matmul with a
# fused bias+ReLU epilogue.  Input (N,3,12,12) -> (N, 36, 512) (spatial-major
# feature layout, avoiding a 16 MB NCHW relayout).
# TODO(synk): real resnet12 backbone unavailable; only its output contract is kept.
# ----------------------------------------------------------------------------------
def base_forward(p, x):
    N, C, H, W = x.shape
    Ho, Wo = H // 2, W // 2
    xp = jnp.pad(x, ((0, 0), (0, 0), (1, 1), (1, 1)))
    cols = []
    for di in range(3):
        for dj in range(3):
            cols.append(xp[:, :, di:di + 2 * Ho:2, dj:dj + 2 * Wo:2])
    patches = jnp.stack(cols, axis=2)                                # (N, C, 9, Ho, Wo)
    patches = patches.transpose(0, 3, 4, 1, 2).reshape(N * Ho * Wo, C * 9)
    wmat = p["base_w"].reshape(NFEAT, C * 9).T                       # (27, 512)
    out = pallas_bmm(patches.astype(jnp.bfloat16)[None],
                     wmat.astype(jnp.bfloat16)[None],
                     bias=p["base_b"], relu=True)[0]                 # (N*36, 512) f32
    return out.reshape(N, Ho * Wo, NFEAT)                            # (N, 36, 512)


# ----------------------------------------------------------------------------------
# Full forward pass (mirrors Model_mltizhixin.forward; the 5-iteration loop is
# vectorized over i — per-iteration math is unchanged).
# ----------------------------------------------------------------------------------
def model_forward(p, xtrain, xtest, ytrain, ytest, scale_cls=SCALE_CLS,
                  training=True, test_fg=False):
    B, num_train = xtrain.shape[0], xtrain.shape[1]
    num_test = xtest.shape[1]
    K = ytrain.shape[2]
    ytrain_t = jnp.transpose(ytrain, (0, 2, 1))                      # (B, K, 5)

    # ---- backbone on support + query images --------------------------------------
    xtr = xtrain.reshape((-1,) + xtrain.shape[2:])
    xte = xtest.reshape((-1,) + xtest.shape[2:])
    x = jnp.concatenate([xtr, xte], axis=0)
    f = base_forward(p, x)                                           # (N, 36, 512)
    n_tr = B * num_train
    ftr = f[:n_tr].reshape(B, 5, -1, HW, NFEAT)                      # (B, way, shot, 36, C)
    fte = f[n_tr:].reshape(B, num_test, HW, NFEAT)                   # (B, n2, 36, C)

    # ---- class prototypes for all 5 loop iterations (i = shot index) -------------
    # ftrain = bmm(ytrain^T, ftrain_i) / ytrain^T.sum — a 5-element weighted mean,
    # done as an einsum (not worth a padded MXU call).
    counts = jnp.sum(ytrain_t, axis=2)                               # (B, K)
    protos = jnp.einsum('bkn,bnisc->biksc', ytrain_t, ftr[:, :, :5])
    protos = protos / counts[:, None, :, None, None]                 # (B, 5, K, 36, C)

    # ---- CAM: normalized cross-correlation, one Pallas bmm for all 5 iterations --
    f1n = l2_normalize(protos, axis=-1)                              # over channels
    f2n = l2_normalize(fte, axis=-1)
    A = f1n.reshape(B, 5 * K * HW, NFEAT).astype(jnp.bfloat16)       # (B, 900, 512)
    Bm = jnp.transpose(f2n, (0, 3, 1, 2)).reshape(B, NFEAT, num_test * HW)
    Bm = Bm.astype(jnp.bfloat16)                                     # (B, 512, 1080)
    corr = pallas_bmm(A, Bm)                                         # (B, 900, 1080) f32
    corr = corr.reshape(B, 5, K, HW, num_test, HW)
    corr = jnp.transpose(corr, (0, 1, 2, 4, 3, 5))                   # [b,i,k,j,s1,s2]

    # ---- CAM.get_attention for a1 (over s1) and a2 (over s2) ---------------------
    # TODO(synk): CAM ConvBlock BatchNorm omitted (synthetic weights); conv1x1+ReLU kept.
    def cam_mlp(v):                                                  # (..., 36) -> (..., 36)
        h = jnp.einsum('...t,ot->...o', v, p["cam_w1"]) + p["cam_b1"]
        h = jax.nn.relu(h)
        return jnp.einsum('...o,to->...t', h, p["cam_w2"]) + p["cam_b2"]

    inv_hw = 1.0 / HW
    am1 = jnp.mean(corr, axis=4)                                     # mean over s1 -> (..., j, s2)
    am2 = jnp.mean(corr, axis=5)                                     # mean over s2 -> (..., j, s1)
    h1 = cam_mlp(am1)
    h2 = cam_mlp(am2)
    g1 = jnp.einsum('bikjst,bikjt->bikjs', corr, h1) * inv_hw        # (B,5,K,n2,36[s1])
    g2 = jnp.einsum('bikjst,bikjs->bikjt', corr, h2) * inv_hw        # (B,5,K,n2,36[s2])
    a1 = jax.nn.softmax(g1 / 0.025, axis=-1) + 1.0
    a2 = jax.nn.softmax(g2 / 0.025, axis=-1) + 1.0

    # ---- attention-weighted prototypes, spatially averaged (fused, no 44 MB tmp) -
    ftrain_mean = jnp.einsum('biksc,bikjs->bijkc', protos, a1) * inv_hw   # (B,5,n2,K,C)
    ftrain_norm = l2_normalize(ftrain_mean, axis=-1)

    if not training:
        # self.test(ftrain, ftest_att) at i == 0 (eval path of the reference)
        ftest_mean = jnp.einsum('bjsc,bkjs->bjkc', fte, a2[:, 0]) * inv_hw
        ftest_mean = l2_normalize(ftest_mean, axis=-1)
        scores = scale_cls * jnp.sum(ftest_mean * ftrain_norm[:, 0], axis=-1)
        if test_fg:
            return scores, a1[:, 0], a2[:, 0]
        return scores

    # ---- cls_scores (reference computes it only for i == 0) ----------------------
    # ftest_att = f2 * a2 with a2 = softmax(.)+1 >= 1 > 0, so L2-normalising
    # ftest_att over channels equals normalising f2 alone (the positive per-pixel
    # scalar cancels) -> reuse f2n instead of materialising (B,n2,K,C,6,6).
    cls_scores = scale_cls * jnp.einsum('bjsc,bjkc->bjks', f2n, ftrain_norm[:, 0])
    cls_scores = cls_scores.reshape(B * num_test, K, FEAT_H, FEAT_W)

    # ---- auxiliary 64-way classifier ---------------------------------------------
    # fta = sum_k ftest_att * ytest = f2 * aw (aw = a2·ytest per pixel); the 1x1
    # conv commutes with that per-pixel scalar, so the 512->64 matmul is done once:
    #   classifier(fta) = aw * (f2 @ W^T) + b
    base_logits = pallas_bmm(
        fte.reshape(1, B * num_test * HW, NFEAT).astype(jnp.bfloat16),
        p["cls_w"].T.astype(jnp.bfloat16)[None],
    )[0].reshape(B, num_test, HW, NUM_CLASSES)                       # (B, n2, 36, 64)
    aw = jnp.einsum('bikjs,bjk->bijs', a2, ytest)                    # (B, 5, n2, 36)
    y_p = aw[..., None] * base_logits[:, None] + p["cls_b"]          # (B, 5, n2, 36, 64)
    y_p = jnp.transpose(y_p, (1, 0, 2, 4, 3))                        # (5, B, n2, 64, 36)
    y_p = y_p.reshape(5 * B * num_test, NUM_CLASSES, FEAT_H, FEAT_W)
    return y_p, cls_scores


# ----------------------------------------------------------------------------------
if __name__ == "__main__":
    key = jax.random.PRNGKey(0)
    kp, k1, k2, k3 = jax.random.split(key, 4)
    params = init_params(kp)

    B, num_train, num_test, Kway = 4, 25, 30, 5   # 5-way / 5-shot / 6-query, 4 episodes
    H = W = 12
    xtrain = jax.random.normal(k1, (B, num_train, 3, H, W), jnp.float32)
    xtest = jax.random.normal(k2, (B, num_test, 3, H, W), jnp.float32)
    # ytrain as consumed by the prototype average: one-hot per-class labels -> identity.
    ytrain = jnp.tile(jnp.eye(Kway, dtype=jnp.float32)[None], (B, 1, 1))
    labels_test = jax.random.randint(k3, (B, num_test), 0, Kway)
    ytest = jax.nn.one_hot(labels_test, Kway, dtype=jnp.float32)

    fwd = jax.jit(functools.partial(model_forward, training=True, test_fg=False))
    y_p, cls_scores = fwd(params, xtrain, xtest, ytrain, ytest)
    y_p, cls_scores = jax.block_until_ready((y_p, cls_scores))

    assert y_p.shape == (600, 64, 6, 6), y_p.shape
    assert cls_scores.shape == (120, 5, 6, 6), cls_scores.shape
    assert bool(jnp.isfinite(y_p).all()) and bool(jnp.isfinite(cls_scores).all())
    print("KERNEL_OK")
</pallas_src>

<mosaic_0001>
module attributes {stable_mosaic.version = 11 : i64} {
  func.func @_mm_bias_kernel(%arg0: i32, %arg1: i32, %arg2: i32, %arg3: memref<1x256x27xbf16, #tpu.memory_space<vmem>>, %arg4: memref<1x27x512xbf16, #tpu.memory_space<vmem>>, %arg5: memref<1x512xf32, #tpu.memory_space<vmem>>, %arg6: memref<1x256x512xf32, #tpu.memory_space<vmem>>) attributes {dimension_semantics = [#tpu.dimension_semantics<parallel>, #tpu.dimension_semantics<parallel>, #tpu.dimension_semantics<parallel>], iteration_bounds = array<i64: 1, 31, 1>, scalar_prefetch = 0 : i64, scratch_operands = 0 : i64, tpu.core_type = #tpu.core_type<tc>, window_params = [{transform_indices = @transform_0, window_bounds = array<i64: 1, 256, 27>}, {transform_indices = @transform_1, window_bounds = array<i64: 1, 27, 512>}, {transform_indices = @transform_2, window_bounds = array<i64: 1, 512>}, {transform_indices = @transform_3, window_bounds = array<i64: 1, 256, 512>}]} {
    %c0 = arith.constant 0 : index
    %c0_0 = arith.constant 0 : index
    %c0_1 = arith.constant 0 : index
    %0 = vector.load %arg3[%c0, %c0_0, %c0_1] : memref<1x256x27xbf16, #tpu.memory_space<vmem>>, vector<1x256x27xbf16>
    %1 = vector.shape_cast %0 : vector<1x256x27xbf16> to vector<256x27xbf16>
    %c0_2 = arith.constant 0 : index
    %c0_3 = arith.constant 0 : index
    %c0_4 = arith.constant 0 : index
    %2 = vector.load %arg4[%c0_2, %c0_3, %c0_4] : memref<1x27x512xbf16, #tpu.memory_space<vmem>>, vector<1x27x512xbf16>
    %3 = vector.shape_cast %2 : vector<1x27x512xbf16> to vector<27x512xbf16>
    %cst = arith.constant dense<0.000000e+00> : vector<256x512xf32>
    %4 = tpu.matmul %1, %3, %cst {dimension_numbers = #tpu.dot_dimension_numbers<[1], [0], [0], [1], [0, 0, 1, 1], [], []>} : vector<256x27xbf16>, vector<27x512xbf16>, vector<256x512xf32> -> vector<256x512xf32>
    %c0_5 = arith.constant 0 : index
    %c0_6 = arith.constant 0 : index
    %5 = vector.load %arg5[%c0_5, %c0_6] : memref<1x512xf32, #tpu.memory_space<vmem>>, vector<1x512xf32>
    %6 = vector.broadcast %5 : vector<1x512xf32> to vector<256x512xf32>
    %7 = arith.addf %4, %6 : vector<256x512xf32>
    %cst_7 = arith.constant 0.000000e+00 : f32
    %8 = vector.broadcast %cst_7 : f32 to vector<256x512xf32>
    %9 = arith.maximumf %7, %8 : vector<256x512xf32>
    %c0_8 = arith.constant 0 : index
    %c0_9 = arith.constant 0 : index
    %c0_10 = arith.constant 0 : index
    %10 = vector.load %arg6[%c0_8, %c0_9, %c0_10] : memref<1x256x512xf32, #tpu.memory_space<vmem>>, vector<1x256x512xf32>
    %11 = vector.shape_cast %10 : vector<1x256x512xf32> to vector<256x512xf32>
    %12 = vector.shape_cast %9 : vector<256x512xf32> to vector<1x256x512xf32>
    tpu.vector_store %arg6[%c0_8, %c0_9, %c0_10], %12 {strides = array<i32>} : memref<1x256x512xf32, #tpu.memory_space<vmem>>, vector<1x256x512xf32>,
    return
  }
  func.func @transform_0(%arg0: i32, %arg1: i32, %arg2: i32) -> (i32, i32, i32) {
    %c0_i32 = arith.constant 0 : i32
    %c0_i32_0 = arith.constant 0 : i32
    return %arg0, %arg1, %c0_i32 : i32, i32, i32
  }
  func.func @transform_1(%arg0: i32, %arg1: i32, %arg2: i32) -> (i32, i32, i32) {
    %c0_i32 = arith.constant 0 : i32
    %c0_i32_0 = arith.constant 0 : i32
    return %arg0, %c0_i32, %arg2 : i32, i32, i32
  }
  func.func @transform_2(%arg0: i32, %arg1: i32, %arg2: i32) -> (i32, i32) {
    %c0_i32 = arith.constant 0 : i32
    %c0_i32_0 = arith.constant 0 : i32
    return %c0_i32, %arg2 : i32, i32
  }
  func.func @transform_3(%arg0: i32, %arg1: i32, %arg2: i32) -> (i32, i32, i32) {
    %c0_i32 = arith.constant 0 : i32
    return %arg0, %arg1, %arg2 : i32, i32, i32
  }
}

module attributes {stable_mosaic.version = 11 : i64} {
  func.func @_mm_kernel(%arg0: i32, %arg1: i32, %arg2: i32, %arg3: memref<1x256x512xbf16, #tpu.memory_space<vmem>>, %arg4: memref<1x512x64xbf16, #tpu.memory_space<vmem>>, %arg5: memref<1x256x64xf32, #tpu.memory_space<vmem>>) attributes {dimension_semantics = [#tpu.dimension_semantics<parallel>, #tpu.dimension_semantics<parallel>, #tpu.dimension_semantics<parallel>], iteration_bounds = array<i64: 1, 17, 1>, scalar_prefetch = 0 : i64, scratch_operands = 0 : i64, tpu.core_type = #tpu.core_type<tc>, window_params = [{transform_indices = @transform_0, window_bounds = array<i64: 1, 256, 512>}, {transform_indices = @transform_1, window_bounds = array<i64: 1, 512, 64>}, {transform_indices = @transform_2, window_bounds = array<i64: 1, 256, 64>}]} {
    %c0 = arith.constant 0 : index
    %c0_0 = arith.constant 0 : index
    %c0_1 = arith.constant 0 : index
    %0 = vector.load %arg3[%c0, %c0_0, %c0_1] : memref<1x256x512xbf16, #tpu.memory_space<vmem>>, vector<1x256x512xbf16>
    %1 = vector.shape_cast %0 : vector<1x256x512xbf16> to vector<256x512xbf16>
    %c0_2 = arith.constant 0 : index
    %c0_3 = arith.constant 0 : index
    %c0_4 = arith.constant 0 : index
    %2 = vector.load %arg4[%c0_2, %c0_3, %c0_4] : memref<1x512x64xbf16, #tpu.memory_space<vmem>>, vector<1x512x64xbf16>
    %3 = vector.shape_cast %2 : vector<1x512x64xbf16> to vector<512x64xbf16>
    %cst = arith.constant dense<0.000000e+00> : vector<256x64xf32>
    %4 = tpu.matmul %1, %3, %cst {dimension_numbers = #tpu.dot_dimension_numbers<[1], [0], [0], [1], [0, 0, 1, 1], [], []>} : vector<256x512xbf16>, vector<512x64xbf16>, vector<256x64xf32> -> vector<256x64xf32>
    %c0_5 = arith.constant 0 : index
    %c0_6 = arith.constant 0 : index
    %c0_7 = arith.constant 0 : index
    %5 = vector.load %arg5[%c0_5, %c0_6, %c0_7] : memref<1x256x64xf32, #tpu.memory_space<vmem>>, vector<1x256x64xf32>
    %6 = vector.shape_cast %5 : vector<1x256x64xf32> to vector<256x64xf32>
    %7 = vector.shape_cast %4 : vector<256x64xf32> to vector<1x256x64xf32>
    tpu.vector_store %arg5[%c0_5, %c0_6, %c0_7], %7 {strides = array<i32>} : memref<1x256x64xf32, #tpu.memory_space<vmem>>, vector<1x256x64xf32>,
    return
  }
  func.func @transform_0(%arg0: i32, %arg1: i32, %arg2: i32) -> (i32, i32, i32) {
    %c0_i32 = arith.constant 0 : i32
    %c0_i32_0 = arith.constant 0 : i32
    return %arg0, %arg1, %c0_i32 : i32, i32, i32
  }
  func.func @transform_1(%arg0: i32, %arg1: i32, %arg2: i32) -> (i32, i32, i32) {
    %c0_i32 = arith.constant 0 : i32
    %c0_i32_0 = arith.constant 0 : i32
    return %arg0, %c0_i32, %arg2 : i32, i32, i32
  }
  func.func @transform_2(%arg0: i32, %arg1: i32, %arg2: i32) -> (i32, i32, i32) {
    %c0_i32 = arith.constant 0 : i32
    return %arg0, %arg1, %arg2 : i32, i32, i32
  }
}

module attributes {stable_mosaic.version = 11 : i64} {
  func.func @_mm_kernel(%arg0: i32, %arg1: i32, %arg2: i32, %arg3: memref<1x256x512xbf16, #tpu.memory_space<vmem>>, %arg4: memref<1x512x1080xbf16, #tpu.memory_space<vmem>>, %arg5: memref<1x256x1080xf32, #tpu.memory_space<vmem>>) attributes {dimension_semantics = [#tpu.dimension_semantics<parallel>, #tpu.dimension_semantics<parallel>, #tpu.dimension_semantics<parallel>], iteration_bounds = array<i64: 4, 4, 1>, scalar_prefetch = 0 : i64, scratch_operands = 0 : i64, tpu.core_type = #tpu.core_type<tc>, window_params = [{transform_indices = @transform_0, window_bounds = array<i64: 1, 256, 512>}, {transform_indices = @transform_1, window_bounds = array<i64: 1, 512, 1080>}, {transform_indices = @transform_2, window_bounds = array<i64: 1, 256, 1080>}]} {
    %c0 = arith.constant 0 : index
    %c0_0 = arith.constant 0 : index
    %c0_1 = arith.constant 0 : index
    %0 = vector.load %arg3[%c0, %c0_0, %c0_1] : memref<1x256x512xbf16, #tpu.memory_space<vmem>>, vector<1x256x512xbf16>
    %1 = vector.shape_cast %0 : vector<1x256x512xbf16> to vector<256x512xbf16>
    %c0_2 = arith.constant 0 : index
    %c0_3 = arith.constant 0 : index
    %c0_4 = arith.constant 0 : index
    %2 = vector.load %arg4[%c0_2, %c0_3, %c0_4] : memref<1x512x1080xbf16, #tpu.memory_space<vmem>>, vector<1x512x1080xbf16>
    %3 = vector.shape_cast %2 : vector<1x512x1080xbf16> to vector<512x1080xbf16>
    %cst = arith.constant dense<0.000000e+00> : vector<256x1080xf32>
    %4 = tpu.matmul %1, %3, %cst {dimension_numbers = #tpu.dot_dimension_numbers<[1], [0], [0], [1], [0, 0, 1, 1], [], []>} : vector<256x512xbf16>, vector<512x1080xbf16>, vector<256x1080xf32> -> vector<256x1080xf32>
    %c0_5 = arith.constant 0 : index
    %c0_6 = arith.constant 0 : index
    %c0_7 = arith.constant 0 : index
    %5 = vector.load %arg5[%c0_5, %c0_6, %c0_7] : memref<1x256x1080xf32, #tpu.memory_space<vmem>>, vector<1x256x1080xf32>
    %6 = vector.shape_cast %5 : vector<1x256x1080xf32> to vector<256x1080xf32>
    %7 = vector.shape_cast %4 : vector<256x1080xf32> to vector<1x256x1080xf32>
    tpu.vector_store %arg5[%c0_5, %c0_6, %c0_7], %7 {strides = array<i32>} : memref<1x256x1080xf32, #tpu.memory_space<vmem>>, vector<1x256x1080xf32>,
    return
  }
  func.func @transform_0(%arg0: i32, %arg1: i32, %arg2: i32) -> (i32, i32, i32) {
    %c0_i32 = arith.constant 0 : i32
    %c0_i32_0 = arith.constant 0 : i32
    return %arg0, %arg1, %c0_i32 : i32, i32, i32
  }
  func.func @transform_1(%arg0: i32, %arg1: i32, %arg2: i32) -> (i32, i32, i32) {
    %c0_i32 = arith.constant 0 : i32
    %c0_i32_0 = arith.constant 0 : i32
    return %arg0, %c0_i32, %arg2 : i32, i32, i32
  }
  func.func @transform_2(%arg0: i32, %arg1: i32, %arg2: i32) -> (i32, i32, i32) {
    %c0_i32 = arith.constant 0 : i32
    return %arg0, %arg1, %arg2 : i32, i32, i32
  }
}

</mosaic_0001>

<llo_original>
// kernel: squeeze.3
$region0: #{squeeze.3}
  %s0 = inlined_call_operand.vmem [shape: f32[1,7920,512], index: 0, kind: input, shape index: {}]
  %s1 = inlined_call_operand.vmem [shape: f32[220,36,512], index: 1, kind: output, shape index: {}]
  loop: start=0, step=1, limit=13
  $region2: #{squeeze.3} parent=0 // loop_pre_header
    _
  $region3: #{squeeze.3} parent=0 // loop_header
    %s3 = sphi 0, %s7
    %p4 = scmp.ge.s32.totalorder %s3, 13
  $region4: #{squeeze.3} parent=0 // loop_header_branch
    %6 = sbr.rel (%p4) target = $region8
  $region5: #{squeeze.3} parent=0 // loop_body
    %s8 = ssub.s32 %s3, 1
    %s9 = ssub.s32 %s3, 2
    %s10 = sadd.s32 %s3, 1
    %p11 = scmp.le.s32.totalorder 1, %s3
    %p12 = scmp.lt.s32.totalorder %s3, 12
    %p13 = pnand %p11, %p12
    %p14 = pneg %p13
    // Predicated region
    $region9: #{squeeze.3} parent=5 // pred_check
      _
    $region10: #{squeeze.3} parent=5 // pred_check_branch
      %16 = sbr.rel (%p13) target = $region12
    $region11: #{squeeze.3} parent=5 // pred_region
      %s17 = ssub.s32 %s3, 1
    $region12: #{squeeze.3} parent=5 // pred_fallthru
      _
    %p18 = scmp.lt.s32.totalorder %s3, 11
    // Predicated region
    $region13: #{squeeze.3} parent=5 // pred_check
      %p19 = pneg %p18
    $region14: #{squeeze.3} parent=5 // pred_check_branch
      %21 = sbr.rel (%p19) target = $region16
    $region15: #{squeeze.3} parent=5 // pred_region
      %s22 = smul.u32 2880, %s3
      %p23 = scmp.lt.s32.totalorder %s22, 31679
      %s24 = scalar_select %p23, %s22, 31679
      %s25 = scalar_lea.vmem %s0, %s24
      %s26 = smul.u32 2880, %s3
    $region16: #{squeeze.3} parent=5 // pred_fallthru
      _
    %p27 = scmp.le.s32.totalorder 1, %s3
    %p28 = scmp.lt.s32.totalorder %s3, 12
    %p29 = pnand %p27, %p28
    %p30 = pneg %p29
    // Predicated region
    $region17: #{squeeze.3} parent=5 // pred_check
      _
    $region18: #{squeeze.3} parent=5 // pred_check_branch
      %32 = sbr.rel (%p29) target = $region20
    $region19: #{squeeze.3} parent=5 // pred_region
      %s33 = ssub.s32 %s3, 1
      %s34 = smul.u32 2880, %s8
      %p35 = scmp.lt.s32.totalorder %s34, 31679
      %s36 = scalar_select %p35, %s34, 31679
      %s37 = scalar_lea.vmem %s0, %s36
      %s38 = smul.u32 3200, %s8
      %p39 = scmp.lt.s32.totalorder %s38, 35199
      %s40 = scalar_select %p39, %s38, 35199
      %s41 = scalar_lea.vmem %s1, %s40
      %s42 = smul.u32 3200, %s8
      %p43 = scmp.lt.s32.totalorder %s42, 35199
      %s44 = scalar_select %p43, %s42, 35199
      %s45 = scalar_lea.vmem %s1, %s44
      %s46 = smul.u32 3200, %s8
      %s47 = smul.u32 2880, %s8
      %p48 = scmp.lt.s32.totalorder %s47, 31679
      %s49 = scalar_select %p48, %s47, 31679
      %s50 = scalar_lea.vmem %s0, %s49
      %s51 = smul.u32 2880, %s8
      %p52 = scmp.lt.s32.totalorder %s8, 10
      %p53 = scmp.eq.s32.totalorder %s8, 10
      %v54 = vld [vmem:[%s50] sm:$0xff]
      %55 = vst [vmem:[%s45] sm:$0xff] %v54
      %s56 = scalar_lea.vmem %s50, 8
      %v57 = vld [vmem:[%s56] sm:$0xff]
      %s58 = scalar_lea.vmem %s45, 8
      %59 = vst [vmem:[%s58] sm:$0xff] %v57
      %s60 = scalar_lea.vmem %s50, 16
      %v61 = vld [vmem:[%s60] sm:$0xff]
      %s62 = scalar_lea.vmem %s45, 16
      %63 = vst [vmem:[%s62] sm:$0xff] %v61
      %s64 = scalar_lea.vmem %s50, 24
      %v65 = vld [vmem:[%s64] sm:$0xff]
      %s66 = scalar_lea.vmem %s45, 24
      %67 = vst [vmem:[%s66] sm:$0xff] %v65
      %s68 = scalar_lea.vmem %s50, 32
      %v69 = vld [vmem:[%s68] sm:$0xff]
      %s70 = scalar_lea.vmem %s45, 32
      %71 = vst [vmem:[%s70] sm:$0xff] %v69
      %s72 = scalar_lea.vmem %s50, 40
      %v73 = vld [vmem:[%s72] sm:$0xff]
      %s74 = scalar_lea.vmem %s45, 40
      %75 = vst [vmem:[%s74] sm:$0xff] %v73
      %s76 = scalar_lea.vmem %s50, 48
      %v77 = vld [vmem:[%s76] sm:$0xff]
      %s78 = scalar_lea.vmem %s45, 48
      %79 = vst [vmem:[%s78] sm:$0xff] %v77
      %s80 = scalar_lea.vmem %s50, 56
      %v81 = vld [vmem:[%s80] sm:$0xff]
      %s82 = scalar_lea.vmem %s45, 56
      %83 = vst [vmem:[%s82] sm:$0xff] %v81
      %s84 = scalar_lea.vmem %s50, 64
      %v85 = vld [vmem:[%s84] sm:$0xff]
      %s86 = scalar_lea.vmem %s45, 64
      %87 = vst [vmem:[%s86] sm:$0xff] %v85
      %s88 = scalar_lea.vmem %s50, 72
      %v89 = vld [vmem:[%s88] sm:$0xff]
      %s90 = scalar_lea.vmem %s45, 72
      %91 = vst [vmem:[%s90] sm:$0xff] %v89
      %s92 = scalar_lea.vmem %s50, 80
      %v93 = vld [vmem:[%s92] sm:$0xff]
      %s94 = scalar_lea.vmem %s45, 80
      %95 = vst [vmem:[%s94] sm:$0xff] %v93
      %s96 = scalar_lea.vmem %s50, 88
      %v97 = vld [vmem:[%s96] sm:$0xff]
      %s98 = scalar_lea.vmem %s45, 88
      %99 = vst [vmem:[%s98] sm:$0xff] %v97
      %s100 = scalar_lea.vmem %s50, 96
      %v101 = vld [vmem:[%s100] sm:$0xff]
      %s102 = scalar_lea.vmem %s45, 96
      %103 = vst [vmem:[%s102] sm:$0xff] %v101
      %s104 = scalar_lea.vmem %s50, 104
      %v105 = vld [vmem:[%s104] sm:$0xff]
      %s106 = scalar_lea.vmem %s45, 104
      %107 = vst [vmem:[%s106] sm:$0xff] %v105
      %s108 = scalar_lea.vmem %s50, 112
      %v109 = vld [vmem:[%s108] sm:$0xff]
      %s110 = scalar_lea.vmem %s45, 112
      %111 = vst [vmem:[%s110] sm:$0xff] %v109
      %s112 = scalar_lea.vmem %s50, 120
      %v113 = vld [vmem:[%s112] sm:$0xff]
      %s114 = scalar_lea.vmem %s45, 120
      %115 = vst [vmem:[%s114] sm:$0xff] %v113
      %s116 = scalar_lea.vmem %s50, 128
      %v117 = vld [vmem:[%s116] sm:$0xff]
      %s118 = scalar_lea.vmem %s45, 128
      %119 = vst [vmem:[%s118] sm:$0xf] %v117
      %s120 = scalar_lea.vmem %s45, 156
      %121 = vst [vmem:[%s120] sm:$0xf0] %v117
      %s122 = scalar_lea.vmem %s50, 136
      %v123 = vld [vmem:[%s122] sm:$0xff]
      %s124 = scalar_lea.vmem %s45, 136
      %125 = vst [vmem:[%s124] sm:$0xf] %v123
      %s126 = scalar_lea.vmem %s45, 164
      %127 = vst [vmem:[%s126] sm:$0xf0] %v123
      %s128 = scalar_lea.vmem %s50, 144
      %v129 = vld [vmem:[%s128] sm:$0xff]
      %s130 = scalar_lea.vmem %s45, 144
      %131 = vst [vmem:[%s130] sm:$0xf] %v129
      %s132 = scalar_lea.vmem %s45, 172
      %133 = vst [vmem:[%s132] sm:$0xf0] %v129
      %s134 = scalar_lea.vmem %s50, 152
      %v135 = vld [vmem:[%s134] sm:$0xff]
      %s136 = scalar_lea.vmem %s45, 152
      %137 = vst [vmem:[%s136] sm:$0xf] %v135
      %s138 = scalar_lea.vmem %s45, 180
      %139 = vst [vmem:[%s138] sm:$0xf0] %v135
      %s140 = scalar_lea.vmem %s50, 160
      %v141 = vld [vmem:[%s140] sm:$0xff]
      %s142 = scalar_lea.vmem %s45, 164
      %143 = vst [vmem:[%s142] sm:$0xf] %v141
      %s144 = scalar_lea.vmem %s45, 188
      %145 = vst [vmem:[%s144] sm:$0xf0] %v141
      %s146 = scalar_lea.vmem %s50, 168
      %v147 = vld [vmem:[%s146] sm:$0xff]
      %s148 = scalar_lea.vmem %s45, 172
      %149 = vst [vmem:[%s148] sm:$0xf] %v147
      %s150 = scalar_lea.vmem %s45, 196
      %151 = vst [vmem:[%s150] sm:$0xf0] %v147
      %s152 = scalar_lea.vmem %s50, 176
      %v153 = vld [vmem:[%s152] sm:$0xff]
      %s154 = scalar_lea.vmem %s45, 180
      %155 = vst [vmem:[%s154] sm:$0xf] %v153
      %s156 = scalar_lea.vmem %s45, 204
      %157 = vst [vmem:[%s156] sm:$0xf0] %v153
      %s158 = scalar_lea.vmem %s50, 184
      %v159 = vld [vmem:[%s158] sm:$0xff]
      %s160 = scalar_lea.vmem %s45, 188
      %161 = vst [vmem:[%s160] sm:$0xf] %v159
      %s162 = scalar_lea.vmem %s45, 212
      %163 = vst [vmem:[%s162] sm:$0xf0] %v159
      %s164 = scalar_lea.vmem %s50, 192
      %v165 = vld [vmem:[%s164] sm:$0xff]
      %s166 = scalar_lea.vmem %s45, 196
      %167 = vst [vmem:[%s166] sm:$0xf] %v165
      %s168 = scalar_lea.vmem %s45, 220
      %169 = vst [vmem:[%s168] sm:$0xf0] %v165
      %s170 = scalar_lea.vmem %s50, 200
      %v171 = vld [vmem:[%s170] sm:$0xff]
      %s172 = scalar_lea.vmem %s45, 204
      %173 = vst [vmem:[%s172] sm:$0xf] %v171
      %s174 = scalar_lea.vmem %s45, 228
      %175 = vst [vmem:[%s174] sm:$0xf0] %v171
      %s176 = scalar_lea.vmem %s50, 208
      %v177 = vld [vmem:[%s176] sm:$0xff]
      %s178 = scalar_lea.vmem %s45, 212
      %179 = vst [vmem:[%s178] sm:$0xf] %v177
      %s180 = scalar_lea.vmem %s45, 236
      %181 = vst [vmem:[%s180] sm:$0xf0] %v177
      %s182 = scalar_lea.vmem %s50, 216
      %v183 = vld [vmem:[%s182] sm:$0xff]
      %s184 = scalar_lea.vmem %s45, 220
      %185 = vst [vmem:[%s184] sm:$0xf] %v183
      %s186 = scalar_lea.vmem %s45, 244
      %187 = vst [vmem:[%s186] sm:$0xf0] %v183
      %s188 = scalar_lea.vmem %s50, 224
      %v189 = vld [vmem:[%s188] sm:$0xff]
      %s190 = scalar_lea.vmem %s45, 228
      %191 = vst [vmem:[%s190] sm:$0xf] %v189
      %s192 = scalar_lea.vmem %s45, 252
      %193 = vst [vmem:[%s192] sm:$0xf0] %v189
      %s194 = scalar_lea.vmem %s50, 232
      %v195 = vld [vmem:[%s194] sm:$0xff]
      %s196 = scalar_lea.vmem %s45, 236
      %197 = vst [vmem:[%s196] sm:$0xf] %v195
      %s198 = scalar_lea.vmem %s45, 260
      %199 = vst [vmem:[%s198] sm:$0xf0] %v195
      %s200 = scalar_lea.vmem %s50, 240
      %v201 = vld [vmem:[%s200] sm:$0xff]
      %s202 = scalar_lea.vmem %s45, 244
      %203 = vst [vmem:[%s202] sm:$0xf] %v201
      %s204 = scalar_lea.vmem %s45, 268
      %205 = vst [vmem:[%s204] sm:$0xf0] %v201
      %s206 = scalar_lea.vmem %s50, 248
      %v207 = vld [vmem:[%s206] sm:$0xff]
      %s208 = scalar_lea.vmem %s45, 252
      %209 = vst [vmem:[%s208] sm:$0xf] %v207
      %s210 = scalar_lea.vmem %s45, 276
      %211 = vst [vmem:[%s210] sm:$0xf0] %v207
      %s212 = scalar_lea.vmem %s50, 256
      %v213 = vld [vmem:[%s212] sm:$0xff]
      %s214 = scalar_lea.vmem %s45, 260
      %215 = vst [vmem:[%s214] sm:$0xf] %v213
      %s216 = scalar_lea.vmem %s45, 284
      %217 = vst [vmem:[%s216] sm:$0xf0] %v213
      %s218 = scalar_lea.vmem %s50, 264
      %v219 = vld [vmem:[%s218] sm:$0xff]
      %s220 = scalar_lea.vmem %s45, 268
      %221 = vst [vmem:[%s220] sm:$0xf] %v219
      %s222 = scalar_lea.vmem %s45, 292
      %223 = vst [vmem:[%s222] sm:$0xf0] %v219
      %s224 = scalar_lea.vmem %s50, 272
      %v225 = vld [vmem:[%s224] sm:$0xff]
      %s226 = scalar_lea.vmem %s45, 276
      %227 = vst [vmem:[%s226] sm:$0xf] %v225
      %s228 = scalar_lea.vmem %s45, 300
      %229 = vst [vmem:[%s228] sm:$0xf0] %v225
      %s230 = scalar_lea.vmem %s50, 280
      %v231 = vld [vmem:[%s230] sm:$0xff]
      %s232 = scalar_lea.vmem %s45, 284
      %233 = vst [vmem:[%s232] sm:$0xf] %v231
      %s234 = scalar_lea.vmem %s45, 308
      %235 = vst [vmem:[%s234] sm:$0xf0] %v231
      %s236 = scalar_lea.vmem %s50, 288
      %v237 = vld [vmem:[%s236] sm:$0xff]
      %s238 = scalar_lea.vmem %s45, 320
      %239 = vst [vmem:[%s238] sm:$0xff] %v237
      %s240 = scalar_lea.vmem %s50, 296
      %v241 = vld [vmem:[%s240] sm:$0xff]
      %s242 = scalar_lea.vmem %s45, 328
      %243 = vst [vmem:[%s242] sm:$0xff] %v241
      %s244 = scalar_lea.vmem %s50, 304
      %v245 = vld [vmem:[%s244] sm:$0xff]
      %s246 = scalar_lea.vmem %s45, 336
      %247 = vst [vmem:[%s246] sm:$0xff] %v245
      %s248 = scalar_lea.vmem %s50, 312
      %v249 = vld [vmem:[%s248] sm:$0xff]
      %s250 = scalar_lea.vmem %s45, 344
      %251 = vst [vmem:[%s250] sm:$0xff] %v249
      %s252 = scalar_lea.vmem %s50, 320
      %v253 = vld [vmem:[%s252] sm:$0xff]
      %s254 = scalar_lea.vmem %s45, 352
      %255 = vst [vmem:[%s254] sm:$0xff] %v253
      %s256 = scalar_lea.vmem %s50, 328
      %v257 = vld [vmem:[%s256] sm:$0xff]
      %s258 = scalar_lea.vmem %s45, 360
      %259 = vst [vmem:[%s258] sm:$0xff] %v257
      %s260 = scalar_lea.vmem %s50, 336
      %v261 = vld [vmem:[%s260] sm:$0xff]
      %s262 = scalar_lea.vmem %s45, 368
      %263 = vst [vmem:[%s262] sm:$0xff] %v261
      %s264 = scalar_lea.vmem %s50, 344
      %v265 = vld [vmem:[%s264] sm:$0xff]
      %s266 = scalar_lea.vmem %s45, 376
      %267 = vst [vmem:[%s266] sm:$0xff] %v265
      %s268 = scalar_lea.vmem %s50, 352
      %v269 = vld [vmem:[%s268] sm:$0xff]
      %s270 = scalar_lea.vmem %s45, 384
      %271 = vst [vmem:[%s270] sm:$0xff] %v269
      %s272 = scalar_lea.vmem %s50, 360
      %v273 = vld [vmem:[%s272] sm:$0xff]
      %s274 = scalar_lea.vmem %s45, 392
      %275 = vst [vmem:[%s274] sm:$0xff] %v273
      %s276 = scalar_lea.vmem %s50, 368
      %v277 = vld [vmem:[%s276] sm:$0xff]
      %s278 = scalar_lea.vmem %s45, 400
      %279 = vst [vmem:[%s278] sm:$0xff] %v277
      %s280 = scalar_lea.vmem %s50, 376
      %v281 = vld [vmem:[%s280] sm:$0xff]
      %s282 = scalar_lea.vmem %s45, 408
      %283 = vst [vmem:[%s282] sm:$0xff] %v281
      %s284 = scalar_lea.vmem %s50, 384
      %v285 = vld [vmem:[%s284] sm:$0xff]
      %s286 = scalar_lea.vmem %s45, 416
      %287 = vst [vmem:[%s286] sm:$0xff] %v285
      %s288 = scalar_lea.vmem %s50, 392
      %v289 = vld [vmem:[%s288] sm:$0xff]
      %s290 = scalar_lea.vmem %s45, 424
      %291 = vst [vmem:[%s290] sm:$0xff] %v289
      %s292 = scalar_lea.vmem %s50, 400
      %v293 = vld [vmem:[%s292] sm:$0xff]
      %s294 = scalar_lea.vmem %s45, 432
      %295 = vst [vmem:[%s294] sm:$0xff] %v293
      %s296 = scalar_lea.vmem %s50, 408
      %v297 = vld [vmem:[%s296] sm:$0xff]
      %s298 = scalar_lea.vmem %s45, 440
      %299 = vst [vmem:[%s298] sm:$0xff] %v297
      %s300 = scalar_lea.vmem %s50, 416
      %v301 = vld [vmem:[%s300] sm:$0xff]
      %s302 = scalar_lea.vmem %s45, 448
      %303 = vst [vmem:[%s302] sm:$0xf] %v301
      %s304 = scalar_lea.vmem %s45, 476
      %305 = vst [vmem:[%s304] sm:$0xf0] %v301
      %s306 = scalar_lea.vmem %s50, 424
      %v307 = vld [vmem:[%s306] sm:$0xff]
      %s308 = scalar_lea.vmem %s45, 456
      %309 = vst [vmem:[%s308] sm:$0xf] %v307
      %s310 = scalar_lea.vmem %s45, 484
      %311 = vst [vmem:[%s310] sm:$0xf0] %v307
      %s312 = scalar_lea.vmem %s50, 432
      %v313 = vld [vmem:[%s312] sm:$0xff]
      %s314 = scalar_lea.vmem %s45, 464
      %315 = vst [vmem:[%s314] sm:$0xf] %v313
      %s316 = scalar_lea.vmem %s45, 492
      %317 = vst [vmem:[%s316] sm:$0xf0] %v313
      %s318 = scalar_lea.vmem %s50, 440
      %v319 = vld [vmem:[%s318] sm:$0xff]
      %s320 = scalar_lea.vmem %s45, 472
      %321 = vst [vmem:[%s320] sm:$0xf] %v319
      %s322 = scalar_lea.vmem %s45, 500
      %323 = vst [vmem:[%s322] sm:$0xf0] %v319
      %s324 = scalar_lea.vmem %s50, 448
      %v325 = vld [vmem:[%s324] sm:$0xff]
      %s326 = scalar_lea.vmem %s45, 484
      %327 = vst [vmem:[%s326] sm:$0xf] %v325
      %s328 = scalar_lea.vmem %s45, 508
      %329 = vst [vmem:[%s328] sm:$0xf0] %v325
      %s330 = scalar_lea.vmem %s50, 456
      %v331 = vld [vmem:[%s330] sm:$0xff]
      %s332 = scalar_lea.vmem %s45, 492
      %333 = vst [vmem:[%s332] sm:$0xf] %v331
      %s334 = scalar_lea.vmem %s45, 516
      %335 = vst [vmem:[%s334] sm:$0xf0] %v331
      %s336 = scalar_lea.vmem %s50, 464
      %v337 = vld [vmem:[%s336] sm:$0xff]
      %s338 = scalar_lea.vmem %s45, 500
      %339 = vst [vmem:[%s338] sm:$0xf] %v337
      %s340 = scalar_lea.vmem %s45, 524
      %341 = vst [vmem:[%s340] sm:$0xf0] %v337
      %s342 = scalar_lea.vmem %s50, 472
      %v343 = vld [vmem:[%s342] sm:$0xff]
      %s344 = scalar_lea.vmem %s45, 508
      %345 = vst [vmem:[%s344] sm:$0xf] %v343
      %s346 = scalar_lea.vmem %s45, 532
      %347 = vst [vmem:[%s346] sm:$0xf0] %v343
      %s348 = scalar_lea.vmem %s50, 480
      %v349 = vld [vmem:[%s348] sm:$0xff]
      %s350 = scalar_lea.vmem %s45, 516
      %351 = vst [vmem:[%s350] sm:$0xf] %v349
      %s352 = scalar_lea.vmem %s45, 540
      %353 = vst [vmem:[%s352] sm:$0xf0] %v349
      %s354 = scalar_lea.vmem %s50, 488
      %v355 = vld [vmem:[%s354] sm:$0xff]
      %s356 = scalar_lea.vmem %s45, 524
      %357 = vst [vmem:[%s356] sm:$0xf] %v355
      %s358 = scalar_lea.vmem %s45, 548
      %359 = vst [vmem:[%s358] sm:$0xf0] %v355
      %s360 = scalar_lea.vmem %s50, 496
      %v361 = vld [vmem:[%s360] sm:$0xff]
      %s362 = scalar_lea.vmem %s45, 532
      %363 = vst [vmem:[%s362] sm:$0xf] %v361
      %s364 = scalar_lea.vmem %s45, 556
      %365 = vst [vmem:[%s364] sm:$0xf0] %v361
      %s366 = scalar_lea.vmem %s50, 504
      %v367 = vld [vmem:[%s366] sm:$0xff]
      %s368 = scalar_lea.vmem %s45, 540
      %369 = vst [vmem:[%s368] sm:$0xf] %v367
      %s370 = scalar_lea.vmem %s45, 564
      %371 = vst [vmem:[%s370] sm:$0xf0] %v367
      %s372 = scalar_lea.vmem %s50, 512
      %v373 = vld [vmem:[%s372] sm:$0xff]
      %s374 = scalar_lea.vmem %s45, 548
      %375 = vst [vmem:[%s374] sm:$0xf] %v373
      %s376 = scalar_lea.vmem %s45, 572
      %377 = vst [vmem:[%s376] sm:$0xf0] %v373
      %s378 = scalar_lea.vmem %s50, 520
      %v379 = vld [vmem:[%s378] sm:$0xff]
      %s380 = scalar_lea.vmem %s45, 556
      %381 = vst [vmem:[%s380] sm:$0xf] %v379
      %s382 = scalar_lea.vmem %s45, 580
      %383 = vst [vmem:[%s382] sm:$0xf0] %v379
      %s384 = scalar_lea.vmem %s50, 528
      %v385 = vld [vmem:[%s384] sm:$0xff]
      %s386 = scalar_lea.vmem %s45, 564
      %387 = vst [vmem:[%s386] sm:$0xf] %v385
      %s388 = scalar_lea.vmem %s45, 588
      %389 = vst [vmem:[%s388] sm:$0xf0] %v385
      %s390 = scalar_lea.vmem %s50, 536
      %v391 = vld [vmem:[%s390] sm:$0xff]
      %s392 = scalar_lea.vmem %s45, 572
      %393 = vst [vmem:[%s392] sm:$0xf] %v391
      %s394 = scalar_lea.vmem %s45, 596
      %395 = vst [vmem:[%s394] sm:$0xf0] %v391
      %s396 = scalar_lea.vmem %s50, 544
      %v397 = vld [vmem:[%s396] sm:$0xff]
      %s398 = scalar_lea.vmem %s45, 580
      %399 = vst [vmem:[%s398] sm:$0xf] %v397
      %s400 = scalar_lea.vmem %s45, 604
      %401 = vst [vmem:[%s400] sm:$0xf0] %v397
      %s402 = scalar_lea.vmem %s50, 552
      %v403 = vld [vmem:[%s402] sm:$0xff]
      %s404 = scalar_lea.vmem %s45, 588
      %405 = vst [vmem:[%s404] sm:$0xf] %v403
      %s406 = scalar_lea.vmem %s45, 612
      %407 = vst [vmem:[%s406] sm:$0xf0] %v403
      %s408 = scalar_lea.vmem %s50, 560
      %v409 = vld [vmem:[%s408] sm:$0xff]
      %s410 = scalar_lea.vmem %s45, 596
      %411 = vst [vmem:[%s410] sm:$0xf] %v409
      %s412 = scalar_lea.vmem %s45, 620
      %413 = vst [vmem:[%s412] sm:$0xf0] %v409
      %s414 = scalar_lea.vmem %s50, 568
      %v415 = vld [vmem:[%s414] sm:$0xff]
      %s416 = scalar_lea.vmem %s45, 604
      %417 = vst [vmem:[%s416] sm:$0xf] %v415
      %s418 = scalar_lea.vmem %s45, 628
      %419 = vst [vmem:[%s418] sm:$0xf0] %v415
      %s420 = scalar_lea.vmem %s50, 576
      %v421 = vld [vmem:[%s420] sm:$0xff]
      %s422 = scalar_lea.vmem %s45, 640
      %423 = vst [vmem:[%s422] sm:$0xff] %v421
      %s424 = scalar_lea.vmem %s50, 584
      %v425 = vld [vmem:[%s424] sm:$0xff]
      %s426 = scalar_lea.vmem %s45, 648
      %427 = vst [vmem:[%s426] sm:$0xff] %v425
      %s428 = scalar_lea.vmem %s50, 592
      %v429 = vld [vmem:[%s428] sm:$0xff]
      %s430 = scalar_lea.vmem %s45, 656
      %431 = vst [vmem:[%s430] sm:$0xff] %v429
      %s432 = scalar_lea.vmem %s50, 600
      %v433 = vld [vmem:[%s432] sm:$0xff]
      %s434 = scalar_lea.vmem %s45, 664
      %435 = vst [vmem:[%s434] sm:$0xff] %v433
      %s436 = scalar_lea.vmem %s50, 608
      %v437 = vld [vmem:[%s436] sm:$0xff]
      %s438 = scalar_lea.vmem %s45, 672
      %439 = vst [vmem:[%s438] sm:$0xff] %v437
      %s440 = scalar_lea.vmem %s50, 616
      %v441 = vld [vmem:[%s440] sm:$0xff]
      %s442 = scalar_lea.vmem %s45, 680
      %443 = vst [vmem:[%s442] sm:$0xff] %v441
      %s444 = scalar_lea.vmem %s50, 624
      %v445 = vld [vmem:[%s444] sm:$0xff]
      %s446 = scalar_lea.vmem %s45, 688
      %447 = vst [vmem:[%s446] sm:$0xff] %v445
      %s448 = scalar_lea.vmem %s50, 632
      %v449 = vld [vmem:[%s448] sm:$0xff]
      %s450 = scalar_lea.vmem %s45, 696
      %451 = vst [vmem:[%s450] sm:$0xff] %v449
      %s452 = scalar_lea.vmem %s50, 640
      %v453 = vld [vmem:[%s452] sm:$0xff]
      %s454 = scalar_lea.vmem %s45, 704
      %455 = vst [vmem:[%s454] sm:$0xff] %v453
      %s456 = scalar_lea.vmem %s50, 648
      %v457 = vld [vmem:[%s456] sm:$0xff]
      %s458 = scalar_lea.vmem %s45, 712
      %459 = vst [vmem:[%s458] sm:$0xff] %v457
      %s460 = scalar_lea.vmem %s50, 656
      %v461 = vld [vmem:[%s460] sm:$0xff]
      %s462 = scalar_lea.vmem %s45, 720
      %463 = vst [vmem:[%s462] sm:$0xff] %v461
      %s464 = scalar_lea.vmem %s50, 664
      %v465 = vld [vmem:[%s464] sm:$0xff]
      %s466 = scalar_lea.vmem %s45, 728
      %467 = vst [vmem:[%s466] sm:$0xff] %v465
      %s468 = scalar_lea.vmem %s50, 672
      %v469 = vld [vmem:[%s468] sm:$0xff]
      %s470 = scalar_lea.vmem %s45, 736
      %471 = vst [vmem:[%s470] sm:$0xff] %v469
      %s472 = scalar_lea.vmem %s50, 680
      %v473 = vld [vmem:[%s472] sm:$0xff]
      %s474 = scalar_lea.vmem %s45, 744
      %475 = vst [vmem:[%s474] sm:$0xff] %v473
      %s476 = scalar_lea.vmem %s50, 688
      %v477 = vld [vmem:[%s476] sm:$0xff]
      %s478 = scalar_lea.vmem %s45, 752
      %479 = vst [vmem:[%s478] sm:$0xff] %v477
      %s480 = scalar_lea.vmem %s50, 696
      %v481 = vld [vmem:[%s480] sm:$0xff]
      %s482 = scalar_lea.vmem %s45, 760
      %483 = vst [vmem:[%s482] sm:$0xff] %v481
      %s484 = scalar_lea.vmem %s50, 704
      %v485 = vld [vmem:[%s484] sm:$0xff]
      %s486 = scalar_lea.vmem %s45, 768
      %487 = vst [vmem:[%s486] sm:$0xf] %v485
      %s488 = scalar_lea.vmem %s45, 796
      %489 = vst [vmem:[%s488] sm:$0xf0] %v485
      %s490 = scalar_lea.vmem %s50, 712
      %v491 = vld [vmem:[%s490] sm:$0xff]
      %s492 = scalar_lea.vmem %s45, 776
      %493 = vst [vmem:[%s492] sm:$0xf] %v491
      %s494 = scalar_lea.vmem %s45, 804
      %495 = vst [vmem:[%s494] sm:$0xf0] %v491
      %s496 = scalar_lea.vmem %s50, 720
      %v497 = vld [vmem:[%s496] sm:$0xff]
      %s498 = scalar_lea.vmem %s45, 784
      %499 = vst [vmem:[%s498] sm:$0xf] %v497
      %s500 = scalar_lea.vmem %s45, 812
      %501 = vst [vmem:[%s500] sm:$0xf0] %v497
      %s502 = scalar_lea.vmem %s50, 728
      %v503 = vld [vmem:[%s502] sm:$0xff]
      %s504 = scalar_lea.vmem %s45, 792
      %505 = vst [vmem:[%s504] sm:$0xf] %v503
      %s506 = scalar_lea.vmem %s45, 820
      %507 = vst [vmem:[%s506] sm:$0xf0] %v503
      %s508 = scalar_lea.vmem %s50, 736
      %v509 = vld [vmem:[%s508] sm:$0xff]
      %s510 = scalar_lea.vmem %s45, 804
      %511 = vst [vmem:[%s510] sm:$0xf] %v509
      %s512 = scalar_lea.vmem %s45, 828
      %513 = vst [vmem:[%s512] sm:$0xf0] %v509
      %s514 = scalar_lea.vmem %s50, 744
      %v515 = vld [vmem:[%s514] sm:$0xff]
      %s516 = scalar_lea.vmem %s45, 812
      %517 = vst [vmem:[%s516] sm:$0xf] %v515
      %s518 = scalar_lea.vmem %s45, 836
      %519 = vst [vmem:[%s518] sm:$0xf0] %v515
      %s520 = scalar_lea.vmem %s50, 752
      %v521 = vld [vmem:[%s520] sm:$0xff]
      %s522 = scalar_lea.vmem %s45, 820
      %523 = vst [vmem:[%s522] sm:$0xf] %v521
      %s524 = scalar_lea.vmem %s45, 844
      %525 = vst [vmem:[%s524] sm:$0xf0] %v521
      %s526 = scalar_lea.vmem %s50, 760
      %v527 = vld [vmem:[%s526] sm:$0xff]
      %s528 = scalar_lea.vmem %s45, 828
      %529 = vst [vmem:[%s528] sm:$0xf] %v527
      %s530 = scalar_lea.vmem %s45, 852
      %531 = vst [vmem:[%s530] sm:$0xf0] %v527
      %s532 = scalar_lea.vmem %s50, 768
      %v533 = vld [vmem:[%s532] sm:$0xff]
      %s534 = scalar_lea.vmem %s45, 836
      %535 = vst [vmem:[%s534] sm:$0xf] %v533
      %s536 = scalar_lea.vmem %s45, 860
      %537 = vst [vmem:[%s536] sm:$0xf0] %v533
      %s538 = scalar_lea.vmem %s50, 776
      %v539 = vld [vmem:[%s538] sm:$0xff]
      %s540 = scalar_lea.vmem %s45, 844
      %541 = vst [vmem:[%s540] sm:$0xf] %v539
      %s542 = scalar_lea.vmem %s45, 868
      %543 = vst [vmem:[%s542] sm:$0xf0] %v539
      %s544 = scalar_lea.vmem %s50, 784
      %v545 = vld [vmem:[%s544] sm:$0xff]
      %s546 = scalar_lea.vmem %s45, 852
      %547 = vst [vmem:[%s546] sm:$0xf] %v545
      %s548 = scalar_lea.vmem %s45, 876
      %549 = vst [vmem:[%s548] sm:$0xf0] %v545
      %s550 = scalar_lea.vmem %s50, 792
      %v551 = vld [vmem:[%s550] sm:$0xff]
      %s552 = scalar_lea.vmem %s45, 860
      %553 = vst [vmem:[%s552] sm:$0xf] %v551
      %s554 = scalar_lea.vmem %s45, 884
      %555 = vst [vmem:[%s554] sm:$0xf0] %v551
      %s556 = scalar_lea.vmem %s50, 800
      %v557 = vld [vmem:[%s556] sm:$0xff]
      %s558 = scalar_lea.vmem %s45, 868
      %559 = vst [vmem:[%s558] sm:$0xf] %v557
      %s560 = scalar_lea.vmem %s45, 892
      %561 = vst [vmem:[%s560] sm:$0xf0] %v557
      %s562 = scalar_lea.vmem %s50, 808
      %v563 = vld [vmem:[%s562] sm:$0xff]
      %s564 = scalar_lea.vmem %s45, 876
      %565 = vst [vmem:[%s564] sm:$0xf] %v563
      %s566 = scalar_lea.vmem %s45, 900
      %567 = vst [vmem:[%s566] sm:$0xf0] %v563
      %s568 = scalar_lea.vmem %s50, 816
      %v569 = vld [vmem:[%s568] sm:$0xff]
      %s570 = scalar_lea.vmem %s45, 884
      %571 = vst [vmem:[%s570] sm:$0xf] %v569
      %s572 = scalar_lea.vmem %s45, 908
      %573 = vst [vmem:[%s572] sm:$0xf0] %v569
      %s574 = scalar_lea.vmem %s50, 824
      %v575 = vld [vmem:[%s574] sm:$0xff]
      %s576 = scalar_lea.vmem %s45, 892
      %577 = vst [vmem:[%s576] sm:$0xf] %v575
      %s578 = scalar_lea.vmem %s45, 916
      %579 = vst [vmem:[%s578] sm:$0xf0] %v575
      %s580 = scalar_lea.vmem %s50, 832
      %v581 = vld [vmem:[%s580] sm:$0xff]
      %s582 = scalar_lea.vmem %s45, 900
      %583 = vst [vmem:[%s582] sm:$0xf] %v581
      %s584 = scalar_lea.vmem %s45, 924
      %585 = vst [vmem:[%s584] sm:$0xf0] %v581
      %s586 = scalar_lea.vmem %s50, 840
      %v587 = vld [vmem:[%s586] sm:$0xff]
      %s588 = scalar_lea.vmem %s45, 908
      %589 = vst [vmem:[%s588] sm:$0xf] %v587
      %s590 = scalar_lea.vmem %s45, 932
      %591 = vst [vmem:[%s590] sm:$0xf0] %v587
      %s592 = scalar_lea.vmem %s50, 848
      %v593 = vld [vmem:[%s592] sm:$0xff]
      %s594 = scalar_lea.vmem %s45, 916
      %595 = vst [vmem:[%s594] sm:$0xf] %v593
      %s596 = scalar_lea.vmem %s45, 940
      %597 = vst [vmem:[%s596] sm:$0xf0] %v593
      %s598 = scalar_lea.vmem %s50, 856
      %v599 = vld [vmem:[%s598] sm:$0xff]
      %s600 = scalar_lea.vmem %s45, 924
      %601 = vst [vmem:[%s600] sm:$0xf] %v599
      %s602 = scalar_lea.vmem %s45, 948
      %603 = vst [vmem:[%s602] sm:$0xf0] %v599
      %s604 = scalar_lea.vmem %s50, 864
      %v605 = vld [vmem:[%s604] sm:$0xff]
      %s606 = scalar_lea.vmem %s45, 960
      %607 = vst [vmem:[%s606] sm:$0xff] %v605
      %s608 = scalar_lea.vmem %s50, 872
      %v609 = vld [vmem:[%s608] sm:$0xff]
      %s610 = scalar_lea.vmem %s45, 968
      %611 = vst [vmem:[%s610] sm:$0xff] %v609
      %s612 = scalar_lea.vmem %s50, 880
      %v613 = vld [vmem:[%s612] sm:$0xff]
      %s614 = scalar_lea.vmem %s45, 976
      %615 = vst [vmem:[%s614] sm:$0xff] %v613
      %s616 = scalar_lea.vmem %s50, 888
      %v617 = vld [vmem:[%s616] sm:$0xff]
      %s618 = scalar_lea.vmem %s45, 984
      %619 = vst [vmem:[%s618] sm:$0xff] %v617
      %s620 = scalar_lea.vmem %s50, 896
      %v621 = vld [vmem:[%s620] sm:$0xff]
      %s622 = scalar_lea.vmem %s45, 992
      %623 = vst [vmem:[%s622] sm:$0xff] %v621
      %s624 = scalar_lea.vmem %s50, 904
      %v625 = vld [vmem:[%s624] sm:$0xff]
      %s626 = scalar_lea.vmem %s45, 1000
      %627 = vst [vmem:[%s626] sm:$0xff] %v625
      %s628 = scalar_lea.vmem %s50, 912
      %v629 = vld [vmem:[%s628] sm:$0xff]
      %s630 = scalar_lea.vmem %s45, 1008
      %631 = vst [vmem:[%s630] sm:$0xff] %v629
      %s632 = scalar_lea.vmem %s50, 920
      %v633 = vld [vmem:[%s632] sm:$0xff]
      %s634 = scalar_lea.vmem %s45, 1016
      %635 = vst [vmem:[%s634] sm:$0xff] %v633
      %s636 = scalar_lea.vmem %s50, 928
      %v637 = vld [vmem:[%s636] sm:$0xff]
      %s638 = scalar_lea.vmem %s45, 1024
      %639 = vst [vmem:[%s638] sm:$0xff] %v637
      %s640 = scalar_lea.vmem %s50, 936
      %v641 = vld [vmem:[%s640] sm:$0xff]
      %s642 = scalar_lea.vmem %s45, 1032
      %643 = vst [vmem:[%s642] sm:$0xff] %v641
      %s644 = scalar_lea.vmem %s50, 944
      %v645 = vld [vmem:[%s644] sm:$0xff]
      %s646 = scalar_lea.vmem %s45, 1040
      %647 = vst [vmem:[%s646] sm:$0xff] %v645
      %s648 = scalar_lea.vmem %s50, 952
      %v649 = vld [vmem:[%s648] sm:$0xff]
      %s650 = scalar_lea.vmem %s45, 1048
      %651 = vst [vmem:[%s650] sm:$0xff] %v649
      %s652 = scalar_lea.vmem %s50, 960
      %v653 = vld [vmem:[%s652] sm:$0xff]
      %s654 = scalar_lea.vmem %s45, 1056
      %655 = vst [vmem:[%s654] sm:$0xff] %v653
      %s656 = scalar_lea.vmem %s50, 968
      %v657 = vld [vmem:[%s656] sm:$0xff]
      %s658 = scalar_lea.vmem %s45, 1064
      %659 = vst [vmem:[%s658] sm:$0xff] %v657
      %s660 = scalar_lea.vmem %s50, 976
      %v661 = vld [vmem:[%s660] sm:$0xff]
      %s662 = scalar_lea.vmem %s45, 1072
      %663 = vst [vmem:[%s662] sm:$0xff] %v661
      %s664 = scalar_lea.vmem %s50, 984
      %v665 = vld [vmem:[%s664] sm:$0xff]
      %s666 = scalar_lea.vmem %s45, 1080
      %667 = vst [vmem:[%s666] sm:$0xff] %v665
      %s668 = scalar_lea.vmem %s50, 992
      %v669 = vld [vmem:[%s668] sm:$0xff]
      %s670 = scalar_lea.vmem %s45, 1088
      %671 = vst [vmem:[%s670] sm:$0xf] %v669
      %s672 = scalar_lea.vmem %s45, 1116
      %673 = vst [vmem:[%s672] sm:$0xf0] %v669
      %s674 = scalar_lea.vmem %s50, 1000
      %v675 = vld [vmem:[%s674] sm:$0xff]
      %s676 = scalar_lea.vmem %s45, 1096
      %677 = vst [vmem:[%s676] sm:$0xf] %v675
      %s678 = scalar_lea.vmem %s45, 1124
      %679 = vst [vmem:[%s678] sm:$0xf0] %v675
      %s680 = scalar_lea.vmem %s50, 1008
      %v681 = vld [vmem:[%s680] sm:$0xff]
      %s682 = scalar_lea.vmem %s45, 1104
      %683 = vst [vmem:[%s682] sm:$0xf] %v681
      %s684 = scalar_lea.vmem %s45, 1132
      %685 = vst [vmem:[%s684] sm:$0xf0] %v681
      %s686 = scalar_lea.vmem %s50, 1016
      %v687 = vld [vmem:[%s686] sm:$0xff]
      %s688 = scalar_lea.vmem %s45, 1112
      %689 = vst [vmem:[%s688] sm:$0xf] %v687
      %s690 = scalar_lea.vmem %s45, 1140
      %691 = vst [vmem:[%s690] sm:$0xf0] %v687
      %s692 = scalar_lea.vmem %s50, 1024
      %v693 = vld [vmem:[%s692] sm:$0xff]
      %s694 = scalar_lea.vmem %s45, 1124
      %695 = vst [vmem:[%s694] sm:$0xf] %v693
      %s696 = scalar_lea.vmem %s45, 1148
      %697 = vst [vmem:[%s696] sm:$0xf0] %v693
      %s698 = scalar_lea.vmem %s50, 1032
      %v699 = vld [vmem:[%s698] sm:$0xff]
      %s700 = scalar_lea.vmem %s45, 1132
      %701 = vst [vmem:[%s700] sm:$0xf] %v699
      %s702 = scalar_lea.vmem %s45, 1156
      %703 = vst [vmem:[%s702] sm:$0xf0] %v699
      %s704 = scalar_lea.vmem %s50, 1040
      %v705 = vld [vmem:[%s704] sm:$0xff]
      %s706 = scalar_lea.vmem %s45, 1140
      %707 = vst [vmem:[%s706] sm:$0xf] %v705
      %s708 = scalar_lea.vmem %s45, 1164
      %709 = vst [vmem:[%s708] sm:$0xf0] %v705
      %s710 = scalar_lea.vmem %s50, 1048
      %v711 = vld [vmem:[%s710] sm:$0xff]
      %s712 = scalar_lea.vmem %s45, 1148
      %713 = vst [vmem:[%s712] sm:$0xf] %v711
      %s714 = scalar_lea.vmem %s45, 1172
      %715 = vst [vmem:[%s714] sm:$0xf0] %v711
      %s716 = scalar_lea.vmem %s50, 1056
      %v717 = vld [vmem:[%s716] sm:$0xff]
      %s718 = scalar_lea.vmem %s45, 1156
      %719 = vst [vmem:[%s718] sm:$0xf] %v717
      %s720 = scalar_lea.vmem %s45, 1180
      %721 = vst [vmem:[%s720] sm:$0xf0] %v717
      %s722 = scalar_lea.vmem %s50, 1064
      %v723 = vld [vmem:[%s722] sm:$0xff]
      %s724 = scalar_lea.vmem %s45, 1164
      %725 = vst [vmem:[%s724] sm:$0xf] %v723
      %s726 = scalar_lea.vmem %s45, 1188
      %727 = vst [vmem:[%s726] sm:$0xf0] %v723
      %s728 = scalar_lea.vmem %s50, 1072
      %v729 = vld [vmem:[%s728] sm:$0xff]
      %s730 = scalar_lea.vmem %s45, 1172
      %731 = vst [vmem:[%s730] sm:$0xf] %v729
      %s732 = scalar_lea.vmem %s45, 1196
      %733 = vst [vmem:[%s732] sm:$0xf0] %v729
      %s734 = scalar_lea.vmem %s50, 1080
      %v735 = vld [vmem:[%s734] sm:$0xff]
      %s736 = scalar_lea.vmem %s45, 1180
      %737 = vst [vmem:[%s736] sm:$0xf] %v735
      %s738 = scalar_lea.vmem %s45, 1204
      %739 = vst [vmem:[%s738] sm:$0xf0] %v735
      %s740 = scalar_lea.vmem %s50, 1088
      %v741 = vld [vmem:[%s740] sm:$0xff]
      %s742 = scalar_lea.vmem %s45, 1188
      %743 = vst [vmem:[%s742] sm:$0xf] %v741
      %s744 = scalar_lea.vmem %s45, 1212
      %745 = vst [vmem:[%s744] sm:$0xf0] %v741
      %s746 = scalar_lea.vmem %s50, 1096
      %v747 = vld [vmem:[%s746] sm:$0xff]
      %s748 = scalar_lea.vmem %s45, 1196
      %749 = vst [vmem:[%s748] sm:$0xf] %v747
      %s750 = scalar_lea.vmem %s45, 1220
      %751 = vst [vmem:[%s750] sm:$0xf0] %v747
      %s752 = scalar_lea.vmem %s50, 1104
      %v753 = vld [vmem:[%s752] sm:$0xff]
      %s754 = scalar_lea.vmem %s45, 1204
      %755 = vst [vmem:[%s754] sm:$0xf] %v753
      %s756 = scalar_lea.vmem %s45, 1228
      %757 = vst [vmem:[%s756] sm:$0xf0] %v753
      %s758 = scalar_lea.vmem %s50, 1112
      %v759 = vld [vmem:[%s758] sm:$0xff]
      %s760 = scalar_lea.vmem %s45, 1212
      %761 = vst [vmem:[%s760] sm:$0xf] %v759
      %s762 = scalar_lea.vmem %s45, 1236
      %763 = vst [vmem:[%s762] sm:$0xf0] %v759
      %s764 = scalar_lea.vmem %s50, 1120
      %v765 = vld [vmem:[%s764] sm:$0xff]
      %s766 = scalar_lea.vmem %s45, 1220
      %767 = vst [vmem:[%s766] sm:$0xf] %v765
      %s768 = scalar_lea.vmem %s45, 1244
      %769 = vst [vmem:[%s768] sm:$0xf0] %v765
      %s770 = scalar_lea.vmem %s50, 1128
      %v771 = vld [vmem:[%s770] sm:$0xff]
      %s772 = scalar_lea.vmem %s45, 1228
      %773 = vst [vmem:[%s772] sm:$0xf] %v771
      %s774 = scalar_lea.vmem %s45, 1252
      %775 = vst [vmem:[%s774] sm:$0xf0] %v771
      %s776 = scalar_lea.vmem %s50, 1136
      %v777 = vld [vmem:[%s776] sm:$0xff]
      %s778 = scalar_lea.vmem %s45, 1236
      %779 = vst [vmem:[%s778] sm:$0xf] %v777
      %s780 = scalar_lea.vmem %s45, 1260
      %781 = vst [vmem:[%s780] sm:$0xf0] %v777
      %s782 = scalar_lea.vmem %s50, 1144
      %v783 = vld [vmem:[%s782] sm:$0xff]
      %s784 = scalar_lea.vmem %s45, 1244
      %785 = vst [vmem:[%s784] sm:$0xf] %v783
      %s786 = scalar_lea.vmem %s45, 1268
      %787 = vst [vmem:[%s786] sm:$0xf0] %v783
      %s788 = scalar_lea.vmem %s50, 1152
      %v789 = vld [vmem:[%s788] sm:$0xff]
      %s790 = scalar_lea.vmem %s45, 1280
      %791 = vst [vmem:[%s790] sm:$0xff] %v789
      %s792 = scalar_lea.vmem %s50, 1160
      %v793 = vld [vmem:[%s792] sm:$0xff]
      %s794 = scalar_lea.vmem %s45, 1288
      %795 = vst [vmem:[%s794] sm:$0xff] %v793
      %s796 = scalar_lea.vmem %s50, 1168
      %v797 = vld [vmem:[%s796] sm:$0xff]
      %s798 = scalar_lea.vmem %s45, 1296
      %799 = vst [vmem:[%s798] sm:$0xff] %v797
      %s800 = scalar_lea.vmem %s50, 1176
      %v801 = vld [vmem:[%s800] sm:$0xff]
      %s802 = scalar_lea.vmem %s45, 1304
      %803 = vst [vmem:[%s802] sm:$0xff] %v801
      %s804 = scalar_lea.vmem %s50, 1184
      %v805 = vld [vmem:[%s804] sm:$0xff]
      %s806 = scalar_lea.vmem %s45, 1312
      %807 = vst [vmem:[%s806] sm:$0xff] %v805
      %s808 = scalar_lea.vmem %s50, 1192
      %v809 = vld [vmem:[%s808] sm:$0xff]
      %s810 = scalar_lea.vmem %s45, 1320
      %811 = vst [vmem:[%s810] sm:$0xff] %v809
      %s812 = scalar_lea.vmem %s50, 1200
      %v813 = vld [vmem:[%s812] sm:$0xff]
      %s814 = scalar_lea.vmem %s45, 1328
      %815 = vst [vmem:[%s814] sm:$0xff] %v813
      %s816 = scalar_lea.vmem %s50, 1208
      %v817 = vld [vmem:[%s816] sm:$0xff]
      %s818 = scalar_lea.vmem %s45, 1336
      %819 = vst [vmem:[%s818] sm:$0xff] %v817
      %s820 = scalar_lea.vmem %s50, 1216
      %v821 = vld [vmem:[%s820] sm:$0xff]
      %s822 = scalar_lea.vmem %s45, 1344
      %823 = vst [vmem:[%s822] sm:$0xff] %v821
      %s824 = scalar_lea.vmem %s50, 1224
      %v825 = vld [vmem:[%s824] sm:$0xff]
      %s826 = scalar_lea.vmem %s45, 1352
      %827 = vst [vmem:[%s826] sm:$0xff] %v825
      %s828 = scalar_lea.vmem %s50, 1232
      %v829 = vld [vmem:[%s828] sm:$0xff]
      %s830 = scalar_lea.vmem %s45, 1360
      %831 = vst [vmem:[%s830] sm:$0xff] %v829
      %s832 = scalar_lea.vmem %s50, 1240
      %v833 = vld [vmem:[%s832] sm:$0xff]
      %s834 = scalar_lea.vmem %s45, 1368
      %835 = vst [vmem:[%s834] sm:$0xff] %v833
      %s836 = scalar_lea.vmem %s50, 1248
      %v837 = vld [vmem:[%s836] sm:$0xff]
      %s838 = scalar_lea.vmem %s45, 1376
      %839 = vst [vmem:[%s838] sm:$0xff] %v837
      %s840 = scalar_lea.vmem %s50, 1256
      %v841 = vld [vmem:[%s840] sm:$0xff]
      %s842 = scalar_lea.vmem %s45, 1384
      %843 = vst [vmem:[%s842] sm:$0xff] %v841
      %s844 = scalar_lea.vmem %s50, 1264
      %v845 = vld [vmem:[%s844] sm:$0xff]
      %s846 = scalar_lea.vmem %s45, 1392
      %847 = vst [vmem:[%s846] sm:$0xff] %v845
      %s848 = scalar_lea.vmem %s50, 1272
      %v849 = vld [vmem:[%s848] sm:$0xff]
      %s850 = scalar_lea.vmem %s45, 1400
      %851 = vst [vmem:[%s850] sm:$0xff] %v849
      %s852 = scalar_lea.vmem %s50, 1280
      %v853 = vld [vmem:[%s852] sm:$0xff]
      %s854 = scalar_lea.vmem %s45, 1408
      %855 = vst [vmem:[%s854] sm:$0xf] %v853
      %s856 = scalar_lea.vmem %s45, 1436
      %857 = vst [vmem:[%s856] sm:$0xf0] %v853
      %s858 = scalar_lea.vmem %s50, 1288
      %v859 = vld [vmem:[%s858] sm:$0xff]
      %s860 = scalar_lea.vmem %s45, 1416
      %861 = vst [vmem:[%s860] sm:$0xf] %v859
      %s862 = scalar_lea.vmem %s45, 1444
      %863 = vst [vmem:[%s862] sm:$0xf0] %v859
      %s864 = scalar_lea.vmem %s50, 1296
      %v865 = vld [vmem:[%s864] sm:$0xff]
      %s866 = scalar_lea.vmem %s45, 1424
      %867 = vst [vmem:[%s866] sm:$0xf] %v865
      %s868 = scalar_lea.vmem %s45, 1452
      %869 = vst [vmem:[%s868] sm:$0xf0] %v865
      %s870 = scalar_lea.vmem %s50, 1304
      %v871 = vld [vmem:[%s870] sm:$0xff]
      %s872 = scalar_lea.vmem %s45, 1432
      %873 = vst [vmem:[%s872] sm:$0xf] %v871
      %s874 = scalar_lea.vmem %s45, 1460
      %875 = vst [vmem:[%s874] sm:$0xf0] %v871
      %s876 = scalar_lea.vmem %s50, 1312
      %v877 = vld [vmem:[%s876] sm:$0xff]
      %s878 = scalar_lea.vmem %s45, 1444
      %879 = vst [vmem:[%s878] sm:$0xf] %v877
      %s880 = scalar_lea.vmem %s45, 1468
      %881 = vst [vmem:[%s880] sm:$0xf0] %v877
      %s882 = scalar_lea.vmem %s50, 1320
      %v883 = vld [vmem:[%s882] sm:$0xff]
      %s884 = scalar_lea.vmem %s45, 1452
      %885 = vst [vmem:[%s884] sm:$0xf] %v883
      %s886 = scalar_lea.vmem %s45, 1476
      %887 = vst [vmem:[%s886] sm:$0xf0] %v883
      %s888 = scalar_lea.vmem %s50, 1328
      %v889 = vld [vmem:[%s888] sm:$0xff]
      %s890 = scalar_lea.vmem %s45, 1460
      %891 = vst [vmem:[%s890] sm:$0xf] %v889
      %s892 = scalar_lea.vmem %s45, 1484
      %893 = vst [vmem:[%s892] sm:$0xf0] %v889
      %s894 = scalar_lea.vmem %s50, 1336
      %v895 = vld [vmem:[%s894] sm:$0xff]
      %s896 = scalar_lea.vmem %s45, 1468
      %897 = vst [vmem:[%s896] sm:$0xf] %v895
      %s898 = scalar_lea.vmem %s45, 1492
      %899 = vst [vmem:[%s898] sm:$0xf0] %v895
      %s900 = scalar_lea.vmem %s50, 1344
      %v901 = vld [vmem:[%s900] sm:$0xff]
      %s902 = scalar_lea.vmem %s45, 1476
      %903 = vst [vmem:[%s902] sm:$0xf] %v901
      %s904 = scalar_lea.vmem %s45, 1500
      %905 = vst [vmem:[%s904] sm:$0xf0] %v901
      %s906 = scalar_lea.vmem %s50, 1352
      %v907 = vld [vmem:[%s906] sm:$0xff]
      %s908 = scalar_lea.vmem %s45, 1484
      %909 = vst [vmem:[%s908] sm:$0xf] %v907
      %s910 = scalar_lea.vmem %s45, 1508
      %911 = vst [vmem:[%s910] sm:$0xf0] %v907
      %s912 = scalar_lea.vmem %s50, 1360
      %v913 = vld [vmem:[%s912] sm:$0xff]
      %s914 = scalar_lea.vmem %s45, 1492
      %915 = vst [vmem:[%s914] sm:$0xf] %v913
      %s916 = scalar_lea.vmem %s45, 1516
      %917 = vst [vmem:[%s916] sm:$0xf0] %v913
      %s918 = scalar_lea.vmem %s50, 1368
      %v919 = vld [vmem:[%s918] sm:$0xff]
      %s920 = scalar_lea.vmem %s45, 1500
      %921 = vst [vmem:[%s920] sm:$0xf] %v919
      %s922 = scalar_lea.vmem %s45, 1524
      %923 = vst [vmem:[%s922] sm:$0xf0] %v919
      %s924 = scalar_lea.vmem %s50, 1376
      %v925 = vld [vmem:[%s924] sm:$0xff]
      %s926 = scalar_lea.vmem %s45, 1508
      %927 = vst [vmem:[%s926] sm:$0xf] %v925
      %s928 = scalar_lea.vmem %s45, 1532
      %929 = vst [vmem:[%s928] sm:$0xf0] %v925
      %s930 = scalar_lea.vmem %s50, 1384
      %v931 = vld [vmem:[%s930] sm:$0xff]
      %s932 = scalar_lea.vmem %s45, 1516
      %933 = vst [vmem:[%s932] sm:$0xf] %v931
      %s934 = scalar_lea.vmem %s45, 1540
      %935 = vst [vmem:[%s934] sm:$0xf0] %v931
      %s936 = scalar_lea.vmem %s50, 1392
      %v937 = vld [vmem:[%s936] sm:$0xff]
      %s938 = scalar_lea.vmem %s45, 1524
      %939 = vst [vmem:[%s938] sm:$0xf] %v937
      %s940 = scalar_lea.vmem %s45, 1548
      %941 = vst [vmem:[%s940] sm:$0xf0] %v937
      %s942 = scalar_lea.vmem %s50, 1400
      %v943 = vld [vmem:[%s942] sm:$0xff]
      %s944 = scalar_lea.vmem %s45, 1532
      %945 = vst [vmem:[%s944] sm:$0xf] %v943
      %s946 = scalar_lea.vmem %s45, 1556
      %947 = vst [vmem:[%s946] sm:$0xf0] %v943
      %s948 = scalar_lea.vmem %s50, 1408
      %v949 = vld [vmem:[%s948] sm:$0xff]
      %s950 = scalar_lea.vmem %s45, 1540
      %951 = vst [vmem:[%s950] sm:$0xf] %v949
      %s952 = scalar_lea.vmem %s45, 1564
      %953 = vst [vmem:[%s952] sm:$0xf0] %v949
      %s954 = scalar_lea.vmem %s50, 1416
      %v955 = vld [vmem:[%s954] sm:$0xff]
      %s956 = scalar_lea.vmem %s45, 1548
      %957 = vst [vmem:[%s956] sm:$0xf] %v955
      %s958 = scalar_lea.vmem %s45, 1572
      %959 = vst [vmem:[%s958] sm:$0xf0] %v955
      %s960 = scalar_lea.vmem %s50, 1424
      %v961 = vld [vmem:[%s960] sm:$0xff]
      %s962 = scalar_lea.vmem %s45, 1556
      %963 = vst [vmem:[%s962] sm:$0xf] %v961
      %s964 = scalar_lea.vmem %s45, 1580
      %965 = vst [vmem:[%s964] sm:$0xf0] %v961
      %s966 = scalar_lea.vmem %s50, 1432
      %v967 = vld [vmem:[%s966] sm:$0xff]
      %s968 = scalar_lea.vmem %s45, 1564
      %969 = vst [vmem:[%s968] sm:$0xf] %v967
      %s970 = scalar_lea.vmem %s45, 1588
      %971 = vst [vmem:[%s970] sm:$0xf0] %v967
      %s972 = scalar_lea.vmem %s50, 1440
      %v973 = vld [vmem:[%s972] sm:$0xff]
      %s974 = scalar_lea.vmem %s45, 1600
      %975 = vst [vmem:[%s974] sm:$0xff] %v973
      %s976 = scalar_lea.vmem %s50, 1448
      %v977 = vld [vmem:[%s976] sm:$0xff]
      %s978 = scalar_lea.vmem %s45, 1608
      %979 = vst [vmem:[%s978] sm:$0xff] %v977
      %s980 = scalar_lea.vmem %s50, 1456
      %v981 = vld [vmem:[%s980] sm:$0xff]
      %s982 = scalar_lea.vmem %s45, 1616
      %983 = vst [vmem:[%s982] sm:$0xff] %v981
      %s984 = scalar_lea.vmem %s50, 1464
      %v985 = vld [vmem:[%s984] sm:$0xff]
      %s986 = scalar_lea.vmem %s45, 1624
      %987 = vst [vmem:[%s986] sm:$0xff] %v985
      %s988 = scalar_lea.vmem %s50, 1472
      %v989 = vld [vmem:[%s988] sm:$0xff]
      %s990 = scalar_lea.vmem %s45, 1632
      %991 = vst [vmem:[%s990] sm:$0xff] %v989
      %s992 = scalar_lea.vmem %s50, 1480
      %v993 = vld [vmem:[%s992] sm:$0xff]
      %s994 = scalar_lea.vmem %s45, 1640
      %995 = vst [vmem:[%s994] sm:$0xff] %v993
      %s996 = scalar_lea.vmem %s50, 1488
      %v997 = vld [vmem:[%s996] sm:$0xff]
      %s998 = scalar_lea.vmem %s45, 1648
      %999 = vst [vmem:[%s998] sm:$0xff] %v997
      %s1000 = scalar_lea.vmem %s50, 1496
      %v1001 = vld [vmem:[%s1000] sm:$0xff]
      %s1002 = scalar_lea.vmem %s45, 1656
      %1003 = vst [vmem:[%s1002] sm:$0xff] %v1001
      %s1004 = scalar_lea.vmem %s50, 1504
      %v1005 = vld [vmem:[%s1004] sm:$0xff]
      %s1006 = scalar_lea.vmem %s45, 1664
      %1007 = vst [vmem:[%s1006] sm:$0xff] %v1005
      %s1008 = scalar_lea.vmem %s50, 1512
      %v1009 = vld [vmem:[%s1008] sm:$0xff]
      %s1010 = scalar_lea.vmem %s45, 1672
      %1011 = vst [vmem:[%s1010] sm:$0xff] %v1009
      %s1012 = scalar_lea.vmem %s50, 1520
      %v1013 = vld [vmem:[%s1012] sm:$0xff]
      %s1014 = scalar_lea.vmem %s45, 1680
      %1015 = vst [vmem:[%s1014] sm:$0xff] %v1013
      %s1016 = scalar_lea.vmem %s50, 1528
      %v1017 = vld [vmem:[%s1016] sm:$0xff]
      %s1018 = scalar_lea.vmem %s45, 1688
      %1019 = vst [vmem:[%s1018] sm:$0xff] %v1017
      %s1020 = scalar_lea.vmem %s50, 1536
      %v1021 = vld [vmem:[%s1020] sm:$0xff]
      %s1022 = scalar_lea.vmem %s45, 1696
      %1023 = vst [vmem:[%s1022] sm:$0xff] %v1021
      %s1024 = scalar_lea.vmem %s50, 1544
      %v1025 = vld [vmem:[%s1024] sm:$0xff]
      %s1026 = scalar_lea.vmem %s45, 1704
      %1027 = vst [vmem:[%s1026] sm:$0xff] %v1025
      %s1028 = scalar_lea.vmem %s50, 1552
      %v1029 = vld [vmem:[%s1028] sm:$0xff]
      %s1030 = scalar_lea.vmem %s45, 1712
      %1031 = vst [vmem:[%s1030] sm:$0xff] %v1029
      %s1032 = scalar_lea.vmem %s50, 1560
      %v1033 = vld [vmem:[%s1032] sm:$0xff]
      %s1034 = scalar_lea.vmem %s45, 1720
      %1035 = vst [vmem:[%s1034] sm:$0xff] %v1033
      %s1036 = scalar_lea.vmem %s50, 1568
      %v1037 = vld [vmem:[%s1036] sm:$0xff]
      %s1038 = scalar_lea.vmem %s45, 1728
      %1039 = vst [vmem:[%s1038] sm:$0xf] %v1037
      %s1040 = scalar_lea.vmem %s45, 1756
      %1041 = vst [vmem:[%s1040] sm:$0xf0] %v1037
      %s1042 = scalar_lea.vmem %s50, 1576
      %v1043 = vld [vmem:[%s1042] sm:$0xff]
      %s1044 = scalar_lea.vmem %s45, 1736
      %1045 = vst [vmem:[%s1044] sm:$0xf] %v1043
      %s1046 = scalar_lea.vmem %s45, 1764
      %1047 = vst [vmem:[%s1046] sm:$0xf0] %v1043
      %s1048 = scalar_lea.vmem %s50, 1584
      %v1049 = vld [vmem:[%s1048] sm:$0xff]
      %s1050 = scalar_lea.vmem %s45, 1744
      %1051 = vst [vmem:[%s1050] sm:$0xf] %v1049
      %s1052 = scalar_lea.vmem %s45, 1772
      %1053 = vst [vmem:[%s1052] sm:$0xf0] %v1049
      %s1054 = scalar_lea.vmem %s50, 1592
      %v1055 = vld [vmem:[%s1054] sm:$0xff]
      %s1056 = scalar_lea.vmem %s45, 1752
      %1057 = vst [vmem:[%s1056] sm:$0xf] %v1055
      %s1058 = scalar_lea.vmem %s45, 1780
      %1059 = vst [vmem:[%s1058] sm:$0xf0] %v1055
      %s1060 = scalar_lea.vmem %s50, 1600
      %v1061 = vld [vmem:[%s1060] sm:$0xff]
      %s1062 = scalar_lea.vmem %s45, 1764
      %1063 = vst [vmem:[%s1062] sm:$0xf] %v1061
      %s1064 = scalar_lea.vmem %s45, 1788
      %1065 = vst [vmem:[%s1064] sm:$0xf0] %v1061
      %s1066 = scalar_lea.vmem %s50, 1608
      %v1067 = vld [vmem:[%s1066] sm:$0xff]
      %s1068 = scalar_lea.vmem %s45, 1772
      %1069 = vst [vmem:[%s1068] sm:$0xf] %v1067
      %s1070 = scalar_lea.vmem %s45, 1796
      %1071 = vst [vmem:[%s1070] sm:$0xf0] %v1067
      %s1072 = scalar_lea.vmem %s50, 1616
      %v1073 = vld [vmem:[%s1072] sm:$0xff]
      %s1074 = scalar_lea.vmem %s45, 1780
      %1075 = vst [vmem:[%s1074] sm:$0xf] %v1073
      %s1076 = scalar_lea.vmem %s45, 1804
      %1077 = vst [vmem:[%s1076] sm:$0xf0] %v1073
      %s1078 = scalar_lea.vmem %s50, 1624
      %v1079 = vld [vmem:[%s1078] sm:$0xff]
      %s1080 = scalar_lea.vmem %s45, 1788
      %1081 = vst [vmem:[%s1080] sm:$0xf] %v1079
      %s1082 = scalar_lea.vmem %s45, 1812
      %1083 = vst [vmem:[%s1082] sm:$0xf0] %v1079
      %s1084 = scalar_lea.vmem %s50, 1632
      %v1085 = vld [vmem:[%s1084] sm:$0xff]
      %s1086 = scalar_lea.vmem %s45, 1796
      %1087 = vst [vmem:[%s1086] sm:$0xf] %v1085
      %s1088 = scalar_lea.vmem %s45, 1820
      %1089 = vst [vmem:[%s1088] sm:$0xf0] %v1085
      %s1090 = scalar_lea.vmem %s50, 1640
      %v1091 = vld [vmem:[%s1090] sm:$0xff]
      %s1092 = scalar_lea.vmem %s45, 1804
      %1093 = vst [vmem:[%s1092] sm:$0xf] %v1091
      %s1094 = scalar_lea.vmem %s45, 1828
      %1095 = vst [vmem:[%s1094] sm:$0xf0] %v1091
      %s1096 = scalar_lea.vmem %s50, 1648
      %v1097 = vld [vmem:[%s1096] sm:$0xff]
      %s1098 = scalar_lea.vmem %s45, 1812
      %1099 = vst [vmem:[%s1098] sm:$0xf] %v1097
      %s1100 = scalar_lea.vmem %s45, 1836
      %1101 = vst [vmem:[%s1100] sm:$0xf0] %v1097
      %s1102 = scalar_lea.vmem %s50, 1656
      %v1103 = vld [vmem:[%s1102] sm:$0xff]
      %s1104 = scalar_lea.vmem %s45, 1820
      %1105 = vst [vmem:[%s1104] sm:$0xf] %v1103
      %s1106 = scalar_lea.vmem %s45, 1844
      %1107 = vst [vmem:[%s1106] sm:$0xf0] %v1103
      %s1108 = scalar_lea.vmem %s50, 1664
      %v1109 = vld [vmem:[%s1108] sm:$0xff]
      %s1110 = scalar_lea.vmem %s45, 1828
      %1111 = vst [vmem:[%s1110] sm:$0xf] %v1109
      %s1112 = scalar_lea.vmem %s45, 1852
      %1113 = vst [vmem:[%s1112] sm:$0xf0] %v1109
      %s1114 = scalar_lea.vmem %s50, 1672
      %v1115 = vld [vmem:[%s1114] sm:$0xff]
      %s1116 = scalar_lea.vmem %s45, 1836
      %1117 = vst [vmem:[%s1116] sm:$0xf] %v1115
      %s1118 = scalar_lea.vmem %s45, 1860
      %1119 = vst [vmem:[%s1118] sm:$0xf0] %v1115
      %s1120 = scalar_lea.vmem %s50, 1680
      %v1121 = vld [vmem:[%s1120] sm:$0xff]
      %s1122 = scalar_lea.vmem %s45, 1844
      %1123 = vst [vmem:[%s1122] sm:$0xf] %v1121
      %s1124 = scalar_lea.vmem %s45, 1868
      %1125 = vst [vmem:[%s1124] sm:$0xf0] %v1121
      %s1126 = scalar_lea.vmem %s50, 1688
      %v1127 = vld [vmem:[%s1126] sm:$0xff]
      %s1128 = scalar_lea.vmem %s45, 1852
      %1129 = vst [vmem:[%s1128] sm:$0xf] %v1127
      %s1130 = scalar_lea.vmem %s45, 1876
      %1131 = vst [vmem:[%s1130] sm:$0xf0] %v1127
      %s1132 = scalar_lea.vmem %s50, 1696
      %v1133 = vld [vmem:[%s1132] sm:$0xff]
      %s1134 = scalar_lea.vmem %s45, 1860
      %1135 = vst [vmem:[%s1134] sm:$0xf] %v1133
      %s1136 = scalar_lea.vmem %s45, 1884
      %1137 = vst [vmem:[%s1136] sm:$0xf0] %v1133
      %s1138 = scalar_lea.vmem %s50, 1704
      %v1139 = vld [vmem:[%s1138] sm:$0xff]
      %s1140 = scalar_lea.vmem %s45, 1868
      %1141 = vst [vmem:[%s1140] sm:$0xf] %v1139
      %s1142 = scalar_lea.vmem %s45, 1892
      %1143 = vst [vmem:[%s1142] sm:$0xf0] %v1139
      %s1144 = scalar_lea.vmem %s50, 1712
      %v1145 = vld [vmem:[%s1144] sm:$0xff]
      %s1146 = scalar_lea.vmem %s45, 1876
      %1147 = vst [vmem:[%s1146] sm:$0xf] %v1145
      %s1148 = scalar_lea.vmem %s45, 1900
      %1149 = vst [vmem:[%s1148] sm:$0xf0] %v1145
      %s1150 = scalar_lea.vmem %s50, 1720
      %v1151 = vld [vmem:[%s1150] sm:$0xff]
      %s1152 = scalar_lea.vmem %s45, 1884
      %1153 = vst [vmem:[%s1152] sm:$0xf] %v1151
      %s1154 = scalar_lea.vmem %s45, 1908
      %1155 = vst [vmem:[%s1154] sm:$0xf0] %v1151
      %s1156 = scalar_lea.vmem %s50, 1728
      %v1157 = vld [vmem:[%s1156] sm:$0xff]
      %s1158 = scalar_lea.vmem %s45, 1920
      %1159 = vst [vmem:[%s1158] sm:$0xff] %v1157
      %s1160 = scalar_lea.vmem %s50, 1736
      %v1161 = vld [vmem:[%s1160] sm:$0xff]
      %s1162 = scalar_lea.vmem %s45, 1928
      %1163 = vst [vmem:[%s1162] sm:$0xff] %v1161
      %s1164 = scalar_lea.vmem %s50, 1744
      %v1165 = vld [vmem:[%s1164] sm:$0xff]
      %s1166 = scalar_lea.vmem %s45, 1936
      %1167 = vst [vmem:[%s1166] sm:$0xff] %v1165
      %s1168 = scalar_lea.vmem %s50, 1752
      %v1169 = vld [vmem:[%s1168] sm:$0xff]
      %s1170 = scalar_lea.vmem %s45, 1944
      %1171 = vst [vmem:[%s1170] sm:$0xff] %v1169
      %s1172 = scalar_lea.vmem %s50, 1760
      %v1173 = vld [vmem:[%s1172] sm:$0xff]
      %s1174 = scalar_lea.vmem %s45, 1952
      %1175 = vst [vmem:[%s1174] sm:$0xff] %v1173
      %s1176 = scalar_lea.vmem %s50, 1768
      %v1177 = vld [vmem:[%s1176] sm:$0xff]
      %s1178 = scalar_lea.vmem %s45, 1960
      %1179 = vst [vmem:[%s1178] sm:$0xff] %v1177
      %s1180 = scalar_lea.vmem %s50, 1776
      %v1181 = vld [vmem:[%s1180] sm:$0xff]
      %s1182 = scalar_lea.vmem %s45, 1968
      %1183 = vst [vmem:[%s1182] sm:$0xff] %v1181
      %s1184 = scalar_lea.vmem %s50, 1784
      %v1185 = vld [vmem:[%s1184] sm:$0xff]
      %s1186 = scalar_lea.vmem %s45, 1976
      %1187 = vst [vmem:[%s1186] sm:$0xff] %v1185
      %s1188 = scalar_lea.vmem %s50, 1792
      %v1189 = vld [vmem:[%s1188] sm:$0xff]
      %s1190 = scalar_lea.vmem %s45, 1984
      %1191 = vst [vmem:[%s1190] sm:$0xff] %v1189
      %s1192 = scalar_lea.vmem %s50, 1800
      %v1193 = vld [vmem:[%s1192] sm:$0xff]
      %s1194 = scalar_lea.vmem %s45, 1992
      %1195 = vst [vmem:[%s1194] sm:$0xff] %v1193
      %s1196 = scalar_lea.vmem %s50, 1808
      %v1197 = vld [vmem:[%s1196] sm:$0xff]
      %s1198 = scalar_lea.vmem %s45, 2000
      %1199 = vst [vmem:[%s1198] sm:$0xff] %v1197
      %s1200 = scalar_lea.vmem %s50, 1816
      %v1201 = vld [vmem:[%s1200] sm:$0xff]
      %s1202 = scalar_lea.vmem %s45, 2008
      %1203 = vst [vmem:[%s1202] sm:$0xff] %v1201
      %s1204 = scalar_lea.vmem %s50, 1824
      %v1205 = vld [vmem:[%s1204] sm:$0xff]
      %s1206 = scalar_lea.vmem %s45, 2016
      %1207 = vst [vmem:[%s1206] sm:$0xff] %v1205
      %s1208 = scalar_lea.vmem %s50, 1832
      %v1209 = vld [vmem:[%s1208] sm:$0xff]
      %s1210 = scalar_lea.vmem %s45, 2024
      %1211 = vst [vmem:[%s1210] sm:$0xff] %v1209
      %s1212 = scalar_lea.vmem %s50, 1840
      %v1213 = vld [vmem:[%s1212] sm:$0xff]
      %s1214 = scalar_lea.vmem %s45, 2032
      %1215 = vst [vmem:[%s1214] sm:$0xff] %v1213
      %s1216 = scalar_lea.vmem %s50, 1848
      %v1217 = vld [vmem:[%s1216] sm:$0xff]
      %s1218 = scalar_lea.vmem %s45, 2040
      %1219 = vst [vmem:[%s1218] sm:$0xff] %v1217
      %s1220 = scalar_lea.vmem %s50, 1856
      %v1221 = vld [vmem:[%s1220] sm:$0xff]
      %s1222 = scalar_lea.vmem %s45, 2048
      %1223 = vst [vmem:[%s1222] sm:$0xf] %v1221
      %s1224 = scalar_lea.vmem %s45, 2076
      %1225 = vst [vmem:[%s1224] sm:$0xf0] %v1221
      %s1226 = scalar_lea.vmem %s50, 1864
      %v1227 = vld [vmem:[%s1226] sm:$0xff]
      %s1228 = scalar_lea.vmem %s45, 2056
      %1229 = vst [vmem:[%s1228] sm:$0xf] %v1227
      %s1230 = scalar_lea.vmem %s45, 2084
      %1231 = vst [vmem:[%s1230] sm:$0xf0] %v1227
      %s1232 = scalar_lea.vmem %s50, 1872
      %v1233 = vld [vmem:[%s1232] sm:$0xff]
      %s1234 = scalar_lea.vmem %s45, 2064
      %1235 = vst [vmem:[%s1234] sm:$0xf] %v1233
      %s1236 = scalar_lea.vmem %s45, 2092
      %1237 = vst [vmem:[%s1236] sm:$0xf0] %v1233
      %s1238 = scalar_lea.vmem %s50, 1880
      %v1239 = vld [vmem:[%s1238] sm:$0xff]
      %s1240 = scalar_lea.vmem %s45, 2072
      %1241 = vst [vmem:[%s1240] sm:$0xf] %v1239
      %s1242 = scalar_lea.vmem %s45, 2100
      %1243 = vst [vmem:[%s1242] sm:$0xf0] %v1239
      %s1244 = scalar_lea.vmem %s50, 1888
      %v1245 = vld [vmem:[%s1244] sm:$0xff]
      %s1246 = scalar_lea.vmem %s45, 2084
      %1247 = vst [vmem:[%s1246] sm:$0xf] %v1245
      %s1248 = scalar_lea.vmem %s45, 2108
      %1249 = vst [vmem:[%s1248] sm:$0xf0] %v1245
      %s1250 = scalar_lea.vmem %s50, 1896
      %v1251 = vld [vmem:[%s1250] sm:$0xff]
      %s1252 = scalar_lea.vmem %s45, 2092
      %1253 = vst [vmem:[%s1252] sm:$0xf] %v1251
      %s1254 = scalar_lea.vmem %s45, 2116
      %1255 = vst [vmem:[%s1254] sm:$0xf0] %v1251
      %s1256 = scalar_lea.vmem %s50, 1904
      %v1257 = vld [vmem:[%s1256] sm:$0xff]
      %s1258 = scalar_lea.vmem %s45, 2100
      %1259 = vst [vmem:[%s1258] sm:$0xf] %v1257
      %s1260 = scalar_lea.vmem %s45, 2124
      %1261 = vst [vmem:[%s1260] sm:$0xf0] %v1257
      %s1262 = scalar_lea.vmem %s50, 1912
      %v1263 = vld [vmem:[%s1262] sm:$0xff]
      %s1264 = scalar_lea.vmem %s45, 2108
      %1265 = vst [vmem:[%s1264] sm:$0xf] %v1263
      %s1266 = scalar_lea.vmem %s45, 2132
      %1267 = vst [vmem:[%s1266] sm:$0xf0] %v1263
      %s1268 = scalar_lea.vmem %s50, 1920
      %v1269 = vld [vmem:[%s1268] sm:$0xff]
      %s1270 = scalar_lea.vmem %s45, 2116
      %1271 = vst [vmem:[%s1270] sm:$0xf] %v1269
      %s1272 = scalar_lea.vmem %s45, 2140
      %1273 = vst [vmem:[%s1272] sm:$0xf0] %v1269
      %s1274 = scalar_lea.vmem %s50, 1928
      %v1275 = vld [vmem:[%s1274] sm:$0xff]
      %s1276 = scalar_lea.vmem %s45, 2124
      %1277 = vst [vmem:[%s1276] sm:$0xf] %v1275
      %s1278 = scalar_lea.vmem %s45, 2148
      %1279 = vst [vmem:[%s1278] sm:$0xf0] %v1275
      %s1280 = scalar_lea.vmem %s50, 1936
      %v1281 = vld [vmem:[%s1280] sm:$0xff]
      %s1282 = scalar_lea.vmem %s45, 2132
      %1283 = vst [vmem:[%s1282] sm:$0xf] %v1281
      %s1284 = scalar_lea.vmem %s45, 2156
      %1285 = vst [vmem:[%s1284] sm:$0xf0] %v1281
      %s1286 = scalar_lea.vmem %s50, 1944
      %v1287 = vld [vmem:[%s1286] sm:$0xff]
      %s1288 = scalar_lea.vmem %s45, 2140
      %1289 = vst [vmem:[%s1288] sm:$0xf] %v1287
      %s1290 = scalar_lea.vmem %s45, 2164
      %1291 = vst [vmem:[%s1290] sm:$0xf0] %v1287
      %s1292 = scalar_lea.vmem %s50, 1952
      %v1293 = vld [vmem:[%s1292] sm:$0xff]
      %s1294 = scalar_lea.vmem %s45, 2148
      %1295 = vst [vmem:[%s1294] sm:$0xf] %v1293
      %s1296 = scalar_lea.vmem %s45, 2172
      %1297 = vst [vmem:[%s1296] sm:$0xf0] %v1293
      %s1298 = scalar_lea.vmem %s50, 1960
      %v1299 = vld [vmem:[%s1298] sm:$0xff]
      %s1300 = scalar_lea.vmem %s45, 2156
      %1301 = vst [vmem:[%s1300] sm:$0xf] %v1299
      %s1302 = scalar_lea.vmem %s45, 2180
      %1303 = vst [vmem:[%s1302] sm:$0xf0] %v1299
      %s1304 = scalar_lea.vmem %s50, 1968
      %v1305 = vld [vmem:[%s1304] sm:$0xff]
      %s1306 = scalar_lea.vmem %s45, 2164
      %1307 = vst [vmem:[%s1306] sm:$0xf] %v1305
      %s1308 = scalar_lea.vmem %s45, 2188
      %1309 = vst [vmem:[%s1308] sm:$0xf0] %v1305
      %s1310 = scalar_lea.vmem %s50, 1976
      %v1311 = vld [vmem:[%s1310] sm:$0xff]
      %s1312 = scalar_lea.vmem %s45, 2172
      %1313 = vst [vmem:[%s1312] sm:$0xf] %v1311
      %s1314 = scalar_lea.vmem %s45, 2196
      %1315 = vst [vmem:[%s1314] sm:$0xf0] %v1311
      %s1316 = scalar_lea.vmem %s50, 1984
      %v1317 = vld [vmem:[%s1316] sm:$0xff]
      %s1318 = scalar_lea.vmem %s45, 2180
      %1319 = vst [vmem:[%s1318] sm:$0xf] %v1317
      %s1320 = scalar_lea.vmem %s45, 2204
      %1321 = vst [vmem:[%s1320] sm:$0xf0] %v1317
      %s1322 = scalar_lea.vmem %s50, 1992
      %v1323 = vld [vmem:[%s1322] sm:$0xff]
      %s1324 = scalar_lea.vmem %s45, 2188
      %1325 = vst [vmem:[%s1324] sm:$0xf] %v1323
      %s1326 = scalar_lea.vmem %s45, 2212
      %1327 = vst [vmem:[%s1326] sm:$0xf0] %v1323
      %s1328 = scalar_lea.vmem %s50, 2000
      %v1329 = vld [vmem:[%s1328] sm:$0xff]
      %s1330 = scalar_lea.vmem %s45, 2196
      %1331 = vst [vmem:[%s1330] sm:$0xf] %v1329
      %s1332 = scalar_lea.vmem %s45, 2220
      %1333 = vst [vmem:[%s1332] sm:$0xf0] %v1329
      %s1334 = scalar_lea.vmem %s50, 2008
      %v1335 = vld [vmem:[%s1334] sm:$0xff]
      %s1336 = scalar_lea.vmem %s45, 2204
      %1337 = vst [vmem:[%s1336] sm:$0xf] %v1335
      %s1338 = scalar_lea.vmem %s45, 2228
      %1339 = vst [vmem:[%s1338] sm:$0xf0] %v1335
      %s1340 = scalar_lea.vmem %s50, 2016
      %v1341 = vld [vmem:[%s1340] sm:$0xff]
      %s1342 = scalar_lea.vmem %s45, 2240
      %1343 = vst [vmem:[%s1342] sm:$0xff] %v1341
      %s1344 = scalar_lea.vmem %s50, 2024
      %v1345 = vld [vmem:[%s1344] sm:$0xff]
      %s1346 = scalar_lea.vmem %s45, 2248
      %1347 = vst [vmem:[%s1346] sm:$0xff] %v1345
      %s1348 = scalar_lea.vmem %s50, 2032
      %v1349 = vld [vmem:[%s1348] sm:$0xff]
      %s1350 = scalar_lea.vmem %s45, 2256
      %1351 = vst [vmem:[%s1350] sm:$0xff] %v1349
      %s1352 = scalar_lea.vmem %s50, 2040
      %v1353 = vld [vmem:[%s1352] sm:$0xff]
      %s1354 = scalar_lea.vmem %s45, 2264
      %1355 = vst [vmem:[%s1354] sm:$0xff] %v1353
      %s1356 = scalar_lea.vmem %s50, 2048
      %v1357 = vld [vmem:[%s1356] sm:$0xff]
      %s1358 = scalar_lea.vmem %s45, 2272
      %1359 = vst [vmem:[%s1358] sm:$0xff] %v1357
      %s1360 = scalar_lea.vmem %s50, 2056
      %v1361 = vld [vmem:[%s1360] sm:$0xff]
      %s1362 = scalar_lea.vmem %s45, 2280
      %1363 = vst [vmem:[%s1362] sm:$0xff] %v1361
      %s1364 = scalar_lea.vmem %s50, 2064
      %v1365 = vld [vmem:[%s1364] sm:$0xff]
      %s1366 = scalar_lea.vmem %s45, 2288
      %1367 = vst [vmem:[%s1366] sm:$0xff] %v1365
      %s1368 = scalar_lea.vmem %s50, 2072
      %v1369 = vld [vmem:[%s1368] sm:$0xff]
      %s1370 = scalar_lea.vmem %s45, 2296
      %1371 = vst [vmem:[%s1370] sm:$0xff] %v1369
      %s1372 = scalar_lea.vmem %s50, 2080
      %v1373 = vld [vmem:[%s1372] sm:$0xff]
      %s1374 = scalar_lea.vmem %s45, 2304
      %1375 = vst [vmem:[%s1374] sm:$0xff] %v1373
      %s1376 = scalar_lea.vmem %s50, 2088
      %v1377 = vld [vmem:[%s1376] sm:$0xff]
      %s1378 = scalar_lea.vmem %s45, 2312
      %1379 = vst [vmem:[%s1378] sm:$0xff] %v1377
      %s1380 = scalar_lea.vmem %s50, 2096
      %v1381 = vld [vmem:[%s1380] sm:$0xff]
      %s1382 = scalar_lea.vmem %s45, 2320
      %1383 = vst [vmem:[%s1382] sm:$0xff] %v1381
      %s1384 = scalar_lea.vmem %s50, 2104
      %v1385 = vld [vmem:[%s1384] sm:$0xff]
      %s1386 = scalar_lea.vmem %s45, 2328
      %1387 = vst [vmem:[%s1386] sm:$0xff] %v1385
      %s1388 = scalar_lea.vmem %s50, 2112
      %v1389 = vld [vmem:[%s1388] sm:$0xff]
      %s1390 = scalar_lea.vmem %s45, 2336
      %1391 = vst [vmem:[%s1390] sm:$0xff] %v1389
      %s1392 = scalar_lea.vmem %s50, 2120
      %v1393 = vld [vmem:[%s1392] sm:$0xff]
      %s1394 = scalar_lea.vmem %s45, 2344
      %1395 = vst [vmem:[%s1394] sm:$0xff] %v1393
      %s1396 = scalar_lea.vmem %s50, 2128
      %v1397 = vld [vmem:[%s1396] sm:$0xff]
      %s1398 = scalar_lea.vmem %s45, 2352
      %1399 = vst [vmem:[%s1398] sm:$0xff] %v1397
      %s1400 = scalar_lea.vmem %s50, 2136
      %v1401 = vld [vmem:[%s1400] sm:$0xff]
      %s1402 = scalar_lea.vmem %s45, 2360
      %1403 = vst [vmem:[%s1402] sm:$0xff] %v1401
      %s1404 = scalar_lea.vmem %s50, 2144
      %v1405 = vld [vmem:[%s1404] sm:$0xff]
      %s1406 = scalar_lea.vmem %s45, 2368
      %1407 = vst [vmem:[%s1406] sm:$0xf] %v1405
      %s1408 = scalar_lea.vmem %s45, 2396
      %1409 = vst [vmem:[%s1408] sm:$0xf0] %v1405
      %s1410 = scalar_lea.vmem %s50, 2152
      %v1411 = vld [vmem:[%s1410] sm:$0xff]
      %s1412 = scalar_lea.vmem %s45, 2376
      %1413 = vst [vmem:[%s1412] sm:$0xf] %v1411
      %s1414 = scalar_lea.vmem %s45, 2404
      %1415 = vst [vmem:[%s1414] sm:$0xf0] %v1411
      %s1416 = scalar_lea.vmem %s50, 2160
      %v1417 = vld [vmem:[%s1416] sm:$0xff]
      %s1418 = scalar_lea.vmem %s45, 2384
      %1419 = vst [vmem:[%s1418] sm:$0xf] %v1417
      %s1420 = scalar_lea.vmem %s45, 2412
      %1421 = vst [vmem:[%s1420] sm:$0xf0] %v1417
      %s1422 = scalar_lea.vmem %s50, 2168
      %v1423 = vld [vmem:[%s1422] sm:$0xff]
      %s1424 = scalar_lea.vmem %s45, 2392
      %1425 = vst [vmem:[%s1424] sm:$0xf] %v1423
      %s1426 = scalar_lea.vmem %s45, 2420
      %1427 = vst [vmem:[%s1426] sm:$0xf0] %v1423
      %s1428 = scalar_lea.vmem %s50, 2176
      %v1429 = vld [vmem:[%s1428] sm:$0xff]
      %s1430 = scalar_lea.vmem %s45, 2404
      %1431 = vst [vmem:[%s1430] sm:$0xf] %v1429
      %s1432 = scalar_lea.vmem %s45, 2428
      %1433 = vst [vmem:[%s1432] sm:$0xf0] %v1429
      %s1434 = scalar_lea.vmem %s50, 2184
      %v1435 = vld [vmem:[%s1434] sm:$0xff]
      %s1436 = scalar_lea.vmem %s45, 2412
      %1437 = vst [vmem:[%s1436] sm:$0xf] %v1435
      %s1438 = scalar_lea.vmem %s45, 2436
      %1439 = vst [vmem:[%s1438] sm:$0xf0] %v1435
      %s1440 = scalar_lea.vmem %s50, 2192
      %v1441 = vld [vmem:[%s1440] sm:$0xff]
      %s1442 = scalar_lea.vmem %s45, 2420
      %1443 = vst [vmem:[%s1442] sm:$0xf] %v1441
      %s1444 = scalar_lea.vmem %s45, 2444
      %1445 = vst [vmem:[%s1444] sm:$0xf0] %v1441
      %s1446 = scalar_lea.vmem %s50, 2200
      %v1447 = vld [vmem:[%s1446] sm:$0xff]
      %s1448 = scalar_lea.vmem %s45, 2428
      %1449 = vst [vmem:[%s1448] sm:$0xf] %v1447
      %s1450 = scalar_lea.vmem %s45, 2452
      %1451 = vst [vmem:[%s1450] sm:$0xf0] %v1447
      %s1452 = scalar_lea.vmem %s50, 2208
      %v1453 = vld [vmem:[%s1452] sm:$0xff]
      %s1454 = scalar_lea.vmem %s45, 2436
      %1455 = vst [vmem:[%s1454] sm:$0xf] %v1453
      %s1456 = scalar_lea.vmem %s45, 2460
      %1457 = vst [vmem:[%s1456] sm:$0xf0] %v1453
      %s1458 = scalar_lea.vmem %s50, 2216
      %v1459 = vld [vmem:[%s1458] sm:$0xff]
      %s1460 = scalar_lea.vmem %s45, 2444
      %1461 = vst [vmem:[%s1460] sm:$0xf] %v1459
      %s1462 = scalar_lea.vmem %s45, 2468
      %1463 = vst [vmem:[%s1462] sm:$0xf0] %v1459
      %s1464 = scalar_lea.vmem %s50, 2224
      %v1465 = vld [vmem:[%s1464] sm:$0xff]
      %s1466 = scalar_lea.vmem %s45, 2452
      %1467 = vst [vmem:[%s1466] sm:$0xf] %v1465
      %s1468 = scalar_lea.vmem %s45, 2476
      %1469 = vst [vmem:[%s1468] sm:$0xf0] %v1465
      %s1470 = scalar_lea.vmem %s50, 2232
      %v1471 = vld [vmem:[%s1470] sm:$0xff]
      %s1472 = scalar_lea.vmem %s45, 2460
      %1473 = vst [vmem:[%s1472] sm:$0xf] %v1471
      %s1474 = scalar_lea.vmem %s45, 2484
      %1475 = vst [vmem:[%s1474] sm:$0xf0] %v1471
      %s1476 = scalar_lea.vmem %s50, 2240
      %v1477 = vld [vmem:[%s1476] sm:$0xff]
      %s1478 = scalar_lea.vmem %s45, 2468
      %1479 = vst [vmem:[%s1478] sm:$0xf] %v1477
      %s1480 = scalar_lea.vmem %s45, 2492
      %1481 = vst [vmem:[%s1480] sm:$0xf0] %v1477
      %s1482 = scalar_lea.vmem %s50, 2248
      %v1483 = vld [vmem:[%s1482] sm:$0xff]
      %s1484 = scalar_lea.vmem %s45, 2476
      %1485 = vst [vmem:[%s1484] sm:$0xf] %v1483
      %s1486 = scalar_lea.vmem %s45, 2500
      %1487 = vst [vmem:[%s1486] sm:$0xf0] %v1483
      %s1488 = scalar_lea.vmem %s50, 2256
      %v1489 = vld [vmem:[%s1488] sm:$0xff]
      %s1490 = scalar_lea.vmem %s45, 2484
      %1491 = vst [vmem:[%s1490] sm:$0xf] %v1489
      %s1492 = scalar_lea.vmem %s45, 2508
      %1493 = vst [vmem:[%s1492] sm:$0xf0] %v1489
      %s1494 = scalar_lea.vmem %s50, 2264
      %v1495 = vld [vmem:[%s1494] sm:$0xff]
      %s1496 = scalar_lea.vmem %s45, 2492
      %1497 = vst [vmem:[%s1496] sm:$0xf] %v1495
      %s1498 = scalar_lea.vmem %s45, 2516
      %1499 = vst [vmem:[%s1498] sm:$0xf0] %v1495
      %s1500 = scalar_lea.vmem %s50, 2272
      %v1501 = vld [vmem:[%s1500] sm:$0xff]
      %s1502 = scalar_lea.vmem %s45, 2500
      %1503 = vst [vmem:[%s1502] sm:$0xf] %v1501
      %s1504 = scalar_lea.vmem %s45, 2524
      %1505 = vst [vmem:[%s1504] sm:$0xf0] %v1501
      %s1506 = scalar_lea.vmem %s50, 2280
      %v1507 = vld [vmem:[%s1506] sm:$0xff]
      %s1508 = scalar_lea.vmem %s45, 2508
      %1509 = vst [vmem:[%s1508] sm:$0xf] %v1507
      %s1510 = scalar_lea.vmem %s45, 2532
      %1511 = vst [vmem:[%s1510] sm:$0xf0] %v1507
      %s1512 = scalar_lea.vmem %s50, 2288
      %v1513 = vld [vmem:[%s1512] sm:$0xff]
      %s1514 = scalar_lea.vmem %s45, 2516
      %1515 = vst [vmem:[%s1514] sm:$0xf] %v1513
      %s1516 = scalar_lea.vmem %s45, 2540
      %1517 = vst [vmem:[%s1516] sm:$0xf0] %v1513
      %s1518 = scalar_lea.vmem %s50, 2296
      %v1519 = vld [vmem:[%s1518] sm:$0xff]
      %s1520 = scalar_lea.vmem %s45, 2524
      %1521 = vst [vmem:[%s1520] sm:$0xf] %v1519
      %s1522 = scalar_lea.vmem %s45, 2548
      %1523 = vst [vmem:[%s1522] sm:$0xf0] %v1519
      %s1524 = scalar_lea.vmem %s50, 2304
      %v1525 = vld [vmem:[%s1524] sm:$0xff]
      %s1526 = scalar_lea.vmem %s45, 2560
      %1527 = vst [vmem:[%s1526] sm:$0xff] %v1525
      %s1528 = scalar_lea.vmem %s50, 2312
      %v1529 = vld [vmem:[%s1528] sm:$0xff]
      %s1530 = scalar_lea.vmem %s45, 2568
      %1531 = vst [vmem:[%s1530] sm:$0xff] %v1529
      %s1532 = scalar_lea.vmem %s50, 2320
      %v1533 = vld [vmem:[%s1532] sm:$0xff]
      %s1534 = scalar_lea.vmem %s45, 2576
      %1535 = vst [vmem:[%s1534] sm:$0xff] %v1533
      %s1536 = scalar_lea.vmem %s50, 2328
      %v1537 = vld [vmem:[%s1536] sm:$0xff]
      %s1538 = scalar_lea.vmem %s45, 2584
      %1539 = vst [vmem:[%s1538] sm:$0xff] %v1537
      %s1540 = scalar_lea.vmem %s50, 2336
      %v1541 = vld [vmem:[%s1540] sm:$0xff]
      %s1542 = scalar_lea.vmem %s45, 2592
      %1543 = vst [vmem:[%s1542] sm:$0xff] %v1541
      %s1544 = scalar_lea.vmem %s50, 2344
      %v1545 = vld [vmem:[%s1544] sm:$0xff]
      %s1546 = scalar_lea.vmem %s45, 2600
      %1547 = vst [vmem:[%s1546] sm:$0xff] %v1545
      %s1548 = scalar_lea.vmem %s50, 2352
      %v1549 = vld [vmem:[%s1548] sm:$0xff]
      %s1550 = scalar_lea.vmem %s45, 2608
      %1551 = vst [vmem:[%s1550] sm:$0xff] %v1549
      %s1552 = scalar_lea.vmem %s50, 2360
      %v1553 = vld [vmem:[%s1552] sm:$0xff]
      %s1554 = scalar_lea.vmem %s45, 2616
      %1555 = vst [vmem:[%s1554] sm:$0xff] %v1553
      %s1556 = scalar_lea.vmem %s50, 2368
      %v1557 = vld [vmem:[%s1556] sm:$0xff]
      %s1558 = scalar_lea.vmem %s45, 2624
      %1559 = vst [vmem:[%s1558] sm:$0xff] %v1557
      %s1560 = scalar_lea.vmem %s50, 2376
      %v1561 = vld [vmem:[%s1560] sm:$0xff]
      %s1562 = scalar_lea.vmem %s45, 2632
      %1563 = vst [vmem:[%s1562] sm:$0xff] %v1561
      %s1564 = scalar_lea.vmem %s50, 2384
      %v1565 = vld [vmem:[%s1564] sm:$0xff]
      %s1566 = scalar_lea.vmem %s45, 2640
      %1567 = vst [vmem:[%s1566] sm:$0xff] %v1565
      %s1568 = scalar_lea.vmem %s50, 2392
      %v1569 = vld [vmem:[%s1568] sm:$0xff]
      %s1570 = scalar_lea.vmem %s45, 2648
      %1571 = vst [vmem:[%s1570] sm:$0xff] %v1569
      %s1572 = scalar_lea.vmem %s50, 2400
      %v1573 = vld [vmem:[%s1572] sm:$0xff]
      %s1574 = scalar_lea.vmem %s45, 2656
      %1575 = vst [vmem:[%s1574] sm:$0xff] %v1573
      %s1576 = scalar_lea.vmem %s50, 2408
      %v1577 = vld [vmem:[%s1576] sm:$0xff]
      %s1578 = scalar_lea.vmem %s45, 2664
      %1579 = vst [vmem:[%s1578] sm:$0xff] %v1577
      %s1580 = scalar_lea.vmem %s50, 2416
      %v1581 = vld [vmem:[%s1580] sm:$0xff]
      %s1582 = scalar_lea.vmem %s45, 2672
      %1583 = vst [vmem:[%s1582] sm:$0xff] %v1581
      %s1584 = scalar_lea.vmem %s50, 2424
      %v1585 = vld [vmem:[%s1584] sm:$0xff]
      %s1586 = scalar_lea.vmem %s45, 2680
      %1587 = vst [vmem:[%s1586] sm:$0xff] %v1585
      %s1588 = scalar_lea.vmem %s50, 2432
      %v1589 = vld [vmem:[%s1588] sm:$0xff]
      %s1590 = scalar_lea.vmem %s45, 2688
      %1591 = vst [vmem:[%s1590] sm:$0xf] %v1589
      %s1592 = scalar_lea.vmem %s45, 2716
      %1593 = vst [vmem:[%s1592] sm:$0xf0] %v1589
      %s1594 = scalar_lea.vmem %s50, 2440
      %v1595 = vld [vmem:[%s1594] sm:$0xff]
      %s1596 = scalar_lea.vmem %s45, 2696
      %1597 = vst [vmem:[%s1596] sm:$0xf] %v1595
      %s1598 = scalar_lea.vmem %s45, 2724
      %1599 = vst [vmem:[%s1598] sm:$0xf0] %v1595
      %s1600 = scalar_lea.vmem %s50, 2448
      %v1601 = vld [vmem:[%s1600] sm:$0xff]
      %s1602 = scalar_lea.vmem %s45, 2704
      %1603 = vst [vmem:[%s1602] sm:$0xf] %v1601
      %s1604 = scalar_lea.vmem %s45, 2732
      %1605 = vst [vmem:[%s1604] sm:$0xf0] %v1601
      %s1606 = scalar_lea.vmem %s50, 2456
      %v1607 = vld [vmem:[%s1606] sm:$0xff]
      %s1608 = scalar_lea.vmem %s45, 2712
      %1609 = vst [vmem:[%s1608] sm:$0xf] %v1607
      %s1610 = scalar_lea.vmem %s45, 2740
      %1611 = vst [vmem:[%s1610] sm:$0xf0] %v1607
      %s1612 = scalar_lea.vmem %s50, 2464
      %v1613 = vld [vmem:[%s1612] sm:$0xff]
      %s1614 = scalar_lea.vmem %s45, 2724
      %1615 = vst [vmem:[%s1614] sm:$0xf] %v1613
      %s1616 = scalar_lea.vmem %s45, 2748
      %1617 = vst [vmem:[%s1616] sm:$0xf0] %v1613
      %s1618 = scalar_lea.vmem %s50, 2472
      %v1619 = vld [vmem:[%s1618] sm:$0xff]
      %s1620 = scalar_lea.vmem %s45, 2732
      %1621 = vst [vmem:[%s1620] sm:$0xf] %v1619
      %s1622 = scalar_lea.vmem %s45, 2756
      %1623 = vst [vmem:[%s1622] sm:$0xf0] %v1619
      %s1624 = scalar_lea.vmem %s50, 2480
      %v1625 = vld [vmem:[%s1624] sm:$0xff]
      %s1626 = scalar_lea.vmem %s45, 2740
      %1627 = vst [vmem:[%s1626] sm:$0xf] %v1625
      %s1628 = scalar_lea.vmem %s45, 2764
      %1629 = vst [vmem:[%s1628] sm:$0xf0] %v1625
      %s1630 = scalar_lea.vmem %s50, 2488
      %v1631 = vld [vmem:[%s1630] sm:$0xff]
      %s1632 = scalar_lea.vmem %s45, 2748
      %1633 = vst [vmem:[%s1632] sm:$0xf] %v1631
      %s1634 = scalar_lea.vmem %s45, 2772
      %1635 = vst [vmem:[%s1634] sm:$0xf0] %v1631
      %s1636 = scalar_lea.vmem %s50, 2496
      %v1637 = vld [vmem:[%s1636] sm:$0xff]
      %s1638 = scalar_lea.vmem %s45, 2756
      %1639 = vst [vmem:[%s1638] sm:$0xf] %v1637
      %s1640 = scalar_lea.vmem %s45, 2780
      %1641 = vst [vmem:[%s1640] sm:$0xf0] %v1637
      %s1642 = scalar_lea.vmem %s50, 2504
      %v1643 = vld [vmem:[%s1642] sm:$0xff]
      %s1644 = scalar_lea.vmem %s45, 2764
      %1645 = vst [vmem:[%s1644] sm:$0xf] %v1643
      %s1646 = scalar_lea.vmem %s45, 2788
      %1647 = vst [vmem:[%s1646] sm:$0xf0] %v1643
      %s1648 = scalar_lea.vmem %s50, 2512
      %v1649 = vld [vmem:[%s1648] sm:$0xff]
      %s1650 = scalar_lea.vmem %s45, 2772
      %1651 = vst [vmem:[%s1650] sm:$0xf] %v1649
      %s1652 = scalar_lea.vmem %s45, 2796
      %1653 = vst [vmem:[%s1652] sm:$0xf0] %v1649
      %s1654 = scalar_lea.vmem %s50, 2520
      %v1655 = vld [vmem:[%s1654] sm:$0xff]
      %s1656 = scalar_lea.vmem %s45, 2780
      %1657 = vst [vmem:[%s1656] sm:$0xf] %v1655
      %s1658 = scalar_lea.vmem %s45, 2804
      %1659 = vst [vmem:[%s1658] sm:$0xf0] %v1655
      %s1660 = scalar_lea.vmem %s50, 2528
      %v1661 = vld [vmem:[%s1660] sm:$0xff]
      %s1662 = scalar_lea.vmem %s45, 2788
      %1663 = vst [vmem:[%s1662] sm:$0xf] %v1661
      %s1664 = scalar_lea.vmem %s45, 2812
      %1665 = vst [vmem:[%s1664] sm:$0xf0] %v1661
      %s1666 = scalar_lea.vmem %s50, 2536
      %v1667 = vld [vmem:[%s1666] sm:$0xff]
      %s1668 = scalar_lea.vmem %s45, 2796
      %1669 = vst [vmem:[%s1668] sm:$0xf] %v1667
      %s1670 = scalar_lea.vmem %s45, 2820
      %1671 = vst [vmem:[%s1670] sm:$0xf0] %v1667
      %s1672 = scalar_lea.vmem %s50, 2544
      %v1673 = vld [vmem:[%s1672] sm:$0xff]
      %s1674 = scalar_lea.vmem %s45, 2804
      %1675 = vst [vmem:[%s1674] sm:$0xf] %v1673
      %s1676 = scalar_lea.vmem %s45, 2828
      %1677 = vst [vmem:[%s1676] sm:$0xf0] %v1673
      %s1678 = scalar_lea.vmem %s50, 2552
      %v1679 = vld [vmem:[%s1678] sm:$0xff]
      %s1680 = scalar_lea.vmem %s45, 2812
      %1681 = vst [vmem:[%s1680] sm:$0xf] %v1679
      %s1682 = scalar_lea.vmem %s45, 2836
      %1683 = vst [vmem:[%s1682] sm:$0xf0] %v1679
      %s1684 = scalar_lea.vmem %s50, 2560
      %v1685 = vld [vmem:[%s1684] sm:$0xff]
      %s1686 = scalar_lea.vmem %s45, 2820
      %1687 = vst [vmem:[%s1686] sm:$0xf] %v1685
      %s1688 = scalar_lea.vmem %s45, 2844
      %1689 = vst [vmem:[%s1688] sm:$0xf0] %v1685
      %s1690 = scalar_lea.vmem %s50, 2568
      %v1691 = vld [vmem:[%s1690] sm:$0xff]
      %s1692 = scalar_lea.vmem %s45, 2828
      %1693 = vst [vmem:[%s1692] sm:$0xf] %v1691
      %s1694 = scalar_lea.vmem %s45, 2852
      %1695 = vst [vmem:[%s1694] sm:$0xf0] %v1691
      %s1696 = scalar_lea.vmem %s50, 2576
      %v1697 = vld [vmem:[%s1696] sm:$0xff]
      %s1698 = scalar_lea.vmem %s45, 2836
      %1699 = vst [vmem:[%s1698] sm:$0xf] %v1697
      %s1700 = scalar_lea.vmem %s45, 2860
      %1701 = vst [vmem:[%s1700] sm:$0xf0] %v1697
      %s1702 = scalar_lea.vmem %s50, 2584
      %v1703 = vld [vmem:[%s1702] sm:$0xff]
      %s1704 = scalar_lea.vmem %s45, 2844
      %1705 = vst [vmem:[%s1704] sm:$0xf] %v1703
      %s1706 = scalar_lea.vmem %s45, 2868
      %1707 = vst [vmem:[%s1706] sm:$0xf0] %v1703
      %s1708 = scalar_lea.vmem %s50, 2592
      %v1709 = vld [vmem:[%s1708] sm:$0xff]
      %s1710 = scalar_lea.vmem %s45, 2880
      %1711 = vst [vmem:[%s1710] sm:$0xff] %v1709
      %s1712 = scalar_lea.vmem %s50, 2600
      %v1713 = vld [vmem:[%s1712] sm:$0xff]
      %s1714 = scalar_lea.vmem %s45, 2888
      %1715 = vst [vmem:[%s1714] sm:$0xff] %v1713
      %s1716 = scalar_lea.vmem %s50, 2608
      %v1717 = vld [vmem:[%s1716] sm:$0xff]
      %s1718 = scalar_lea.vmem %s45, 2896
      %1719 = vst [vmem:[%s1718] sm:$0xff] %v1717
      %s1720 = scalar_lea.vmem %s50, 2616
      %v1721 = vld [vmem:[%s1720] sm:$0xff]
      %s1722 = scalar_lea.vmem %s45, 2904
      %1723 = vst [vmem:[%s1722] sm:$0xff] %v1721
      %s1724 = scalar_lea.vmem %s50, 2624
      %v1725 = vld [vmem:[%s1724] sm:$0xff]
      %s1726 = scalar_lea.vmem %s45, 2912
      %1727 = vst [vmem:[%s1726] sm:$0xff] %v1725
      %s1728 = scalar_lea.vmem %s50, 2632
      %v1729 = vld [vmem:[%s1728] sm:$0xff]
      %s1730 = scalar_lea.vmem %s45, 2920
      %1731 = vst [vmem:[%s1730] sm:$0xff] %v1729
      %s1732 = scalar_lea.vmem %s50, 2640
      %v1733 = vld [vmem:[%s1732] sm:$0xff]
      %s1734 = scalar_lea.vmem %s45, 2928
      %1735 = vst [vmem:[%s1734] sm:$0xff] %v1733
      %s1736 = scalar_lea.vmem %s50, 2648
      %v1737 = vld [vmem:[%s1736] sm:$0xff]
      %s1738 = scalar_lea.vmem %s45, 2936
      %1739 = vst [vmem:[%s1738] sm:$0xff] %v1737
      %s1740 = scalar_lea.vmem %s50, 2656
      %v1741 = vld [vmem:[%s1740] sm:$0xff]
      %s1742 = scalar_lea.vmem %s45, 2944
      %1743 = vst [vmem:[%s1742] sm:$0xff] %v1741
      %s1744 = scalar_lea.vmem %s50, 2664
      %v1745 = vld [vmem:[%s1744] sm:$0xff]
      %s1746 = scalar_lea.vmem %s45, 2952
      %1747 = vst [vmem:[%s1746] sm:$0xff] %v1745
      %s1748 = scalar_lea.vmem %s50, 2672
      %v1749 = vld [vmem:[%s1748] sm:$0xff]
      %s1750 = scalar_lea.vmem %s45, 2960
      %1751 = vst [vmem:[%s1750] sm:$0xff] %v1749
      %s1752 = scalar_lea.vmem %s50, 2680
      %v1753 = vld [vmem:[%s1752] sm:$0xff]
      %s1754 = scalar_lea.vmem %s45, 2968
      %1755 = vst [vmem:[%s1754] sm:$0xff] %v1753
      %s1756 = scalar_lea.vmem %s50, 2688
      %v1757 = vld [vmem:[%s1756] sm:$0xff]
      %s1758 = scalar_lea.vmem %s45, 2976
      %1759 = vst [vmem:[%s1758] sm:$0xff] %v1757
      %s1760 = scalar_lea.vmem %s50, 2696
      %v1761 = vld [vmem:[%s1760] sm:$0xff]
      %s1762 = scalar_lea.vmem %s45, 2984
      %1763 = vst [vmem:[%s1762] sm:$0xff] %v1761
      %s1764 = scalar_lea.vmem %s50, 2704
      %v1765 = vld [vmem:[%s1764] sm:$0xff]
      %s1766 = scalar_lea.vmem %s45, 2992
      %1767 = vst [vmem:[%s1766] sm:$0xff] %v1765
      %s1768 = scalar_lea.vmem %s50, 2712
      %v1769 = vld [vmem:[%s1768] sm:$0xff]
      %s1770 = scalar_lea.vmem %s45, 3000
      %1771 = vst [vmem:[%s1770] sm:$0xff] %v1769
      %s1772 = scalar_lea.vmem %s50, 2720
      %v1773 = vld [vmem:[%s1772] sm:$0xff]
      %s1774 = scalar_lea.vmem %s45, 3008
      %1775 = vst [vmem:[%s1774] sm:$0xf] %v1773
      %s1776 = scalar_lea.vmem %s45, 3036
      %1777 = vst [vmem:[%s1776] sm:$0xf0] %v1773
      %s1778 = scalar_lea.vmem %s50, 2728
      %v1779 = vld [vmem:[%s1778] sm:$0xff]
      %s1780 = scalar_lea.vmem %s45, 3016
      %1781 = vst [vmem:[%s1780] sm:$0xf] %v1779
      %s1782 = scalar_lea.vmem %s45, 3044
      %1783 = vst [vmem:[%s1782] sm:$0xf0] %v1779
      %s1784 = scalar_lea.vmem %s50, 2736
      %v1785 = vld [vmem:[%s1784] sm:$0xff]
      %s1786 = scalar_lea.vmem %s45, 3024
      %1787 = vst [vmem:[%s1786] sm:$0xf] %v1785
      %s1788 = scalar_lea.vmem %s45, 3052
      %1789 = vst [vmem:[%s1788] sm:$0xf0] %v1785
      %s1790 = scalar_lea.vmem %s50, 2744
      %v1791 = vld [vmem:[%s1790] sm:$0xff]
      %s1792 = scalar_lea.vmem %s45, 3032
      %1793 = vst [vmem:[%s1792] sm:$0xf] %v1791
      %s1794 = scalar_lea.vmem %s45, 3060
      %1795 = vst [vmem:[%s1794] sm:$0xf0] %v1791
      %s1796 = scalar_lea.vmem %s50, 2752
      %v1797 = vld [vmem:[%s1796] sm:$0xff]
      %s1798 = scalar_lea.vmem %s45, 3044
      %1799 = vst [vmem:[%s1798] sm:$0xf] %v1797
      %s1800 = scalar_lea.vmem %s45, 3068
      %1801 = vst [vmem:[%s1800] sm:$0xf0] %v1797
      %s1802 = scalar_lea.vmem %s50, 2760
      %v1803 = vld [vmem:[%s1802] sm:$0xff]
      %s1804 = scalar_lea.vmem %s45, 3052
      %1805 = vst [vmem:[%s1804] sm:$0xf] %v1803
      %s1806 = scalar_lea.vmem %s45, 3076
      %1807 = vst [vmem:[%s1806] sm:$0xf0] %v1803
      %s1808 = scalar_lea.vmem %s50, 2768
      %v1809 = vld [vmem:[%s1808] sm:$0xff]
      %s1810 = scalar_lea.vmem %s45, 3060
      %1811 = vst [vmem:[%s1810] sm:$0xf] %v1809
      %s1812 = scalar_lea.vmem %s45, 3084
      %1813 = vst [vmem:[%s1812] sm:$0xf0] %v1809
      %s1814 = scalar_lea.vmem %s50, 2776
      %v1815 = vld [vmem:[%s1814] sm:$0xff]
      %s1816 = scalar_lea.vmem %s45, 3068
      %1817 = vst [vmem:[%s1816] sm:$0xf] %v1815
      %s1818 = scalar_lea.vmem %s45, 3092
      %1819 = vst [vmem:[%s1818] sm:$0xf0] %v1815
      %s1820 = scalar_lea.vmem %s50, 2784
      %v1821 = vld [vmem:[%s1820] sm:$0xff]
      %s1822 = scalar_lea.vmem %s45, 3076
      %1823 = vst [vmem:[%s1822] sm:$0xf] %v1821
      %s1824 = scalar_lea.vmem %s45, 3100
      %1825 = vst [vmem:[%s1824] sm:$0xf0] %v1821
      %s1826 = scalar_lea.vmem %s50, 2792
      %v1827 = vld [vmem:[%s1826] sm:$0xff]
      %s1828 = scalar_lea.vmem %s45, 3084
      %1829 = vst [vmem:[%s1828] sm:$0xf] %v1827
      %s1830 = scalar_lea.vmem %s45, 3108
      %1831 = vst [vmem:[%s1830] sm:$0xf0] %v1827
      %s1832 = scalar_lea.vmem %s50, 2800
      %v1833 = vld [vmem:[%s1832] sm:$0xff]
      %s1834 = scalar_lea.vmem %s45, 3092
      %1835 = vst [vmem:[%s1834] sm:$0xf] %v1833
      %s1836 = scalar_lea.vmem %s45, 3116
      %1837 = vst [vmem:[%s1836] sm:$0xf0] %v1833
      %s1838 = scalar_lea.vmem %s50, 2808
      %v1839 = vld [vmem:[%s1838] sm:$0xff]
      %s1840 = scalar_lea.vmem %s45, 3100
      %1841 = vst [vmem:[%s1840] sm:$0xf] %v1839
      %s1842 = scalar_lea.vmem %s45, 3124
      %1843 = vst [vmem:[%s1842] sm:$0xf0] %v1839
      %s1844 = scalar_lea.vmem %s50, 2816
      %v1845 = vld [vmem:[%s1844] sm:$0xff]
      %s1846 = scalar_lea.vmem %s45, 3108
      %1847 = vst [vmem:[%s1846] sm:$0xf] %v1845
      %s1848 = scalar_lea.vmem %s45, 3132
      %1849 = vst [vmem:[%s1848] sm:$0xf0] %v1845
      %s1850 = scalar_lea.vmem %s50, 2824
      %v1851 = vld [vmem:[%s1850] sm:$0xff]
      %s1852 = scalar_lea.vmem %s45, 3116
      %1853 = vst [vmem:[%s1852] sm:$0xf] %v1851
      %s1854 = scalar_lea.vmem %s45, 3140
      %1855 = vst [vmem:[%s1854] sm:$0xf0] %v1851
      %s1856 = scalar_lea.vmem %s50, 2832
      %v1857 = vld [vmem:[%s1856] sm:$0xff]
      %s1858 = scalar_lea.vmem %s45, 3124
      %1859 = vst [vmem:[%s1858] sm:$0xf] %v1857
      %s1860 = scalar_lea.vmem %s45, 3148
      %1861 = vst [vmem:[%s1860] sm:$0xf0] %v1857
      %s1862 = scalar_lea.vmem %s50, 2840
      %v1863 = vld [vmem:[%s1862] sm:$0xff]
      %s1864 = scalar_lea.vmem %s45, 3132
      %1865 = vst [vmem:[%s1864] sm:$0xf] %v1863
      %s1866 = scalar_lea.vmem %s45, 3156
      %1867 = vst [vmem:[%s1866] sm:$0xf0] %v1863
      %s1868 = scalar_lea.vmem %s50, 2848
      %v1869 = vld [vmem:[%s1868] sm:$0xff]
      %s1870 = scalar_lea.vmem %s45, 3140
      %1871 = vst [vmem:[%s1870] sm:$0xf] %v1869
      %s1872 = scalar_lea.vmem %s45, 3164
      %1873 = vst [vmem:[%s1872] sm:$0xf0] %v1869
      %s1874 = scalar_lea.vmem %s50, 2856
      %v1875 = vld [vmem:[%s1874] sm:$0xff]
      %s1876 = scalar_lea.vmem %s45, 3148
      %1877 = vst [vmem:[%s1876] sm:$0xf] %v1875
      %s1878 = scalar_lea.vmem %s45, 3172
      %1879 = vst [vmem:[%s1878] sm:$0xf0] %v1875
      %s1880 = scalar_lea.vmem %s50, 2864
      %v1881 = vld [vmem:[%s1880] sm:$0xff]
      %s1882 = scalar_lea.vmem %s45, 3156
      %1883 = vst [vmem:[%s1882] sm:$0xf] %v1881
      %s1884 = scalar_lea.vmem %s45, 3180
      %1885 = vst [vmem:[%s1884] sm:$0xf0] %v1881
      %s1886 = scalar_lea.vmem %s50, 2872
      %v1887 = vld [vmem:[%s1886] sm:$0xff]
      %s1888 = scalar_lea.vmem %s45, 3164
      %1889 = vst [vmem:[%s1888] sm:$0xf] %v1887
      %s1890 = scalar_lea.vmem %s45, 3188
      %1891 = vst [vmem:[%s1890] sm:$0xf0] %v1887
      %s1892 = smul.u32 3200, %s8
      %p1893 = scmp.lt.s32.totalorder %s1892, 35199
      %s1894 = scalar_select %p1893, %s1892, 35199
      %s1895 = scalar_lea.vmem %s1, %s1894
      %s1896 = smul.u32 3200, %s8
    $region20: #{squeeze.3} parent=5 // pred_fallthru
      _
    %p1897 = scmp.le.s32.totalorder 2, %s3
    // Predicated region
    $region21: #{squeeze.3} parent=5 // pred_check
      %p1898 = pneg %p1897
    $region22: #{squeeze.3} parent=5 // pred_check_branch
      %1900 = sbr.rel (%p1898) target = $region24
    $region23: #{squeeze.3} parent=5 // pred_region
      %s1901 = ssub.s32 %s3, 2
      %s1902 = smul.u32 3200, %s9
      %p1903 = scmp.lt.s32.totalorder %s1902, 35199
      %s1904 = scalar_select %p1903, %s1902, 35199
      %s1905 = scalar_lea.vmem %s1, %s1904
    $region24: #{squeeze.3} parent=5 // pred_fallthru
      _
  $region6: #{squeeze.3} parent=0 // loop_footer
    %s7 = sadd.s32 1, %s3
  $region7: #{squeeze.3} parent=0 // loop_footer_branch
    %2 = sbr.rel target = $region3
  $region8: #{squeeze.3} parent=0 // loop_exit
    _

// kernel: model_forward.3
$region0: #{model_forward.3}
  #allocation0 [shape = 'u32[]', space=smem, size = 0x4, offset = 0x4, fixed_abs, tag = 'smem constant byte address 0x4 - core index']
  #allocation1 [shape = 'u32[144,128]{1,0:T(1,128)}', space=vmem, size = 0x12000, scoped, tag = 'internal scratch']
  %s0 = inlined_call_operand.vmem [shape: bf16[1,7920,27], index: 0, kind: input, shape index: {}]
  %s1 = inlined_call_operand.vmem [shape: bf16[1,27,512], index: 1, kind: input, shape index: {}]
  %s2 = inlined_call_operand.vmem [shape: f32[1,512], index: 2, kind: input, shape index: {}]
  %s3 = inlined_call_operand.vmem [shape: f32[1,7920,512], index: 3, kind: output, shape index: {}]
  %s4 = sld [smem:[#allocation0]]
  $region71: #{model_forward.3} parent=0
    _
  %s6 = ssub.s32 1, %s4
  %s7 = scalar_select 0, %s6, %s4
  $region1: #{model_forward.3} parent=0
    #allocation2 [shape = 'u8[1048576]{0}', space=vmem, size = 0x100000, scoped, tag = 'output window, operand 0']
    loop: start=0, step=1, limit=33
    $region2: #{model_forward.3} parent=1 // loop_pre_header
      _
    $region3: #{model_forward.3} parent=1 // loop_header
      %s9 = sphi 0, %s13
      %p10 = scmp.ge.s32.totalorder %s9, 33
      %s16 = sphi 0, %s35
      %s17 = sphi 0, %s31
      %s18 = sphi 0, %s27
      %s19 = sphi 0, %s16
      %s20 = sphi 0, %s17
      %s21 = sphi 0, %s18
      %s22 = sphi 0, %s19
      %s23 = sphi 0, %s20
      %s24 = sphi 0, %s21
      %s40 = sphi 0, %s42
      %s43 = sphi 0, %s40
      %s44 = sphi 0, %s43
      %s60 = sphi 0, %s44
      %s68 = sphi 0, %s70
      %s71 = sphi 0, %s68
      %s72 = sphi 0, %s71
      %s88 = sphi 0, %s72
      %s94 = sphi 0, %s96
      %s97 = sphi 0, %s94
      %s98 = sphi 0, %s97
      %s114 = sphi 0, %s98
      %s124 = sphi 0, %s126
      %s127 = sphi 0, %s124
      %s128 = sphi 0, %s127
      %s144 = sphi 0, %s128
    $region4: #{model_forward.3} parent=1 // loop_header_branch
      %12 = sbr.rel (%p10) target = $region8
    $region5: #{model_forward.3} parent=1 // loop_body
      %s14 = ssub.s32 %s9, 1
      %s15 = ssub.s32 %s9, 2
      %s25 = sadd.s32 1, %s18
      %p26 = scmp.ge.s32.totalorder %s25, 1
      %s27 = scalar_select %p26, 0, %s25
      %s28 = sadd.s32 1, %s17
      %s29 = scalar_select %p26, %s28, %s17
      %p30 = scmp.ge.s32.totalorder %s29, 31
      %s31 = scalar_select %p30, 0, %s29
      %s32 = sadd.s32 1, %s16
      %s33 = scalar_select %p30, %s32, %s16
      %p34 = scmp.ge.s32.totalorder %s33, 1
      %s35 = scalar_select %p34, 0, %s33
      %s36 = ssub.s32 %s16, %s35
      %s37 = ssub.s32 %s17, %s31
      %s38 = sor.u32 %s36, %s37
      %p39 = scmp.eq.s32.totalorder %s38, 0
      %s41 = sadd.s32 %s40, 1
      %s42 = scalar_select %p39, %s40, %s41
      %p45 = pneg %p39
      %p46 = scmp.eq.s32.totalorder %s9, 30
      %p47 = por %p45, %p46
      %p48 = scmp.ne.s32.totalorder %s40, %s43
      %p49 = scmp.eq.s32.totalorder %s9, 0
      %p50 = por %p48, %p49
      %p51 = scmp.ne.s32.totalorder %s40, %s43
      %p52 = scmp.eq.s32.totalorder %s14, 30
      %p53 = por %p51, %p52
      %p54 = scmp.ne.s32.totalorder %s43, %s44
      %p55 = scmp.eq.s32.totalorder %s14, 0
      %p56 = por %p54, %p55
      %p57 = scmp.ne.s32.totalorder %s43, %s44
      %p58 = scmp.eq.s32.totalorder %s15, 30
      %p59 = por %p57, %p58
      %p61 = scmp.ne.s32.totalorder %s44, %s60
      %p62 = scmp.eq.s32.totalorder %s15, 0
      %p63 = por %p61, %p62
      %s64 = ssub.s32 %s16, %s35
      %s65 = ssub.s32 %s18, %s27
      %s66 = sor.u32 %s64, %s65
      %p67 = scmp.eq.s32.totalorder %s66, 0
      %s69 = sadd.s32 %s68, 1
      %s70 = scalar_select %p67, %s68, %s69
      %p73 = pneg %p67
      %p74 = scmp.eq.s32.totalorder %s9, 30
      %p75 = por %p73, %p74
      %p76 = scmp.ne.s32.totalorder %s68, %s71
      %p77 = scmp.eq.s32.totalorder %s9, 0
      %p78 = por %p76, %p77
      %p79 = scmp.ne.s32.totalorder %s68, %s71
      %p80 = scmp.eq.s32.totalorder %s14, 30
      %p81 = por %p79, %p80
      %p82 = scmp.ne.s32.totalorder %s71, %s72
      %p83 = scmp.eq.s32.totalorder %s14, 0
      %p84 = por %p82, %p83
      %p85 = scmp.ne.s32.totalorder %s71, %s72
      %p86 = scmp.eq.s32.totalorder %s15, 30
      %p87 = por %p85, %p86
      %p89 = scmp.ne.s32.totalorder %s72, %s88
      %p90 = scmp.eq.s32.totalorder %s15, 0
      %p91 = por %p89, %p90
      %s92 = ssub.s32 %s18, %s27
      %p93 = scmp.eq.s32.totalorder %s92, 0
      %s95 = sadd.s32 %s94, 1
      %s96 = scalar_select %p93, %s94, %s95
      %p99 = pneg %p93
      %p100 = scmp.eq.s32.totalorder %s9, 30
      %p101 = por %p99, %p100
      %p102 = scmp.ne.s32.totalorder %s94, %s97
      %p103 = scmp.eq.s32.totalorder %s9, 0
      %p104 = por %p102, %p103
      %p105 = scmp.ne.s32.totalorder %s94, %s97
      %p106 = scmp.eq.s32.totalorder %s14, 30
      %p107 = por %p105, %p106
      %p108 = scmp.ne.s32.totalorder %s97, %s98
      %p109 = scmp.eq.s32.totalorder %s14, 0
      %p110 = por %p108, %p109
      %p111 = scmp.ne.s32.totalorder %s97, %s98
      %p112 = scmp.eq.s32.totalorder %s15, 30
      %p113 = por %p111, %p112
      %p115 = scmp.ne.s32.totalorder %s98, %s114
      %p116 = scmp.eq.s32.totalorder %s15, 0
      %p117 = por %p115, %p116
      %s118 = ssub.s32 %s16, %s35
      %s119 = ssub.s32 %s17, %s31
      %s120 = sor.u32 %s118, %s119
      %s121 = ssub.s32 %s18, %s27
      %s122 = sor.u32 %s120, %s121
      %p123 = scmp.eq.s32.totalorder %s122, 0
      %s125 = sadd.s32 %s124, 1
      %s126 = scalar_select %p123, %s124, %s125
      %p129 = pneg %p123
      %p130 = scmp.eq.s32.totalorder %s9, 30
      %p131 = por %p129, %p130
      %p132 = scmp.ne.s32.totalorder %s124, %s127
      %p133 = scmp.eq.s32.totalorder %s9, 0
      %p134 = por %p132, %p133
      %p135 = scmp.ne.s32.totalorder %s124, %s127
      %p136 = scmp.eq.s32.totalorder %s14, 30
      %p137 = por %p135, %p136
      %p138 = scmp.ne.s32.totalorder %s127, %s128
      %p139 = scmp.eq.s32.totalorder %s14, 0
      %p140 = por %p138, %p139
      %p141 = scmp.ne.s32.totalorder %s127, %s128
      %p142 = scmp.eq.s32.totalorder %s15, 30
      %p143 = por %p141, %p142
      %p145 = scmp.ne.s32.totalorder %s128, %s144
      %p146 = scmp.eq.s32.totalorder %s15, 0
      %p147 = por %p145, %p146
      %p148 = scmp.le.s32.totalorder 1, %s9
      %p149 = scmp.lt.s32.totalorder %s9, 32
      %p150 = pnand %p148, %p149
      %p151 = pneg %p150
      // Predicated region
      $region9: #{model_forward.3} parent=5 // pred_check
        _
      $region10: #{model_forward.3} parent=5 // pred_check_branch
        %153 = sbr.rel (%p150) target = $region12
      $region11: #{model_forward.3} parent=5 // pred_region
        %s154 = ssub.s32 %s9, 1
        // Predicated region
        $region13: #{model_forward.3} parent=11 // pred_check
          %p155 = pneg %p84
        $region14: #{model_forward.3} parent=11 // pred_check_branch
          %157 = sbr.rel (%p155) target = $region16
        $region15: #{model_forward.3} parent=11 // pred_region
          %s158 = smul.u32 4, %s21
          %p159 = scmp.lt.s32.totalorder %s19, 0
          %s160 = scalar_select %p159, %s19, 0
          %p161 = scmp.lt.s32.totalorder %s158, 3
          %s162 = scalar_select %p161, %s158, 3
          %s163 = smul.addr %s160, 16
          %s164 = sadd.s32 %s162, %s163
          %s165 = smul.addr %s164, 4
          %s166 = scalar_lea.vmem %s1, %s165
          %s167 = smul.u32 4, %s21
        $region16: #{model_forward.3} parent=11 // pred_fallthru
          _
        // Predicated region
        $region17: #{model_forward.3} parent=11 // pred_check
          %p168 = pneg %p110
        $region18: #{model_forward.3} parent=11 // pred_check_branch
          %170 = sbr.rel (%p168) target = $region20
        $region19: #{model_forward.3} parent=11 // pred_region
          %s171 = smul.u32 4, %s21
          %p172 = scmp.lt.s32.totalorder %s171, 3
          %s173 = scalar_select %p172, %s171, 3
          %s174 = scalar_lea.vmem %s2, %s173
          %s175 = smul.u32 4, %s21
        $region20: #{model_forward.3} parent=11 // pred_fallthru
          _
      $region12: #{model_forward.3} parent=5 // pred_fallthru
        _
      %p176 = scmp.lt.s32.totalorder %s9, 31
      // Predicated region
      $region21: #{model_forward.3} parent=5 // pred_check
        %p177 = pneg %p176
      $region22: #{model_forward.3} parent=5 // pred_check_branch
        %179 = sbr.rel (%p177) target = $region24
      $region23: #{model_forward.3} parent=5 // pred_region
        // Predicated region
        $region25: #{model_forward.3} parent=23 // pred_check
          %p180 = pneg %p50
        $region26: #{model_forward.3} parent=23 // pred_check_branch
          %182 = sbr.rel (%p180) target = $region28
        $region27: #{model_forward.3} parent=23 // pred_region
          %s183 = smul.u32 32, %s17
          %s184 = ssub.s32 990, %s183
          %p185 = scmp.lt.s32.totalorder %s184, 32
          %s186 = scalar_select %p185, %s184, 32
          %s187 = smul.u32 64, %s186
          %p188 = scmp.lt.s32.totalorder %s16, 0
          %s189 = scalar_select %p188, %s16, 0
          %p190 = scmp.lt.s32.totalorder %s183, 989
          %s191 = scalar_select %p190, %s183, 989
          %s192 = smul.addr %s189, 990
          %s193 = sadd.s32 %s191, %s192
          %s194 = smul.addr %s193, 4
          %s195 = scalar_lea.vmem %s0, %s194
          %s196 = smul.u32 32, %s17
          %s197 = ssub.s32 990, %s196
          %p198 = scmp.lt.s32.totalorder %s197, 32
          %s199 = scalar_select %p198, %s197, 32
          %s200 = smul.u32 64, %s199
        $region28: #{model_forward.3} parent=23 // pred_fallthru
          _
      $region24: #{model_forward.3} parent=5 // pred_fallthru
        _
      %p201 = scmp.le.s32.totalorder 1, %s9
      %p202 = scmp.lt.s32.totalorder %s9, 32
      %p203 = pnand %p201, %p202
      %p204 = pneg %p203
      // Predicated region
      $region29: #{model_forward.3} parent=5 // pred_check
        _
      $region30: #{model_forward.3} parent=5 // pred_check_branch
        %206 = sbr.rel (%p203) target = $region32
      $region31: #{model_forward.3} parent=5 // pred_region
        %s207 = ssub.s32 %s9, 1
        %s208 = smul.u32 32, %s20
        %s209 = ssub.s32 990, %s208
        %p210 = scmp.lt.s32.totalorder %s209, 32
        %s211 = scalar_select %p210, %s209, 32
        %s212 = smul.u32 64, %s211
        %p213 = scmp.lt.s32.totalorder %s19, 0
        %s214 = scalar_select %p213, %s19, 0
        %p215 = scmp.lt.s32.totalorder %s208, 989
        %s216 = scalar_select %p215, %s208, 989
        %s217 = smul.addr %s214, 990
        %s218 = sadd.s32 %s216, %s217
        %s219 = smul.addr %s218, 4
        %s220 = scalar_lea.vmem %s0, %s219
        %p221 = pneg %p56
        %p222 = pneg %p53
        %s223 = smul.u32 4, %s21
        %p224 = scmp.lt.s32.totalorder %s19, 0
        %s225 = scalar_select %p224, %s19, 0
        %p226 = scmp.lt.s32.totalorder %s223, 3
        %s227 = scalar_select %p226, %s223, 3
        %s228 = smul.addr %s225, 16
        %s229 = sadd.s32 %s227, %s228
        %s230 = smul.addr %s229, 4
        %s231 = scalar_lea.vmem %s1, %s230
        %p232 = pneg %p84
        %p233 = pneg %p81
        %s234 = smul.u32 4, %s21
        %p235 = scmp.lt.s32.totalorder %s234, 3
        %s236 = scalar_select %p235, %s234, 3
        %s237 = scalar_lea.vmem %s2, %s236
        %p238 = pneg %p110
        %p239 = pneg %p107
        %p240 = pneg %p140
        %p241 = pneg %p137
        %s242 = sand.u32 %s127, 1
        %s243 = sand.u32 %s127, 1
        %s244 = smul.addr %s243, 1024
        %s245 = scalar_lea.vmem [#allocation2], %s244
        %s246 = smul.u32 32, %s20
        %s247 = ssub.s32 990, %s246
        %p248 = scmp.lt.s32.totalorder %s247, 32
        %s249 = scalar_select %p248, %s247, 32
        %s250 = smul.u32 64, %s249
        %p251 = scmp.lt.s32.totalorder %s19, 0
        %s252 = scalar_select %p251, %s19, 0
        %p253 = scmp.lt.s32.totalorder %s246, 989
        %s254 = scalar_select %p253, %s246, 989
        %s255 = smul.addr %s252, 990
        %s256 = sadd.s32 %s254, %s255
        %s257 = smul.addr %s256, 4
        %s258 = scalar_lea.vmem %s0, %s257
        %s259 = smul.u32 32, %s20
        %s260 = ssub.s32 990, %s259
        %p261 = scmp.lt.s32.totalorder %s260, 32
        %s262 = scalar_select %p261, %s260, 32
        %s263 = smul.u32 64, %s262
        %s264 = smul.u32 4, %s21
        %p265 = scmp.lt.s32.totalorder %s19, 0
        %s266 = scalar_select %p265, %s19, 0
        %p267 = scmp.lt.s32.totalorder %s264, 3
        %s268 = scalar_select %p267, %s264, 3
        %s269 = smul.addr %s266, 16
        %s270 = sadd.s32 %s268, %s269
        %s271 = smul.addr %s270, 4
        %s272 = scalar_lea.vmem %s1, %s271
        %s273 = smul.u32 4, %s21
        %s274 = smul.u32 4, %s21
        %p275 = scmp.lt.s32.totalorder %s274, 3
        %s276 = scalar_select %p275, %s274, 3
        %s277 = scalar_lea.vmem %s2, %s276
        %s278 = smul.u32 4, %s21
        %s279 = smul.u32 32, %s20
        %s280 = smul.u32 4, %s21
        %s281 = ssub.s32 990, %s279
        %p282 = scmp.lt.s32.totalorder %s281, 32
        %s283 = scalar_select %p282, %s281, 32
        %s284 = smul.u32 128, %s283
        %s285 = smul.u32 %s284, 4
        %v287 = vld [vmem:[%s258] sm:$0xf]
        %v288 = vld [vmem:[%s258 + $0x4] sm:$0xf]
        %v289 = vld [vmem:[%s258 + $0x8] sm:$0xf]
        %v290 = vld [vmem:[%s258 + $0xc] sm:$0xf]
        %v291 = vld [vmem:[%s258 + $0x10] sm:$0xf]
        %v292 = vld [vmem:[%s258 + $0x14] sm:$0xf]
        %v293 = vld [vmem:[%s258 + $0x18] sm:$0xf]
        %v294 = vld [vmem:[%s258 + $0x1c] sm:$0xf]
        %v295 = vld [vmem:[%s258 + $0x20] sm:$0xf]
        %v296 = vld [vmem:[%s258 + $0x24] sm:$0xf]
        %v297 = vld [vmem:[%s258 + $0x28] sm:$0xf]
        %v298 = vld [vmem:[%s258 + $0x2c] sm:$0xf]
        %v299 = vld [vmem:[%s258 + $0x30] sm:$0xf]
        %v300 = vld [vmem:[%s258 + $0x34] sm:$0xf]
        %v301 = vld [vmem:[%s258 + $0x38] sm:$0xf]
        %v302 = vld [vmem:[%s258 + $0x3c] sm:$0xf]
        %v303 = vld [vmem:[%s258 + $0x40] sm:$0xf]
        %v304 = vld [vmem:[%s258 + $0x44] sm:$0xf]
        %v305 = vld [vmem:[%s258 + $0x48] sm:$0xf]
        %v306 = vld [vmem:[%s258 + $0x4c] sm:$0xf]
        %v307 = vld [vmem:[%s258 + $0x50] sm:$0xf]
        %v308 = vld [vmem:[%s258 + $0x54] sm:$0xf]
        %v309 = vld [vmem:[%s258 + $0x58] sm:$0xf]
        %v310 = vld [vmem:[%s258 + $0x5c] sm:$0xf]
        %v311 = vld [vmem:[%s258 + $0x60] sm:$0xf]
        %v312 = vld [vmem:[%s258 + $0x64] sm:$0xf]
        %v313 = vld [vmem:[%s258 + $0x68] sm:$0xf]
        %v314 = vld [vmem:[%s258 + $0x6c] sm:$0xf]
        %v315 = vld [vmem:[%s258 + $0x70] sm:$0xf]
        %v316 = vld [vmem:[%s258 + $0x74] sm:$0xf]
        %v317 = vld [vmem:[%s258 + $0x78] sm:$0xf]
        %v318 = vld [vmem:[%s258 + $0x7c] sm:$0xf]
        %v319 = vld [vmem:[%s272] sm:$0xff]
        %v320 = vld [vmem:[%s272 + $0x8] sm:$0xff]
        %v321 = vld [vmem:[%s272 + $0x10] sm:$0xff]
        %v322 = vld [vmem:[%s272 + $0x18] sm:$0xff]
        %v323 = vld [vmem:[%s272 + $0x20] sm:$0xff]
        %v324 = vld [vmem:[%s272 + $0x28] sm:$0xff]
        %v325 = vld [vmem:[%s272 + $0x30] sm:$0x33]
        %v326 = vld [vmem:[%s272 + $0x38] sm:$0x33]
        %v327 = vld [vmem:[%s277] sm:$0xf]
        %v329 = vlaneseq
        %v330 = vshrl.u32 %v329, 7
        %v331 = vsub.s32 0, %v330
        %v332 = vrot.slane %v327, %v331
        %v333 = vlaneseq
        %v334 = vshrl.u32 %v333, 7
        %v335 = vsub.s32 1, %v334
        %v336 = vrot.slane %v327, %v335
        %v337 = vlaneseq
        %v338 = vshrl.u32 %v337, 7
        %v339 = vsub.s32 2, %v338
        %v340 = vrot.slane %v327, %v339
        %v341 = vlaneseq
        %v342 = vshrl.u32 %v341, 7
        %v343 = vsub.s32 3, %v342
        %v344 = vrot.slane %v327, %v343
        %v381 = vunpack.c.l.b16 %v287
        %v382 = vunpack.c.l.b16 %v288
        %v383 = vunpack.c.l.b16 %v289
        %v384 = vunpack.c.l.b16 %v290
        %v385 = vunpack.c.l.b16 %v291
        %v386 = vunpack.c.l.b16 %v292
        %v387 = vunpack.c.l.b16 %v293
        %v388 = vunpack.c.l.b16 %v294
        %v389 = vunpack.c.l.b16 %v295
        %v390 = vunpack.c.l.b16 %v296
        %v391 = vunpack.c.l.b16 %v297
        %v392 = vunpack.c.l.b16 %v298
        %v393 = vunpack.c.l.b16 %v299
        %v394 = vunpack.c.l.b16 %v300
        %v395 = vunpack.c.l.b16 %v301
        %v396 = vunpack.c.l.b16 %v302
        %v397 = vunpack.c.l.b16 %v303
        %v398 = vunpack.c.l.b16 %v304
        %v399 = vunpack.c.l.b16 %v305
        %v400 = vunpack.c.l.b16 %v306
        %v401 = vunpack.c.l.b16 %v307
        %v402 = vunpack.c.l.b16 %v308
        %v403 = vunpack.c.l.b16 %v309
        %v404 = vunpack.c.l.b16 %v310
        %v405 = vunpack.c.l.b16 %v311
        %v406 = vunpack.c.l.b16 %v312
        %v407 = vunpack.c.l.b16 %v313
        %v408 = vunpack.c.l.b16 %v314
        %v409 = vunpack.c.l.b16 %v315
        %v410 = vunpack.c.l.b16 %v316
        %v411 = vunpack.c.l.b16 %v317
        %v412 = vunpack.c.l.b16 %v318
        %v413 = vpack.c.b16 %v382, %v381
        %v414 = vpack.c.b16 %v384, %v383
        %v415 = vpack.c.b16 %v386, %v385
        %v416 = vpack.c.b16 %v388, %v387
        %v417 = vpack.c.b16 %v390, %v389
        %v418 = vpack.c.b16 %v392, %v391
        %v419 = vpack.c.b16 %v394, %v393
        %v420 = vpack.c.b16 %v396, %v395
        %v421 = vpack.c.b16 %v398, %v397
        %v422 = vpack.c.b16 %v400, %v399
        %v423 = vpack.c.b16 %v402, %v401
        %v424 = vpack.c.b16 %v404, %v403
        %v425 = vpack.c.b16 %v406, %v405
        %v426 = vpack.c.b16 %v408, %v407
        %v427 = vpack.c.b16 %v410, %v409
        %v428 = vpack.c.b16 %v412, %v411
        %v437 = vunpack.c.l.b16 %v319
        %v438 = vunpack.c.h.b16 %v319
        %v439 = vunpack.c.l.b16 %v320
        %v440 = vunpack.c.h.b16 %v320
        %v441 = vunpack.c.l.b16 %v321
        %v442 = vunpack.c.h.b16 %v321
        %v443 = vunpack.c.l.b16 %v322
        %v444 = vunpack.c.h.b16 %v322
        %v445 = vunpack.c.l.b16 %v323
        %v446 = vunpack.c.h.b16 %v323
        %v447 = vunpack.c.l.b16 %v324
        %v448 = vunpack.c.h.b16 %v324
        %v449 = vunpack.c.l.b16 %v325
        %v450 = vunpack.c.h.b16 %v325
        %v451 = vunpack.c.l.b16 %v326
        %v452 = vunpack.c.h.b16 %v326
        %v453 = vpack.c.b16 %v441, %v437
        %v454 = vpack.c.b16 %v442, %v438
        %v455 = vpack.c.b16 %v443, %v439
        %v456 = vpack.c.b16 %v444, %v440
        %v457 = vpack.c.b16 %v449, %v445
        %v458 = vpack.c.b16 %v450, %v446
        %v459 = vpack.c.b16 %v451, %v447
        %v460 = vpack.c.b16 %v452, %v448
        %vm465 = vcmask 220160
        %v467 = vsel %vm465, %v413, 0
        %v470 = vsel %vm465, %v414, 0
        %v473 = vsel %vm465, %v415, 0
        %v476 = vsel %vm465, %v416, 0
        %v479 = vsel %vm465, %v417, 0
        %v482 = vsel %vm465, %v418, 0
        %v485 = vsel %vm465, %v419, 0
        %v488 = vsel %vm465, %v420, 0
        %v491 = vsel %vm465, %v421, 0
        %v494 = vsel %vm465, %v422, 0
        %v497 = vsel %vm465, %v423, 0
        %v500 = vsel %vm465, %v424, 0
        %v503 = vsel %vm465, %v425, 0
        %v506 = vsel %vm465, %v426, 0
        %v509 = vsel %vm465, %v427, 0
        %v512 = vsel %vm465, %v428, 0
        %vm514 = vcmask 1044480
        %vm515 = vcmask 1045504
        %v516 = vsel %vm514, 4294967295, 65535
        %v517 = vsel %vm515, %v516, 0
        %v519 = vand.u32 %v457, %v517
        %v522 = vand.u32 %v458, %v517
        %v525 = vand.u32 %v459, %v517
        %v528 = vand.u32 %v460, %v517
        %530 = vmatprep.subr.bf16.mxu0 0
        %531 = vmatpush1.bf16.msra.mxu0 0
        %532 = vmatprep.subr.bf16.mxu0 0
        %533 = vmatpush1.bf16.msra.mxu0 0
        %534 = vmatprep.subr.bf16.mxu0 0
        %535 = vmatpush1.bf16.msra.mxu0 0
        %536 = vmatprep.subr.bf16.mxu0 0
        %537 = vmatpush1.bf16.msra.mxu0 0
        %538 = vmatprep.subr.bf16.mxu0 0
        %539 = vmatpush1.bf16.msra.mxu0 0
        %540 = vmatprep.subr.bf16.mxu0 0
        %541 = vmatpush1.bf16.msra.mxu0 0
        %542 = vmatprep.subr.bf16.mxu0 %v522
        %543 = vmatpush1.bf16.msra.mxu0 %v519
        %544 = vmatprep.subr.bf16.mxu0 %v454
        %545 = vmatpush1.bf16.msra.mxu0 %v453
        %546 = vmatprep.subr.bf16.mxu0 0
        %547 = vmatpush2.bf16.msra.mxu0 0
        %548 = vmatprep.subr.bf16.mxu0 0
        %549 = vmatpush2.bf16.msra.mxu0 0
        %550 = vmatprep.subr.bf16.mxu0 0
        %551 = vmatpush2.bf16.msra.mxu0 0
        %552 = vmatprep.subr.bf16.mxu0 0
        %553 = vmatpush2.bf16.msra.mxu0 0
        %554 = vmatprep.subr.bf16.mxu0 0
        %555 = vmatpush2.bf16.msra.mxu0 0
        %556 = vmatprep.subr.bf16.mxu0 0
        %557 = vmatpush2.bf16.msra.mxu0 0
        %558 = vmatprep.subr.bf16.mxu0 0
        %559 = vmatpush2.bf16.msra.mxu0 0
        %560 = vmatprep.subr.bf16.mxu0 0
        %561 = vmatpush2.bf16.msra.mxu0 0
        %562 = vmatprep.mubr.bf16.mxu0 0
        %563 = vmatmul.mubr.bf16.gmra.mxu0 %v467
        %v564 = vpop.f32.mrf.mxu0
        %v565 = vadd.f32 %v332, %v564
        %v566 = vpop.f32.mrf.mxu0
        %v567 = vadd.f32 %v336, %v566
        %v568 = vpop.f32.mrf.mxu0
        %v569 = vadd.f32 %v332, %v568
        %v570 = vpop.f32.mrf.mxu0
        %v571 = vadd.f32 %v336, %v570
        %572 = vmatprep.mubr.bf16.mxu0 0
        %573 = vmatmul.mubr.bf16.gmra.mxu0 %v470
        %v574 = vpop.f32.mrf.mxu0
        %v575 = vadd.f32 %v332, %v574
        %v576 = vpop.f32.mrf.mxu0
        %v577 = vadd.f32 %v336, %v576
        %v578 = vpop.f32.mrf.mxu0
        %v579 = vadd.f32 %v332, %v578
        %v580 = vpop.f32.mrf.mxu0
        %v581 = vadd.f32 %v336, %v580
        %582 = vmatprep.mubr.bf16.mxu0 0
        %583 = vmatmul.mubr.bf16.gmra.mxu0 %v473
        %v584 = vpop.f32.mrf.mxu0
        %v585 = vadd.f32 %v332, %v584
        %v586 = vpop.f32.mrf.mxu0
        %v587 = vadd.f32 %v336, %v586
        %v588 = vpop.f32.mrf.mxu0
        %v589 = vadd.f32 %v332, %v588
        %v590 = vpop.f32.mrf.mxu0
        %v591 = vadd.f32 %v336, %v590
        %592 = vmatprep.mubr.bf16.mxu0 0
        %593 = vmatmul.mubr.bf16.gmra.mxu0 %v476
        %v594 = vpop.f32.mrf.mxu0
        %v595 = vadd.f32 %v332, %v594
        %v596 = vpop.f32.mrf.mxu0
        %v597 = vadd.f32 %v336, %v596
        %v598 = vpop.f32.mrf.mxu0
        %v599 = vadd.f32 %v332, %v598
        %v600 = vpop.f32.mrf.mxu0
        %v601 = vadd.f32 %v336, %v600
        %602 = vmatprep.mubr.bf16.mxu0 0
        %603 = vmatmul.mubr.bf16.gmra.mxu0 %v479
        %v604 = vpop.f32.mrf.mxu0
        %v605 = vadd.f32 %v332, %v604
        %v606 = vpop.f32.mrf.mxu0
        %v607 = vadd.f32 %v336, %v606
        %v608 = vpop.f32.mrf.mxu0
        %v609 = vadd.f32 %v332, %v608
        %v610 = vpop.f32.mrf.mxu0
        %v611 = vadd.f32 %v336, %v610
        %612 = vmatprep.mubr.bf16.mxu0 0
        %613 = vmatmul.mubr.bf16.gmra.mxu0 %v482
        %v614 = vpop.f32.mrf.mxu0
        %v615 = vadd.f32 %v332, %v614
        %v616 = vpop.f32.mrf.mxu0
        %v617 = vadd.f32 %v336, %v616
        %v618 = vpop.f32.mrf.mxu0
        %v619 = vadd.f32 %v332, %v618
        %v620 = vpop.f32.mrf.mxu0
        %v621 = vadd.f32 %v336, %v620
        %622 = vmatprep.mubr.bf16.mxu0 0
        %623 = vmatmul.mubr.bf16.gmra.mxu0 %v485
        %v624 = vpop.f32.mrf.mxu0
        %v625 = vadd.f32 %v332, %v624
        %v626 = vpop.f32.mrf.mxu0
        %v627 = vadd.f32 %v336, %v626
        %v628 = vpop.f32.mrf.mxu0
        %v629 = vadd.f32 %v332, %v628
        %v630 = vpop.f32.mrf.mxu0
        %v631 = vadd.f32 %v336, %v630
        %632 = vmatprep.mubr.bf16.mxu0 0
        %633 = vmatmul.mubr.bf16.gmra.mxu0 %v488
        %v634 = vpop.f32.mrf.mxu0
        %v635 = vadd.f32 %v332, %v634
        %v636 = vpop.f32.mrf.mxu0
        %v637 = vadd.f32 %v336, %v636
        %v638 = vpop.f32.mrf.mxu0
        %v639 = vadd.f32 %v332, %v638
        %v640 = vpop.f32.mrf.mxu0
        %v641 = vadd.f32 %v336, %v640
        %642 = vmatprep.mubr.bf16.mxu0 0
        %643 = vmatmul.mubr.bf16.gmra.mxu0 %v491
        %v644 = vpop.f32.mrf.mxu0
        %v645 = vadd.f32 %v332, %v644
        %v646 = vpop.f32.mrf.mxu0
        %v647 = vadd.f32 %v336, %v646
        %v648 = vpop.f32.mrf.mxu0
        %v649 = vadd.f32 %v332, %v648
        %v650 = vpop.f32.mrf.mxu0
        %v651 = vadd.f32 %v336, %v650
        %652 = vmatprep.mubr.bf16.mxu0 0
        %653 = vmatmul.mubr.bf16.gmra.mxu0 %v494
        %v654 = vpop.f32.mrf.mxu0
        %v655 = vadd.f32 %v332, %v654
        %v656 = vpop.f32.mrf.mxu0
        %v657 = vadd.f32 %v336, %v656
        %v658 = vpop.f32.mrf.mxu0
        %v659 = vadd.f32 %v332, %v658
        %v660 = vpop.f32.mrf.mxu0
        %v661 = vadd.f32 %v336, %v660
        %662 = vmatprep.mubr.bf16.mxu0 0
        %663 = vmatmul.mubr.bf16.gmra.mxu0 %v497
        %v664 = vpop.f32.mrf.mxu0
        %v665 = vadd.f32 %v332, %v664
        %v666 = vpop.f32.mrf.mxu0
        %v667 = vadd.f32 %v336, %v666
        %v668 = vpop.f32.mrf.mxu0
        %v669 = vadd.f32 %v332, %v668
        %v670 = vpop.f32.mrf.mxu0
        %v671 = vadd.f32 %v336, %v670
        %672 = vmatprep.mubr.bf16.mxu0 0
        %673 = vmatmul.mubr.bf16.gmra.mxu0 %v500
        %v674 = vpop.f32.mrf.mxu0
        %v675 = vadd.f32 %v332, %v674
        %v676 = vpop.f32.mrf.mxu0
        %v677 = vadd.f32 %v336, %v676
        %v678 = vpop.f32.mrf.mxu0
        %v679 = vadd.f32 %v332, %v678
        %v680 = vpop.f32.mrf.mxu0
        %v681 = vadd.f32 %v336, %v680
        %682 = vmatprep.mubr.bf16.mxu0 0
        %683 = vmatmul.mubr.bf16.gmra.mxu0 %v503
        %v684 = vpop.f32.mrf.mxu0
        %v685 = vadd.f32 %v332, %v684
        %v686 = vpop.f32.mrf.mxu0
        %v687 = vadd.f32 %v336, %v686
        %v688 = vpop.f32.mrf.mxu0
        %v689 = vadd.f32 %v332, %v688
        %v690 = vpop.f32.mrf.mxu0
        %v691 = vadd.f32 %v336, %v690
        %692 = vmatprep.mubr.bf16.mxu0 0
        %693 = vmatmul.mubr.bf16.gmra.mxu0 %v506
        %v694 = vpop.f32.mrf.mxu0
        %v695 = vadd.f32 %v332, %v694
        %v696 = vpop.f32.mrf.mxu0
        %v697 = vadd.f32 %v336, %v696
        %v698 = vpop.f32.mrf.mxu0
        %v699 = vadd.f32 %v332, %v698
        %v700 = vpop.f32.mrf.mxu0
        %v701 = vadd.f32 %v336, %v700
        %702 = vmatprep.mubr.bf16.mxu0 0
        %703 = vmatmul.mubr.bf16.gmra.mxu0 %v509
        %v704 = vpop.f32.mrf.mxu0
        %v705 = vadd.f32 %v332, %v704
        %v706 = vpop.f32.mrf.mxu0
        %v707 = vadd.f32 %v336, %v706
        %v708 = vpop.f32.mrf.mxu0
        %v709 = vadd.f32 %v332, %v708
        %v710 = vpop.f32.mrf.mxu0
        %v711 = vadd.f32 %v336, %v710
        %712 = vmatprep.mubr.bf16.mxu0 0
        %713 = vmatmul.mubr.bf16.gmra.mxu0 %v512
        %v714 = vpop.f32.mrf.mxu0
        %v715 = vadd.f32 %v332, %v714
        %v716 = vpop.f32.mrf.mxu0
        %v717 = vadd.f32 %v336, %v716
        %v718 = vpop.f32.mrf.mxu0
        %v719 = vadd.f32 %v332, %v718
        %v720 = vpop.f32.mrf.mxu0
        %v721 = vadd.f32 %v336, %v720
        %722 = vdwg.mxu0
        %723 = vmatprep.subr.bf16.mxu0 0
        %724 = vmatpush1.bf16.msra.mxu0 0
        %725 = vmatprep.subr.bf16.mxu0 0
        %726 = vmatpush1.bf16.msra.mxu0 0
        %727 = vmatprep.subr.bf16.mxu0 0
        %728 = vmatpush1.bf16.msra.mxu0 0
        %729 = vmatprep.subr.bf16.mxu0 0
        %730 = vmatpush1.bf16.msra.mxu0 0
        %731 = vmatprep.subr.bf16.mxu0 0
        %732 = vmatpush1.bf16.msra.mxu0 0
        %733 = vmatprep.subr.bf16.mxu0 0
        %734 = vmatpush1.bf16.msra.mxu0 0
        %735 = vmatprep.subr.bf16.mxu0 %v528
        %736 = vmatpush1.bf16.msra.mxu0 %v525
        %737 = vmatprep.subr.bf16.mxu0 %v456
        %738 = vmatpush1.bf16.msra.mxu0 %v455
        %739 = vmatprep.subr.bf16.mxu0 0
        %740 = vmatpush2.bf16.msra.mxu0 0
        %741 = vmatprep.subr.bf16.mxu0 0
        %742 = vmatpush2.bf16.msra.mxu0 0
        %743 = vmatprep.subr.bf16.mxu0 0
        %744 = vmatpush2.bf16.msra.mxu0 0
        %745 = vmatprep.subr.bf16.mxu0 0
        %746 = vmatpush2.bf16.msra.mxu0 0
        %747 = vmatprep.subr.bf16.mxu0 0
        %748 = vmatpush2.bf16.msra.mxu0 0
        %749 = vmatprep.subr.bf16.mxu0 0
        %750 = vmatpush2.bf16.msra.mxu0 0
        %751 = vmatprep.subr.bf16.mxu0 0
        %752 = vmatpush2.bf16.msra.mxu0 0
        %753 = vmatprep.subr.bf16.mxu0 0
        %754 = vmatpush2.bf16.msra.mxu0 0
        %755 = vmatprep.mubr.bf16.mxu0 0
        %756 = vmatmul.mubr.bf16.gmra.mxu0 %v467
        %v757 = vpop.f32.mrf.mxu0
        %v758 = vadd.f32 %v340, %v757
        %v759 = vpop.f32.mrf.mxu0
        %v760 = vadd.f32 %v344, %v759
        %v761 = vpop.f32.mrf.mxu0
        %v762 = vadd.f32 %v340, %v761
        %v763 = vpop.f32.mrf.mxu0
        %v764 = vadd.f32 %v344, %v763
        %765 = vmatprep.mubr.bf16.mxu0 0
        %766 = vmatmul.mubr.bf16.gmra.mxu0 %v470
        %v767 = vpop.f32.mrf.mxu0
        %v768 = vadd.f32 %v340, %v767
        %v769 = vpop.f32.mrf.mxu0
        %v770 = vadd.f32 %v344, %v769
        %v771 = vpop.f32.mrf.mxu0
        %v772 = vadd.f32 %v340, %v771
        %v773 = vpop.f32.mrf.mxu0
        %v774 = vadd.f32 %v344, %v773
        %775 = vmatprep.mubr.bf16.mxu0 0
        %776 = vmatmul.mubr.bf16.gmra.mxu0 %v473
        %v777 = vpop.f32.mrf.mxu0
        %v778 = vadd.f32 %v340, %v777
        %v779 = vpop.f32.mrf.mxu0
        %v780 = vadd.f32 %v344, %v779
        %v781 = vpop.f32.mrf.mxu0
        %v782 = vadd.f32 %v340, %v781
        %v783 = vpop.f32.mrf.mxu0
        %v784 = vadd.f32 %v344, %v783
        %785 = vmatprep.mubr.bf16.mxu0 0
        %786 = vmatmul.mubr.bf16.gmra.mxu0 %v476
        %v787 = vpop.f32.mrf.mxu0
        %v788 = vadd.f32 %v340, %v787
        %v789 = vpop.f32.mrf.mxu0
        %v790 = vadd.f32 %v344, %v789
        %v791 = vpop.f32.mrf.mxu0
        %v792 = vadd.f32 %v340, %v791
        %v793 = vpop.f32.mrf.mxu0
        %v794 = vadd.f32 %v344, %v793
        %795 = vmatprep.mubr.bf16.mxu0 0
        %796 = vmatmul.mubr.bf16.gmra.mxu0 %v479
        %v797 = vpop.f32.mrf.mxu0
        %v798 = vadd.f32 %v340, %v797
        %v799 = vpop.f32.mrf.mxu0
        %v800 = vadd.f32 %v344, %v799
        %v801 = vpop.f32.mrf.mxu0
        %v802 = vadd.f32 %v340, %v801
        %v803 = vpop.f32.mrf.mxu0
        %v804 = vadd.f32 %v344, %v803
        %805 = vmatprep.mubr.bf16.mxu0 0
        %806 = vmatmul.mubr.bf16.gmra.mxu0 %v482
        %v807 = vpop.f32.mrf.mxu0
        %v808 = vadd.f32 %v340, %v807
        %v809 = vpop.f32.mrf.mxu0
        %v810 = vadd.f32 %v344, %v809
        %v811 = vpop.f32.mrf.mxu0
        %v812 = vadd.f32 %v340, %v811
        %v813 = vpop.f32.mrf.mxu0
        %v814 = vadd.f32 %v344, %v813
        %815 = vmatprep.mubr.bf16.mxu0 0
        %816 = vmatmul.mubr.bf16.gmra.mxu0 %v485
        %v817 = vpop.f32.mrf.mxu0
        %v818 = vadd.f32 %v340, %v817
        %v819 = vpop.f32.mrf.mxu0
        %v820 = vadd.f32 %v344, %v819
        %v821 = vpop.f32.mrf.mxu0
        %v822 = vadd.f32 %v340, %v821
        %v823 = vpop.f32.mrf.mxu0
        %v824 = vadd.f32 %v344, %v823
        %825 = vmatprep.mubr.bf16.mxu0 0
        %826 = vmatmul.mubr.bf16.gmra.mxu0 %v488
        %v827 = vpop.f32.mrf.mxu0
        %v828 = vadd.f32 %v340, %v827
        %v829 = vpop.f32.mrf.mxu0
        %v830 = vadd.f32 %v344, %v829
        %v831 = vpop.f32.mrf.mxu0
        %v832 = vadd.f32 %v340, %v831
        %v833 = vpop.f32.mrf.mxu0
        %v834 = vadd.f32 %v344, %v833
        %835 = vmatprep.mubr.bf16.mxu0 0
        %836 = vmatmul.mubr.bf16.gmra.mxu0 %v491
        %v837 = vpop.f32.mrf.mxu0
        %v838 = vadd.f32 %v340, %v837
        %v839 = vpop.f32.mrf.mxu0
        %v840 = vadd.f32 %v344, %v839
        %v841 = vpop.f32.mrf.mxu0
        %v842 = vadd.f32 %v340, %v841
        %v843 = vpop.f32.mrf.mxu0
        %v844 = vadd.f32 %v344, %v843
        %845 = vmatprep.mubr.bf16.mxu0 0
        %846 = vmatmul.mubr.bf16.gmra.mxu0 %v494
        %v847 = vpop.f32.mrf.mxu0
        %v848 = vadd.f32 %v340, %v847
        %v849 = vpop.f32.mrf.mxu0
        %v850 = vadd.f32 %v344, %v849
        %v851 = vpop.f32.mrf.mxu0
        %v852 = vadd.f32 %v340, %v851
        %v853 = vpop.f32.mrf.mxu0
        %v854 = vadd.f32 %v344, %v853
        %855 = vmatprep.mubr.bf16.mxu0 0
        %856 = vmatmul.mubr.bf16.gmra.mxu0 %v497
        %v857 = vpop.f32.mrf.mxu0
        %v858 = vadd.f32 %v340, %v857
        %v859 = vpop.f32.mrf.mxu0
        %v860 = vadd.f32 %v344, %v859
        %v861 = vpop.f32.mrf.mxu0
        %v862 = vadd.f32 %v340, %v861
        %v863 = vpop.f32.mrf.mxu0
        %v864 = vadd.f32 %v344, %v863
        %865 = vmatprep.mubr.bf16.mxu0 0
        %866 = vmatmul.mubr.bf16.gmra.mxu0 %v500
        %v867 = vpop.f32.mrf.mxu0
        %v868 = vadd.f32 %v340, %v867
        %v869 = vpop.f32.mrf.mxu0
        %v870 = vadd.f32 %v344, %v869
        %v871 = vpop.f32.mrf.mxu0
        %v872 = vadd.f32 %v340, %v871
        %v873 = vpop.f32.mrf.mxu0
        %v874 = vadd.f32 %v344, %v873
        %875 = vmatprep.mubr.bf16.mxu0 0
        %876 = vmatmul.mubr.bf16.gmra.mxu0 %v503
        %v877 = vpop.f32.mrf.mxu0
        %v878 = vadd.f32 %v340, %v877
        %v879 = vpop.f32.mrf.mxu0
        %v880 = vadd.f32 %v344, %v879
        %v881 = vpop.f32.mrf.mxu0
        %v882 = vadd.f32 %v340, %v881
        %v883 = vpop.f32.mrf.mxu0
        %v884 = vadd.f32 %v344, %v883
        %885 = vmatprep.mubr.bf16.mxu0 0
        %886 = vmatmul.mubr.bf16.gmra.mxu0 %v506
        %v887 = vpop.f32.mrf.mxu0
        %v888 = vadd.f32 %v340, %v887
        %v889 = vpop.f32.mrf.mxu0
        %v890 = vadd.f32 %v344, %v889
        %v891 = vpop.f32.mrf.mxu0
        %v892 = vadd.f32 %v340, %v891
        %v893 = vpop.f32.mrf.mxu0
        %v894 = vadd.f32 %v344, %v893
        %895 = vmatprep.mubr.bf16.mxu0 0
        %896 = vmatmul.mubr.bf16.gmra.mxu0 %v509
        %v897 = vpop.f32.mrf.mxu0
        %v898 = vadd.f32 %v340, %v897
        %v899 = vpop.f32.mrf.mxu0
        %v900 = vadd.f32 %v344, %v899
        %v901 = vpop.f32.mrf.mxu0
        %v902 = vadd.f32 %v340, %v901
        %v903 = vpop.f32.mrf.mxu0
        %v904 = vadd.f32 %v344, %v903
        %905 = vmatprep.mubr.bf16.mxu0 0
        %906 = vmatmul.mubr.bf16.gmra.mxu0 %v512
        %v907 = vpop.f32.mrf.mxu0
        %v908 = vadd.f32 %v340, %v907
        %v909 = vpop.f32.mrf.mxu0
        %v910 = vadd.f32 %v344, %v909
        %v911 = vpop.f32.mrf.mxu0
        %v912 = vadd.f32 %v340, %v911
        %v913 = vpop.f32.mrf.mxu0
        %v914 = vadd.f32 %v344, %v913
        %915 = vdwg.mxu0
        %v916 = vmax.f32 %v565, 0.0
        %v917 = vmax.f32 %v567, 0.0
        %v918 = vmax.f32 %v758, 0.0
        %v919 = vmax.f32 %v760, 0.0
        %v920 = vmax.f32 %v569, 0.0
        %v921 = vmax.f32 %v571, 0.0
        %v922 = vmax.f32 %v762, 0.0
        %v923 = vmax.f32 %v764, 0.0
        %v924 = vmax.f32 %v575, 0.0
        %v925 = vmax.f32 %v577, 0.0
        %v926 = vmax.f32 %v768, 0.0
        %v927 = vmax.f32 %v770, 0.0
        %v928 = vmax.f32 %v579, 0.0
        %v929 = vmax.f32 %v581, 0.0
        %v930 = vmax.f32 %v772, 0.0
        %v931 = vmax.f32 %v774, 0.0
        %v932 = vmax.f32 %v585, 0.0
        %v933 = vmax.f32 %v587, 0.0
        %v934 = vmax.f32 %v778, 0.0
        %v935 = vmax.f32 %v780, 0.0
        %v936 = vmax.f32 %v589, 0.0
        %v937 = vmax.f32 %v591, 0.0
        %v938 = vmax.f32 %v782, 0.0
        %v939 = vmax.f32 %v784, 0.0
        %v940 = vmax.f32 %v595, 0.0
        %v941 = vmax.f32 %v597, 0.0
        %v942 = vmax.f32 %v788, 0.0
        %v943 = vmax.f32 %v790, 0.0
        %v944 = vmax.f32 %v599, 0.0
        %v945 = vmax.f32 %v601, 0.0
        %v946 = vmax.f32 %v792, 0.0
        %v947 = vmax.f32 %v794, 0.0
        %v948 = vmax.f32 %v605, 0.0
        %v949 = vmax.f32 %v607, 0.0
        %v950 = vmax.f32 %v798, 0.0
        %v951 = vmax.f32 %v800, 0.0
        %v952 = vmax.f32 %v609, 0.0
        %v953 = vmax.f32 %v611, 0.0
        %v954 = vmax.f32 %v802, 0.0
        %v955 = vmax.f32 %v804, 0.0
        %v956 = vmax.f32 %v615, 0.0
        %v957 = vmax.f32 %v617, 0.0
        %v958 = vmax.f32 %v808, 0.0
        %v959 = vmax.f32 %v810, 0.0
        %v960 = vmax.f32 %v619, 0.0
        %v961 = vmax.f32 %v621, 0.0
        %v962 = vmax.f32 %v812, 0.0
        %v963 = vmax.f32 %v814, 0.0
        %v964 = vmax.f32 %v625, 0.0
        %v965 = vmax.f32 %v627, 0.0
        %v966 = vmax.f32 %v818, 0.0
        %v967 = vmax.f32 %v820, 0.0
        %v968 = vmax.f32 %v629, 0.0
        %v969 = vmax.f32 %v631, 0.0
        %v970 = vmax.f32 %v822, 0.0
        %v971 = vmax.f32 %v824, 0.0
        %v972 = vmax.f32 %v635, 0.0
        %v973 = vmax.f32 %v637, 0.0
        %v974 = vmax.f32 %v828, 0.0
        %v975 = vmax.f32 %v830, 0.0
        %v976 = vmax.f32 %v639, 0.0
        %v977 = vmax.f32 %v641, 0.0
        %v978 = vmax.f32 %v832, 0.0
        %v979 = vmax.f32 %v834, 0.0
        %v980 = vmax.f32 %v645, 0.0
        %v981 = vmax.f32 %v647, 0.0
        %v982 = vmax.f32 %v838, 0.0
        %v983 = vmax.f32 %v840, 0.0
        %v984 = vmax.f32 %v649, 0.0
        %v985 = vmax.f32 %v651, 0.0
        %v986 = vmax.f32 %v842, 0.0
        %v987 = vmax.f32 %v844, 0.0
        %v988 = vmax.f32 %v655, 0.0
        %v989 = vmax.f32 %v657, 0.0
        %v990 = vmax.f32 %v848, 0.0
        %v991 = vmax.f32 %v850, 0.0
        %v992 = vmax.f32 %v659, 0.0
        %v993 = vmax.f32 %v661, 0.0
        %v994 = vmax.f32 %v852, 0.0
        %v995 = vmax.f32 %v854, 0.0
        %v996 = vmax.f32 %v665, 0.0
        %v997 = vmax.f32 %v667, 0.0
        %v998 = vmax.f32 %v858, 0.0
        %v999 = vmax.f32 %v860, 0.0
        %v1000 = vmax.f32 %v669, 0.0
        %v1001 = vmax.f32 %v671, 0.0
        %v1002 = vmax.f32 %v862, 0.0
        %v1003 = vmax.f32 %v864, 0.0
        %v1004 = vmax.f32 %v675, 0.0
        %v1005 = vmax.f32 %v677, 0.0
        %v1006 = vmax.f32 %v868, 0.0
        %v1007 = vmax.f32 %v870, 0.0
        %v1008 = vmax.f32 %v679, 0.0
        %v1009 = vmax.f32 %v681, 0.0
        %v1010 = vmax.f32 %v872, 0.0
        %v1011 = vmax.f32 %v874, 0.0
        %v1012 = vmax.f32 %v685, 0.0
        %v1013 = vmax.f32 %v687, 0.0
        %v1014 = vmax.f32 %v878, 0.0
        %v1015 = vmax.f32 %v880, 0.0
        %v1016 = vmax.f32 %v689, 0.0
        %v1017 = vmax.f32 %v691, 0.0
        %v1018 = vmax.f32 %v882, 0.0
        %v1019 = vmax.f32 %v884, 0.0
        %v1020 = vmax.f32 %v695, 0.0
        %v1021 = vmax.f32 %v697, 0.0
        %v1022 = vmax.f32 %v888, 0.0
        %v1023 = vmax.f32 %v890, 0.0
        %v1024 = vmax.f32 %v699, 0.0
        %v1025 = vmax.f32 %v701, 0.0
        %v1026 = vmax.f32 %v892, 0.0
        %v1027 = vmax.f32 %v894, 0.0
        %v1028 = vmax.f32 %v705, 0.0
        %v1029 = vmax.f32 %v707, 0.0
        %v1030 = vmax.f32 %v898, 0.0
        %v1031 = vmax.f32 %v900, 0.0
        %v1032 = vmax.f32 %v709, 0.0
        %v1033 = vmax.f32 %v711, 0.0
        %v1034 = vmax.f32 %v902, 0.0
        %v1035 = vmax.f32 %v904, 0.0
        %v1036 = vmax.f32 %v715, 0.0
        %v1037 = vmax.f32 %v717, 0.0
        %v1038 = vmax.f32 %v908, 0.0
        %v1039 = vmax.f32 %v910, 0.0
        %v1040 = vmax.f32 %v719, 0.0
        %v1041 = vmax.f32 %v721, 0.0
        %v1042 = vmax.f32 %v912, 0.0
        %v1043 = vmax.f32 %v914, 0.0
        %1044 = vst [vmem:[%s245] sm:$0xff] %v916
        %1045 = vst [vmem:[%s245 + $0x8] sm:$0xff] %v917
        %1046 = vst [vmem:[%s245 + $0x10] sm:$0xff] %v918
        %1047 = vst [vmem:[%s245 + $0x18] sm:$0xff] %v919
        %1048 = vst [vmem:[%s245 + $0x20] sm:$0xff] %v920
        %1049 = vst [vmem:[%s245 + $0x28] sm:$0xff] %v921
        %1050 = vst [vmem:[%s245 + $0x30] sm:$0xff] %v922
        %1051 = vst [vmem:[%s245 + $0x38] sm:$0xff] %v923
        %1052 = vst [vmem:[%s245 + $0x40] sm:$0xff] %v924
        %1053 = vst [vmem:[%s245 + $0x48] sm:$0xff] %v925
        %1054 = vst [vmem:[%s245 + $0x50] sm:$0xff] %v926
        %1055 = vst [vmem:[%s245 + $0x58] sm:$0xff] %v927
        %1056 = vst [vmem:[%s245 + $0x60] sm:$0xff] %v928
        %1057 = vst [vmem:[%s245 + $0x68] sm:$0xff] %v929
        %1058 = vst [vmem:[%s245 + $0x70] sm:$0xff] %v930
        %1059 = vst [vmem:[%s245 + $0x78] sm:$0xff] %v931
        %1060 = vst [vmem:[%s245 + $0x80] sm:$0xff] %v932
        %1061 = vst [vmem:[%s245 + $0x88] sm:$0xff] %v933
        %1062 = vst [vmem:[%s245 + $0x90] sm:$0xff] %v934
        %1063 = vst [vmem:[%s245 + $0x98] sm:$0xff] %v935
        %1064 = vst [vmem:[%s245 + $0xa0] sm:$0xff] %v936
        %1065 = vst [vmem:[%s245 + $0xa8] sm:$0xff] %v937
        %1066 = vst [vmem:[%s245 + $0xb0] sm:$0xff] %v938
        %1067 = vst [vmem:[%s245 + $0xb8] sm:$0xff] %v939
        %1068 = vst [vmem:[%s245 + $0xc0] sm:$0xff] %v940
        %1069 = vst [vmem:[%s245 + $0xc8] sm:$0xff] %v941
        %1070 = vst [vmem:[%s245 + $0xd0] sm:$0xff] %v942
        %1071 = vst [vmem:[%s245 + $0xd8] sm:$0xff] %v943
        %1072 = vst [vmem:[%s245 + $0xe0] sm:$0xff] %v944
        %1073 = vst [vmem:[%s245 + $0xe8] sm:$0xff] %v945
        %1074 = vst [vmem:[%s245 + $0xf0] sm:$0xff] %v946
        %1075 = vst [vmem:[%s245 + $0xf8] sm:$0xff] %v947
        %1076 = vst [vmem:[%s245 + $0x100] sm:$0xff] %v948
        %1077 = vst [vmem:[%s245 + $0x108] sm:$0xff] %v949
        %1078 = vst [vmem:[%s245 + $0x110] sm:$0xff] %v950
        %1079 = vst [vmem:[%s245 + $0x118] sm:$0xff] %v951
        %1080 = vst [vmem:[%s245 + $0x120] sm:$0xff] %v952
        %1081 = vst [vmem:[%s245 + $0x128] sm:$0xff] %v953
        %1082 = vst [vmem:[%s245 + $0x130] sm:$0xff] %v954
        %1083 = vst [vmem:[%s245 + $0x138] sm:$0xff] %v955
        %1084 = vst [vmem:[%s245 + $0x140] sm:$0xff] %v956
        %1085 = vst [vmem:[%s245 + $0x148] sm:$0xff] %v957
        %1086 = vst [vmem:[%s245 + $0x150] sm:$0xff] %v958
        %1087 = vst [vmem:[%s245 + $0x158] sm:$0xff] %v959
        %1088 = vst [vmem:[%s245 + $0x160] sm:$0xff] %v960
        %1089 = vst [vmem:[%s245 + $0x168] sm:$0xff] %v961
        %1090 = vst [vmem:[%s245 + $0x170] sm:$0xff] %v962
        %1091 = vst [vmem:[%s245 + $0x178] sm:$0xff] %v963
        %1092 = vst [vmem:[%s245 + $0x180] sm:$0xff] %v964
        %1093 = vst [vmem:[%s245 + $0x188] sm:$0xff] %v965
        %1094 = vst [vmem:[%s245 + $0x190] sm:$0xff] %v966
        %1095 = vst [vmem:[%s245 + $0x198] sm:$0xff] %v967
        %1096 = vst [vmem:[%s245 + $0x1a0] sm:$0xff] %v968
        %1097 = vst [vmem:[%s245 + $0x1a8] sm:$0xff] %v969
        %1098 = vst [vmem:[%s245 + $0x1b0] sm:$0xff] %v970
        %1099 = vst [vmem:[%s245 + $0x1b8] sm:$0xff] %v971
        %1100 = vst [vmem:[%s245 + $0x1c0] sm:$0xff] %v972
        %1101 = vst [vmem:[%s245 + $0x1c8] sm:$0xff] %v973
        %1102 = vst [vmem:[%s245 + $0x1d0] sm:$0xff] %v974
        %1103 = vst [vmem:[%s245 + $0x1d8] sm:$0xff] %v975
        %1104 = vst [vmem:[%s245 + $0x1e0] sm:$0xff] %v976
        %1105 = vst [vmem:[%s245 + $0x1e8] sm:$0xff] %v977
        %1106 = vst [vmem:[%s245 + $0x1f0] sm:$0xff] %v978
        %1107 = vst [vmem:[%s245 + $0x1f8] sm:$0xff] %v979
        %1108 = vst [vmem:[%s245 + $0x200] sm:$0xff] %v980
        %1109 = vst [vmem:[%s245 + $0x208] sm:$0xff] %v981
        %1110 = vst [vmem:[%s245 + $0x210] sm:$0xff] %v982
        %1111 = vst [vmem:[%s245 + $0x218] sm:$0xff] %v983
        %1112 = vst [vmem:[%s245 + $0x220] sm:$0xff] %v984
        %1113 = vst [vmem:[%s245 + $0x228] sm:$0xff] %v985
        %1114 = vst [vmem:[%s245 + $0x230] sm:$0xff] %v986
        %1115 = vst [vmem:[%s245 + $0x238] sm:$0xff] %v987
        %1116 = vst [vmem:[%s245 + $0x240] sm:$0xff] %v988
        %1117 = vst [vmem:[%s245 + $0x248] sm:$0xff] %v989
        %1118 = vst [vmem:[%s245 + $0x250] sm:$0xff] %v990
        %1119 = vst [vmem:[%s245 + $0x258] sm:$0xff] %v991
        %1120 = vst [vmem:[%s245 + $0x260] sm:$0xff] %v992
        %1121 = vst [vmem:[%s245 + $0x268] sm:$0xff] %v993
        %1122 = vst [vmem:[%s245 + $0x270] sm:$0xff] %v994
        %1123 = vst [vmem:[%s245 + $0x278] sm:$0xff] %v995
        %1124 = vst [vmem:[%s245 + $0x280] sm:$0xff] %v996
        %1125 = vst [vmem:[%s245 + $0x288] sm:$0xff] %v997
        %1126 = vst [vmem:[%s245 + $0x290] sm:$0xff] %v998
        %1127 = vst [vmem:[%s245 + $0x298] sm:$0xff] %v999
        %1128 = vst [vmem:[%s245 + $0x2a0] sm:$0xff] %v1000
        %1129 = vst [vmem:[%s245 + $0x2a8] sm:$0xff] %v1001
        %1130 = vst [vmem:[%s245 + $0x2b0] sm:$0xff] %v1002
        %1131 = vst [vmem:[%s245 + $0x2b8] sm:$0xff] %v1003
        %1132 = vst [vmem:[%s245 + $0x2c0] sm:$0xff] %v1004
        %1133 = vst [vmem:[%s245 + $0x2c8] sm:$0xff] %v1005
        %1134 = vst [vmem:[%s245 + $0x2d0] sm:$0xff] %v1006
        %1135 = vst [vmem:[%s245 + $0x2d8] sm:$0xff] %v1007
        %1136 = vst [vmem:[%s245 + $0x2e0] sm:$0xff] %v1008
        %1137 = vst [vmem:[%s245 + $0x2e8] sm:$0xff] %v1009
        %1138 = vst [vmem:[%s245 + $0x2f0] sm:$0xff] %v1010
        %1139 = vst [vmem:[%s245 + $0x2f8] sm:$0xff] %v1011
        %1140 = vst [vmem:[%s245 + $0x300] sm:$0xff] %v1012
        %1141 = vst [vmem:[%s245 + $0x308] sm:$0xff] %v1013
        %1142 = vst [vmem:[%s245 + $0x310] sm:$0xff] %v1014
        %1143 = vst [vmem:[%s245 + $0x318] sm:$0xff] %v1015
        %1144 = vst [vmem:[%s245 + $0x320] sm:$0xff] %v1016
        %1145 = vst [vmem:[%s245 + $0x328] sm:$0xff] %v1017
        %1146 = vst [vmem:[%s245 + $0x330] sm:$0xff] %v1018
        %1147 = vst [vmem:[%s245 + $0x338] sm:$0xff] %v1019
        %1148 = vst [vmem:[%s245 + $0x340] sm:$0xff] %v1020
        %1149 = vst [vmem:[%s245 + $0x348] sm:$0xff] %v1021
        %1150 = vst [vmem:[%s245 + $0x350] sm:$0xff] %v1022
        %1151 = vst [vmem:[%s245 + $0x358] sm:$0xff] %v1023
        %1152 = vst [vmem:[%s245 + $0x360] sm:$0xff] %v1024
        %1153 = vst [vmem:[%s245 + $0x368] sm:$0xff] %v1025
        %1154 = vst [vmem:[%s245 + $0x370] sm:$0xff] %v1026
        %1155 = vst [vmem:[%s245 + $0x378] sm:$0xff] %v1027
        %1156 = vst [vmem:[%s245 + $0x380] sm:$0xff] %v1028
        %1157 = vst [vmem:[%s245 + $0x388] sm:$0xff] %v1029
        %1158 = vst [vmem:[%s245 + $0x390] sm:$0xff] %v1030
        %1159 = vst [vmem:[%s245 + $0x398] sm:$0xff] %v1031
        %1160 = vst [vmem:[%s245 + $0x3a0] sm:$0xff] %v1032
        %1161 = vst [vmem:[%s245 + $0x3a8] sm:$0xff] %v1033
        %1162 = vst [vmem:[%s245 + $0x3b0] sm:$0xff] %v1034
        %1163 = vst [vmem:[%s245 + $0x3b8] sm:$0xff] %v1035
        %1164 = vst [vmem:[%s245 + $0x3c0] sm:$0xff] %v1036
        %1165 = vst [vmem:[%s245 + $0x3c8] sm:$0xff] %v1037
        %1166 = vst [vmem:[%s245 + $0x3d0] sm:$0xff] %v1038
        %1167 = vst [vmem:[%s245 + $0x3d8] sm:$0xff] %v1039
        %1168 = vst [vmem:[%s245 + $0x3e0] sm:$0xff] %v1040
        %1169 = vst [vmem:[%s245 + $0x3e8] sm:$0xff] %v1041
        %1170 = vst [vmem:[%s245 + $0x3f0] sm:$0xff] %v1042
        %1171 = vst [vmem:[%s245 + $0x3f8] sm:$0xff] %v1043
        %s1172 = sand.u32 %s127, 1
        %s1173 = sand.u32 %s127, 1
        %s1174 = smul.addr %s1173, 1024
        %s1175 = scalar_lea.vmem [#allocation2], %s1174
        // Predicated region
        $region33: #{model_forward.3} parent=31 // pred_check
          %p1176 = pneg %p137
        $region34: #{model_forward.3} parent=31 // pred_check_branch
          %1178 = sbr.rel (%p1176) target = $region36
        $region35: #{model_forward.3} parent=31 // pred_region
          %s1179 = smul.u32 32, %s20
          %s1180 = smul.u32 4, %s21
          %s1181 = ssub.s32 990, %s1179
          %p1182 = scmp.lt.s32.totalorder %s1181, 32
          %s1183 = scalar_select %p1182, %s1181, 32
          %s1184 = smul.u32 128, %s1183
          %s1185 = smul.u32 %s1184, 4
          %p1186 = scmp.ne.s32.totalorder 0, %s1185
          %s1187 = smul.addr %s1179, 4
          %s1188 = sadd.s32 %s1180, %s1187
          %s1189 = smul.addr %s19, 3960
          %s1190 = sadd.s32 %s1188, %s1189
          %s1191 = smul.addr %s1190, 8
          %s1192 = scalar_lea.vmem %s3, %s1191
          // Predicated region
          $region37: #{model_forward.3} parent=35 // pred_check
            %p1193 = pneg %p1186
          $region38: #{model_forward.3} parent=35 // pred_check_branch
            %1195 = sbr.rel (%p1193) target = $region40
          $region39: #{model_forward.3} parent=35 // pred_region
            // Predicated region
            $region41: #{model_forward.3} parent=39 // pred_check
              _
            $region42: #{model_forward.3} parent=39 // pred_check_branch
              %1197 = sbr.rel (0) target = $region44
            $region43: #{model_forward.3} parent=39 // pred_region
              %s1198 = sshrl.u32 %s1183, 4
              // While loop
              $region45: #{model_forward.3} parent=43 // loop_pre_header
                _
              $region46: #{model_forward.3} parent=43 // loop_header
                %s1200 = sphi 0, %s1202
                %p1201 = scmp.ge.s32.totalorder %s1200, %s1198
                %s1205 = sphi 0, %s1338
                %s1206 = sphi %s1175, %s1341
                %s1207 = sphi %s1192, %s1342
              $region47: #{model_forward.3} parent=43 // loop_header_branch
                %1204 = sbr.rel (%p1201) target = $region51
              $region48: #{model_forward.3} parent=43 // loop_body
                %v1208 = vld [vmem:[%s1206] sm:$0xff]
                %1209 = vst [vmem:[%s1207] sm:$0xff] %v1208
                %v1210 = vld [vmem:[%s1206 + $0x20] sm:$0xff]
                %1211 = vst [vmem:[%s1207 + $0x20] sm:$0xff] %v1210
                %v1212 = vld [vmem:[%s1206 + $0x40] sm:$0xff]
                %1213 = vst [vmem:[%s1207 + $0x40] sm:$0xff] %v1212
                %v1214 = vld [vmem:[%s1206 + $0x60] sm:$0xff]
                %1215 = vst [vmem:[%s1207 + $0x60] sm:$0xff] %v1214
                %v1216 = vld [vmem:[%s1206 + $0x80] sm:$0xff]
                %1217 = vst [vmem:[%s1207 + $0x80] sm:$0xff] %v1216
                %v1218 = vld [vmem:[%s1206 + $0xa0] sm:$0xff]
                %1219 = vst [vmem:[%s1207 + $0xa0] sm:$0xff] %v1218
                %v1220 = vld [vmem:[%s1206 + $0xc0] sm:$0xff]
                %1221 = vst [vmem:[%s1207 + $0xc0] sm:$0xff] %v1220
                %v1222 = vld [vmem:[%s1206 + $0xe0] sm:$0xff]
                %1223 = vst [vmem:[%s1207 + $0xe0] sm:$0xff] %v1222
                %v1224 = vld [vmem:[%s1206 + $0x100] sm:$0xff]
                %1225 = vst [vmem:[%s1207 + $0x100] sm:$0xff] %v1224
                %v1226 = vld [vmem:[%s1206 + $0x120] sm:$0xff]
                %1227 = vst [vmem:[%s1207 + $0x120] sm:$0xff] %v1226
                %v1228 = vld [vmem:[%s1206 + $0x140] sm:$0xff]
                %1229 = vst [vmem:[%s1207 + $0x140] sm:$0xff] %v1228
                %v1230 = vld [vmem:[%s1206 + $0x160] sm:$0xff]
                %1231 = vst [vmem:[%s1207 + $0x160] sm:$0xff] %v1230
                %v1232 = vld [vmem:[%s1206 + $0x180] sm:$0xff]
                %1233 = vst [vmem:[%s1207 + $0x180] sm:$0xff] %v1232
                %v1234 = vld [vmem:[%s1206 + $0x1a0] sm:$0xff]
                %1235 = vst [vmem:[%s1207 + $0x1a0] sm:$0xff] %v1234
                %v1236 = vld [vmem:[%s1206 + $0x1c0] sm:$0xff]
                %1237 = vst [vmem:[%s1207 + $0x1c0] sm:$0xff] %v1236
                %v1238 = vld [vmem:[%s1206 + $0x1e0] sm:$0xff]
                %1239 = vst [vmem:[%s1207 + $0x1e0] sm:$0xff] %v1238
                %v1240 = vld [vmem:[%s1206 + $0x8] sm:$0xff]
                %1241 = vst [vmem:[%s1207 + $0x8] sm:$0xff] %v1240
                %v1242 = vld [vmem:[%s1206 + $0x28] sm:$0xff]
                %1243 = vst [vmem:[%s1207 + $0x28] sm:$0xff] %v1242
                %v1244 = vld [vmem:[%s1206 + $0x48] sm:$0xff]
                %1245 = vst [vmem:[%s1207 + $0x48] sm:$0xff] %v1244
                %v1246 = vld [vmem:[%s1206 + $0x68] sm:$0xff]
                %1247 = vst [vmem:[%s1207 + $0x68] sm:$0xff] %v1246
                %v1248 = vld [vmem:[%s1206 + $0x88] sm:$0xff]
                %1249 = vst [vmem:[%s1207 + $0x88] sm:$0xff] %v1248
                %v1250 = vld [vmem:[%s1206 + $0xa8] sm:$0xff]
                %1251 = vst [vmem:[%s1207 + $0xa8] sm:$0xff] %v1250
                %v1252 = vld [vmem:[%s1206 + $0xc8] sm:$0xff]
                %1253 = vst [vmem:[%s1207 + $0xc8] sm:$0xff] %v1252
                %v1254 = vld [vmem:[%s1206 + $0xe8] sm:$0xff]
                %1255 = vst [vmem:[%s1207 + $0xe8] sm:$0xff] %v1254
                %v1256 = vld [vmem:[%s1206 + $0x108] sm:$0xff]
                %1257 = vst [vmem:[%s1207 + $0x108] sm:$0xff] %v1256
                %v1258 = vld [vmem:[%s1206 + $0x128] sm:$0xff]
                %1259 = vst [vmem:[%s1207 + $0x128] sm:$0xff] %v1258
                %v1260 = vld [vmem:[%s1206 + $0x148] sm:$0xff]
                %1261 = vst [vmem:[%s1207 + $0x148] sm:$0xff] %v1260
                %v1262 = vld [vmem:[%s1206 + $0x168] sm:$0xff]
                %1263 = vst [vmem:[%s1207 + $0x168] sm:$0xff] %v1262
                %v1264 = vld [vmem:[%s1206 + $0x188] sm:$0xff]
                %1265 = vst [vmem:[%s1207 + $0x188] sm:$0xff] %v1264
                %v1266 = vld [vmem:[%s1206 + $0x1a8] sm:$0xff]
                %1267 = vst [vmem:[%s1207 + $0x1a8] sm:$0xff] %v1266
                %v1268 = vld [vmem:[%s1206 + $0x1c8] sm:$0xff]
                %1269 = vst [vmem:[%s1207 + $0x1c8] sm:$0xff] %v1268
                %v1270 = vld [vmem:[%s1206 + $0x1e8] sm:$0xff]
                %1271 = vst [vmem:[%s1207 + $0x1e8] sm:$0xff] %v1270
                %v1272 = vld [vmem:[%s1206 + $0x10] sm:$0xff]
                %1273 = vst [vmem:[%s1207 + $0x10] sm:$0xff] %v1272
                %v1274 = vld [vmem:[%s1206 + $0x30] sm:$0xff]
                %1275 = vst [vmem:[%s1207 + $0x30] sm:$0xff] %v1274
                %v1276 = vld [vmem:[%s1206 + $0x50] sm:$0xff]
                %1277 = vst [vmem:[%s1207 + $0x50] sm:$0xff] %v1276
                %v1278 = vld [vmem:[%s1206 + $0x70] sm:$0xff]
                %1279 = vst [vmem:[%s1207 + $0x70] sm:$0xff] %v1278
                %v1280 = vld [vmem:[%s1206 + $0x90] sm:$0xff]
                %1281 = vst [vmem:[%s1207 + $0x90] sm:$0xff] %v1280
                %v1282 = vld [vmem:[%s1206 + $0xb0] sm:$0xff]
                %1283 = vst [vmem:[%s1207 + $0xb0] sm:$0xff] %v1282
                %v1284 = vld [vmem:[%s1206 + $0xd0] sm:$0xff]
                %1285 = vst [vmem:[%s1207 + $0xd0] sm:$0xff] %v1284
                %v1286 = vld [vmem:[%s1206 + $0xf0] sm:$0xff]
                %1287 = vst [vmem:[%s1207 + $0xf0] sm:$0xff] %v1286
                %v1288 = vld [vmem:[%s1206 + $0x110] sm:$0xff]
                %1289 = vst [vmem:[%s1207 + $0x110] sm:$0xff] %v1288
                %v1290 = vld [vmem:[%s1206 + $0x130] sm:$0xff]
                %1291 = vst [vmem:[%s1207 + $0x130] sm:$0xff] %v1290
                %v1292 = vld [vmem:[%s1206 + $0x150] sm:$0xff]
                %1293 = vst [vmem:[%s1207 + $0x150] sm:$0xff] %v1292
                %v1294 = vld [vmem:[%s1206 + $0x170] sm:$0xff]
                %1295 = vst [vmem:[%s1207 + $0x170] sm:$0xff] %v1294
                %v1296 = vld [vmem:[%s1206 + $0x190] sm:$0xff]
                %1297 = vst [vmem:[%s1207 + $0x190] sm:$0xff] %v1296
                %v1298 = vld [vmem:[%s1206 + $0x1b0] sm:$0xff]
                %1299 = vst [vmem:[%s1207 + $0x1b0] sm:$0xff] %v1298
                %v1300 = vld [vmem:[%s1206 + $0x1d0] sm:$0xff]
                %1301 = vst [vmem:[%s1207 + $0x1d0] sm:$0xff] %v1300
                %v1302 = vld [vmem:[%s1206 + $0x1f0] sm:$0xff]
                %1303 = vst [vmem:[%s1207 + $0x1f0] sm:$0xff] %v1302
                %v1304 = vld [vmem:[%s1206 + $0x18] sm:$0xff]
                %1305 = vst [vmem:[%s1207 + $0x18] sm:$0xff] %v1304
                %v1306 = vld [vmem:[%s1206 + $0x38] sm:$0xff]
                %1307 = vst [vmem:[%s1207 + $0x38] sm:$0xff] %v1306
                %v1308 = vld [vmem:[%s1206 + $0x58] sm:$0xff]
                %1309 = vst [vmem:[%s1207 + $0x58] sm:$0xff] %v1308
                %v1310 = vld [vmem:[%s1206 + $0x78] sm:$0xff]
                %1311 = vst [vmem:[%s1207 + $0x78] sm:$0xff] %v1310
                %v1312 = vld [vmem:[%s1206 + $0x98] sm:$0xff]
                %1313 = vst [vmem:[%s1207 + $0x98] sm:$0xff] %v1312
                %v1314 = vld [vmem:[%s1206 + $0xb8] sm:$0xff]
                %1315 = vst [vmem:[%s1207 + $0xb8] sm:$0xff] %v1314
                %v1316 = vld [vmem:[%s1206 + $0xd8] sm:$0xff]
                %1317 = vst [vmem:[%s1207 + $0xd8] sm:$0xff] %v1316
                %v1318 = vld [vmem:[%s1206 + $0xf8] sm:$0xff]
                %1319 = vst [vmem:[%s1207 + $0xf8] sm:$0xff] %v1318
                %v1320 = vld [vmem:[%s1206 + $0x118] sm:$0xff]
                %1321 = vst [vmem:[%s1207 + $0x118] sm:$0xff] %v1320
                %v1322 = vld [vmem:[%s1206 + $0x138] sm:$0xff]
                %1323 = vst [vmem:[%s1207 + $0x138] sm:$0xff] %v1322
                %v1324 = vld [vmem:[%s1206 + $0x158] sm:$0xff]
                %1325 = vst [vmem:[%s1207 + $0x158] sm:$0xff] %v1324
                %v1326 = vld [vmem:[%s1206 + $0x178] sm:$0xff]
                %1327 = vst [vmem:[%s1207 + $0x178] sm:$0xff] %v1326
                %v1328 = vld [vmem:[%s1206 + $0x198] sm:$0xff]
                %1329 = vst [vmem:[%s1207 + $0x198] sm:$0xff] %v1328
                %v1330 = vld [vmem:[%s1206 + $0x1b8] sm:$0xff]
                %1331 = vst [vmem:[%s1207 + $0x1b8] sm:$0xff] %v1330
                %v1332 = vld [vmem:[%s1206 + $0x1d8] sm:$0xff]
                %1333 = vst [vmem:[%s1207 + $0x1d8] sm:$0xff] %v1332
                %v1334 = vld [vmem:[%s1206 + $0x1f8] sm:$0xff]
                %1335 = vst [vmem:[%s1207 + $0x1f8] sm:$0xff] %v1334
                %s1336 = sadd.s32 1, %s1205
                %p1337 = scmp.ge.s32.totalorder %s1336, %s1198
                %s1338 = scalar_select %p1337, 0, %s1336
                %s1339 = smul.u32 %s1338, 512
                %s1340 = smul.u32 %s1338, 512
                %s1341 = scalar_lea.vmem %s1175, %s1339 [#allocation2]
                %s1342 = scalar_lea.vmem %s1192, %s1340
              $region49: #{model_forward.3} parent=43 // loop_footer
                %s1202 = sadd.s32 %s1200, 1
              $region50: #{model_forward.3} parent=43 // loop_footer_branch
                %1199 = sbr.rel target = $region46
              $region51: #{model_forward.3} parent=43 // loop_exit
                _
              %s1343 = sshrl.u32 %s1183, 4
              %s1344 = sand.u32 %s1183, 15
              %s1345 = smul.u32 %s1343, 16
              %s1346 = smul.u32 32, %s1345
              %s1347 = scalar_lea.vmem %s1175, %s1346 [#allocation2]
              %s1348 = smul.u32 32, %s1345
              %s1349 = scalar_lea.vmem %s1192, %s1348
              // While loop
              $region52: #{model_forward.3} parent=43 // loop_pre_header
                _
              $region53: #{model_forward.3} parent=43 // loop_header
                %s1351 = sphi 0, %s1353
                %p1352 = scmp.ge.s32.totalorder %s1351, %s1344
                %s1356 = sphi 0, %s1369
                %s1357 = sphi %s1347, %s1372
                %s1358 = sphi %s1349, %s1373
              $region54: #{model_forward.3} parent=43 // loop_header_branch
                %1355 = sbr.rel (%p1352) target = $region58
              $region55: #{model_forward.3} parent=43 // loop_body
                %v1359 = vld [vmem:[%s1357] sm:$0xff]
                %1360 = vst [vmem:[%s1358] sm:$0xff] %v1359
                %v1361 = vld [vmem:[%s1357 + $0x8] sm:$0xff]
                %1362 = vst [vmem:[%s1358 + $0x8] sm:$0xff] %v1361
                %v1363 = vld [vmem:[%s1357 + $0x10] sm:$0xff]
                %1364 = vst [vmem:[%s1358 + $0x10] sm:$0xff] %v1363
                %v1365 = vld [vmem:[%s1357 + $0x18] sm:$0xff]
                %1366 = vst [vmem:[%s1358 + $0x18] sm:$0xff] %v1365
                %s1367 = sadd.s32 1, %s1356
                %p1368 = scmp.ge.s32.totalorder %s1367, %s1344
                %s1369 = scalar_select %p1368, 0, %s1367
                %s1370 = smul.u32 %s1369, 32
                %s1371 = smul.u32 %s1369, 32
                %s1372 = scalar_lea.vmem %s1347, %s1370 [#allocation2]
                %s1373 = scalar_lea.vmem %s1349, %s1371
              $region56: #{model_forward.3} parent=43 // loop_footer
                %s1353 = sadd.s32 %s1351, 1
              $region57: #{model_forward.3} parent=43 // loop_footer_branch
                %1350 = sbr.rel target = $region53
              $region58: #{model_forward.3} parent=43 // loop_exit
                _
            $region44: #{model_forward.3} parent=39 // pred_fallthru
              _
            // Predicated region
            $region59: #{model_forward.3} parent=39 // pred_check
              _
            $region60: #{model_forward.3} parent=39 // pred_check_branch
              %1375 = sbr.rel target = $region62
            $region61: #{model_forward.3} parent=39 // pred_region
              _
            $region62: #{model_forward.3} parent=39 // pred_fallthru
              _
          $region40: #{model_forward.3} parent=35 // pred_fallthru
            _
          %1376 = vnop
        $region36: #{model_forward.3} parent=31 // pred_fallthru
          _
      $region32: #{model_forward.3} parent=5 // pred_fallthru
        _
      %p1377 = scmp.le.s32.totalorder 2, %s9
      // Predicated region
      $region63: #{model_forward.3} parent=5 // pred_check
        %p1378 = pneg %p1377
      $region64: #{model_forward.3} parent=5 // pred_check_branch
        %1380 = sbr.rel (%p1378) target = $region66
      $region65: #{model_forward.3} parent=5 // pred_region
        %s1381 = ssub.s32 %s9, 2
        // Predicated region
        $region67: #{model_forward.3} parent=65 // pred_check
          %p1382 = pneg %p143
        $region68: #{model_forward.3} parent=65 // pred_check_branch
          %1384 = sbr.rel (%p1382) target = $region70
        $region69: #{model_forward.3} parent=65 // pred_region
          %s1385 = sand.u32 %s128, 1
          %s1386 = sand.u32 %s128, 1
          %s1387 = smul.addr %s1386, 1024
          %s1388 = scalar_lea.vmem [#allocation2], %s1387
        $region70: #{model_forward.3} parent=65 // pred_fallthru
          _
      $region66: #{model_forward.3} parent=5 // pred_fallthru
        _
    $region6: #{model_forward.3} parent=1 // loop_footer
      %s13 = sadd.s32 1, %s9
    $region7: #{model_forward.3} parent=1 // loop_footer_branch
      %8 = sbr.rel target = $region3
    $region8: #{model_forward.3} parent=1 // loop_exit
      _

// kernel: mul.29
$region0: #{mul.29}
  %s0 = inlined_call_operand.vmem [shape: f32[1,4320,64], index: 0, kind: input, shape index: {}]
  %s1 = inlined_call_operand.vmem [shape: f32[4,30,36,64], index: 1, kind: output, shape index: {}]
  loop: start=0, step=1, limit=4
  $region2: #{mul.29} parent=0 // loop_pre_header
    _
  $region3: #{mul.29} parent=0 // loop_header
    %s3 = sphi 0, %s7
    %p4 = scmp.ge.s32.totalorder %s3, 4
  $region4: #{mul.29} parent=0 // loop_header_branch
    %6 = sbr.rel (%p4) target = $region8
  $region5: #{mul.29} parent=0 // loop_body
    %s8 = ssub.s32 %s3, 1
    %s9 = ssub.s32 %s3, 2
    %s10 = sadd.s32 %s3, 1
    %p11 = scmp.le.s32.totalorder 1, %s3
    %p12 = scmp.lt.s32.totalorder %s3, 3
    %p13 = pnand %p11, %p12
    %p14 = pneg %p13
    // Predicated region
    $region9: #{mul.29} parent=5 // pred_check
      _
    $region10: #{mul.29} parent=5 // pred_check_branch
      %16 = sbr.rel (%p13) target = $region12
    $region11: #{mul.29} parent=5 // pred_region
      %s17 = ssub.s32 %s3, 1
    $region12: #{mul.29} parent=5 // pred_fallthru
      _
    %p18 = scmp.lt.s32.totalorder %s3, 2
    // Predicated region
    $region13: #{mul.29} parent=5 // pred_check
      %p19 = pneg %p18
    $region14: #{mul.29} parent=5 // pred_check_branch
      %21 = sbr.rel (%p19) target = $region16
    $region15: #{mul.29} parent=5 // pred_region
      %s22 = smul.u32 2160, %s3
      %p23 = scmp.lt.s32.totalorder %s22, 4319
      %s24 = scalar_select %p23, %s22, 4319
      %s25 = scalar_lea.vmem %s0, %s24
      %s26 = smul.u32 2160, %s3
    $region16: #{mul.29} parent=5 // pred_fallthru
      _
    %p27 = scmp.le.s32.totalorder 1, %s3
    %p28 = scmp.lt.s32.totalorder %s3, 3
    %p29 = pnand %p27, %p28
    %p30 = pneg %p29
    // Predicated region
    $region17: #{mul.29} parent=5 // pred_check
      _
    $region18: #{mul.29} parent=5 // pred_check_branch
      %32 = sbr.rel (%p29) target = $region20
    $region19: #{mul.29} parent=5 // pred_region
      %s33 = ssub.s32 %s3, 1
      %s34 = smul.u32 2160, %s8
      %p35 = scmp.lt.s32.totalorder %s34, 4319
      %s36 = scalar_select %p35, %s34, 4319
      %s37 = scalar_lea.vmem %s0, %s36
      %s38 = smul.u32 2400, %s8
      %p39 = scmp.lt.s32.totalorder %s38, 4799
      %s40 = scalar_select %p39, %s38, 4799
      %s41 = scalar_lea.vmem %s1, %s40
      %s42 = smul.u32 2400, %s8
      %p43 = scmp.lt.s32.totalorder %s42, 4799
      %s44 = scalar_select %p43, %s42, 4799
      %s45 = scalar_lea.vmem %s1, %s44
      %s46 = smul.u32 2400, %s8
      %s47 = smul.u32 2160, %s8
      %p48 = scmp.lt.s32.totalorder %s47, 4319
      %s49 = scalar_select %p48, %s47, 4319
      %s50 = scalar_lea.vmem %s0, %s49
      %s51 = smul.u32 2160, %s8
      %p52 = scmp.lt.s32.totalorder %s8, 1
      %p53 = scmp.eq.s32.totalorder %s8, 1
      %v54 = vld [vmem:[%s50] sm:$0xff]
      %vm55 = vcmask 523264
      %56 = vst.msk [vmem:[%s45] sm:$0xff] %vm55, %v54
      %s57 = scalar_lea.vmem %s50, 8
      %v58 = vld [vmem:[%s57] sm:$0xff]
      %vm59 = vcmask 523264
      %s60 = scalar_lea.vmem %s45, 8
      %61 = vst.msk [vmem:[%s60] sm:$0xff] %vm59, %v58
      %s62 = scalar_lea.vmem %s50, 16
      %v63 = vld [vmem:[%s62] sm:$0xff]
      %vm64 = vcmask 523264
      %s65 = scalar_lea.vmem %s45, 16
      %66 = vst.msk [vmem:[%s65] sm:$0xff] %vm64, %v63
      %s67 = scalar_lea.vmem %s50, 24
      %v68 = vld [vmem:[%s67] sm:$0xff]
      %vm69 = vcmask 523264
      %s70 = scalar_lea.vmem %s45, 24
      %71 = vst.msk [vmem:[%s70] sm:$0xff] %vm69, %v68
      %s72 = scalar_lea.vmem %s50, 32
      %v73 = vld [vmem:[%s72] sm:$0xff]
      %vm74 = vcmask 523264
      %s75 = scalar_lea.vmem %s45, 32
      %76 = vst.msk [vmem:[%s75] sm:$0xf] %vm74, %v73
      %s77 = scalar_lea.vmem %s45, 36
      %78 = vst.msk [vmem:[%s77] sm:$0xf0] %vm74, %v73
      %s79 = scalar_lea.vmem %s50, 40
      %v80 = vld [vmem:[%s79] sm:$0xff]
      %vm81 = vcmask 523264
      %s82 = scalar_lea.vmem %s45, 44
      %83 = vst.msk [vmem:[%s82] sm:$0xff] %vm81, %v80
      %s84 = scalar_lea.vmem %s50, 48
      %v85 = vld [vmem:[%s84] sm:$0xff]
      %vm86 = vcmask 523264
      %s87 = scalar_lea.vmem %s45, 52
      %88 = vst.msk [vmem:[%s87] sm:$0xff] %vm86, %v85
      %s89 = scalar_lea.vmem %s50, 56
      %v90 = vld [vmem:[%s89] sm:$0xff]
      %vm91 = vcmask 523264
      %s92 = scalar_lea.vmem %s45, 60
      %93 = vst.msk [vmem:[%s92] sm:$0xff] %vm91, %v90
      %s94 = scalar_lea.vmem %s50, 64
      %v95 = vld [vmem:[%s94] sm:$0xff]
      %vm96 = vcmask 523264
      %s97 = scalar_lea.vmem %s45, 68
      %98 = vst.msk [vmem:[%s97] sm:$0xff] %vm96, %v95
      %s99 = scalar_lea.vmem %s50, 72
      %v100 = vld [vmem:[%s99] sm:$0xff]
      %vm101 = vcmask 523264
      %s102 = scalar_lea.vmem %s45, 80
      %103 = vst.msk [vmem:[%s102] sm:$0xff] %vm101, %v100
      %s104 = scalar_lea.vmem %s50, 80
      %v105 = vld [vmem:[%s104] sm:$0xff]
      %vm106 = vcmask 523264
      %s107 = scalar_lea.vmem %s45, 88
      %108 = vst.msk [vmem:[%s107] sm:$0xff] %vm106, %v105
      %s109 = scalar_lea.vmem %s50, 88
      %v110 = vld [vmem:[%s109] sm:$0xff]
      %vm111 = vcmask 523264
      %s112 = scalar_lea.vmem %s45, 96
      %113 = vst.msk [vmem:[%s112] sm:$0xff] %vm111, %v110
      %s114 = scalar_lea.vmem %s50, 96
      %v115 = vld [vmem:[%s114] sm:$0xff]
      %vm116 = vcmask 523264
      %s117 = scalar_lea.vmem %s45, 104
      %118 = vst.msk [vmem:[%s117] sm:$0xff] %vm116, %v115
      %s119 = scalar_lea.vmem %s50, 104
      %v120 = vld [vmem:[%s119] sm:$0xff]
      %vm121 = vcmask 523264
      %s122 = scalar_lea.vmem %s45, 112
      %123 = vst.msk [vmem:[%s122] sm:$0xf] %vm121, %v120
      %s124 = scalar_lea.vmem %s45, 116
      %125 = vst.msk [vmem:[%s124] sm:$0xf0] %vm121, %v120
      %s126 = scalar_lea.vmem %s50, 112
      %v127 = vld [vmem:[%s126] sm:$0xff]
      %vm128 = vcmask 523264
      %s129 = scalar_lea.vmem %s45, 124
      %130 = vst.msk [vmem:[%s129] sm:$0xff] %vm128, %v127
      %s131 = scalar_lea.vmem %s50, 120
      %v132 = vld [vmem:[%s131] sm:$0xff]
      %vm133 = vcmask 523264
      %s134 = scalar_lea.vmem %s45, 132
      %135 = vst.msk [vmem:[%s134] sm:$0xff] %vm133, %v132
      %s136 = scalar_lea.vmem %s50, 128
      %v137 = vld [vmem:[%s136] sm:$0xff]
      %vm138 = vcmask 523264
      %s139 = scalar_lea.vmem %s45, 140
      %140 = vst.msk [vmem:[%s139] sm:$0xff] %vm138, %v137
      %s141 = scalar_lea.vmem %s50, 136
      %v142 = vld [vmem:[%s141] sm:$0xff]
      %vm143 = vcmask 523264
      %s144 = scalar_lea.vmem %s45, 148
      %145 = vst.msk [vmem:[%s144] sm:$0xff] %vm143, %v142
      %s146 = scalar_lea.vmem %s50, 144
      %v147 = vld [vmem:[%s146] sm:$0xff]
      %vm148 = vcmask 523264
      %s149 = scalar_lea.vmem %s45, 160
      %150 = vst.msk [vmem:[%s149] sm:$0xff] %vm148, %v147
      %s151 = scalar_lea.vmem %s50, 152
      %v152 = vld [vmem:[%s151] sm:$0xff]
      %vm153 = vcmask 523264
      %s154 = scalar_lea.vmem %s45, 168
      %155 = vst.msk [vmem:[%s154] sm:$0xff] %vm153, %v152
      %s156 = scalar_lea.vmem %s50, 160
      %v157 = vld [vmem:[%s156] sm:$0xff]
      %vm158 = vcmask 523264
      %s159 = scalar_lea.vmem %s45, 176
      %160 = vst.msk [vmem:[%s159] sm:$0xff] %vm158, %v157
      %s161 = scalar_lea.vmem %s50, 168
      %v162 = vld [vmem:[%s161] sm:$0xff]
      %vm163 = vcmask 523264
      %s164 = scalar_lea.vmem %s45, 184
      %165 = vst.msk [vmem:[%s164] sm:$0xff] %vm163, %v162
      %s166 = scalar_lea.vmem %s50, 176
      %v167 = vld [vmem:[%s166] sm:$0xff]
      %vm168 = vcmask 523264
      %s169 = scalar_lea.vmem %s45, 192
      %170 = vst.msk [vmem:[%s169] sm:$0xf] %vm168, %v167
      %s171 = scalar_lea.vmem %s45, 196
      %172 = vst.msk [vmem:[%s171] sm:$0xf0] %vm168, %v167
      %s173 = scalar_lea.vmem %s50, 184
      %v174 = vld [vmem:[%s173] sm:$0xff]
      %vm175 = vcmask 523264
      %s176 = scalar_lea.vmem %s45, 204
      %177 = vst.msk [vmem:[%s176] sm:$0xff] %vm175, %v174
      %s178 = scalar_lea.vmem %s50, 192
      %v179 = vld [vmem:[%s178] sm:$0xff]
      %vm180 = vcmask 523264
      %s181 = scalar_lea.vmem %s45, 212
      %182 = vst.msk [vmem:[%s181] sm:$0xff] %vm180, %v179
      %s183 = scalar_lea.vmem %s50, 200
      %v184 = vld [vmem:[%s183] sm:$0xff]
      %vm185 = vcmask 523264
      %s186 = scalar_lea.vmem %s45, 220
      %187 = vst.msk [vmem:[%s186] sm:$0xff] %vm185, %v184
      %s188 = scalar_lea.vmem %s50, 208
      %v189 = vld [vmem:[%s188] sm:$0xff]
      %vm190 = vcmask 523264
      %s191 = scalar_lea.vmem %s45, 228
      %192 = vst.msk [vmem:[%s191] sm:$0xff] %vm190, %v189
      %s193 = scalar_lea.vmem %s50, 216
      %v194 = vld [vmem:[%s193] sm:$0xff]
      %vm195 = vcmask 523264
      %s196 = scalar_lea.vmem %s45, 240
      %197 = vst.msk [vmem:[%s196] sm:$0xff] %vm195, %v194
      %s198 = scalar_lea.vmem %s50, 224
      %v199 = vld [vmem:[%s198] sm:$0xff]
      %vm200 = vcmask 523264
      %s201 = scalar_lea.vmem %s45, 248
      %202 = vst.msk [vmem:[%s201] sm:$0xff] %vm200, %v199
      %s203 = scalar_lea.vmem %s50, 232
      %v204 = vld [vmem:[%s203] sm:$0xff]
      %vm205 = vcmask 523264
      %s206 = scalar_lea.vmem %s45, 256
      %207 = vst.msk [vmem:[%s206] sm:$0xff] %vm205, %v204
      %s208 = scalar_lea.vmem %s50, 240
      %v209 = vld [vmem:[%s208] sm:$0xff]
      %vm210 = vcmask 523264
      %s211 = scalar_lea.vmem %s45, 264
      %212 = vst.msk [vmem:[%s211] sm:$0xff] %vm210, %v209
      %s213 = scalar_lea.vmem %s50, 248
      %v214 = vld [vmem:[%s213] sm:$0xff]
      %vm215 = vcmask 523264
      %s216 = scalar_lea.vmem %s45, 272
      %217 = vst.msk [vmem:[%s216] sm:$0xf] %vm215, %v214
      %s218 = scalar_lea.vmem %s45, 276
      %219 = vst.msk [vmem:[%s218] sm:$0xf0] %vm215, %v214
      %s220 = scalar_lea.vmem %s50, 256
      %v221 = vld [vmem:[%s220] sm:$0xff]
      %vm222 = vcmask 523264
      %s223 = scalar_lea.vmem %s45, 284
      %224 = vst.msk [vmem:[%s223] sm:$0xff] %vm222, %v221
      %s225 = scalar_lea.vmem %s50, 264
      %v226 = vld [vmem:[%s225] sm:$0xff]
      %vm227 = vcmask 523264
      %s228 = scalar_lea.vmem %s45, 292
      %229 = vst.msk [vmem:[%s228] sm:$0xff] %vm227, %v226
      %s230 = scalar_lea.vmem %s50, 272
      %v231 = vld [vmem:[%s230] sm:$0xff]
      %vm232 = vcmask 523264
      %s233 = scalar_lea.vmem %s45, 300
      %234 = vst.msk [vmem:[%s233] sm:$0xff] %vm232, %v231
      %s235 = scalar_lea.vmem %s50, 280
      %v236 = vld [vmem:[%s235] sm:$0xff]
      %vm237 = vcmask 523264
      %s238 = scalar_lea.vmem %s45, 308
      %239 = vst.msk [vmem:[%s238] sm:$0xff] %vm237, %v236
      %s240 = scalar_lea.vmem %s50, 288
      %v241 = vld [vmem:[%s240] sm:$0xff]
      %vm242 = vcmask 523264
      %s243 = scalar_lea.vmem %s45, 320
      %244 = vst.msk [vmem:[%s243] sm:$0xff] %vm242, %v241
      %s245 = scalar_lea.vmem %s50, 296
      %v246 = vld [vmem:[%s245] sm:$0xff]
      %vm247 = vcmask 523264
      %s248 = scalar_lea.vmem %s45, 328
      %249 = vst.msk [vmem:[%s248] sm:$0xff] %vm247, %v246
      %s250 = scalar_lea.vmem %s50, 304
      %v251 = vld [vmem:[%s250] sm:$0xff]
      %vm252 = vcmask 523264
      %s253 = scalar_lea.vmem %s45, 336
      %254 = vst.msk [vmem:[%s253] sm:$0xff] %vm252, %v251
      %s255 = scalar_lea.vmem %s50, 312
      %v256 = vld [vmem:[%s255] sm:$0xff]
      %vm257 = vcmask 523264
      %s258 = scalar_lea.vmem %s45, 344
      %259 = vst.msk [vmem:[%s258] sm:$0xff] %vm257, %v256
      %s260 = scalar_lea.vmem %s50, 320
      %v261 = vld [vmem:[%s260] sm:$0xff]
      %vm262 = vcmask 523264
      %s263 = scalar_lea.vmem %s45, 352
      %264 = vst.msk [vmem:[%s263] sm:$0xf] %vm262, %v261
      %s265 = scalar_lea.vmem %s45, 356
      %266 = vst.msk [vmem:[%s265] sm:$0xf0] %vm262, %v261
      %s267 = scalar_lea.vmem %s50, 328
      %v268 = vld [vmem:[%s267] sm:$0xff]
      %vm269 = vcmask 523264
      %s270 = scalar_lea.vmem %s45, 364
      %271 = vst.msk [vmem:[%s270] sm:$0xff] %vm269, %v268
      %s272 = scalar_lea.vmem %s50, 336
      %v273 = vld [vmem:[%s272] sm:$0xff]
      %vm274 = vcmask 523264
      %s275 = scalar_lea.vmem %s45, 372
      %276 = vst.msk [vmem:[%s275] sm:$0xff] %vm274, %v273
      %s277 = scalar_lea.vmem %s50, 344
      %v278 = vld [vmem:[%s277] sm:$0xff]
      %vm279 = vcmask 523264
      %s280 = scalar_lea.vmem %s45, 380
      %281 = vst.msk [vmem:[%s280] sm:$0xff] %vm279, %v278
      %s282 = scalar_lea.vmem %s50, 352
      %v283 = vld [vmem:[%s282] sm:$0xff]
      %vm284 = vcmask 523264
      %s285 = scalar_lea.vmem %s45, 388
      %286 = vst.msk [vmem:[%s285] sm:$0xff] %vm284, %v283
      %s287 = scalar_lea.vmem %s50, 360
      %v288 = vld [vmem:[%s287] sm:$0xff]
      %vm289 = vcmask 523264
      %s290 = scalar_lea.vmem %s45, 400
      %291 = vst.msk [vmem:[%s290] sm:$0xff] %vm289, %v288
      %s292 = scalar_lea.vmem %s50, 368
      %v293 = vld [vmem:[%s292] sm:$0xff]
      %vm294 = vcmask 523264
      %s295 = scalar_lea.vmem %s45, 408
      %296 = vst.msk [vmem:[%s295] sm:$0xff] %vm294, %v293
      %s297 = scalar_lea.vmem %s50, 376
      %v298 = vld [vmem:[%s297] sm:$0xff]
      %vm299 = vcmask 523264
      %s300 = scalar_lea.vmem %s45, 416
      %301 = vst.msk [vmem:[%s300] sm:$0xff] %vm299, %v298
      %s302 = scalar_lea.vmem %s50, 384
      %v303 = vld [vmem:[%s302] sm:$0xff]
      %vm304 = vcmask 523264
      %s305 = scalar_lea.vmem %s45, 424
      %306 = vst.msk [vmem:[%s305] sm:$0xff] %vm304, %v303
      %s307 = scalar_lea.vmem %s50, 392
      %v308 = vld [vmem:[%s307] sm:$0xff]
      %vm309 = vcmask 523264
      %s310 = scalar_lea.vmem %s45, 432
      %311 = vst.msk [vmem:[%s310] sm:$0xf] %vm309, %v308
      %s312 = scalar_lea.vmem %s45, 436
      %313 = vst.msk [vmem:[%s312] sm:$0xf0] %vm309, %v308
      %s314 = scalar_lea.vmem %s50, 400
      %v315 = vld [vmem:[%s314] sm:$0xff]
      %vm316 = vcmask 523264
      %s317 = scalar_lea.vmem %s45, 444
      %318 = vst.msk [vmem:[%s317] sm:$0xff] %vm316, %v315
      %s319 = scalar_lea.vmem %s50, 408
      %v320 = vld [vmem:[%s319] sm:$0xff]
      %vm321 = vcmask 523264
      %s322 = scalar_lea.vmem %s45, 452
      %323 = vst.msk [vmem:[%s322] sm:$0xff] %vm321, %v320
      %s324 = scalar_lea.vmem %s50, 416
      %v325 = vld [vmem:[%s324] sm:$0xff]
      %vm326 = vcmask 523264
      %s327 = scalar_lea.vmem %s45, 460
      %328 = vst.msk [vmem:[%s327] sm:$0xff] %vm326, %v325
      %s329 = scalar_lea.vmem %s50, 424
      %v330 = vld [vmem:[%s329] sm:$0xff]
      %vm331 = vcmask 523264
      %s332 = scalar_lea.vmem %s45, 468
      %333 = vst.msk [vmem:[%s332] sm:$0xff] %vm331, %v330
      %s334 = scalar_lea.vmem %s50, 432
      %v335 = vld [vmem:[%s334] sm:$0xff]
      %vm336 = vcmask 523264
      %s337 = scalar_lea.vmem %s45, 480
      %338 = vst.msk [vmem:[%s337] sm:$0xff] %vm336, %v335
      %s339 = scalar_lea.vmem %s50, 440
      %v340 = vld [vmem:[%s339] sm:$0xff]
      %vm341 = vcmask 523264
      %s342 = scalar_lea.vmem %s45, 488
      %343 = vst.msk [vmem:[%s342] sm:$0xff] %vm341, %v340
      %s344 = scalar_lea.vmem %s50, 448
      %v345 = vld [vmem:[%s344] sm:$0xff]
      %vm346 = vcmask 523264
      %s347 = scalar_lea.vmem %s45, 496
      %348 = vst.msk [vmem:[%s347] sm:$0xff] %vm346, %v345
      %s349 = scalar_lea.vmem %s50, 456
      %v350 = vld [vmem:[%s349] sm:$0xff]
      %vm351 = vcmask 523264
      %s352 = scalar_lea.vmem %s45, 504
      %353 = vst.msk [vmem:[%s352] sm:$0xff] %vm351, %v350
      %s354 = scalar_lea.vmem %s50, 464
      %v355 = vld [vmem:[%s354] sm:$0xff]
      %vm356 = vcmask 523264
      %s357 = scalar_lea.vmem %s45, 512
      %358 = vst.msk [vmem:[%s357] sm:$0xf] %vm356, %v355
      %s359 = scalar_lea.vmem %s45, 516
      %360 = vst.msk [vmem:[%s359] sm:$0xf0] %vm356, %v355
      %s361 = scalar_lea.vmem %s50, 472
      %v362 = vld [vmem:[%s361] sm:$0xff]
      %vm363 = vcmask 523264
      %s364 = scalar_lea.vmem %s45, 524
      %365 = vst.msk [vmem:[%s364] sm:$0xff] %vm363, %v362
      %s366 = scalar_lea.vmem %s50, 480
      %v367 = vld [vmem:[%s366] sm:$0xff]
      %vm368 = vcmask 523264
      %s369 = scalar_lea.vmem %s45, 532
      %370 = vst.msk [vmem:[%s369] sm:$0xff] %vm368, %v367
      %s371 = scalar_lea.vmem %s50, 488
      %v372 = vld [vmem:[%s371] sm:$0xff]
      %vm373 = vcmask 523264
      %s374 = scalar_lea.vmem %s45, 540
      %375 = vst.msk [vmem:[%s374] sm:$0xff] %vm373, %v372
      %s376 = scalar_lea.vmem %s50, 496
      %v377 = vld [vmem:[%s376] sm:$0xff]
      %vm378 = vcmask 523264
      %s379 = scalar_lea.vmem %s45, 548
      %380 = vst.msk [vmem:[%s379] sm:$0xff] %vm378, %v377
      %s381 = scalar_lea.vmem %s50, 504
      %v382 = vld [vmem:[%s381] sm:$0xff]
      %vm383 = vcmask 523264
      %s384 = scalar_lea.vmem %s45, 560
      %385 = vst.msk [vmem:[%s384] sm:$0xff] %vm383, %v382
      %s386 = scalar_lea.vmem %s50, 512
      %v387 = vld [vmem:[%s386] sm:$0xff]
      %vm388 = vcmask 523264
      %s389 = scalar_lea.vmem %s45, 568
      %390 = vst.msk [vmem:[%s389] sm:$0xff] %vm388, %v387
      %s391 = scalar_lea.vmem %s50, 520
      %v392 = vld [vmem:[%s391] sm:$0xff]
      %vm393 = vcmask 523264
      %s394 = scalar_lea.vmem %s45, 576
      %395 = vst.msk [vmem:[%s394] sm:$0xff] %vm393, %v392
      %s396 = scalar_lea.vmem %s50, 528
      %v397 = vld [vmem:[%s396] sm:$0xff]
      %vm398 = vcmask 523264
      %s399 = scalar_lea.vmem %s45, 584
      %400 = vst.msk [vmem:[%s399] sm:$0xff] %vm398, %v397
      %s401 = scalar_lea.vmem %s50, 536
      %v402 = vld [vmem:[%s401] sm:$0xff]
      %vm403 = vcmask 523264
      %s404 = scalar_lea.vmem %s45, 592
      %405 = vst.msk [vmem:[%s404] sm:$0xf] %vm403, %v402
      %s406 = scalar_lea.vmem %s45, 596
      %407 = vst.msk [vmem:[%s406] sm:$0xf0] %vm403, %v402
      %s408 = scalar_lea.vmem %s50, 544
      %v409 = vld [vmem:[%s408] sm:$0xff]
      %vm410 = vcmask 523264
      %s411 = scalar_lea.vmem %s45, 604
      %412 = vst.msk [vmem:[%s411] sm:$0xff] %vm410, %v409
      %s413 = scalar_lea.vmem %s50, 552
      %v414 = vld [vmem:[%s413] sm:$0xff]
      %vm415 = vcmask 523264
      %s416 = scalar_lea.vmem %s45, 612
      %417 = vst.msk [vmem:[%s416] sm:$0xff] %vm415, %v414
      %s418 = scalar_lea.vmem %s50, 560
      %v419 = vld [vmem:[%s418] sm:$0xff]
      %vm420 = vcmask 523264
      %s421 = scalar_lea.vmem %s45, 620
      %422 = vst.msk [vmem:[%s421] sm:$0xff] %vm420, %v419
      %s423 = scalar_lea.vmem %s50, 568
      %v424 = vld [vmem:[%s423] sm:$0xff]
      %vm425 = vcmask 523264
      %s426 = scalar_lea.vmem %s45, 628
      %427 = vst.msk [vmem:[%s426] sm:$0xff] %vm425, %v424
      %s428 = scalar_lea.vmem %s50, 576
      %v429 = vld [vmem:[%s428] sm:$0xff]
      %vm430 = vcmask 523264
      %s431 = scalar_lea.vmem %s45, 640
      %432 = vst.msk [vmem:[%s431] sm:$0xff] %vm430, %v429
      %s433 = scalar_lea.vmem %s50, 584
      %v434 = vld [vmem:[%s433] sm:$0xff]
      %vm435 = vcmask 523264
      %s436 = scalar_lea.vmem %s45, 648
      %437 = vst.msk [vmem:[%s436] sm:$0xff] %vm435, %v434
      %s438 = scalar_lea.vmem %s50, 592
      %v439 = vld [vmem:[%s438] sm:$0xff]
      %vm440 = vcmask 523264
      %s441 = scalar_lea.vmem %s45, 656
      %442 = vst.msk [vmem:[%s441] sm:$0xff] %vm440, %v439
      %s443 = scalar_lea.vmem %s50, 600
      %v444 = vld [vmem:[%s443] sm:$0xff]
      %vm445 = vcmask 523264
      %s446 = scalar_lea.vmem %s45, 664
      %447 = vst.msk [vmem:[%s446] sm:$0xff] %vm445, %v444
      %s448 = scalar_lea.vmem %s50, 608
      %v449 = vld [vmem:[%s448] sm:$0xff]
      %vm450 = vcmask 523264
      %s451 = scalar_lea.vmem %s45, 672
      %452 = vst.msk [vmem:[%s451] sm:$0xf] %vm450, %v449
      %s453 = scalar_lea.vmem %s45, 676
      %454 = vst.msk [vmem:[%s453] sm:$0xf0] %vm450, %v449
      %s455 = scalar_lea.vmem %s50, 616
      %v456 = vld [vmem:[%s455] sm:$0xff]
      %vm457 = vcmask 523264
      %s458 = scalar_lea.vmem %s45, 684
      %459 = vst.msk [vmem:[%s458] sm:$0xff] %vm457, %v456
      %s460 = scalar_lea.vmem %s50, 624
      %v461 = vld [vmem:[%s460] sm:$0xff]
      %vm462 = vcmask 523264
      %s463 = scalar_lea.vmem %s45, 692
      %464 = vst.msk [vmem:[%s463] sm:$0xff] %vm462, %v461
      %s465 = scalar_lea.vmem %s50, 632
      %v466 = vld [vmem:[%s465] sm:$0xff]
      %vm467 = vcmask 523264
      %s468 = scalar_lea.vmem %s45, 700
      %469 = vst.msk [vmem:[%s468] sm:$0xff] %vm467, %v466
      %s470 = scalar_lea.vmem %s50, 640
      %v471 = vld [vmem:[%s470] sm:$0xff]
      %vm472 = vcmask 523264
      %s473 = scalar_lea.vmem %s45, 708
      %474 = vst.msk [vmem:[%s473] sm:$0xff] %vm472, %v471
      %s475 = scalar_lea.vmem %s50, 648
      %v476 = vld [vmem:[%s475] sm:$0xff]
      %vm477 = vcmask 523264
      %s478 = scalar_lea.vmem %s45, 720
      %479 = vst.msk [vmem:[%s478] sm:$0xff] %vm477, %v476
      %s480 = scalar_lea.vmem %s50, 656
      %v481 = vld [vmem:[%s480] sm:$0xff]
      %vm482 = vcmask 523264
      %s483 = scalar_lea.vmem %s45, 728
      %484 = vst.msk [vmem:[%s483] sm:$0xff] %vm482, %v481
      %s485 = scalar_lea.vmem %s50, 664
      %v486 = vld [vmem:[%s485] sm:$0xff]
      %vm487 = vcmask 523264
      %s488 = scalar_lea.vmem %s45, 736
      %489 = vst.msk [vmem:[%s488] sm:$0xff] %vm487, %v486
      %s490 = scalar_lea.vmem %s50, 672
      %v491 = vld [vmem:[%s490] sm:$0xff]
      %vm492 = vcmask 523264
      %s493 = scalar_lea.vmem %s45, 744
      %494 = vst.msk [vmem:[%s493] sm:$0xff] %vm492, %v491
      %s495 = scalar_lea.vmem %s50, 680
      %v496 = vld [vmem:[%s495] sm:$0xff]
      %vm497 = vcmask 523264
      %s498 = scalar_lea.vmem %s45, 752
      %499 = vst.msk [vmem:[%s498] sm:$0xf] %vm497, %v496
      %s500 = scalar_lea.vmem %s45, 756
      %501 = vst.msk [vmem:[%s500] sm:$0xf0] %vm497, %v496
      %s502 = scalar_lea.vmem %s50, 688
      %v503 = vld [vmem:[%s502] sm:$0xff]
      %vm504 = vcmask 523264
      %s505 = scalar_lea.vmem %s45, 764
      %506 = vst.msk [vmem:[%s505] sm:$0xff] %vm504, %v503
      %s507 = scalar_lea.vmem %s50, 696
      %v508 = vld [vmem:[%s507] sm:$0xff]
      %vm509 = vcmask 523264
      %s510 = scalar_lea.vmem %s45, 772
      %511 = vst.msk [vmem:[%s510] sm:$0xff] %vm509, %v508
      %s512 = scalar_lea.vmem %s50, 704
      %v513 = vld [vmem:[%s512] sm:$0xff]
      %vm514 = vcmask 523264
      %s515 = scalar_lea.vmem %s45, 780
      %516 = vst.msk [vmem:[%s515] sm:$0xff] %vm514, %v513
      %s517 = scalar_lea.vmem %s50, 712
      %v518 = vld [vmem:[%s517] sm:$0xff]
      %vm519 = vcmask 523264
      %s520 = scalar_lea.vmem %s45, 788
      %521 = vst.msk [vmem:[%s520] sm:$0xff] %vm519, %v518
      %s522 = scalar_lea.vmem %s50, 720
      %v523 = vld [vmem:[%s522] sm:$0xff]
      %vm524 = vcmask 523264
      %s525 = scalar_lea.vmem %s45, 800
      %526 = vst.msk [vmem:[%s525] sm:$0xff] %vm524, %v523
      %s527 = scalar_lea.vmem %s50, 728
      %v528 = vld [vmem:[%s527] sm:$0xff]
      %vm529 = vcmask 523264
      %s530 = scalar_lea.vmem %s45, 808
      %531 = vst.msk [vmem:[%s530] sm:$0xff] %vm529, %v528
      %s532 = scalar_lea.vmem %s50, 736
      %v533 = vld [vmem:[%s532] sm:$0xff]
      %vm534 = vcmask 523264
      %s535 = scalar_lea.vmem %s45, 816
      %536 = vst.msk [vmem:[%s535] sm:$0xff] %vm534, %v533
      %s537 = scalar_lea.vmem %s50, 744
      %v538 = vld [vmem:[%s537] sm:$0xff]
      %vm539 = vcmask 523264
      %s540 = scalar_lea.vmem %s45, 824
      %541 = vst.msk [vmem:[%s540] sm:$0xff] %vm539, %v538
      %s542 = scalar_lea.vmem %s50, 752
      %v543 = vld [vmem:[%s542] sm:$0xff]
      %vm544 = vcmask 523264
      %s545 = scalar_lea.vmem %s45, 832
      %546 = vst.msk [vmem:[%s545] sm:$0xf] %vm544, %v543
      %s547 = scalar_lea.vmem %s45, 836
      %548 = vst.msk [vmem:[%s547] sm:$0xf0] %vm544, %v543
      %s549 = scalar_lea.vmem %s50, 760
      %v550 = vld [vmem:[%s549] sm:$0xff]
      %vm551 = vcmask 523264
      %s552 = scalar_lea.vmem %s45, 844
      %553 = vst.msk [vmem:[%s552] sm:$0xff] %vm551, %v550
      %s554 = scalar_lea.vmem %s50, 768
      %v555 = vld [vmem:[%s554] sm:$0xff]
      %vm556 = vcmask 523264
      %s557 = scalar_lea.vmem %s45, 852
      %558 = vst.msk [vmem:[%s557] sm:$0xff] %vm556, %v555
      %s559 = scalar_lea.vmem %s50, 776
      %v560 = vld [vmem:[%s559] sm:$0xff]
      %vm561 = vcmask 523264
      %s562 = scalar_lea.vmem %s45, 860
      %563 = vst.msk [vmem:[%s562] sm:$0xff] %vm561, %v560
      %s564 = scalar_lea.vmem %s50, 784
      %v565 = vld [vmem:[%s564] sm:$0xff]
      %vm566 = vcmask 523264
      %s567 = scalar_lea.vmem %s45, 868
      %568 = vst.msk [vmem:[%s567] sm:$0xff] %vm566, %v565
      %s569 = scalar_lea.vmem %s50, 792
      %v570 = vld [vmem:[%s569] sm:$0xff]
      %vm571 = vcmask 523264
      %s572 = scalar_lea.vmem %s45, 880
      %573 = vst.msk [vmem:[%s572] sm:$0xff] %vm571, %v570
      %s574 = scalar_lea.vmem %s50, 800
      %v575 = vld [vmem:[%s574] sm:$0xff]
      %vm576 = vcmask 523264
      %s577 = scalar_lea.vmem %s45, 888
      %578 = vst.msk [vmem:[%s577] sm:$0xff] %vm576, %v575
      %s579 = scalar_lea.vmem %s50, 808
      %v580 = vld [vmem:[%s579] sm:$0xff]
      %vm581 = vcmask 523264
      %s582 = scalar_lea.vmem %s45, 896
      %583 = vst.msk [vmem:[%s582] sm:$0xff] %vm581, %v580
      %s584 = scalar_lea.vmem %s50, 816
      %v585 = vld [vmem:[%s584] sm:$0xff]
      %vm586 = vcmask 523264
      %s587 = scalar_lea.vmem %s45, 904
      %588 = vst.msk [vmem:[%s587] sm:$0xff] %vm586, %v585
      %s589 = scalar_lea.vmem %s50, 824
      %v590 = vld [vmem:[%s589] sm:$0xff]
      %vm591 = vcmask 523264
      %s592 = scalar_lea.vmem %s45, 912
      %593 = vst.msk [vmem:[%s592] sm:$0xf] %vm591, %v590
      %s594 = scalar_lea.vmem %s45, 916
      %595 = vst.msk [vmem:[%s594] sm:$0xf0] %vm591, %v590
      %s596 = scalar_lea.vmem %s50, 832
      %v597 = vld [vmem:[%s596] sm:$0xff]
      %vm598 = vcmask 523264
      %s599 = scalar_lea.vmem %s45, 924
      %600 = vst.msk [vmem:[%s599] sm:$0xff] %vm598, %v597
      %s601 = scalar_lea.vmem %s50, 840
      %v602 = vld [vmem:[%s601] sm:$0xff]
      %vm603 = vcmask 523264
      %s604 = scalar_lea.vmem %s45, 932
      %605 = vst.msk [vmem:[%s604] sm:$0xff] %vm603, %v602
      %s606 = scalar_lea.vmem %s50, 848
      %v607 = vld [vmem:[%s606] sm:$0xff]
      %vm608 = vcmask 523264
      %s609 = scalar_lea.vmem %s45, 940
      %610 = vst.msk [vmem:[%s609] sm:$0xff] %vm608, %v607
      %s611 = scalar_lea.vmem %s50, 856
      %v612 = vld [vmem:[%s611] sm:$0xff]
      %vm613 = vcmask 523264
      %s614 = scalar_lea.vmem %s45, 948
      %615 = vst.msk [vmem:[%s614] sm:$0xff] %vm613, %v612
      %s616 = scalar_lea.vmem %s50, 864
      %v617 = vld [vmem:[%s616] sm:$0xff]
      %vm618 = vcmask 523264
      %s619 = scalar_lea.vmem %s45, 960
      %620 = vst.msk [vmem:[%s619] sm:$0xff] %vm618, %v617
      %s621 = scalar_lea.vmem %s50, 872
      %v622 = vld [vmem:[%s621] sm:$0xff]
      %vm623 = vcmask 523264
      %s624 = scalar_lea.vmem %s45, 968
      %625 = vst.msk [vmem:[%s624] sm:$0xff] %vm623, %v622
      %s626 = scalar_lea.vmem %s50, 880
      %v627 = vld [vmem:[%s626] sm:$0xff]
      %vm628 = vcmask 523264
      %s629 = scalar_lea.vmem %s45, 976
      %630 = vst.msk [vmem:[%s629] sm:$0xff] %vm628, %v627
      %s631 = scalar_lea.vmem %s50, 888
      %v632 = vld [vmem:[%s631] sm:$0xff]
      %vm633 = vcmask 523264
      %s634 = scalar_lea.vmem %s45, 984
      %635 = vst.msk [vmem:[%s634] sm:$0xff] %vm633, %v632
      %s636 = scalar_lea.vmem %s50, 896
      %v637 = vld [vmem:[%s636] sm:$0xff]
      %vm638 = vcmask 523264
      %s639 = scalar_lea.vmem %s45, 992
      %640 = vst.msk [vmem:[%s639] sm:$0xf] %vm638, %v637
      %s641 = scalar_lea.vmem %s45, 996
      %642 = vst.msk [vmem:[%s641] sm:$0xf0] %vm638, %v637
      %s643 = scalar_lea.vmem %s50, 904
      %v644 = vld [vmem:[%s643] sm:$0xff]
      %vm645 = vcmask 523264
      %s646 = scalar_lea.vmem %s45, 1004
      %647 = vst.msk [vmem:[%s646] sm:$0xff] %vm645, %v644
      %s648 = scalar_lea.vmem %s50, 912
      %v649 = vld [vmem:[%s648] sm:$0xff]
      %vm650 = vcmask 523264
      %s651 = scalar_lea.vmem %s45, 1012
      %652 = vst.msk [vmem:[%s651] sm:$0xff] %vm650, %v649
      %s653 = scalar_lea.vmem %s50, 920
      %v654 = vld [vmem:[%s653] sm:$0xff]
      %vm655 = vcmask 523264
      %s656 = scalar_lea.vmem %s45, 1020
      %657 = vst.msk [vmem:[%s656] sm:$0xff] %vm655, %v654
      %s658 = scalar_lea.vmem %s50, 928
      %v659 = vld [vmem:[%s658] sm:$0xff]
      %vm660 = vcmask 523264
      %s661 = scalar_lea.vmem %s45, 1028
      %662 = vst.msk [vmem:[%s661] sm:$0xff] %vm660, %v659
      %s663 = scalar_lea.vmem %s50, 936
      %v664 = vld [vmem:[%s663] sm:$0xff]
      %vm665 = vcmask 523264
      %s666 = scalar_lea.vmem %s45, 1040
      %667 = vst.msk [vmem:[%s666] sm:$0xff] %vm665, %v664
      %s668 = scalar_lea.vmem %s50, 944
      %v669 = vld [vmem:[%s668] sm:$0xff]
      %vm670 = vcmask 523264
      %s671 = scalar_lea.vmem %s45, 1048
      %672 = vst.msk [vmem:[%s671] sm:$0xff] %vm670, %v669
      %s673 = scalar_lea.vmem %s50, 952
      %v674 = vld [vmem:[%s673] sm:$0xff]
      %vm675 = vcmask 523264
      %s676 = scalar_lea.vmem %s45, 1056
      %677 = vst.msk [vmem:[%s676] sm:$0xff] %vm675, %v674
      %s678 = scalar_lea.vmem %s50, 960
      %v679 = vld [vmem:[%s678] sm:$0xff]
      %vm680 = vcmask 523264
      %s681 = scalar_lea.vmem %s45, 1064
      %682 = vst.msk [vmem:[%s681] sm:$0xff] %vm680, %v679
      %s683 = scalar_lea.vmem %s50, 968
      %v684 = vld [vmem:[%s683] sm:$0xff]
      %vm685 = vcmask 523264
      %s686 = scalar_lea.vmem %s45, 1072
      %687 = vst.msk [vmem:[%s686] sm:$0xf] %vm685, %v684
      %s688 = scalar_lea.vmem %s45, 1076
      %689 = vst.msk [vmem:[%s688] sm:$0xf0] %vm685, %v684
      %s690 = scalar_lea.vmem %s50, 976
      %v691 = vld [vmem:[%s690] sm:$0xff]
      %vm692 = vcmask 523264
      %s693 = scalar_lea.vmem %s45, 1084
      %694 = vst.msk [vmem:[%s693] sm:$0xff] %vm692, %v691
      %s695 = scalar_lea.vmem %s50, 984
      %v696 = vld [vmem:[%s695] sm:$0xff]
      %vm697 = vcmask 523264
      %s698 = scalar_lea.vmem %s45, 1092
      %699 = vst.msk [vmem:[%s698] sm:$0xff] %vm697, %v696
      %s700 = scalar_lea.vmem %s50, 992
      %v701 = vld [vmem:[%s700] sm:$0xff]
      %vm702 = vcmask 523264
      %s703 = scalar_lea.vmem %s45, 1100
      %704 = vst.msk [vmem:[%s703] sm:$0xff] %vm702, %v701
      %s705 = scalar_lea.vmem %s50, 1000
      %v706 = vld [vmem:[%s705] sm:$0xff]
      %vm707 = vcmask 523264
      %s708 = scalar_lea.vmem %s45, 1108
      %709 = vst.msk [vmem:[%s708] sm:$0xff] %vm707, %v706
      %s710 = scalar_lea.vmem %s50, 1008
      %v711 = vld [vmem:[%s710] sm:$0xff]
      %vm712 = vcmask 523264
      %s713 = scalar_lea.vmem %s45, 1120
      %714 = vst.msk [vmem:[%s713] sm:$0xff] %vm712, %v711
      %s715 = scalar_lea.vmem %s50, 1016
      %v716 = vld [vmem:[%s715] sm:$0xff]
      %vm717 = vcmask 523264
      %s718 = scalar_lea.vmem %s45, 1128
      %719 = vst.msk [vmem:[%s718] sm:$0xff] %vm717, %v716
      %s720 = scalar_lea.vmem %s50, 1024
      %v721 = vld [vmem:[%s720] sm:$0xff]
      %vm722 = vcmask 523264
      %s723 = scalar_lea.vmem %s45, 1136
      %724 = vst.msk [vmem:[%s723] sm:$0xff] %vm722, %v721
      %s725 = scalar_lea.vmem %s50, 1032
      %v726 = vld [vmem:[%s725] sm:$0xff]
      %vm727 = vcmask 523264
      %s728 = scalar_lea.vmem %s45, 1144
      %729 = vst.msk [vmem:[%s728] sm:$0xff] %vm727, %v726
      %s730 = scalar_lea.vmem %s50, 1040
      %v731 = vld [vmem:[%s730] sm:$0xff]
      %vm732 = vcmask 523264
      %s733 = scalar_lea.vmem %s45, 1152
      %734 = vst.msk [vmem:[%s733] sm:$0xf] %vm732, %v731
      %s735 = scalar_lea.vmem %s45, 1156
      %736 = vst.msk [vmem:[%s735] sm:$0xf0] %vm732, %v731
      %s737 = scalar_lea.vmem %s50, 1048
      %v738 = vld [vmem:[%s737] sm:$0xff]
      %vm739 = vcmask 523264
      %s740 = scalar_lea.vmem %s45, 1164
      %741 = vst.msk [vmem:[%s740] sm:$0xff] %vm739, %v738
      %s742 = scalar_lea.vmem %s50, 1056
      %v743 = vld [vmem:[%s742] sm:$0xff]
      %vm744 = vcmask 523264
      %s745 = scalar_lea.vmem %s45, 1172
      %746 = vst.msk [vmem:[%s745] sm:$0xff] %vm744, %v743
      %s747 = scalar_lea.vmem %s50, 1064
      %v748 = vld [vmem:[%s747] sm:$0xff]
      %vm749 = vcmask 523264
      %s750 = scalar_lea.vmem %s45, 1180
      %751 = vst.msk [vmem:[%s750] sm:$0xff] %vm749, %v748
      %s752 = scalar_lea.vmem %s50, 1072
      %v753 = vld [vmem:[%s752] sm:$0xff]
      %vm754 = vcmask 523264
      %s755 = scalar_lea.vmem %s45, 1188
      %756 = vst.msk [vmem:[%s755] sm:$0xff] %vm754, %v753
      %s757 = scalar_lea.vmem %s50, 1080
      %v758 = vld [vmem:[%s757] sm:$0xff]
      %vm759 = vcmask 523264
      %s760 = scalar_lea.vmem %s45, 1200
      %761 = vst.msk [vmem:[%s760] sm:$0xff] %vm759, %v758
      %s762 = scalar_lea.vmem %s50, 1088
      %v763 = vld [vmem:[%s762] sm:$0xff]
      %vm764 = vcmask 523264
      %s765 = scalar_lea.vmem %s45, 1208
      %766 = vst.msk [vmem:[%s765] sm:$0xff] %vm764, %v763
      %s767 = scalar_lea.vmem %s50, 1096
      %v768 = vld [vmem:[%s767] sm:$0xff]
      %vm769 = vcmask 523264
      %s770 = scalar_lea.vmem %s45, 1216
      %771 = vst.msk [vmem:[%s770] sm:$0xff] %vm769, %v768
      %s772 = scalar_lea.vmem %s50, 1104
      %v773 = vld [vmem:[%s772] sm:$0xff]
      %vm774 = vcmask 523264
      %s775 = scalar_lea.vmem %s45, 1224
      %776 = vst.msk [vmem:[%s775] sm:$0xff] %vm774, %v773
      %s777 = scalar_lea.vmem %s50, 1112
      %v778 = vld [vmem:[%s777] sm:$0xff]
      %vm779 = vcmask 523264
      %s780 = scalar_lea.vmem %s45, 1232
      %781 = vst.msk [vmem:[%s780] sm:$0xf] %vm779, %v778
      %s782 = scalar_lea.vmem %s45, 1236
      %783 = vst.msk [vmem:[%s782] sm:$0xf0] %vm779, %v778
      %s784 = scalar_lea.vmem %s50, 1120
      %v785 = vld [vmem:[%s784] sm:$0xff]
      %vm786 = vcmask 523264
      %s787 = scalar_lea.vmem %s45, 1244
      %788 = vst.msk [vmem:[%s787] sm:$0xff] %vm786, %v785
      %s789 = scalar_lea.vmem %s50, 1128
      %v790 = vld [vmem:[%s789] sm:$0xff]
      %vm791 = vcmask 523264
      %s792 = scalar_lea.vmem %s45, 1252
      %793 = vst.msk [vmem:[%s792] sm:$0xff] %vm791, %v790
      %s794 = scalar_lea.vmem %s50, 1136
      %v795 = vld [vmem:[%s794] sm:$0xff]
      %vm796 = vcmask 523264
      %s797 = scalar_lea.vmem %s45, 1260
      %798 = vst.msk [vmem:[%s797] sm:$0xff] %vm796, %v795
      %s799 = scalar_lea.vmem %s50, 1144
      %v800 = vld [vmem:[%s799] sm:$0xff]
      %vm801 = vcmask 523264
      %s802 = scalar_lea.vmem %s45, 1268
      %803 = vst.msk [vmem:[%s802] sm:$0xff] %vm801, %v800
      %s804 = scalar_lea.vmem %s50, 1152
      %v805 = vld [vmem:[%s804] sm:$0xff]
      %vm806 = vcmask 523264
      %s807 = scalar_lea.vmem %s45, 1280
      %808 = vst.msk [vmem:[%s807] sm:$0xff] %vm806, %v805
      %s809 = scalar_lea.vmem %s50, 1160
      %v810 = vld [vmem:[%s809] sm:$0xff]
      %vm811 = vcmask 523264
      %s812 = scalar_lea.vmem %s45, 1288
      %813 = vst.msk [vmem:[%s812] sm:$0xff] %vm811, %v810
      %s814 = scalar_lea.vmem %s50, 1168
      %v815 = vld [vmem:[%s814] sm:$0xff]
      %vm816 = vcmask 523264
      %s817 = scalar_lea.vmem %s45, 1296
      %818 = vst.msk [vmem:[%s817] sm:$0xff] %vm816, %v815
      %s819 = scalar_lea.vmem %s50, 1176
      %v820 = vld [vmem:[%s819] sm:$0xff]
      %vm821 = vcmask 523264
      %s822 = scalar_lea.vmem %s45, 1304
      %823 = vst.msk [vmem:[%s822] sm:$0xff] %vm821, %v820
      %s824 = scalar_lea.vmem %s50, 1184
      %v825 = vld [vmem:[%s824] sm:$0xff]
      %vm826 = vcmask 523264
      %s827 = scalar_lea.vmem %s45, 1312
      %828 = vst.msk [vmem:[%s827] sm:$0xf] %vm826, %v825
      %s829 = scalar_lea.vmem %s45, 1316
      %830 = vst.msk [vmem:[%s829] sm:$0xf0] %vm826, %v825
      %s831 = scalar_lea.vmem %s50, 1192
      %v832 = vld [vmem:[%s831] sm:$0xff]
      %vm833 = vcmask 523264
      %s834 = scalar_lea.vmem %s45, 1324
      %835 = vst.msk [vmem:[%s834] sm:$0xff] %vm833, %v832
      %s836 = scalar_lea.vmem %s50, 1200
      %v837 = vld [vmem:[%s836] sm:$0xff]
      %vm838 = vcmask 523264
      %s839 = scalar_lea.vmem %s45, 1332
      %840 = vst.msk [vmem:[%s839] sm:$0xff] %vm838, %v837
      %s841 = scalar_lea.vmem %s50, 1208
      %v842 = vld [vmem:[%s841] sm:$0xff]
      %vm843 = vcmask 523264
      %s844 = scalar_lea.vmem %s45, 1340
      %845 = vst.msk [vmem:[%s844] sm:$0xff] %vm843, %v842
      %s846 = scalar_lea.vmem %s50, 1216
      %v847 = vld [vmem:[%s846] sm:$0xff]
      %vm848 = vcmask 523264
      %s849 = scalar_lea.vmem %s45, 1348
      %850 = vst.msk [vmem:[%s849] sm:$0xff] %vm848, %v847
      %s851 = scalar_lea.vmem %s50, 1224
      %v852 = vld [vmem:[%s851] sm:$0xff]
      %vm853 = vcmask 523264
      %s854 = scalar_lea.vmem %s45, 1360
      %855 = vst.msk [vmem:[%s854] sm:$0xff] %vm853, %v852
      %s856 = scalar_lea.vmem %s50, 1232
      %v857 = vld [vmem:[%s856] sm:$0xff]
      %vm858 = vcmask 523264
      %s859 = scalar_lea.vmem %s45, 1368
      %860 = vst.msk [vmem:[%s859] sm:$0xff] %vm858, %v857
      %s861 = scalar_lea.vmem %s50, 1240
      %v862 = vld [vmem:[%s861] sm:$0xff]
      %vm863 = vcmask 523264
      %s864 = scalar_lea.vmem %s45, 1376
      %865 = vst.msk [vmem:[%s864] sm:$0xff] %vm863, %v862
      %s866 = scalar_lea.vmem %s50, 1248
      %v867 = vld [vmem:[%s866] sm:$0xff]
      %vm868 = vcmask 523264
      %s869 = scalar_lea.vmem %s45, 1384
      %870 = vst.msk [vmem:[%s869] sm:$0xff] %vm868, %v867
      %s871 = scalar_lea.vmem %s50, 1256
      %v872 = vld [vmem:[%s871] sm:$0xff]
      %vm873 = vcmask 523264
      %s874 = scalar_lea.vmem %s45, 1392
      %875 = vst.msk [vmem:[%s874] sm:$0xf] %vm873, %v872
      %s876 = scalar_lea.vmem %s45, 1396
      %877 = vst.msk [vmem:[%s876] sm:$0xf0] %vm873, %v872
      %s878 = scalar_lea.vmem %s50, 1264
      %v879 = vld [vmem:[%s878] sm:$0xff]
      %vm880 = vcmask 523264
      %s881 = scalar_lea.vmem %s45, 1404
      %882 = vst.msk [vmem:[%s881] sm:$0xff] %vm880, %v879
      %s883 = scalar_lea.vmem %s50, 1272
      %v884 = vld [vmem:[%s883] sm:$0xff]
      %vm885 = vcmask 523264
      %s886 = scalar_lea.vmem %s45, 1412
      %887 = vst.msk [vmem:[%s886] sm:$0xff] %vm885, %v884
      %s888 = scalar_lea.vmem %s50, 1280
      %v889 = vld [vmem:[%s888] sm:$0xff]
      %vm890 = vcmask 523264
      %s891 = scalar_lea.vmem %s45, 1420
      %892 = vst.msk [vmem:[%s891] sm:$0xff] %vm890, %v889
      %s893 = scalar_lea.vmem %s50, 1288
      %v894 = vld [vmem:[%s893] sm:$0xff]
      %vm895 = vcmask 523264
      %s896 = scalar_lea.vmem %s45, 1428
      %897 = vst.msk [vmem:[%s896] sm:$0xff] %vm895, %v894
      %s898 = scalar_lea.vmem %s50, 1296
      %v899 = vld [vmem:[%s898] sm:$0xff]
      %vm900 = vcmask 523264
      %s901 = scalar_lea.vmem %s45, 1440
      %902 = vst.msk [vmem:[%s901] sm:$0xff] %vm900, %v899
      %s903 = scalar_lea.vmem %s50, 1304
      %v904 = vld [vmem:[%s903] sm:$0xff]
      %vm905 = vcmask 523264
      %s906 = scalar_lea.vmem %s45, 1448
      %907 = vst.msk [vmem:[%s906] sm:$0xff] %vm905, %v904
      %s908 = scalar_lea.vmem %s50, 1312
      %v909 = vld [vmem:[%s908] sm:$0xff]
      %vm910 = vcmask 523264
      %s911 = scalar_lea.vmem %s45, 1456
      %912 = vst.msk [vmem:[%s911] sm:$0xff] %vm910, %v909
      %s913 = scalar_lea.vmem %s50, 1320
      %v914 = vld [vmem:[%s913] sm:$0xff]
      %vm915 = vcmask 523264
      %s916 = scalar_lea.vmem %s45, 1464
      %917 = vst.msk [vmem:[%s916] sm:$0xff] %vm915, %v914
      %s918 = scalar_lea.vmem %s50, 1328
      %v919 = vld [vmem:[%s918] sm:$0xff]
      %vm920 = vcmask 523264
      %s921 = scalar_lea.vmem %s45, 1472
      %922 = vst.msk [vmem:[%s921] sm:$0xf] %vm920, %v919
      %s923 = scalar_lea.vmem %s45, 1476
      %924 = vst.msk [vmem:[%s923] sm:$0xf0] %vm920, %v919
      %s925 = scalar_lea.vmem %s50, 1336
      %v926 = vld [vmem:[%s925] sm:$0xff]
      %vm927 = vcmask 523264
      %s928 = scalar_lea.vmem %s45, 1484
      %929 = vst.msk [vmem:[%s928] sm:$0xff] %vm927, %v926
      %s930 = scalar_lea.vmem %s50, 1344
      %v931 = vld [vmem:[%s930] sm:$0xff]
      %vm932 = vcmask 523264
      %s933 = scalar_lea.vmem %s45, 1492
      %934 = vst.msk [vmem:[%s933] sm:$0xff] %vm932, %v931
      %s935 = scalar_lea.vmem %s50, 1352
      %v936 = vld [vmem:[%s935] sm:$0xff]
      %vm937 = vcmask 523264
      %s938 = scalar_lea.vmem %s45, 1500
      %939 = vst.msk [vmem:[%s938] sm:$0xff] %vm937, %v936
      %s940 = scalar_lea.vmem %s50, 1360
      %v941 = vld [vmem:[%s940] sm:$0xff]
      %vm942 = vcmask 523264
      %s943 = scalar_lea.vmem %s45, 1508
      %944 = vst.msk [vmem:[%s943] sm:$0xff] %vm942, %v941
      %s945 = scalar_lea.vmem %s50, 1368
      %v946 = vld [vmem:[%s945] sm:$0xff]
      %vm947 = vcmask 523264
      %s948 = scalar_lea.vmem %s45, 1520
      %949 = vst.msk [vmem:[%s948] sm:$0xff] %vm947, %v946
      %s950 = scalar_lea.vmem %s50, 1376
      %v951 = vld [vmem:[%s950] sm:$0xff]
      %vm952 = vcmask 523264
      %s953 = scalar_lea.vmem %s45, 1528
      %954 = vst.msk [vmem:[%s953] sm:$0xff] %vm952, %v951
      %s955 = scalar_lea.vmem %s50, 1384
      %v956 = vld [vmem:[%s955] sm:$0xff]
      %vm957 = vcmask 523264
      %s958 = scalar_lea.vmem %s45, 1536
      %959 = vst.msk [vmem:[%s958] sm:$0xff] %vm957, %v956
      %s960 = scalar_lea.vmem %s50, 1392
      %v961 = vld [vmem:[%s960] sm:$0xff]
      %vm962 = vcmask 523264
      %s963 = scalar_lea.vmem %s45, 1544
      %964 = vst.msk [vmem:[%s963] sm:$0xff] %vm962, %v961
      %s965 = scalar_lea.vmem %s50, 1400
      %v966 = vld [vmem:[%s965] sm:$0xff]
      %vm967 = vcmask 523264
      %s968 = scalar_lea.vmem %s45, 1552
      %969 = vst.msk [vmem:[%s968] sm:$0xf] %vm967, %v966
      %s970 = scalar_lea.vmem %s45, 1556
      %971 = vst.msk [vmem:[%s970] sm:$0xf0] %vm967, %v966
      %s972 = scalar_lea.vmem %s50, 1408
      %v973 = vld [vmem:[%s972] sm:$0xff]
      %vm974 = vcmask 523264
      %s975 = scalar_lea.vmem %s45, 1564
      %976 = vst.msk [vmem:[%s975] sm:$0xff] %vm974, %v973
      %s977 = scalar_lea.vmem %s50, 1416
      %v978 = vld [vmem:[%s977] sm:$0xff]
      %vm979 = vcmask 523264
      %s980 = scalar_lea.vmem %s45, 1572
      %981 = vst.msk [vmem:[%s980] sm:$0xff] %vm979, %v978
      %s982 = scalar_lea.vmem %s50, 1424
      %v983 = vld [vmem:[%s982] sm:$0xff]
      %vm984 = vcmask 523264
      %s985 = scalar_lea.vmem %s45, 1580
      %986 = vst.msk [vmem:[%s985] sm:$0xff] %vm984, %v983
      %s987 = scalar_lea.vmem %s50, 1432
      %v988 = vld [vmem:[%s987] sm:$0xff]
      %vm989 = vcmask 523264
      %s990 = scalar_lea.vmem %s45, 1588
      %991 = vst.msk [vmem:[%s990] sm:$0xff] %vm989, %v988
      %s992 = scalar_lea.vmem %s50, 1440
      %v993 = vld [vmem:[%s992] sm:$0xff]
      %vm994 = vcmask 523264
      %s995 = scalar_lea.vmem %s45, 1600
      %996 = vst.msk [vmem:[%s995] sm:$0xff] %vm994, %v993
      %s997 = scalar_lea.vmem %s50, 1448
      %v998 = vld [vmem:[%s997] sm:$0xff]
      %vm999 = vcmask 523264
      %s1000 = scalar_lea.vmem %s45, 1608
      %1001 = vst.msk [vmem:[%s1000] sm:$0xff] %vm999, %v998
      %s1002 = scalar_lea.vmem %s50, 1456
      %v1003 = vld [vmem:[%s1002] sm:$0xff]
      %vm1004 = vcmask 523264
      %s1005 = scalar_lea.vmem %s45, 1616
      %1006 = vst.msk [vmem:[%s1005] sm:$0xff] %vm1004, %v1003
      %s1007 = scalar_lea.vmem %s50, 1464
      %v1008 = vld [vmem:[%s1007] sm:$0xff]
      %vm1009 = vcmask 523264
      %s1010 = scalar_lea.vmem %s45, 1624
      %1011 = vst.msk [vmem:[%s1010] sm:$0xff] %vm1009, %v1008
      %s1012 = scalar_lea.vmem %s50, 1472
      %v1013 = vld [vmem:[%s1012] sm:$0xff]
      %vm1014 = vcmask 523264
      %s1015 = scalar_lea.vmem %s45, 1632
      %1016 = vst.msk [vmem:[%s1015] sm:$0xf] %vm1014, %v1013
      %s1017 = scalar_lea.vmem %s45, 1636
      %1018 = vst.msk [vmem:[%s1017] sm:$0xf0] %vm1014, %v1013
      %s1019 = scalar_lea.vmem %s50, 1480
      %v1020 = vld [vmem:[%s1019] sm:$0xff]
      %vm1021 = vcmask 523264
      %s1022 = scalar_lea.vmem %s45, 1644
      %1023 = vst.msk [vmem:[%s1022] sm:$0xff] %vm1021, %v1020
      %s1024 = scalar_lea.vmem %s50, 1488
      %v1025 = vld [vmem:[%s1024] sm:$0xff]
      %vm1026 = vcmask 523264
      %s1027 = scalar_lea.vmem %s45, 1652
      %1028 = vst.msk [vmem:[%s1027] sm:$0xff] %vm1026, %v1025
      %s1029 = scalar_lea.vmem %s50, 1496
      %v1030 = vld [vmem:[%s1029] sm:$0xff]
      %vm1031 = vcmask 523264
      %s1032 = scalar_lea.vmem %s45, 1660
      %1033 = vst.msk [vmem:[%s1032] sm:$0xff] %vm1031, %v1030
      %s1034 = scalar_lea.vmem %s50, 1504
      %v1035 = vld [vmem:[%s1034] sm:$0xff]
      %vm1036 = vcmask 523264
      %s1037 = scalar_lea.vmem %s45, 1668
      %1038 = vst.msk [vmem:[%s1037] sm:$0xff] %vm1036, %v1035
      %s1039 = scalar_lea.vmem %s50, 1512
      %v1040 = vld [vmem:[%s1039] sm:$0xff]
      %vm1041 = vcmask 523264
      %s1042 = scalar_lea.vmem %s45, 1680
      %1043 = vst.msk [vmem:[%s1042] sm:$0xff] %vm1041, %v1040
      %s1044 = scalar_lea.vmem %s50, 1520
      %v1045 = vld [vmem:[%s1044] sm:$0xff]
      %vm1046 = vcmask 523264
      %s1047 = scalar_lea.vmem %s45, 1688
      %1048 = vst.msk [vmem:[%s1047] sm:$0xff] %vm1046, %v1045
      %s1049 = scalar_lea.vmem %s50, 1528
      %v1050 = vld [vmem:[%s1049] sm:$0xff]
      %vm1051 = vcmask 523264
      %s1052 = scalar_lea.vmem %s45, 1696
      %1053 = vst.msk [vmem:[%s1052] sm:$0xff] %vm1051, %v1050
      %s1054 = scalar_lea.vmem %s50, 1536
      %v1055 = vld [vmem:[%s1054] sm:$0xff]
      %vm1056 = vcmask 523264
      %s1057 = scalar_lea.vmem %s45, 1704
      %1058 = vst.msk [vmem:[%s1057] sm:$0xff] %vm1056, %v1055
      %s1059 = scalar_lea.vmem %s50, 1544
      %v1060 = vld [vmem:[%s1059] sm:$0xff]
      %vm1061 = vcmask 523264
      %s1062 = scalar_lea.vmem %s45, 1712
      %1063 = vst.msk [vmem:[%s1062] sm:$0xf] %vm1061, %v1060
      %s1064 = scalar_lea.vmem %s45, 1716
      %1065 = vst.msk [vmem:[%s1064] sm:$0xf0] %vm1061, %v1060
      %s1066 = scalar_lea.vmem %s50, 1552
      %v1067 = vld [vmem:[%s1066] sm:$0xff]
      %vm1068 = vcmask 523264
      %s1069 = scalar_lea.vmem %s45, 1724
      %1070 = vst.msk [vmem:[%s1069] sm:$0xff] %vm1068, %v1067
      %s1071 = scalar_lea.vmem %s50, 1560
      %v1072 = vld [vmem:[%s1071] sm:$0xff]
      %vm1073 = vcmask 523264
      %s1074 = scalar_lea.vmem %s45, 1732
      %1075 = vst.msk [vmem:[%s1074] sm:$0xff] %vm1073, %v1072
      %s1076 = scalar_lea.vmem %s50, 1568
      %v1077 = vld [vmem:[%s1076] sm:$0xff]
      %vm1078 = vcmask 523264
      %s1079 = scalar_lea.vmem %s45, 1740
      %1080 = vst.msk [vmem:[%s1079] sm:$0xff] %vm1078, %v1077
      %s1081 = scalar_lea.vmem %s50, 1576
      %v1082 = vld [vmem:[%s1081] sm:$0xff]
      %vm1083 = vcmask 523264
      %s1084 = scalar_lea.vmem %s45, 1748
      %1085 = vst.msk [vmem:[%s1084] sm:$0xff] %vm1083, %v1082
      %s1086 = scalar_lea.vmem %s50, 1584
      %v1087 = vld [vmem:[%s1086] sm:$0xff]
      %vm1088 = vcmask 523264
      %s1089 = scalar_lea.vmem %s45, 1760
      %1090 = vst.msk [vmem:[%s1089] sm:$0xff] %vm1088, %v1087
      %s1091 = scalar_lea.vmem %s50, 1592
      %v1092 = vld [vmem:[%s1091] sm:$0xff]
      %vm1093 = vcmask 523264
      %s1094 = scalar_lea.vmem %s45, 1768
      %1095 = vst.msk [vmem:[%s1094] sm:$0xff] %vm1093, %v1092
      %s1096 = scalar_lea.vmem %s50, 1600
      %v1097 = vld [vmem:[%s1096] sm:$0xff]
      %vm1098 = vcmask 523264
      %s1099 = scalar_lea.vmem %s45, 1776
      %1100 = vst.msk [vmem:[%s1099] sm:$0xff] %vm1098, %v1097
      %s1101 = scalar_lea.vmem %s50, 1608
      %v1102 = vld [vmem:[%s1101] sm:$0xff]
      %vm1103 = vcmask 523264
      %s1104 = scalar_lea.vmem %s45, 1784
      %1105 = vst.msk [vmem:[%s1104] sm:$0xff] %vm1103, %v1102
      %s1106 = scalar_lea.vmem %s50, 1616
      %v1107 = vld [vmem:[%s1106] sm:$0xff]
      %vm1108 = vcmask 523264
      %s1109 = scalar_lea.vmem %s45, 1792
      %1110 = vst.msk [vmem:[%s1109] sm:$0xf] %vm1108, %v1107
      %s1111 = scalar_lea.vmem %s45, 1796
      %1112 = vst.msk [vmem:[%s1111] sm:$0xf0] %vm1108, %v1107
      %s1113 = scalar_lea.vmem %s50, 1624
      %v1114 = vld [vmem:[%s1113] sm:$0xff]
      %vm1115 = vcmask 523264
      %s1116 = scalar_lea.vmem %s45, 1804
      %1117 = vst.msk [vmem:[%s1116] sm:$0xff] %vm1115, %v1114
      %s1118 = scalar_lea.vmem %s50, 1632
      %v1119 = vld [vmem:[%s1118] sm:$0xff]
      %vm1120 = vcmask 523264
      %s1121 = scalar_lea.vmem %s45, 1812
      %1122 = vst.msk [vmem:[%s1121] sm:$0xff] %vm1120, %v1119
      %s1123 = scalar_lea.vmem %s50, 1640
      %v1124 = vld [vmem:[%s1123] sm:$0xff]
      %vm1125 = vcmask 523264
      %s1126 = scalar_lea.vmem %s45, 1820
      %1127 = vst.msk [vmem:[%s1126] sm:$0xff] %vm1125, %v1124
      %s1128 = scalar_lea.vmem %s50, 1648
      %v1129 = vld [vmem:[%s1128] sm:$0xff]
      %vm1130 = vcmask 523264
      %s1131 = scalar_lea.vmem %s45, 1828
      %1132 = vst.msk [vmem:[%s1131] sm:$0xff] %vm1130, %v1129
      %s1133 = scalar_lea.vmem %s50, 1656
      %v1134 = vld [vmem:[%s1133] sm:$0xff]
      %vm1135 = vcmask 523264
      %s1136 = scalar_lea.vmem %s45, 1840
      %1137 = vst.msk [vmem:[%s1136] sm:$0xff] %vm1135, %v1134
      %s1138 = scalar_lea.vmem %s50, 1664
      %v1139 = vld [vmem:[%s1138] sm:$0xff]
      %vm1140 = vcmask 523264
      %s1141 = scalar_lea.vmem %s45, 1848
      %1142 = vst.msk [vmem:[%s1141] sm:$0xff] %vm1140, %v1139
      %s1143 = scalar_lea.vmem %s50, 1672
      %v1144 = vld [vmem:[%s1143] sm:$0xff]
      %vm1145 = vcmask 523264
      %s1146 = scalar_lea.vmem %s45, 1856
      %1147 = vst.msk [vmem:[%s1146] sm:$0xff] %vm1145, %v1144
      %s1148 = scalar_lea.vmem %s50, 1680
      %v1149 = vld [vmem:[%s1148] sm:$0xff]
      %vm1150 = vcmask 523264
      %s1151 = scalar_lea.vmem %s45, 1864
      %1152 = vst.msk [vmem:[%s1151] sm:$0xff] %vm1150, %v1149
      %s1153 = scalar_lea.vmem %s50, 1688
      %v1154 = vld [vmem:[%s1153] sm:$0xff]
      %vm1155 = vcmask 523264
      %s1156 = scalar_lea.vmem %s45, 1872
      %1157 = vst.msk [vmem:[%s1156] sm:$0xf] %vm1155, %v1154
      %s1158 = scalar_lea.vmem %s45, 1876
      %1159 = vst.msk [vmem:[%s1158] sm:$0xf0] %vm1155, %v1154
      %s1160 = scalar_lea.vmem %s50, 1696
      %v1161 = vld [vmem:[%s1160] sm:$0xff]
      %vm1162 = vcmask 523264
      %s1163 = scalar_lea.vmem %s45, 1884
      %1164 = vst.msk [vmem:[%s1163] sm:$0xff] %vm1162, %v1161
      %s1165 = scalar_lea.vmem %s50, 1704
      %v1166 = vld [vmem:[%s1165] sm:$0xff]
      %vm1167 = vcmask 523264
      %s1168 = scalar_lea.vmem %s45, 1892
      %1169 = vst.msk [vmem:[%s1168] sm:$0xff] %vm1167, %v1166
      %s1170 = scalar_lea.vmem %s50, 1712
      %v1171 = vld [vmem:[%s1170] sm:$0xff]
      %vm1172 = vcmask 523264
      %s1173 = scalar_lea.vmem %s45, 1900
      %1174 = vst.msk [vmem:[%s1173] sm:$0xff] %vm1172, %v1171
      %s1175 = scalar_lea.vmem %s50, 1720
      %v1176 = vld [vmem:[%s1175] sm:$0xff]
      %vm1177 = vcmask 523264
      %s1178 = scalar_lea.vmem %s45, 1908
      %1179 = vst.msk [vmem:[%s1178] sm:$0xff] %vm1177, %v1176
      %s1180 = scalar_lea.vmem %s50, 1728
      %v1181 = vld [vmem:[%s1180] sm:$0xff]
      %vm1182 = vcmask 523264
      %s1183 = scalar_lea.vmem %s45, 1920
      %1184 = vst.msk [vmem:[%s1183] sm:$0xff] %vm1182, %v1181
      %s1185 = scalar_lea.vmem %s50, 1736
      %v1186 = vld [vmem:[%s1185] sm:$0xff]
      %vm1187 = vcmask 523264
      %s1188 = scalar_lea.vmem %s45, 1928
      %1189 = vst.msk [vmem:[%s1188] sm:$0xff] %vm1187, %v1186
      %s1190 = scalar_lea.vmem %s50, 1744
      %v1191 = vld [vmem:[%s1190] sm:$0xff]
      %vm1192 = vcmask 523264
      %s1193 = scalar_lea.vmem %s45, 1936
      %1194 = vst.msk [vmem:[%s1193] sm:$0xff] %vm1192, %v1191
      %s1195 = scalar_lea.vmem %s50, 1752
      %v1196 = vld [vmem:[%s1195] sm:$0xff]
      %vm1197 = vcmask 523264
      %s1198 = scalar_lea.vmem %s45, 1944
      %1199 = vst.msk [vmem:[%s1198] sm:$0xff] %vm1197, %v1196
      %s1200 = scalar_lea.vmem %s50, 1760
      %v1201 = vld [vmem:[%s1200] sm:$0xff]
      %vm1202 = vcmask 523264
      %s1203 = scalar_lea.vmem %s45, 1952
      %1204 = vst.msk [vmem:[%s1203] sm:$0xf] %vm1202, %v1201
      %s1205 = scalar_lea.vmem %s45, 1956
      %1206 = vst.msk [vmem:[%s1205] sm:$0xf0] %vm1202, %v1201
      %s1207 = scalar_lea.vmem %s50, 1768
      %v1208 = vld [vmem:[%s1207] sm:$0xff]
      %vm1209 = vcmask 523264
      %s1210 = scalar_lea.vmem %s45, 1964
      %1211 = vst.msk [vmem:[%s1210] sm:$0xff] %vm1209, %v1208
      %s1212 = scalar_lea.vmem %s50, 1776
      %v1213 = vld [vmem:[%s1212] sm:$0xff]
      %vm1214 = vcmask 523264
      %s1215 = scalar_lea.vmem %s45, 1972
      %1216 = vst.msk [vmem:[%s1215] sm:$0xff] %vm1214, %v1213
      %s1217 = scalar_lea.vmem %s50, 1784
      %v1218 = vld [vmem:[%s1217] sm:$0xff]
      %vm1219 = vcmask 523264
      %s1220 = scalar_lea.vmem %s45, 1980
      %1221 = vst.msk [vmem:[%s1220] sm:$0xff] %vm1219, %v1218
      %s1222 = scalar_lea.vmem %s50, 1792
      %v1223 = vld [vmem:[%s1222] sm:$0xff]
      %vm1224 = vcmask 523264
      %s1225 = scalar_lea.vmem %s45, 1988
      %1226 = vst.msk [vmem:[%s1225] sm:$0xff] %vm1224, %v1223
      %s1227 = scalar_lea.vmem %s50, 1800
      %v1228 = vld [vmem:[%s1227] sm:$0xff]
      %vm1229 = vcmask 523264
      %s1230 = scalar_lea.vmem %s45, 2000
      %1231 = vst.msk [vmem:[%s1230] sm:$0xff] %vm1229, %v1228
      %s1232 = scalar_lea.vmem %s50, 1808
      %v1233 = vld [vmem:[%s1232] sm:$0xff]
      %vm1234 = vcmask 523264
      %s1235 = scalar_lea.vmem %s45, 2008
      %1236 = vst.msk [vmem:[%s1235] sm:$0xff] %vm1234, %v1233
      %s1237 = scalar_lea.vmem %s50, 1816
      %v1238 = vld [vmem:[%s1237] sm:$0xff]
      %vm1239 = vcmask 523264
      %s1240 = scalar_lea.vmem %s45, 2016
      %1241 = vst.msk [vmem:[%s1240] sm:$0xff] %vm1239, %v1238
      %s1242 = scalar_lea.vmem %s50, 1824
      %v1243 = vld [vmem:[%s1242] sm:$0xff]
      %vm1244 = vcmask 523264
      %s1245 = scalar_lea.vmem %s45, 2024
      %1246 = vst.msk [vmem:[%s1245] sm:$0xff] %vm1244, %v1243
      %s1247 = scalar_lea.vmem %s50, 1832
      %v1248 = vld [vmem:[%s1247] sm:$0xff]
      %vm1249 = vcmask 523264
      %s1250 = scalar_lea.vmem %s45, 2032
      %1251 = vst.msk [vmem:[%s1250] sm:$0xf] %vm1249, %v1248
      %s1252 = scalar_lea.vmem %s45, 2036
      %1253 = vst.msk [vmem:[%s1252] sm:$0xf0] %vm1249, %v1248
      %s1254 = scalar_lea.vmem %s50, 1840
      %v1255 = vld [vmem:[%s1254] sm:$0xff]
      %vm1256 = vcmask 523264
      %s1257 = scalar_lea.vmem %s45, 2044
      %1258 = vst.msk [vmem:[%s1257] sm:$0xff] %vm1256, %v1255
      %s1259 = scalar_lea.vmem %s50, 1848
      %v1260 = vld [vmem:[%s1259] sm:$0xff]
      %vm1261 = vcmask 523264
      %s1262 = scalar_lea.vmem %s45, 2052
      %1263 = vst.msk [vmem:[%s1262] sm:$0xff] %vm1261, %v1260
      %s1264 = scalar_lea.vmem %s50, 1856
      %v1265 = vld [vmem:[%s1264] sm:$0xff]
      %vm1266 = vcmask 523264
      %s1267 = scalar_lea.vmem %s45, 2060
      %1268 = vst.msk [vmem:[%s1267] sm:$0xff] %vm1266, %v1265
      %s1269 = scalar_lea.vmem %s50, 1864
      %v1270 = vld [vmem:[%s1269] sm:$0xff]
      %vm1271 = vcmask 523264
      %s1272 = scalar_lea.vmem %s45, 2068
      %1273 = vst.msk [vmem:[%s1272] sm:$0xff] %vm1271, %v1270
      %s1274 = scalar_lea.vmem %s50, 1872
      %v1275 = vld [vmem:[%s1274] sm:$0xff]
      %vm1276 = vcmask 523264
      %s1277 = scalar_lea.vmem %s45, 2080
      %1278 = vst.msk [vmem:[%s1277] sm:$0xff] %vm1276, %v1275
      %s1279 = scalar_lea.vmem %s50, 1880
      %v1280 = vld [vmem:[%s1279] sm:$0xff]
      %vm1281 = vcmask 523264
      %s1282 = scalar_lea.vmem %s45, 2088
      %1283 = vst.msk [vmem:[%s1282] sm:$0xff] %vm1281, %v1280
      %s1284 = scalar_lea.vmem %s50, 1888
      %v1285 = vld [vmem:[%s1284] sm:$0xff]
      %vm1286 = vcmask 523264
      %s1287 = scalar_lea.vmem %s45, 2096
      %1288 = vst.msk [vmem:[%s1287] sm:$0xff] %vm1286, %v1285
      %s1289 = scalar_lea.vmem %s50, 1896
      %v1290 = vld [vmem:[%s1289] sm:$0xff]
      %vm1291 = vcmask 523264
      %s1292 = scalar_lea.vmem %s45, 2104
      %1293 = vst.msk [vmem:[%s1292] sm:$0xff] %vm1291, %v1290
      %s1294 = scalar_lea.vmem %s50, 1904
      %v1295 = vld [vmem:[%s1294] sm:$0xff]
      %vm1296 = vcmask 523264
      %s1297 = scalar_lea.vmem %s45, 2112
      %1298 = vst.msk [vmem:[%s1297] sm:$0xf] %vm1296, %v1295
      %s1299 = scalar_lea.vmem %s45, 2116
      %1300 = vst.msk [vmem:[%s1299] sm:$0xf0] %vm1296, %v1295
      %s1301 = scalar_lea.vmem %s50, 1912
      %v1302 = vld [vmem:[%s1301] sm:$0xff]
      %vm1303 = vcmask 523264
      %s1304 = scalar_lea.vmem %s45, 2124
      %1305 = vst.msk [vmem:[%s1304] sm:$0xff] %vm1303, %v1302
      %s1306 = scalar_lea.vmem %s50, 1920
      %v1307 = vld [vmem:[%s1306] sm:$0xff]
      %vm1308 = vcmask 523264
      %s1309 = scalar_lea.vmem %s45, 2132
      %1310 = vst.msk [vmem:[%s1309] sm:$0xff] %vm1308, %v1307
      %s1311 = scalar_lea.vmem %s50, 1928
      %v1312 = vld [vmem:[%s1311] sm:$0xff]
      %vm1313 = vcmask 523264
      %s1314 = scalar_lea.vmem %s45, 2140
      %1315 = vst.msk [vmem:[%s1314] sm:$0xff] %vm1313, %v1312
      %s1316 = scalar_lea.vmem %s50, 1936
      %v1317 = vld [vmem:[%s1316] sm:$0xff]
      %vm1318 = vcmask 523264
      %s1319 = scalar_lea.vmem %s45, 2148
      %1320 = vst.msk [vmem:[%s1319] sm:$0xff] %vm1318, %v1317
      %s1321 = scalar_lea.vmem %s50, 1944
      %v1322 = vld [vmem:[%s1321] sm:$0xff]
      %vm1323 = vcmask 523264
      %s1324 = scalar_lea.vmem %s45, 2160
      %1325 = vst.msk [vmem:[%s1324] sm:$0xff] %vm1323, %v1322
      %s1326 = scalar_lea.vmem %s50, 1952
      %v1327 = vld [vmem:[%s1326] sm:$0xff]
      %vm1328 = vcmask 523264
      %s1329 = scalar_lea.vmem %s45, 2168
      %1330 = vst.msk [vmem:[%s1329] sm:$0xff] %vm1328, %v1327
      %s1331 = scalar_lea.vmem %s50, 1960
      %v1332 = vld [vmem:[%s1331] sm:$0xff]
      %vm1333 = vcmask 523264
      %s1334 = scalar_lea.vmem %s45, 2176
      %1335 = vst.msk [vmem:[%s1334] sm:$0xff] %vm1333, %v1332
      %s1336 = scalar_lea.vmem %s50, 1968
      %v1337 = vld [vmem:[%s1336] sm:$0xff]
      %vm1338 = vcmask 523264
      %s1339 = scalar_lea.vmem %s45, 2184
      %1340 = vst.msk [vmem:[%s1339] sm:$0xff] %vm1338, %v1337
      %s1341 = scalar_lea.vmem %s50, 1976
      %v1342 = vld [vmem:[%s1341] sm:$0xff]
      %vm1343 = vcmask 523264
      %s1344 = scalar_lea.vmem %s45, 2192
      %1345 = vst.msk [vmem:[%s1344] sm:$0xf] %vm1343, %v1342
      %s1346 = scalar_lea.vmem %s45, 2196
      %1347 = vst.msk [vmem:[%s1346] sm:$0xf0] %vm1343, %v1342
      %s1348 = scalar_lea.vmem %s50, 1984
      %v1349 = vld [vmem:[%s1348] sm:$0xff]
      %vm1350 = vcmask 523264
      %s1351 = scalar_lea.vmem %s45, 2204
      %1352 = vst.msk [vmem:[%s1351] sm:$0xff] %vm1350, %v1349
      %s1353 = scalar_lea.vmem %s50, 1992
      %v1354 = vld [vmem:[%s1353] sm:$0xff]
      %vm1355 = vcmask 523264
      %s1356 = scalar_lea.vmem %s45, 2212
      %1357 = vst.msk [vmem:[%s1356] sm:$0xff] %vm1355, %v1354
      %s1358 = scalar_lea.vmem %s50, 2000
      %v1359 = vld [vmem:[%s1358] sm:$0xff]
      %vm1360 = vcmask 523264
      %s1361 = scalar_lea.vmem %s45, 2220
      %1362 = vst.msk [vmem:[%s1361] sm:$0xff] %vm1360, %v1359
      %s1363 = scalar_lea.vmem %s50, 2008
      %v1364 = vld [vmem:[%s1363] sm:$0xff]
      %vm1365 = vcmask 523264
      %s1366 = scalar_lea.vmem %s45, 2228
      %1367 = vst.msk [vmem:[%s1366] sm:$0xff] %vm1365, %v1364
      %s1368 = scalar_lea.vmem %s50, 2016
      %v1369 = vld [vmem:[%s1368] sm:$0xff]
      %vm1370 = vcmask 523264
      %s1371 = scalar_lea.vmem %s45, 2240
      %1372 = vst.msk [vmem:[%s1371] sm:$0xff] %vm1370, %v1369
      %s1373 = scalar_lea.vmem %s50, 2024
      %v1374 = vld [vmem:[%s1373] sm:$0xff]
      %vm1375 = vcmask 523264
      %s1376 = scalar_lea.vmem %s45, 2248
      %1377 = vst.msk [vmem:[%s1376] sm:$0xff] %vm1375, %v1374
      %s1378 = scalar_lea.vmem %s50, 2032
      %v1379 = vld [vmem:[%s1378] sm:$0xff]
      %vm1380 = vcmask 523264
      %s1381 = scalar_lea.vmem %s45, 2256
      %1382 = vst.msk [vmem:[%s1381] sm:$0xff] %vm1380, %v1379
      %s1383 = scalar_lea.vmem %s50, 2040
      %v1384 = vld [vmem:[%s1383] sm:$0xff]
      %vm1385 = vcmask 523264
      %s1386 = scalar_lea.vmem %s45, 2264
      %1387 = vst.msk [vmem:[%s1386] sm:$0xff] %vm1385, %v1384
      %s1388 = scalar_lea.vmem %s50, 2048
      %v1389 = vld [vmem:[%s1388] sm:$0xff]
      %vm1390 = vcmask 523264
      %s1391 = scalar_lea.vmem %s45, 2272
      %1392 = vst.msk [vmem:[%s1391] sm:$0xf] %vm1390, %v1389
      %s1393 = scalar_lea.vmem %s45, 2276
      %1394 = vst.msk [vmem:[%s1393] sm:$0xf0] %vm1390, %v1389
      %s1395 = scalar_lea.vmem %s50, 2056
      %v1396 = vld [vmem:[%s1395] sm:$0xff]
      %vm1397 = vcmask 523264
      %s1398 = scalar_lea.vmem %s45, 2284
      %1399 = vst.msk [vmem:[%s1398] sm:$0xff] %vm1397, %v1396
      %s1400 = scalar_lea.vmem %s50, 2064
      %v1401 = vld [vmem:[%s1400] sm:$0xff]
      %vm1402 = vcmask 523264
      %s1403 = scalar_lea.vmem %s45, 2292
      %1404 = vst.msk [vmem:[%s1403] sm:$0xff] %vm1402, %v1401
      %s1405 = scalar_lea.vmem %s50, 2072
      %v1406 = vld [vmem:[%s1405] sm:$0xff]
      %vm1407 = vcmask 523264
      %s1408 = scalar_lea.vmem %s45, 2300
      %1409 = vst.msk [vmem:[%s1408] sm:$0xff] %vm1407, %v1406
      %s1410 = scalar_lea.vmem %s50, 2080
      %v1411 = vld [vmem:[%s1410] sm:$0xff]
      %vm1412 = vcmask 523264
      %s1413 = scalar_lea.vmem %s45, 2308
      %1414 = vst.msk [vmem:[%s1413] sm:$0xff] %vm1412, %v1411
      %s1415 = scalar_lea.vmem %s50, 2088
      %v1416 = vld [vmem:[%s1415] sm:$0xff]
      %vm1417 = vcmask 523264
      %s1418 = scalar_lea.vmem %s45, 2320
      %1419 = vst.msk [vmem:[%s1418] sm:$0xff] %vm1417, %v1416
      %s1420 = scalar_lea.vmem %s50, 2096
      %v1421 = vld [vmem:[%s1420] sm:$0xff]
      %vm1422 = vcmask 523264
      %s1423 = scalar_lea.vmem %s45, 2328
      %1424 = vst.msk [vmem:[%s1423] sm:$0xff] %vm1422, %v1421
      %s1425 = scalar_lea.vmem %s50, 2104
      %v1426 = vld [vmem:[%s1425] sm:$0xff]
      %vm1427 = vcmask 523264
      %s1428 = scalar_lea.vmem %s45, 2336
      %1429 = vst.msk [vmem:[%s1428] sm:$0xff] %vm1427, %v1426
      %s1430 = scalar_lea.vmem %s50, 2112
      %v1431 = vld [vmem:[%s1430] sm:$0xff]
      %vm1432 = vcmask 523264
      %s1433 = scalar_lea.vmem %s45, 2344
      %1434 = vst.msk [vmem:[%s1433] sm:$0xff] %vm1432, %v1431
      %s1435 = scalar_lea.vmem %s50, 2120
      %v1436 = vld [vmem:[%s1435] sm:$0xff]
      %vm1437 = vcmask 523264
      %s1438 = scalar_lea.vmem %s45, 2352
      %1439 = vst.msk [vmem:[%s1438] sm:$0xf] %vm1437, %v1436
      %s1440 = scalar_lea.vmem %s45, 2356
      %1441 = vst.msk [vmem:[%s1440] sm:$0xf0] %vm1437, %v1436
      %s1442 = scalar_lea.vmem %s50, 2128
      %v1443 = vld [vmem:[%s1442] sm:$0xff]
      %vm1444 = vcmask 523264
      %s1445 = scalar_lea.vmem %s45, 2364
      %1446 = vst.msk [vmem:[%s1445] sm:$0xff] %vm1444, %v1443
      %s1447 = scalar_lea.vmem %s50, 2136
      %v1448 = vld [vmem:[%s1447] sm:$0xff]
      %vm1449 = vcmask 523264
      %s1450 = scalar_lea.vmem %s45, 2372
      %1451 = vst.msk [vmem:[%s1450] sm:$0xff] %vm1449, %v1448
      %s1452 = scalar_lea.vmem %s50, 2144
      %v1453 = vld [vmem:[%s1452] sm:$0xff]
      %vm1454 = vcmask 523264
      %s1455 = scalar_lea.vmem %s45, 2380
      %1456 = vst.msk [vmem:[%s1455] sm:$0xff] %vm1454, %v1453
      %s1457 = scalar_lea.vmem %s50, 2152
      %v1458 = vld [vmem:[%s1457] sm:$0xff]
      %vm1459 = vcmask 523264
      %s1460 = scalar_lea.vmem %s45, 2388
      %1461 = vst.msk [vmem:[%s1460] sm:$0xff] %vm1459, %v1458
      %s1462 = smul.u32 2400, %s8
      %p1463 = scmp.lt.s32.totalorder %s1462, 4799
      %s1464 = scalar_select %p1463, %s1462, 4799
      %s1465 = scalar_lea.vmem %s1, %s1464
      %s1466 = smul.u32 2400, %s8
    $region20: #{mul.29} parent=5 // pred_fallthru
      _
    %p1467 = scmp.le.s32.totalorder 2, %s3
    // Predicated region
    $region21: #{mul.29} parent=5 // pred_check
      %p1468 = pneg %p1467
    $region22: #{mul.29} parent=5 // pred_check_branch
      %1470 = sbr.rel (%p1468) target = $region24
    $region23: #{mul.29} parent=5 // pred_region
      %s1471 = ssub.s32 %s3, 2
      %s1472 = smul.u32 2400, %s9
      %p1473 = scmp.lt.s32.totalorder %s1472, 4799
      %s1474 = scalar_select %p1473, %s1472, 4799
      %s1475 = scalar_lea.vmem %s1, %s1474
    $region24: #{mul.29} parent=5 // pred_fallthru
      _
  $region6: #{mul.29} parent=0 // loop_footer
    %s7 = sadd.s32 1, %s3
  $region7: #{mul.29} parent=0 // loop_footer_branch
    %2 = sbr.rel target = $region3
  $region8: #{mul.29} parent=0 // loop_exit
    _

// kernel: model_forward.5
$region0: #{model_forward.5}
  #allocation0 [shape = 'u32[]', space=smem, size = 0x4, offset = 0x4, fixed_abs, tag = 'smem constant byte address 0x4 - core index']
  #allocation1 [shape = 'u32[144,128]{1,0:T(1,128)}', space=vmem, size = 0x12000, scoped, tag = 'internal scratch']
  %s0 = inlined_call_operand.vmem [shape: bf16[1,4320,512], index: 0, kind: input, shape index: {}]
  %s1 = inlined_call_operand.vmem [shape: bf16[1,512,64], index: 1, kind: input, shape index: {}]
  %s2 = inlined_call_operand.vmem [shape: f32[1,4320,64], index: 2, kind: output, shape index: {}]
  %s3 = sld [smem:[#allocation0]]
  $region89: #{model_forward.5} parent=0
    _
  %s5 = ssub.s32 1, %s3
  %s6 = scalar_select 0, %s5, %s3
  $region1: #{model_forward.5} parent=0
    #allocation2 [shape = 'u8[262144]{0}', space=vmem, size = 0x40000, scoped, tag = 'output window, operand 0']
    loop: start=0, step=1, limit=19
    $region2: #{model_forward.5} parent=1 // loop_pre_header
      _
    $region3: #{model_forward.5} parent=1 // loop_header
      %s8 = sphi 0, %s12
      %p9 = scmp.ge.s32.totalorder %s8, 19
      %s15 = sphi 0, %s34
      %s16 = sphi 0, %s30
      %s17 = sphi 0, %s26
      %s18 = sphi 0, %s15
      %s19 = sphi 0, %s16
      %s20 = sphi 0, %s17
      %s21 = sphi 0, %s18
      %s22 = sphi 0, %s19
      %s23 = sphi 0, %s20
      %s39 = sphi 0, %s41
      %s42 = sphi 0, %s39
      %s43 = sphi 0, %s42
      %s59 = sphi 0, %s43
      %s67 = sphi 0, %s69
      %s70 = sphi 0, %s67
      %s71 = sphi 0, %s70
      %s87 = sphi 0, %s71
      %s97 = sphi 0, %s99
      %s100 = sphi 0, %s97
      %s101 = sphi 0, %s100
      %s117 = sphi 0, %s101
    $region4: #{model_forward.5} parent=1 // loop_header_branch
      %11 = sbr.rel (%p9) target = $region8
    $region5: #{model_forward.5} parent=1 // loop_body
      %s13 = ssub.s32 %s8, 1
      %s14 = ssub.s32 %s8, 2
      %s24 = sadd.s32 1, %s17
      %p25 = scmp.ge.s32.totalorder %s24, 1
      %s26 = scalar_select %p25, 0, %s24
      %s27 = sadd.s32 1, %s16
      %s28 = scalar_select %p25, %s27, %s16
      %p29 = scmp.ge.s32.totalorder %s28, 17
      %s30 = scalar_select %p29, 0, %s28
      %s31 = sadd.s32 1, %s15
      %s32 = scalar_select %p29, %s31, %s15
      %p33 = scmp.ge.s32.totalorder %s32, 1
      %s34 = scalar_select %p33, 0, %s32
      %s35 = ssub.s32 %s15, %s34
      %s36 = ssub.s32 %s16, %s30
      %s37 = sor.u32 %s35, %s36
      %p38 = scmp.eq.s32.totalorder %s37, 0
      %s40 = sadd.s32 %s39, 1
      %s41 = scalar_select %p38, %s39, %s40
      %p44 = pneg %p38
      %p45 = scmp.eq.s32.totalorder %s8, 16
      %p46 = por %p44, %p45
      %p47 = scmp.ne.s32.totalorder %s39, %s42
      %p48 = scmp.eq.s32.totalorder %s8, 0
      %p49 = por %p47, %p48
      %p50 = scmp.ne.s32.totalorder %s39, %s42
      %p51 = scmp.eq.s32.totalorder %s13, 16
      %p52 = por %p50, %p51
      %p53 = scmp.ne.s32.totalorder %s42, %s43
      %p54 = scmp.eq.s32.totalorder %s13, 0
      %p55 = por %p53, %p54
      %p56 = scmp.ne.s32.totalorder %s42, %s43
      %p57 = scmp.eq.s32.totalorder %s14, 16
      %p58 = por %p56, %p57
      %p60 = scmp.ne.s32.totalorder %s43, %s59
      %p61 = scmp.eq.s32.totalorder %s14, 0
      %p62 = por %p60, %p61
      %s63 = ssub.s32 %s15, %s34
      %s64 = ssub.s32 %s17, %s26
      %s65 = sor.u32 %s63, %s64
      %p66 = scmp.eq.s32.totalorder %s65, 0
      %s68 = sadd.s32 %s67, 1
      %s69 = scalar_select %p66, %s67, %s68
      %p72 = pneg %p66
      %p73 = scmp.eq.s32.totalorder %s8, 16
      %p74 = por %p72, %p73
      %p75 = scmp.ne.s32.totalorder %s67, %s70
      %p76 = scmp.eq.s32.totalorder %s8, 0
      %p77 = por %p75, %p76
      %p78 = scmp.ne.s32.totalorder %s67, %s70
      %p79 = scmp.eq.s32.totalorder %s13, 16
      %p80 = por %p78, %p79
      %p81 = scmp.ne.s32.totalorder %s70, %s71
      %p82 = scmp.eq.s32.totalorder %s13, 0
      %p83 = por %p81, %p82
      %p84 = scmp.ne.s32.totalorder %s70, %s71
      %p85 = scmp.eq.s32.totalorder %s14, 16
      %p86 = por %p84, %p85
      %p88 = scmp.ne.s32.totalorder %s71, %s87
      %p89 = scmp.eq.s32.totalorder %s14, 0
      %p90 = por %p88, %p89
      %s91 = ssub.s32 %s15, %s34
      %s92 = ssub.s32 %s16, %s30
      %s93 = sor.u32 %s91, %s92
      %s94 = ssub.s32 %s17, %s26
      %s95 = sor.u32 %s93, %s94
      %p96 = scmp.eq.s32.totalorder %s95, 0
      %s98 = sadd.s32 %s97, 1
      %s99 = scalar_select %p96, %s97, %s98
      %p102 = pneg %p96
      %p103 = scmp.eq.s32.totalorder %s8, 16
      %p104 = por %p102, %p103
      %p105 = scmp.ne.s32.totalorder %s97, %s100
      %p106 = scmp.eq.s32.totalorder %s8, 0
      %p107 = por %p105, %p106
      %p108 = scmp.ne.s32.totalorder %s97, %s100
      %p109 = scmp.eq.s32.totalorder %s13, 16
      %p110 = por %p108, %p109
      %p111 = scmp.ne.s32.totalorder %s100, %s101
      %p112 = scmp.eq.s32.totalorder %s13, 0
      %p113 = por %p111, %p112
      %p114 = scmp.ne.s32.totalorder %s100, %s101
      %p115 = scmp.eq.s32.totalorder %s14, 16
      %p116 = por %p114, %p115
      %p118 = scmp.ne.s32.totalorder %s101, %s117
      %p119 = scmp.eq.s32.totalorder %s14, 0
      %p120 = por %p118, %p119
      %p121 = scmp.le.s32.totalorder 1, %s8
      %p122 = scmp.lt.s32.totalorder %s8, 18
      %p123 = pnand %p121, %p122
      %p124 = pneg %p123
      // Predicated region
      $region9: #{model_forward.5} parent=5 // pred_check
        _
      $region10: #{model_forward.5} parent=5 // pred_check_branch
        %126 = sbr.rel (%p123) target = $region12
      $region11: #{model_forward.5} parent=5 // pred_region
        %s127 = ssub.s32 %s8, 1
        // Predicated region
        $region13: #{model_forward.5} parent=11 // pred_check
          %p128 = pneg %p83
        $region14: #{model_forward.5} parent=11 // pred_check_branch
          %130 = sbr.rel (%p128) target = $region16
        $region15: #{model_forward.5} parent=11 // pred_region
          %p131 = scmp.lt.s32.totalorder %s18, 0
          %s132 = scalar_select %p131, %s18, 0
          %p133 = scmp.lt.s32.totalorder %s20, 0
          %s134 = scalar_select %p133, %s20, 0
          %s135 = smul.addr %s132, 64
          %s136 = sadd.s32 %s134, %s135
          %s137 = smul.addr %s136, 4
          %s138 = scalar_lea.vmem %s1, %s137
        $region16: #{model_forward.5} parent=11 // pred_fallthru
          _
      $region12: #{model_forward.5} parent=5 // pred_fallthru
        _
      %p139 = scmp.lt.s32.totalorder %s8, 17
      // Predicated region
      $region17: #{model_forward.5} parent=5 // pred_check
        %p140 = pneg %p139
      $region18: #{model_forward.5} parent=5 // pred_check_branch
        %142 = sbr.rel (%p140) target = $region20
      $region19: #{model_forward.5} parent=5 // pred_region
        // Predicated region
        $region21: #{model_forward.5} parent=19 // pred_check
          %p143 = pneg %p49
        $region22: #{model_forward.5} parent=19 // pred_check_branch
          %145 = sbr.rel (%p143) target = $region24
        $region23: #{model_forward.5} parent=19 // pred_region
          %s146 = smul.u32 32, %s16
          %s147 = ssub.s32 540, %s146
          %p148 = scmp.lt.s32.totalorder %s147, 32
          %s149 = scalar_select %p148, %s147, 32
          %s150 = smul.u32 64, %s149
          %s151 = smul.u32 %s150, 4
          %p152 = scmp.lt.s32.totalorder %s15, 0
          %s153 = scalar_select %p152, %s15, 0
          %p154 = scmp.lt.s32.totalorder %s146, 539
          %s155 = scalar_select %p154, %s146, 539
          %s156 = smul.addr %s155, 4
          %s157 = smul.addr %s153, 2160
          %s158 = sadd.s32 %s156, %s157
          %s159 = smul.addr %s158, 4
          %s160 = scalar_lea.vmem %s0, %s159
          %s161 = smul.u32 32, %s16
          %s162 = ssub.s32 540, %s161
          %p163 = scmp.lt.s32.totalorder %s162, 32
          %s164 = scalar_select %p163, %s162, 32
          %s165 = smul.u32 64, %s164
          %s166 = smul.u32 %s165, 4
        $region24: #{model_forward.5} parent=19 // pred_fallthru
          _
      $region20: #{model_forward.5} parent=5 // pred_fallthru
        _
      %p167 = scmp.le.s32.totalorder 1, %s8
      %p168 = scmp.lt.s32.totalorder %s8, 18
      %p169 = pnand %p167, %p168
      %p170 = pneg %p169
      // Predicated region
      $region25: #{model_forward.5} parent=5 // pred_check
        _
      $region26: #{model_forward.5} parent=5 // pred_check_branch
        %172 = sbr.rel (%p169) target = $region28
      $region27: #{model_forward.5} parent=5 // pred_region
        %s173 = ssub.s32 %s8, 1
        %s174 = smul.u32 32, %s19
        %s175 = ssub.s32 540, %s174
        %p176 = scmp.lt.s32.totalorder %s175, 32
        %s177 = scalar_select %p176, %s175, 32
        %s178 = smul.u32 64, %s177
        %s179 = smul.u32 %s178, 4
        %p180 = scmp.lt.s32.totalorder %s18, 0
        %s181 = scalar_select %p180, %s18, 0
        %p182 = scmp.lt.s32.totalorder %s174, 539
        %s183 = scalar_select %p182, %s174, 539
        %s184 = smul.addr %s183, 4
        %s185 = smul.addr %s181, 2160
        %s186 = sadd.s32 %s184, %s185
        %s187 = smul.addr %s186, 4
        %s188 = scalar_lea.vmem %s0, %s187
        %p189 = pneg %p55
        %p190 = pneg %p52
        %p191 = scmp.lt.s32.totalorder %s18, 0
        %s192 = scalar_select %p191, %s18, 0
        %p193 = scmp.lt.s32.totalorder %s20, 0
        %s194 = scalar_select %p193, %s20, 0
        %s195 = smul.addr %s192, 64
        %s196 = sadd.s32 %s194, %s195
        %s197 = smul.addr %s196, 4
        %s198 = scalar_lea.vmem %s1, %s197
        %p199 = pneg %p83
        %p200 = pneg %p80
        %p201 = pneg %p113
        %p202 = pneg %p110
        %s203 = sand.u32 %s100, 1
        %s204 = sand.u32 %s100, 1
        %s205 = smul.addr %s204, 256
        %s206 = scalar_lea.vmem [#allocation2], %s205
        %s207 = smul.u32 32, %s19
        %s208 = ssub.s32 540, %s207
        %p209 = scmp.lt.s32.totalorder %s208, 32
        %s210 = scalar_select %p209, %s208, 32
        %s211 = smul.u32 64, %s210
        %s212 = smul.u32 %s211, 4
        %p213 = scmp.lt.s32.totalorder %s18, 0
        %s214 = scalar_select %p213, %s18, 0
        %p215 = scmp.lt.s32.totalorder %s207, 539
        %s216 = scalar_select %p215, %s207, 539
        %s217 = smul.addr %s216, 4
        %s218 = smul.addr %s214, 2160
        %s219 = sadd.s32 %s217, %s218
        %s220 = smul.addr %s219, 4
        %s221 = scalar_lea.vmem %s0, %s220
        %s222 = smul.u32 32, %s19
        %s223 = ssub.s32 540, %s222
        %p224 = scmp.lt.s32.totalorder %s223, 32
        %s225 = scalar_select %p224, %s223, 32
        %s226 = smul.u32 64, %s225
        %s227 = smul.u32 %s226, 4
        %p228 = scmp.lt.s32.totalorder %s18, 0
        %s229 = scalar_select %p228, %s18, 0
        %p230 = scmp.lt.s32.totalorder %s20, 0
        %s231 = scalar_select %p230, %s20, 0
        %s232 = smul.addr %s229, 64
        %s233 = sadd.s32 %s231, %s232
        %s234 = smul.addr %s233, 4
        %s235 = scalar_lea.vmem %s1, %s234
        %s236 = smul.u32 32, %s19
        %s237 = ssub.s32 540, %s236
        %p238 = scmp.lt.s32.totalorder %s237, 32
        %s239 = scalar_select %p238, %s237, 32
        %s240 = smul.u32 128, %s239
        %v242 = vld [vmem:[%s221] sm:$0xff]
        %v243 = vld [vmem:[%s221 + $0x8] sm:$0xff]
        %v244 = vld [vmem:[%s221 + $0x10] sm:$0xff]
        %v245 = vld [vmem:[%s221 + $0x18] sm:$0xff]
        %v246 = vld [vmem:[%s221 + $0x20] sm:$0xff]
        %v247 = vld [vmem:[%s221 + $0x28] sm:$0xff]
        %v248 = vld [vmem:[%s221 + $0x30] sm:$0xff]
        %v249 = vld [vmem:[%s221 + $0x38] sm:$0xff]
        %v250 = vld [vmem:[%s221 + $0x40] sm:$0xff]
        %v251 = vld [vmem:[%s221 + $0x48] sm:$0xff]
        %v252 = vld [vmem:[%s221 + $0x50] sm:$0xff]
        %v253 = vld [vmem:[%s221 + $0x58] sm:$0xff]
        %v254 = vld [vmem:[%s221 + $0x60] sm:$0xff]
        %v255 = vld [vmem:[%s221 + $0x68] sm:$0xff]
        %v256 = vld [vmem:[%s221 + $0x70] sm:$0xff]
        %v257 = vld [vmem:[%s221 + $0x78] sm:$0xff]
        %v258 = vld [vmem:[%s221 + $0x80] sm:$0xff]
        %v259 = vld [vmem:[%s221 + $0x88] sm:$0xff]
        %v260 = vld [vmem:[%s221 + $0x90] sm:$0xff]
        %v261 = vld [vmem:[%s221 + $0x98] sm:$0xff]
        %v262 = vld [vmem:[%s221 + $0xa0] sm:$0xff]
        %v263 = vld [vmem:[%s221 + $0xa8] sm:$0xff]
        %v264 = vld [vmem:[%s221 + $0xb0] sm:$0xff]
        %v265 = vld [vmem:[%s221 + $0xb8] sm:$0xff]
        %v266 = vld [vmem:[%s221 + $0xc0] sm:$0xff]
        %v267 = vld [vmem:[%s221 + $0xc8] sm:$0xff]
        %v268 = vld [vmem:[%s221 + $0xd0] sm:$0xff]
        %v269 = vld [vmem:[%s221 + $0xd8] sm:$0xff]
        %v270 = vld [vmem:[%s221 + $0xe0] sm:$0xff]
        %v271 = vld [vmem:[%s221 + $0xe8] sm:$0xff]
        %v272 = vld [vmem:[%s221 + $0xf0] sm:$0xff]
        %v273 = vld [vmem:[%s221 + $0xf8] sm:$0xff]
        %v274 = vld [vmem:[%s221 + $0x100] sm:$0xff]
        %v275 = vld [vmem:[%s221 + $0x108] sm:$0xff]
        %v276 = vld [vmem:[%s221 + $0x110] sm:$0xff]
        %v277 = vld [vmem:[%s221 + $0x118] sm:$0xff]
        %v278 = vld [vmem:[%s221 + $0x120] sm:$0xff]
        %v279 = vld [vmem:[%s221 + $0x128] sm:$0xff]
        %v280 = vld [vmem:[%s221 + $0x130] sm:$0xff]
        %v281 = vld [vmem:[%s221 + $0x138] sm:$0xff]
        %v282 = vld [vmem:[%s221 + $0x140] sm:$0xff]
        %v283 = vld [vmem:[%s221 + $0x148] sm:$0xff]
        %v284 = vld [vmem:[%s221 + $0x150] sm:$0xff]
        %v285 = vld [vmem:[%s221 + $0x158] sm:$0xff]
        %v286 = vld [vmem:[%s221 + $0x160] sm:$0xff]
        %v287 = vld [vmem:[%s221 + $0x168] sm:$0xff]
        %v288 = vld [vmem:[%s221 + $0x170] sm:$0xff]
        %v289 = vld [vmem:[%s221 + $0x178] sm:$0xff]
        %v290 = vld [vmem:[%s221 + $0x180] sm:$0xff]
        %v291 = vld [vmem:[%s221 + $0x188] sm:$0xff]
        %v292 = vld [vmem:[%s221 + $0x190] sm:$0xff]
        %v293 = vld [vmem:[%s221 + $0x198] sm:$0xff]
        %v294 = vld [vmem:[%s221 + $0x1a0] sm:$0xff]
        %v295 = vld [vmem:[%s221 + $0x1a8] sm:$0xff]
        %v296 = vld [vmem:[%s221 + $0x1b0] sm:$0xff]
        %v297 = vld [vmem:[%s221 + $0x1b8] sm:$0xff]
        %v298 = vld [vmem:[%s221 + $0x1c0] sm:$0xff]
        %v299 = vld [vmem:[%s221 + $0x1c8] sm:$0xff]
        %v300 = vld [vmem:[%s221 + $0x1d0] sm:$0xff]
        %v301 = vld [vmem:[%s221 + $0x1d8] sm:$0xff]
        %v302 = vld [vmem:[%s221 + $0x1e0] sm:$0xff]
        %v303 = vld [vmem:[%s221 + $0x1e8] sm:$0xff]
        %v304 = vld [vmem:[%s221 + $0x1f0] sm:$0xff]
        %v305 = vld [vmem:[%s221 + $0x1f8] sm:$0xff]
        %v306 = vld [vmem:[%s235] sm:$0xf]
        %v307 = vld [vmem:[%s235 + $0x4] sm:$0xf]
        %v308 = vld [vmem:[%s235 + $0x8] sm:$0xf]
        %v309 = vld [vmem:[%s235 + $0xc] sm:$0xf]
        %v310 = vld [vmem:[%s235 + $0x10] sm:$0xf]
        %v311 = vld [vmem:[%s235 + $0x14] sm:$0xf]
        %v312 = vld [vmem:[%s235 + $0x18] sm:$0xf]
        %v313 = vld [vmem:[%s235 + $0x1c] sm:$0xf]
        %v314 = vld [vmem:[%s235 + $0x20] sm:$0xf]
        %v315 = vld [vmem:[%s235 + $0x24] sm:$0xf]
        %v316 = vld [vmem:[%s235 + $0x28] sm:$0xf]
        %v317 = vld [vmem:[%s235 + $0x2c] sm:$0xf]
        %v318 = vld [vmem:[%s235 + $0x30] sm:$0xf]
        %v319 = vld [vmem:[%s235 + $0x34] sm:$0xf]
        %v320 = vld [vmem:[%s235 + $0x38] sm:$0xf]
        %v321 = vld [vmem:[%s235 + $0x3c] sm:$0xf]
        %v322 = vld [vmem:[%s235 + $0x40] sm:$0xf]
        %v323 = vld [vmem:[%s235 + $0x44] sm:$0xf]
        %v324 = vld [vmem:[%s235 + $0x48] sm:$0xf]
        %v325 = vld [vmem:[%s235 + $0x4c] sm:$0xf]
        %v326 = vld [vmem:[%s235 + $0x50] sm:$0xf]
        %v327 = vld [vmem:[%s235 + $0x54] sm:$0xf]
        %v328 = vld [vmem:[%s235 + $0x58] sm:$0xf]
        %v329 = vld [vmem:[%s235 + $0x5c] sm:$0xf]
        %v330 = vld [vmem:[%s235 + $0x60] sm:$0xf]
        %v331 = vld [vmem:[%s235 + $0x64] sm:$0xf]
        %v332 = vld [vmem:[%s235 + $0x68] sm:$0xf]
        %v333 = vld [vmem:[%s235 + $0x6c] sm:$0xf]
        %v334 = vld [vmem:[%s235 + $0x70] sm:$0xf]
        %v335 = vld [vmem:[%s235 + $0x74] sm:$0xf]
        %v336 = vld [vmem:[%s235 + $0x78] sm:$0xf]
        %v337 = vld [vmem:[%s235 + $0x7c] sm:$0xf]
        %v338 = vld [vmem:[%s235 + $0x80] sm:$0xf]
        %v339 = vld [vmem:[%s235 + $0x84] sm:$0xf]
        %v340 = vld [vmem:[%s235 + $0x88] sm:$0xf]
        %v341 = vld [vmem:[%s235 + $0x8c] sm:$0xf]
        %v342 = vld [vmem:[%s235 + $0x90] sm:$0xf]
        %v343 = vld [vmem:[%s235 + $0x94] sm:$0xf]
        %v344 = vld [vmem:[%s235 + $0x98] sm:$0xf]
        %v345 = vld [vmem:[%s235 + $0x9c] sm:$0xf]
        %v346 = vld [vmem:[%s235 + $0xa0] sm:$0xf]
        %v347 = vld [vmem:[%s235 + $0xa4] sm:$0xf]
        %v348 = vld [vmem:[%s235 + $0xa8] sm:$0xf]
        %v349 = vld [vmem:[%s235 + $0xac] sm:$0xf]
        %v350 = vld [vmem:[%s235 + $0xb0] sm:$0xf]
        %v351 = vld [vmem:[%s235 + $0xb4] sm:$0xf]
        %v352 = vld [vmem:[%s235 + $0xb8] sm:$0xf]
        %v353 = vld [vmem:[%s235 + $0xbc] sm:$0xf]
        %v354 = vld [vmem:[%s235 + $0xc0] sm:$0xf]
        %v355 = vld [vmem:[%s235 + $0xc4] sm:$0xf]
        %v356 = vld [vmem:[%s235 + $0xc8] sm:$0xf]
        %v357 = vld [vmem:[%s235 + $0xcc] sm:$0xf]
        %v358 = vld [vmem:[%s235 + $0xd0] sm:$0xf]
        %v359 = vld [vmem:[%s235 + $0xd4] sm:$0xf]
        %v360 = vld [vmem:[%s235 + $0xd8] sm:$0xf]
        %v361 = vld [vmem:[%s235 + $0xdc] sm:$0xf]
        %v362 = vld [vmem:[%s235 + $0xe0] sm:$0xf]
        %v363 = vld [vmem:[%s235 + $0xe4] sm:$0xf]
        %v364 = vld [vmem:[%s235 + $0xe8] sm:$0xf]
        %v365 = vld [vmem:[%s235 + $0xec] sm:$0xf]
        %v366 = vld [vmem:[%s235 + $0xf0] sm:$0xf]
        %v367 = vld [vmem:[%s235 + $0xf4] sm:$0xf]
        %v368 = vld [vmem:[%s235 + $0xf8] sm:$0xf]
        %v369 = vld [vmem:[%s235 + $0xfc] sm:$0xf]
        %v434 = vunpack.c.l.b16 %v242
        %v435 = vunpack.c.h.b16 %v242
        %v436 = vunpack.c.l.b16 %v243
        %v437 = vunpack.c.h.b16 %v243
        %v438 = vunpack.c.l.b16 %v244
        %v439 = vunpack.c.h.b16 %v244
        %v440 = vunpack.c.l.b16 %v245
        %v441 = vunpack.c.h.b16 %v245
        %v442 = vunpack.c.l.b16 %v246
        %v443 = vunpack.c.h.b16 %v246
        %v444 = vunpack.c.l.b16 %v247
        %v445 = vunpack.c.h.b16 %v247
        %v446 = vunpack.c.l.b16 %v248
        %v447 = vunpack.c.h.b16 %v248
        %v448 = vunpack.c.l.b16 %v249
        %v449 = vunpack.c.h.b16 %v249
        %v450 = vunpack.c.l.b16 %v250
        %v451 = vunpack.c.h.b16 %v250
        %v452 = vunpack.c.l.b16 %v251
        %v453 = vunpack.c.h.b16 %v251
        %v454 = vunpack.c.l.b16 %v252
        %v455 = vunpack.c.h.b16 %v252
        %v456 = vunpack.c.l.b16 %v253
        %v457 = vunpack.c.h.b16 %v253
        %v458 = vunpack.c.l.b16 %v254
        %v459 = vunpack.c.h.b16 %v254
        %v460 = vunpack.c.l.b16 %v255
        %v461 = vunpack.c.h.b16 %v255
        %v462 = vunpack.c.l.b16 %v256
        %v463 = vunpack.c.h.b16 %v256
        %v464 = vunpack.c.l.b16 %v257
        %v465 = vunpack.c.h.b16 %v257
        %v466 = vunpack.c.l.b16 %v258
        %v467 = vunpack.c.h.b16 %v258
        %v468 = vunpack.c.l.b16 %v259
        %v469 = vunpack.c.h.b16 %v259
        %v470 = vunpack.c.l.b16 %v260
        %v471 = vunpack.c.h.b16 %v260
        %v472 = vunpack.c.l.b16 %v261
        %v473 = vunpack.c.h.b16 %v261
        %v474 = vunpack.c.l.b16 %v262
        %v475 = vunpack.c.h.b16 %v262
        %v476 = vunpack.c.l.b16 %v263
        %v477 = vunpack.c.h.b16 %v263
        %v478 = vunpack.c.l.b16 %v264
        %v479 = vunpack.c.h.b16 %v264
        %v480 = vunpack.c.l.b16 %v265
        %v481 = vunpack.c.h.b16 %v265
        %v482 = vunpack.c.l.b16 %v266
        %v483 = vunpack.c.h.b16 %v266
        %v484 = vunpack.c.l.b16 %v267
        %v485 = vunpack.c.h.b16 %v267
        %v486 = vunpack.c.l.b16 %v268
        %v487 = vunpack.c.h.b16 %v268
        %v488 = vunpack.c.l.b16 %v269
        %v489 = vunpack.c.h.b16 %v269
        %v490 = vunpack.c.l.b16 %v270
        %v491 = vunpack.c.h.b16 %v270
        %v492 = vunpack.c.l.b16 %v271
        %v493 = vunpack.c.h.b16 %v271
        %v494 = vunpack.c.l.b16 %v272
        %v495 = vunpack.c.h.b16 %v272
        %v496 = vunpack.c.l.b16 %v273
        %v497 = vunpack.c.h.b16 %v273
        %v498 = vunpack.c.l.b16 %v274
        %v499 = vunpack.c.h.b16 %v274
        %v500 = vunpack.c.l.b16 %v275
        %v501 = vunpack.c.h.b16 %v275
        %v502 = vunpack.c.l.b16 %v276
        %v503 = vunpack.c.h.b16 %v276
        %v504 = vunpack.c.l.b16 %v277
        %v505 = vunpack.c.h.b16 %v277
        %v506 = vunpack.c.l.b16 %v278
        %v507 = vunpack.c.h.b16 %v278
        %v508 = vunpack.c.l.b16 %v279
        %v509 = vunpack.c.h.b16 %v279
        %v510 = vunpack.c.l.b16 %v280
        %v511 = vunpack.c.h.b16 %v280
        %v512 = vunpack.c.l.b16 %v281
        %v513 = vunpack.c.h.b16 %v281
        %v514 = vunpack.c.l.b16 %v282
        %v515 = vunpack.c.h.b16 %v282
        %v516 = vunpack.c.l.b16 %v283
        %v517 = vunpack.c.h.b16 %v283
        %v518 = vunpack.c.l.b16 %v284
        %v519 = vunpack.c.h.b16 %v284
        %v520 = vunpack.c.l.b16 %v285
        %v521 = vunpack.c.h.b16 %v285
        %v522 = vunpack.c.l.b16 %v286
        %v523 = vunpack.c.h.b16 %v286
        %v524 = vunpack.c.l.b16 %v287
        %v525 = vunpack.c.h.b16 %v287
        %v526 = vunpack.c.l.b16 %v288
        %v527 = vunpack.c.h.b16 %v288
        %v528 = vunpack.c.l.b16 %v289
        %v529 = vunpack.c.h.b16 %v289
        %v530 = vunpack.c.l.b16 %v290
        %v531 = vunpack.c.h.b16 %v290
        %v532 = vunpack.c.l.b16 %v291
        %v533 = vunpack.c.h.b16 %v291
        %v534 = vunpack.c.l.b16 %v292
        %v535 = vunpack.c.h.b16 %v292
        %v536 = vunpack.c.l.b16 %v293
        %v537 = vunpack.c.h.b16 %v293
        %v538 = vunpack.c.l.b16 %v294
        %v539 = vunpack.c.h.b16 %v294
        %v540 = vunpack.c.l.b16 %v295
        %v541 = vunpack.c.h.b16 %v295
        %v542 = vunpack.c.l.b16 %v296
        %v543 = vunpack.c.h.b16 %v296
        %v544 = vunpack.c.l.b16 %v297
        %v545 = vunpack.c.h.b16 %v297
        %v546 = vunpack.c.l.b16 %v298
        %v547 = vunpack.c.h.b16 %v298
        %v548 = vunpack.c.l.b16 %v299
        %v549 = vunpack.c.h.b16 %v299
        %v550 = vunpack.c.l.b16 %v300
        %v551 = vunpack.c.h.b16 %v300
        %v552 = vunpack.c.l.b16 %v301
        %v553 = vunpack.c.h.b16 %v301
        %v554 = vunpack.c.l.b16 %v302
        %v555 = vunpack.c.h.b16 %v302
        %v556 = vunpack.c.l.b16 %v303
        %v557 = vunpack.c.h.b16 %v303
        %v558 = vunpack.c.l.b16 %v304
        %v559 = vunpack.c.h.b16 %v304
        %v560 = vunpack.c.l.b16 %v305
        %v561 = vunpack.c.h.b16 %v305
        %v562 = vpack.c.b16 %v438, %v434
        %v563 = vpack.c.b16 %v439, %v435
        %v564 = vpack.c.b16 %v440, %v436
        %v565 = vpack.c.b16 %v441, %v437
        %v566 = vpack.c.b16 %v446, %v442
        %v567 = vpack.c.b16 %v447, %v443
        %v568 = vpack.c.b16 %v448, %v444
        %v569 = vpack.c.b16 %v449, %v445
        %v570 = vpack.c.b16 %v454, %v450
        %v571 = vpack.c.b16 %v455, %v451
        %v572 = vpack.c.b16 %v456, %v452
        %v573 = vpack.c.b16 %v457, %v453
        %v574 = vpack.c.b16 %v462, %v458
        %v575 = vpack.c.b16 %v463, %v459
        %v576 = vpack.c.b16 %v464, %v460
        %v577 = vpack.c.b16 %v465, %v461
        %v578 = vpack.c.b16 %v470, %v466
        %v579 = vpack.c.b16 %v471, %v467
        %v580 = vpack.c.b16 %v472, %v468
        %v581 = vpack.c.b16 %v473, %v469
        %v582 = vpack.c.b16 %v478, %v474
        %v583 = vpack.c.b16 %v479, %v475
        %v584 = vpack.c.b16 %v480, %v476
        %v585 = vpack.c.b16 %v481, %v477
        %v586 = vpack.c.b16 %v486, %v482
        %v587 = vpack.c.b16 %v487, %v483
        %v588 = vpack.c.b16 %v488, %v484
        %v589 = vpack.c.b16 %v489, %v485
        %v590 = vpack.c.b16 %v494, %v490
        %v591 = vpack.c.b16 %v495, %v491
        %v592 = vpack.c.b16 %v496, %v492
        %v593 = vpack.c.b16 %v497, %v493
        %v594 = vpack.c.b16 %v502, %v498
        %v595 = vpack.c.b16 %v503, %v499
        %v596 = vpack.c.b16 %v504, %v500
        %v597 = vpack.c.b16 %v505, %v501
        %v598 = vpack.c.b16 %v510, %v506
        %v599 = vpack.c.b16 %v511, %v507
        %v600 = vpack.c.b16 %v512, %v508
        %v601 = vpack.c.b16 %v513, %v509
        %v602 = vpack.c.b16 %v518, %v514
        %v603 = vpack.c.b16 %v519, %v515
        %v604 = vpack.c.b16 %v520, %v516
        %v605 = vpack.c.b16 %v521, %v517
        %v606 = vpack.c.b16 %v526, %v522
        %v607 = vpack.c.b16 %v527, %v523
        %v608 = vpack.c.b16 %v528, %v524
        %v609 = vpack.c.b16 %v529, %v525
        %v610 = vpack.c.b16 %v534, %v530
        %v611 = vpack.c.b16 %v535, %v531
        %v612 = vpack.c.b16 %v536, %v532
        %v613 = vpack.c.b16 %v537, %v533
        %v614 = vpack.c.b16 %v542, %v538
        %v615 = vpack.c.b16 %v543, %v539
        %v616 = vpack.c.b16 %v544, %v540
        %v617 = vpack.c.b16 %v545, %v541
        %v618 = vpack.c.b16 %v550, %v546
        %v619 = vpack.c.b16 %v551, %v547
        %v620 = vpack.c.b16 %v552, %v548
        %v621 = vpack.c.b16 %v553, %v549
        %v622 = vpack.c.b16 %v558, %v554
        %v623 = vpack.c.b16 %v559, %v555
        %v624 = vpack.c.b16 %v560, %v556
        %v625 = vpack.c.b16 %v561, %v557
        %v754 = vunpack.c.l.b16 %v306
        %v755 = vunpack.c.l.b16 %v307
        %v756 = vunpack.c.l.b16 %v308
        %v757 = vunpack.c.l.b16 %v309
        %v758 = vunpack.c.l.b16 %v310
        %v759 = vunpack.c.l.b16 %v311
        %v760 = vunpack.c.l.b16 %v312
        %v761 = vunpack.c.l.b16 %v313
        %v762 = vunpack.c.l.b16 %v314
        %v763 = vunpack.c.l.b16 %v315
        %v764 = vunpack.c.l.b16 %v316
        %v765 = vunpack.c.l.b16 %v317
        %v766 = vunpack.c.l.b16 %v318
        %v767 = vunpack.c.l.b16 %v319
        %v768 = vunpack.c.l.b16 %v320
        %v769 = vunpack.c.l.b16 %v321
        %v770 = vunpack.c.l.b16 %v322
        %v771 = vunpack.c.l.b16 %v323
        %v772 = vunpack.c.l.b16 %v324
        %v773 = vunpack.c.l.b16 %v325
        %v774 = vunpack.c.l.b16 %v326
        %v775 = vunpack.c.l.b16 %v327
        %v776 = vunpack.c.l.b16 %v328
        %v777 = vunpack.c.l.b16 %v329
        %v778 = vunpack.c.l.b16 %v330
        %v779 = vunpack.c.l.b16 %v331
        %v780 = vunpack.c.l.b16 %v332
        %v781 = vunpack.c.l.b16 %v333
        %v782 = vunpack.c.l.b16 %v334
        %v783 = vunpack.c.l.b16 %v335
        %v784 = vunpack.c.l.b16 %v336
        %v785 = vunpack.c.l.b16 %v337
        %v786 = vunpack.c.l.b16 %v338
        %v787 = vunpack.c.l.b16 %v339
        %v788 = vunpack.c.l.b16 %v340
        %v789 = vunpack.c.l.b16 %v341
        %v790 = vunpack.c.l.b16 %v342
        %v791 = vunpack.c.l.b16 %v343
        %v792 = vunpack.c.l.b16 %v344
        %v793 = vunpack.c.l.b16 %v345
        %v794 = vunpack.c.l.b16 %v346
        %v795 = vunpack.c.l.b16 %v347
        %v796 = vunpack.c.l.b16 %v348
        %v797 = vunpack.c.l.b16 %v349
        %v798 = vunpack.c.l.b16 %v350
        %v799 = vunpack.c.l.b16 %v351
        %v800 = vunpack.c.l.b16 %v352
        %v801 = vunpack.c.l.b16 %v353
        %v802 = vunpack.c.l.b16 %v354
        %v803 = vunpack.c.l.b16 %v355
        %v804 = vunpack.c.l.b16 %v356
        %v805 = vunpack.c.l.b16 %v357
        %v806 = vunpack.c.l.b16 %v358
        %v807 = vunpack.c.l.b16 %v359
        %v808 = vunpack.c.l.b16 %v360
        %v809 = vunpack.c.l.b16 %v361
        %v810 = vunpack.c.l.b16 %v362
        %v811 = vunpack.c.l.b16 %v363
        %v812 = vunpack.c.l.b16 %v364
        %v813 = vunpack.c.l.b16 %v365
        %v814 = vunpack.c.l.b16 %v366
        %v815 = vunpack.c.l.b16 %v367
        %v816 = vunpack.c.l.b16 %v368
        %v817 = vunpack.c.l.b16 %v369
        %v818 = vpack.c.b16 %v755, %v754
        %v819 = vpack.c.b16 %v757, %v756
        %v820 = vpack.c.b16 %v759, %v758
        %v821 = vpack.c.b16 %v761, %v760
        %v822 = vpack.c.b16 %v763, %v762
        %v823 = vpack.c.b16 %v765, %v764
        %v824 = vpack.c.b16 %v767, %v766
        %v825 = vpack.c.b16 %v769, %v768
        %v826 = vpack.c.b16 %v771, %v770
        %v827 = vpack.c.b16 %v773, %v772
        %v828 = vpack.c.b16 %v775, %v774
        %v829 = vpack.c.b16 %v777, %v776
        %v830 = vpack.c.b16 %v779, %v778
        %v831 = vpack.c.b16 %v781, %v780
        %v832 = vpack.c.b16 %v783, %v782
        %v833 = vpack.c.b16 %v785, %v784
        %v834 = vpack.c.b16 %v787, %v786
        %v835 = vpack.c.b16 %v789, %v788
        %v836 = vpack.c.b16 %v791, %v790
        %v837 = vpack.c.b16 %v793, %v792
        %v838 = vpack.c.b16 %v795, %v794
        %v839 = vpack.c.b16 %v797, %v796
        %v840 = vpack.c.b16 %v799, %v798
        %v841 = vpack.c.b16 %v801, %v800
        %v842 = vpack.c.b16 %v803, %v802
        %v843 = vpack.c.b16 %v805, %v804
        %v844 = vpack.c.b16 %v807, %v806
        %v845 = vpack.c.b16 %v809, %v808
        %v846 = vpack.c.b16 %v811, %v810
        %v847 = vpack.c.b16 %v813, %v812
        %v848 = vpack.c.b16 %v815, %v814
        %v849 = vpack.c.b16 %v817, %v816
        %882 = vmatprep.subr.bf16.mxu0 0
        %883 = vmatpush1.bf16.msra.mxu0 %v825
        %884 = vmatprep.subr.bf16.mxu0 0
        %885 = vmatpush1.bf16.msra.mxu0 %v824
        %886 = vmatprep.subr.bf16.mxu0 0
        %887 = vmatpush1.bf16.msra.mxu0 %v823
        %888 = vmatprep.subr.bf16.mxu0 0
        %889 = vmatpush1.bf16.msra.mxu0 %v822
        %890 = vmatprep.subr.bf16.mxu0 0
        %891 = vmatpush1.bf16.msra.mxu0 %v821
        %892 = vmatprep.subr.bf16.mxu0 0
        %893 = vmatpush1.bf16.msra.mxu0 %v820
        %894 = vmatprep.subr.bf16.mxu0 0
        %895 = vmatpush1.bf16.msra.mxu0 %v819
        %896 = vmatprep.subr.bf16.mxu0 0
        %897 = vmatpush1.bf16.msra.mxu0 %v818
        %898 = vmatprep.subr.bf16.mxu0 0
        %899 = vmatpush2.bf16.msra.mxu0 %v833
        %900 = vmatprep.subr.bf16.mxu0 0
        %901 = vmatpush2.bf16.msra.mxu0 %v832
        %902 = vmatprep.subr.bf16.mxu0 0
        %903 = vmatpush2.bf16.msra.mxu0 %v831
        %904 = vmatprep.subr.bf16.mxu0 0
        %905 = vmatpush2.bf16.msra.mxu0 %v830
        %906 = vmatprep.subr.bf16.mxu0 0
        %907 = vmatpush2.bf16.msra.mxu0 %v829
        %908 = vmatprep.subr.bf16.mxu0 0
        %909 = vmatpush2.bf16.msra.mxu0 %v828
        %910 = vmatprep.subr.bf16.mxu0 0
        %911 = vmatpush2.bf16.msra.mxu0 %v827
        %912 = vmatprep.subr.bf16.mxu0 0
        %913 = vmatpush2.bf16.msra.mxu0 %v826
        %914 = vmatprep.mubr.bf16.mxu0 %v563
        %915 = vmatmul.mubr.bf16.gmra.mxu0 %v562
        %v916 = vpop.f32.mrf.mxu0
        %v917 = vadd.f32 0.0, %v916
        %v918 = vpop.f32.mrf.mxu0
        %v919 = vpop.f32.mrf.mxu0
        %v920 = vadd.f32 0.0, %v919
        %v921 = vpop.f32.mrf.mxu0
        %922 = vmatprep.mubr.bf16.mxu0 %v567
        %923 = vmatmul.mubr.bf16.gmra.mxu0 %v566
        %v924 = vpop.f32.mrf.mxu0
        %v925 = vadd.f32 0.0, %v924
        %v926 = vpop.f32.mrf.mxu0
        %v927 = vpop.f32.mrf.mxu0
        %v928 = vadd.f32 0.0, %v927
        %v929 = vpop.f32.mrf.mxu0
        %930 = vmatprep.mubr.bf16.mxu0 %v571
        %931 = vmatmul.mubr.bf16.gmra.mxu0 %v570
        %v932 = vpop.f32.mrf.mxu0
        %v933 = vadd.f32 0.0, %v932
        %v934 = vpop.f32.mrf.mxu0
        %v935 = vpop.f32.mrf.mxu0
        %v936 = vadd.f32 0.0, %v935
        %v937 = vpop.f32.mrf.mxu0
        %938 = vmatprep.mubr.bf16.mxu0 %v575
        %939 = vmatmul.mubr.bf16.gmra.mxu0 %v574
        %v940 = vpop.f32.mrf.mxu0
        %v941 = vadd.f32 0.0, %v940
        %v942 = vpop.f32.mrf.mxu0
        %v943 = vpop.f32.mrf.mxu0
        %v944 = vadd.f32 0.0, %v943
        %v945 = vpop.f32.mrf.mxu0
        %946 = vmatprep.mubr.bf16.mxu0 %v579
        %947 = vmatmul.mubr.bf16.gmra.mxu0 %v578
        %v948 = vpop.f32.mrf.mxu0
        %v949 = vadd.f32 0.0, %v948
        %v950 = vpop.f32.mrf.mxu0
        %v951 = vpop.f32.mrf.mxu0
        %v952 = vadd.f32 0.0, %v951
        %v953 = vpop.f32.mrf.mxu0
        %954 = vmatprep.mubr.bf16.mxu0 %v583
        %955 = vmatmul.mubr.bf16.gmra.mxu0 %v582
        %v956 = vpop.f32.mrf.mxu0
        %v957 = vadd.f32 0.0, %v956
        %v958 = vpop.f32.mrf.mxu0
        %v959 = vpop.f32.mrf.mxu0
        %v960 = vadd.f32 0.0, %v959
        %v961 = vpop.f32.mrf.mxu0
        %962 = vmatprep.mubr.bf16.mxu0 %v587
        %963 = vmatmul.mubr.bf16.gmra.mxu0 %v586
        %v964 = vpop.f32.mrf.mxu0
        %v965 = vadd.f32 0.0, %v964
        %v966 = vpop.f32.mrf.mxu0
        %v967 = vpop.f32.mrf.mxu0
        %v968 = vadd.f32 0.0, %v967
        %v969 = vpop.f32.mrf.mxu0
        %970 = vmatprep.mubr.bf16.mxu0 %v591
        %971 = vmatmul.mubr.bf16.gmra.mxu0 %v590
        %v972 = vpop.f32.mrf.mxu0
        %v973 = vadd.f32 0.0, %v972
        %v974 = vpop.f32.mrf.mxu0
        %v975 = vpop.f32.mrf.mxu0
        %v976 = vadd.f32 0.0, %v975
        %v977 = vpop.f32.mrf.mxu0
        %978 = vmatprep.mubr.bf16.mxu0 %v595
        %979 = vmatmul.mubr.bf16.gmra.mxu0 %v594
        %v980 = vpop.f32.mrf.mxu0
        %v981 = vadd.f32 0.0, %v980
        %v982 = vpop.f32.mrf.mxu0
        %v983 = vpop.f32.mrf.mxu0
        %v984 = vadd.f32 0.0, %v983
        %v985 = vpop.f32.mrf.mxu0
        %986 = vmatprep.mubr.bf16.mxu0 %v599
        %987 = vmatmul.mubr.bf16.gmra.mxu0 %v598
        %v988 = vpop.f32.mrf.mxu0
        %v989 = vadd.f32 0.0, %v988
        %v990 = vpop.f32.mrf.mxu0
        %v991 = vpop.f32.mrf.mxu0
        %v992 = vadd.f32 0.0, %v991
        %v993 = vpop.f32.mrf.mxu0
        %994 = vmatprep.mubr.bf16.mxu0 %v603
        %995 = vmatmul.mubr.bf16.gmra.mxu0 %v602
        %v996 = vpop.f32.mrf.mxu0
        %v997 = vadd.f32 0.0, %v996
        %v998 = vpop.f32.mrf.mxu0
        %v999 = vpop.f32.mrf.mxu0
        %v1000 = vadd.f32 0.0, %v999
        %v1001 = vpop.f32.mrf.mxu0
        %1002 = vmatprep.mubr.bf16.mxu0 %v607
        %1003 = vmatmul.mubr.bf16.gmra.mxu0 %v606
        %v1004 = vpop.f32.mrf.mxu0
        %v1005 = vadd.f32 0.0, %v1004
        %v1006 = vpop.f32.mrf.mxu0
        %v1007 = vpop.f32.mrf.mxu0
        %v1008 = vadd.f32 0.0, %v1007
        %v1009 = vpop.f32.mrf.mxu0
        %1010 = vmatprep.mubr.bf16.mxu0 %v611
        %1011 = vmatmul.mubr.bf16.gmra.mxu0 %v610
        %v1012 = vpop.f32.mrf.mxu0
        %v1013 = vadd.f32 0.0, %v1012
        %v1014 = vpop.f32.mrf.mxu0
        %v1015 = vpop.f32.mrf.mxu0
        %v1016 = vadd.f32 0.0, %v1015
        %v1017 = vpop.f32.mrf.mxu0
        %1018 = vmatprep.mubr.bf16.mxu0 %v615
        %1019 = vmatmul.mubr.bf16.gmra.mxu0 %v614
        %v1020 = vpop.f32.mrf.mxu0
        %v1021 = vadd.f32 0.0, %v1020
        %v1022 = vpop.f32.mrf.mxu0
        %v1023 = vpop.f32.mrf.mxu0
        %v1024 = vadd.f32 0.0, %v1023
        %v1025 = vpop.f32.mrf.mxu0
        %1026 = vmatprep.mubr.bf16.mxu0 %v619
        %1027 = vmatmul.mubr.bf16.gmra.mxu0 %v618
        %v1028 = vpop.f32.mrf.mxu0
        %v1029 = vadd.f32 0.0, %v1028
        %v1030 = vpop.f32.mrf.mxu0
        %v1031 = vpop.f32.mrf.mxu0
        %v1032 = vadd.f32 0.0, %v1031
        %v1033 = vpop.f32.mrf.mxu0
        %1034 = vmatprep.mubr.bf16.mxu0 %v623
        %1035 = vmatmul.mubr.bf16.gmra.mxu0 %v622
        %v1036 = vpop.f32.mrf.mxu0
        %v1037 = vadd.f32 0.0, %v1036
        %v1038 = vpop.f32.mrf.mxu0
        %v1039 = vpop.f32.mrf.mxu0
        %v1040 = vadd.f32 0.0, %v1039
        %v1041 = vpop.f32.mrf.mxu0
        %1042 = vdwg.mxu0
        %1043 = vmatprep.subr.bf16.mxu0 0
        %1044 = vmatpush1.bf16.msra.mxu0 %v841
        %1045 = vmatprep.subr.bf16.mxu0 0
        %1046 = vmatpush1.bf16.msra.mxu0 %v840
        %1047 = vmatprep.subr.bf16.mxu0 0
        %1048 = vmatpush1.bf16.msra.mxu0 %v839
        %1049 = vmatprep.subr.bf16.mxu0 0
        %1050 = vmatpush1.bf16.msra.mxu0 %v838
        %1051 = vmatprep.subr.bf16.mxu0 0
        %1052 = vmatpush1.bf16.msra.mxu0 %v837
        %1053 = vmatprep.subr.bf16.mxu0 0
        %1054 = vmatpush1.bf16.msra.mxu0 %v836
        %1055 = vmatprep.subr.bf16.mxu0 0
        %1056 = vmatpush1.bf16.msra.mxu0 %v835
        %1057 = vmatprep.subr.bf16.mxu0 0
        %1058 = vmatpush1.bf16.msra.mxu0 %v834
        %1059 = vmatprep.subr.bf16.mxu0 0
        %1060 = vmatpush2.bf16.msra.mxu0 %v849
        %1061 = vmatprep.subr.bf16.mxu0 0
        %1062 = vmatpush2.bf16.msra.mxu0 %v848
        %1063 = vmatprep.subr.bf16.mxu0 0
        %1064 = vmatpush2.bf16.msra.mxu0 %v847
        %1065 = vmatprep.subr.bf16.mxu0 0
        %1066 = vmatpush2.bf16.msra.mxu0 %v846
        %1067 = vmatprep.subr.bf16.mxu0 0
        %1068 = vmatpush2.bf16.msra.mxu0 %v845
        %1069 = vmatprep.subr.bf16.mxu0 0
        %1070 = vmatpush2.bf16.msra.mxu0 %v844
        %1071 = vmatprep.subr.bf16.mxu0 0
        %1072 = vmatpush2.bf16.msra.mxu0 %v843
        %1073 = vmatprep.subr.bf16.mxu0 0
        %1074 = vmatpush2.bf16.msra.mxu0 %v842
        %1075 = vmatprep.mubr.bf16.mxu0 %v565
        %1076 = vmatmul.mubr.bf16.gmra.mxu0 %v564
        %v1077 = vpop.f32.mrf.mxu0
        %v1078 = vadd.f32 %v917, %v1077
        %v1079 = vpop.f32.mrf.mxu0
        %v1080 = vpop.f32.mrf.mxu0
        %v1081 = vadd.f32 %v920, %v1080
        %v1082 = vpop.f32.mrf.mxu0
        %1083 = vmatprep.mubr.bf16.mxu0 %v569
        %1084 = vmatmul.mubr.bf16.gmra.mxu0 %v568
        %v1085 = vpop.f32.mrf.mxu0
        %v1086 = vadd.f32 %v925, %v1085
        %v1087 = vpop.f32.mrf.mxu0
        %v1088 = vpop.f32.mrf.mxu0
        %v1089 = vadd.f32 %v928, %v1088
        %v1090 = vpop.f32.mrf.mxu0
        %1091 = vmatprep.mubr.bf16.mxu0 %v573
        %1092 = vmatmul.mubr.bf16.gmra.mxu0 %v572
        %v1093 = vpop.f32.mrf.mxu0
        %v1094 = vadd.f32 %v933, %v1093
        %v1095 = vpop.f32.mrf.mxu0
        %v1096 = vpop.f32.mrf.mxu0
        %v1097 = vadd.f32 %v936, %v1096
        %v1098 = vpop.f32.mrf.mxu0
        %1099 = vmatprep.mubr.bf16.mxu0 %v577
        %1100 = vmatmul.mubr.bf16.gmra.mxu0 %v576
        %v1101 = vpop.f32.mrf.mxu0
        %v1102 = vadd.f32 %v941, %v1101
        %v1103 = vpop.f32.mrf.mxu0
        %v1104 = vpop.f32.mrf.mxu0
        %v1105 = vadd.f32 %v944, %v1104
        %v1106 = vpop.f32.mrf.mxu0
        %1107 = vmatprep.mubr.bf16.mxu0 %v581
        %1108 = vmatmul.mubr.bf16.gmra.mxu0 %v580
        %v1109 = vpop.f32.mrf.mxu0
        %v1110 = vadd.f32 %v949, %v1109
        %v1111 = vpop.f32.mrf.mxu0
        %v1112 = vpop.f32.mrf.mxu0
        %v1113 = vadd.f32 %v952, %v1112
        %v1114 = vpop.f32.mrf.mxu0
        %1115 = vmatprep.mubr.bf16.mxu0 %v585
        %1116 = vmatmul.mubr.bf16.gmra.mxu0 %v584
        %v1117 = vpop.f32.mrf.mxu0
        %v1118 = vadd.f32 %v957, %v1117
        %v1119 = vpop.f32.mrf.mxu0
        %v1120 = vpop.f32.mrf.mxu0
        %v1121 = vadd.f32 %v960, %v1120
        %v1122 = vpop.f32.mrf.mxu0
        %1123 = vmatprep.mubr.bf16.mxu0 %v589
        %1124 = vmatmul.mubr.bf16.gmra.mxu0 %v588
        %v1125 = vpop.f32.mrf.mxu0
        %v1126 = vadd.f32 %v965, %v1125
        %v1127 = vpop.f32.mrf.mxu0
        %v1128 = vpop.f32.mrf.mxu0
        %v1129 = vadd.f32 %v968, %v1128
        %v1130 = vpop.f32.mrf.mxu0
        %1131 = vmatprep.mubr.bf16.mxu0 %v593
        %1132 = vmatmul.mubr.bf16.gmra.mxu0 %v592
        %v1133 = vpop.f32.mrf.mxu0
        %v1134 = vadd.f32 %v973, %v1133
        %v1135 = vpop.f32.mrf.mxu0
        %v1136 = vpop.f32.mrf.mxu0
        %v1137 = vadd.f32 %v976, %v1136
        %v1138 = vpop.f32.mrf.mxu0
        %1139 = vmatprep.mubr.bf16.mxu0 %v597
        %1140 = vmatmul.mubr.bf16.gmra.mxu0 %v596
        %v1141 = vpop.f32.mrf.mxu0
        %v1142 = vadd.f32 %v981, %v1141
        %v1143 = vpop.f32.mrf.mxu0
        %v1144 = vpop.f32.mrf.mxu0
        %v1145 = vadd.f32 %v984, %v1144
        %v1146 = vpop.f32.mrf.mxu0
        %1147 = vmatprep.mubr.bf16.mxu0 %v601
        %1148 = vmatmul.mubr.bf16.gmra.mxu0 %v600
        %v1149 = vpop.f32.mrf.mxu0
        %v1150 = vadd.f32 %v989, %v1149
        %v1151 = vpop.f32.mrf.mxu0
        %v1152 = vpop.f32.mrf.mxu0
        %v1153 = vadd.f32 %v992, %v1152
        %v1154 = vpop.f32.mrf.mxu0
        %1155 = vmatprep.mubr.bf16.mxu0 %v605
        %1156 = vmatmul.mubr.bf16.gmra.mxu0 %v604
        %v1157 = vpop.f32.mrf.mxu0
        %v1158 = vadd.f32 %v997, %v1157
        %v1159 = vpop.f32.mrf.mxu0
        %v1160 = vpop.f32.mrf.mxu0
        %v1161 = vadd.f32 %v1000, %v1160
        %v1162 = vpop.f32.mrf.mxu0
        %1163 = vmatprep.mubr.bf16.mxu0 %v609
        %1164 = vmatmul.mubr.bf16.gmra.mxu0 %v608
        %v1165 = vpop.f32.mrf.mxu0
        %v1166 = vadd.f32 %v1005, %v1165
        %v1167 = vpop.f32.mrf.mxu0
        %v1168 = vpop.f32.mrf.mxu0
        %v1169 = vadd.f32 %v1008, %v1168
        %v1170 = vpop.f32.mrf.mxu0
        %1171 = vmatprep.mubr.bf16.mxu0 %v613
        %1172 = vmatmul.mubr.bf16.gmra.mxu0 %v612
        %v1173 = vpop.f32.mrf.mxu0
        %v1174 = vadd.f32 %v1013, %v1173
        %v1175 = vpop.f32.mrf.mxu0
        %v1176 = vpop.f32.mrf.mxu0
        %v1177 = vadd.f32 %v1016, %v1176
        %v1178 = vpop.f32.mrf.mxu0
        %1179 = vmatprep.mubr.bf16.mxu0 %v617
        %1180 = vmatmul.mubr.bf16.gmra.mxu0 %v616
        %v1181 = vpop.f32.mrf.mxu0
        %v1182 = vadd.f32 %v1021, %v1181
        %v1183 = vpop.f32.mrf.mxu0
        %v1184 = vpop.f32.mrf.mxu0
        %v1185 = vadd.f32 %v1024, %v1184
        %v1186 = vpop.f32.mrf.mxu0
        %1187 = vmatprep.mubr.bf16.mxu0 %v621
        %1188 = vmatmul.mubr.bf16.gmra.mxu0 %v620
        %v1189 = vpop.f32.mrf.mxu0
        %v1190 = vadd.f32 %v1029, %v1189
        %v1191 = vpop.f32.mrf.mxu0
        %v1192 = vpop.f32.mrf.mxu0
        %v1193 = vadd.f32 %v1032, %v1192
        %v1194 = vpop.f32.mrf.mxu0
        %1195 = vmatprep.mubr.bf16.mxu0 %v625
        %1196 = vmatmul.mubr.bf16.gmra.mxu0 %v624
        %v1197 = vpop.f32.mrf.mxu0
        %v1198 = vadd.f32 %v1037, %v1197
        %v1199 = vpop.f32.mrf.mxu0
        %v1200 = vpop.f32.mrf.mxu0
        %v1201 = vadd.f32 %v1040, %v1200
        %v1202 = vpop.f32.mrf.mxu0
        %1203 = vdwg.mxu0
        %vm1204 = vcmask 523264
        %1205 = vst.msk [vmem:[%s206] sm:$0xff] %vm1204, %v1078
        %1206 = vst.msk [vmem:[%s206 + $0x8] sm:$0xff] %vm1204, %v1081
        %1207 = vst.msk [vmem:[%s206 + $0x10] sm:$0xff] %vm1204, %v1086
        %1208 = vst.msk [vmem:[%s206 + $0x18] sm:$0xff] %vm1204, %v1089
        %1209 = vst.msk [vmem:[%s206 + $0x20] sm:$0xff] %vm1204, %v1094
        %1210 = vst.msk [vmem:[%s206 + $0x28] sm:$0xff] %vm1204, %v1097
        %1211 = vst.msk [vmem:[%s206 + $0x30] sm:$0xff] %vm1204, %v1102
        %1212 = vst.msk [vmem:[%s206 + $0x38] sm:$0xff] %vm1204, %v1105
        %1213 = vst.msk [vmem:[%s206 + $0x40] sm:$0xff] %vm1204, %v1110
        %1214 = vst.msk [vmem:[%s206 + $0x48] sm:$0xff] %vm1204, %v1113
        %1215 = vst.msk [vmem:[%s206 + $0x50] sm:$0xff] %vm1204, %v1118
        %1216 = vst.msk [vmem:[%s206 + $0x58] sm:$0xff] %vm1204, %v1121
        %1217 = vst.msk [vmem:[%s206 + $0x60] sm:$0xff] %vm1204, %v1126
        %1218 = vst.msk [vmem:[%s206 + $0x68] sm:$0xff] %vm1204, %v1129
        %1219 = vst.msk [vmem:[%s206 + $0x70] sm:$0xff] %vm1204, %v1134
        %1220 = vst.msk [vmem:[%s206 + $0x78] sm:$0xff] %vm1204, %v1137
        %1221 = vst.msk [vmem:[%s206 + $0x80] sm:$0xff] %vm1204, %v1142
        %1222 = vst.msk [vmem:[%s206 + $0x88] sm:$0xff] %vm1204, %v1145
        %1223 = vst.msk [vmem:[%s206 + $0x90] sm:$0xff] %vm1204, %v1150
        %1224 = vst.msk [vmem:[%s206 + $0x98] sm:$0xff] %vm1204, %v1153
        %1225 = vst.msk [vmem:[%s206 + $0xa0] sm:$0xff] %vm1204, %v1158
        %1226 = vst.msk [vmem:[%s206 + $0xa8] sm:$0xff] %vm1204, %v1161
        %1227 = vst.msk [vmem:[%s206 + $0xb0] sm:$0xff] %vm1204, %v1166
        %1228 = vst.msk [vmem:[%s206 + $0xb8] sm:$0xff] %vm1204, %v1169
        %1229 = vst.msk [vmem:[%s206 + $0xc0] sm:$0xff] %vm1204, %v1174
        %1230 = vst.msk [vmem:[%s206 + $0xc8] sm:$0xff] %vm1204, %v1177
        %1231 = vst.msk [vmem:[%s206 + $0xd0] sm:$0xff] %vm1204, %v1182
        %1232 = vst.msk [vmem:[%s206 + $0xd8] sm:$0xff] %vm1204, %v1185
        %1233 = vst.msk [vmem:[%s206 + $0xe0] sm:$0xff] %vm1204, %v1190
        %1234 = vst.msk [vmem:[%s206 + $0xe8] sm:$0xff] %vm1204, %v1193
        %1235 = vst.msk [vmem:[%s206 + $0xf0] sm:$0xff] %vm1204, %v1198
        %1236 = vst.msk [vmem:[%s206 + $0xf8] sm:$0xff] %vm1204, %v1201
        %s1237 = sand.u32 %s100, 1
        %s1238 = sand.u32 %s100, 1
        %s1239 = smul.addr %s1238, 256
        %s1240 = scalar_lea.vmem [#allocation2], %s1239
        // Predicated region
        $region29: #{model_forward.5} parent=27 // pred_check
          %p1241 = pneg %p110
        $region30: #{model_forward.5} parent=27 // pred_check_branch
          %1243 = sbr.rel (%p1241) target = $region32
        $region31: #{model_forward.5} parent=27 // pred_region
          %s1244 = smul.u32 32, %s19
          %s1245 = ssub.s32 540, %s1244
          %p1246 = scmp.lt.s32.totalorder %s1245, 32
          %s1247 = scalar_select %p1246, %s1245, 32
          %s1248 = smul.u32 128, %s1247
          %p1249 = scmp.ne.s32.totalorder 0, %s1248
          %s1250 = sadd.s32 %s20, %s1244
          %s1251 = smul.addr %s18, 540
          %s1252 = sadd.s32 %s1250, %s1251
          %s1253 = smul.addr %s1252, 8
          %s1254 = scalar_lea.vmem %s2, %s1253
          // Predicated region
          $region33: #{model_forward.5} parent=31 // pred_check
            %p1255 = pneg %p1249
          $region34: #{model_forward.5} parent=31 // pred_check_branch
            %1257 = sbr.rel (%p1255) target = $region36
          $region35: #{model_forward.5} parent=31 // pred_region
            // Predicated region
            $region37: #{model_forward.5} parent=35 // pred_check
              _
            $region38: #{model_forward.5} parent=35 // pred_check_branch
              %1259 = sbr.rel (0) target = $region40
            $region39: #{model_forward.5} parent=35 // pred_region
              // Predicated region
              $region59: #{model_forward.5} parent=39 // pred_check
                _
              $region60: #{model_forward.5} parent=39 // pred_check_branch
                %1371 = sbr.rel (0) target = $region62
              $region61: #{model_forward.5} parent=39 // pred_region
                %s1372 = sshrl.u32 %s1247, 5
                // While loop
                $region63: #{model_forward.5} parent=61 // loop_pre_header
                  _
                $region64: #{model_forward.5} parent=61 // loop_header
                  %s1374 = sphi 0, %s1376
                  %p1375 = scmp.ge.s32.totalorder %s1374, %s1372
                  %s1379 = sphi 0, %s1448
                  %s1380 = sphi %s1240, %s1451
                  %s1381 = sphi %s1254, %s1452
                $region65: #{model_forward.5} parent=61 // loop_header_branch
                  %1378 = sbr.rel (%p1375) target = $region69
                $region66: #{model_forward.5} parent=61 // loop_body
                  %v1382 = vld [vmem:[%s1380] sm:$0xff]
                  %1383 = vst [vmem:[%s1381] sm:$0xff] %v1382
                  %v1384 = vld [vmem:[%s1380 + $0x8] sm:$0xff]
                  %1385 = vst [vmem:[%s1381 + $0x8] sm:$0xff] %v1384
                  %v1386 = vld [vmem:[%s1380 + $0x10] sm:$0xff]
                  %1387 = vst [vmem:[%s1381 + $0x10] sm:$0xff] %v1386
                  %v1388 = vld [vmem:[%s1380 + $0x18] sm:$0xff]
                  %1389 = vst [vmem:[%s1381 + $0x18] sm:$0xff] %v1388
                  %v1390 = vld [vmem:[%s1380 + $0x20] sm:$0xff]
                  %1391 = vst [vmem:[%s1381 + $0x20] sm:$0xff] %v1390
                  %v1392 = vld [vmem:[%s1380 + $0x28] sm:$0xff]
                  %1393 = vst [vmem:[%s1381 + $0x28] sm:$0xff] %v1392
                  %v1394 = vld [vmem:[%s1380 + $0x30] sm:$0xff]
                  %1395 = vst [vmem:[%s1381 + $0x30] sm:$0xff] %v1394
                  %v1396 = vld [vmem:[%s1380 + $0x38] sm:$0xff]
                  %1397 = vst [vmem:[%s1381 + $0x38] sm:$0xff] %v1396
                  %v1398 = vld [vmem:[%s1380 + $0x40] sm:$0xff]
                  %1399 = vst [vmem:[%s1381 + $0x40] sm:$0xff] %v1398
                  %v1400 = vld [vmem:[%s1380 + $0x48] sm:$0xff]
                  %1401 = vst [vmem:[%s1381 + $0x48] sm:$0xff] %v1400
                  %v1402 = vld [vmem:[%s1380 + $0x50] sm:$0xff]
                  %1403 = vst [vmem:[%s1381 + $0x50] sm:$0xff] %v1402
                  %v1404 = vld [vmem:[%s1380 + $0x58] sm:$0xff]
                  %1405 = vst [vmem:[%s1381 + $0x58] sm:$0xff] %v1404
                  %v1406 = vld [vmem:[%s1380 + $0x60] sm:$0xff]
                  %1407 = vst [vmem:[%s1381 + $0x60] sm:$0xff] %v1406
                  %v1408 = vld [vmem:[%s1380 + $0x68] sm:$0xff]
                  %1409 = vst [vmem:[%s1381 + $0x68] sm:$0xff] %v1408
                  %v1410 = vld [vmem:[%s1380 + $0x70] sm:$0xff]
                  %1411 = vst [vmem:[%s1381 + $0x70] sm:$0xff] %v1410
                  %v1412 = vld [vmem:[%s1380 + $0x78] sm:$0xff]
                  %1413 = vst [vmem:[%s1381 + $0x78] sm:$0xff] %v1412
                  %v1414 = vld [vmem:[%s1380 + $0x80] sm:$0xff]
                  %1415 = vst [vmem:[%s1381 + $0x80] sm:$0xff] %v1414
                  %v1416 = vld [vmem:[%s1380 + $0x88] sm:$0xff]
                  %1417 = vst [vmem:[%s1381 + $0x88] sm:$0xff] %v1416
                  %v1418 = vld [vmem:[%s1380 + $0x90] sm:$0xff]
                  %1419 = vst [vmem:[%s1381 + $0x90] sm:$0xff] %v1418
                  %v1420 = vld [vmem:[%s1380 + $0x98] sm:$0xff]
                  %1421 = vst [vmem:[%s1381 + $0x98] sm:$0xff] %v1420
                  %v1422 = vld [vmem:[%s1380 + $0xa0] sm:$0xff]
                  %1423 = vst [vmem:[%s1381 + $0xa0] sm:$0xff] %v1422
                  %v1424 = vld [vmem:[%s1380 + $0xa8] sm:$0xff]
                  %1425 = vst [vmem:[%s1381 + $0xa8] sm:$0xff] %v1424
                  %v1426 = vld [vmem:[%s1380 + $0xb0] sm:$0xff]
                  %1427 = vst [vmem:[%s1381 + $0xb0] sm:$0xff] %v1426
                  %v1428 = vld [vmem:[%s1380 + $0xb8] sm:$0xff]
                  %1429 = vst [vmem:[%s1381 + $0xb8] sm:$0xff] %v1428
                  %v1430 = vld [vmem:[%s1380 + $0xc0] sm:$0xff]
                  %1431 = vst [vmem:[%s1381 + $0xc0] sm:$0xff] %v1430
                  %v1432 = vld [vmem:[%s1380 + $0xc8] sm:$0xff]
                  %1433 = vst [vmem:[%s1381 + $0xc8] sm:$0xff] %v1432
                  %v1434 = vld [vmem:[%s1380 + $0xd0] sm:$0xff]
                  %1435 = vst [vmem:[%s1381 + $0xd0] sm:$0xff] %v1434
                  %v1436 = vld [vmem:[%s1380 + $0xd8] sm:$0xff]
                  %1437 = vst [vmem:[%s1381 + $0xd8] sm:$0xff] %v1436
                  %v1438 = vld [vmem:[%s1380 + $0xe0] sm:$0xff]
                  %1439 = vst [vmem:[%s1381 + $0xe0] sm:$0xff] %v1438
                  %v1440 = vld [vmem:[%s1380 + $0xe8] sm:$0xff]
                  %1441 = vst [vmem:[%s1381 + $0xe8] sm:$0xff] %v1440
                  %v1442 = vld [vmem:[%s1380 + $0xf0] sm:$0xff]
                  %1443 = vst [vmem:[%s1381 + $0xf0] sm:$0xff] %v1442
                  %v1444 = vld [vmem:[%s1380 + $0xf8] sm:$0xff]
                  %1445 = vst [vmem:[%s1381 + $0xf8] sm:$0xff] %v1444
                  %s1446 = sadd.s32 1, %s1379
                  %p1447 = scmp.ge.s32.totalorder %s1446, %s1372
                  %s1448 = scalar_select %p1447, 0, %s1446
                  %s1449 = smul.u32 %s1448, 256
                  %s1450 = smul.u32 %s1448, 256
                  %s1451 = scalar_lea.vmem %s1240, %s1449 [#allocation2]
                  %s1452 = scalar_lea.vmem %s1254, %s1450
                $region67: #{model_forward.5} parent=61 // loop_footer
                  %s1376 = sadd.s32 %s1374, 1
                $region68: #{model_forward.5} parent=61 // loop_footer_branch
                  %1373 = sbr.rel target = $region64
                $region69: #{model_forward.5} parent=61 // loop_exit
                  _
                %s1453 = sshrl.u32 %s1247, 5
                %s1454 = sand.u32 %s1247, 31
                %s1455 = smul.u32 %s1453, 32
                %s1456 = smul.u32 8, %s1455
                %s1457 = scalar_lea.vmem %s1240, %s1456 [#allocation2]
                %s1458 = smul.u32 8, %s1455
                %s1459 = scalar_lea.vmem %s1254, %s1458
                // While loop
                $region70: #{model_forward.5} parent=61 // loop_pre_header
                  _
                $region71: #{model_forward.5} parent=61 // loop_header
                  %s1461 = sphi 0, %s1463
                  %p1462 = scmp.ge.s32.totalorder %s1461, %s1454
                  %s1466 = sphi 0, %s1473
                  %s1467 = sphi %s1457, %s1476
                  %s1468 = sphi %s1459, %s1477
                $region72: #{model_forward.5} parent=61 // loop_header_branch
                  %1465 = sbr.rel (%p1462) target = $region76
                $region73: #{model_forward.5} parent=61 // loop_body
                  %v1469 = vld [vmem:[%s1467] sm:$0xff]
                  %1470 = vst [vmem:[%s1468] sm:$0xff] %v1469
                  %s1471 = sadd.s32 1, %s1466
                  %p1472 = scmp.ge.s32.totalorder %s1471, %s1454
                  %s1473 = scalar_select %p1472, 0, %s1471
                  %s1474 = smul.u32 %s1473, 8
                  %s1475 = smul.u32 %s1473, 8
                  %s1476 = scalar_lea.vmem %s1457, %s1474 [#allocation2]
                  %s1477 = scalar_lea.vmem %s1459, %s1475
                $region74: #{model_forward.5} parent=61 // loop_footer
                  %s1463 = sadd.s32 %s1461, 1
                $region75: #{model_forward.5} parent=61 // loop_footer_branch
                  %1460 = sbr.rel target = $region71
                $region76: #{model_forward.5} parent=61 // loop_exit
                  _
              $region62: #{model_forward.5} parent=39 // pred_fallthru
                _
              // Predicated region
              $region77: #{model_forward.5} parent=39 // pred_check
                _
              $region78: #{model_forward.5} parent=39 // pred_check_branch
                %1479 = sbr.rel target = $region80
              $region79: #{model_forward.5} parent=39 // pred_region
                _
              $region80: #{model_forward.5} parent=39 // pred_fallthru
                _
            $region40: #{model_forward.5} parent=35 // pred_fallthru
              _
            // Predicated region
            $region41: #{model_forward.5} parent=35 // pred_check
              _
            $region42: #{model_forward.5} parent=35 // pred_check_branch
              %1261 = sbr.rel target = $region44
            $region43: #{model_forward.5} parent=35 // pred_region
              %s1263 = ssub.s32 256, 1
              %s1264 = sshrl.u32 %s1247, 5
              // While loop
              $region45: #{model_forward.5} parent=43 // loop_pre_header
                _
              $region46: #{model_forward.5} parent=43 // loop_header
                %s1266 = sphi 0, %s1268
                %p1267 = scmp.ge.s32.totalorder %s1266, %s1264
                %s1271 = sphi 0, %s1340
                %s1272 = sphi %s1240, %s1343
                %s1273 = sphi %s1254, %s1344
              $region47: #{model_forward.5} parent=43 // loop_header_branch
                %1270 = sbr.rel (%p1267) target = $region51
              $region48: #{model_forward.5} parent=43 // loop_body
                %v1274 = vld [vmem:[%s1272] sm:%s1263]
                %1275 = vst [vmem:[%s1273] sm:%s1263] %v1274
                %v1276 = vld [vmem:[%s1272 + $0x8] sm:%s1263]
                %1277 = vst [vmem:[%s1273 + $0x8] sm:%s1263] %v1276
                %v1278 = vld [vmem:[%s1272 + $0x10] sm:%s1263]
                %1279 = vst [vmem:[%s1273 + $0x10] sm:%s1263] %v1278
                %v1280 = vld [vmem:[%s1272 + $0x18] sm:%s1263]
                %1281 = vst [vmem:[%s1273 + $0x18] sm:%s1263] %v1280
                %v1282 = vld [vmem:[%s1272 + $0x20] sm:%s1263]
                %1283 = vst [vmem:[%s1273 + $0x20] sm:%s1263] %v1282
                %v1284 = vld [vmem:[%s1272 + $0x28] sm:%s1263]
                %1285 = vst [vmem:[%s1273 + $0x28] sm:%s1263] %v1284
                %v1286 = vld [vmem:[%s1272 + $0x30] sm:%s1263]
                %1287 = vst [vmem:[%s1273 + $0x30] sm:%s1263] %v1286
                %v1288 = vld [vmem:[%s1272 + $0x38] sm:%s1263]
                %1289 = vst [vmem:[%s1273 + $0x38] sm:%s1263] %v1288
                %v1290 = vld [vmem:[%s1272 + $0x40] sm:%s1263]
                %1291 = vst [vmem:[%s1273 + $0x40] sm:%s1263] %v1290
                %v1292 = vld [vmem:[%s1272 + $0x48] sm:%s1263]
                %1293 = vst [vmem:[%s1273 + $0x48] sm:%s1263] %v1292
                %v1294 = vld [vmem:[%s1272 + $0x50] sm:%s1263]
                %1295 = vst [vmem:[%s1273 + $0x50] sm:%s1263] %v1294
                %v1296 = vld [vmem:[%s1272 + $0x58] sm:%s1263]
                %1297 = vst [vmem:[%s1273 + $0x58] sm:%s1263] %v1296
                %v1298 = vld [vmem:[%s1272 + $0x60] sm:%s1263]
                %1299 = vst [vmem:[%s1273 + $0x60] sm:%s1263] %v1298
                %v1300 = vld [vmem:[%s1272 + $0x68] sm:%s1263]
                %1301 = vst [vmem:[%s1273 + $0x68] sm:%s1263] %v1300
                %v1302 = vld [vmem:[%s1272 + $0x70] sm:%s1263]
                %1303 = vst [vmem:[%s1273 + $0x70] sm:%s1263] %v1302
                %v1304 = vld [vmem:[%s1272 + $0x78] sm:%s1263]
                %1305 = vst [vmem:[%s1273 + $0x78] sm:%s1263] %v1304
                %v1306 = vld [vmem:[%s1272 + $0x80] sm:%s1263]
                %1307 = vst [vmem:[%s1273 + $0x80] sm:%s1263] %v1306
                %v1308 = vld [vmem:[%s1272 + $0x88] sm:%s1263]
                %1309 = vst [vmem:[%s1273 + $0x88] sm:%s1263] %v1308
                %v1310 = vld [vmem:[%s1272 + $0x90] sm:%s1263]
                %1311 = vst [vmem:[%s1273 + $0x90] sm:%s1263] %v1310
                %v1312 = vld [vmem:[%s1272 + $0x98] sm:%s1263]
                %1313 = vst [vmem:[%s1273 + $0x98] sm:%s1263] %v1312
                %v1314 = vld [vmem:[%s1272 + $0xa0] sm:%s1263]
                %1315 = vst [vmem:[%s1273 + $0xa0] sm:%s1263] %v1314
                %v1316 = vld [vmem:[%s1272 + $0xa8] sm:%s1263]
                %1317 = vst [vmem:[%s1273 + $0xa8] sm:%s1263] %v1316
                %v1318 = vld [vmem:[%s1272 + $0xb0] sm:%s1263]
                %1319 = vst [vmem:[%s1273 + $0xb0] sm:%s1263] %v1318
                %v1320 = vld [vmem:[%s1272 + $0xb8] sm:%s1263]
                %1321 = vst [vmem:[%s1273 + $0xb8] sm:%s1263] %v1320
                %v1322 = vld [vmem:[%s1272 + $0xc0] sm:%s1263]
                %1323 = vst [vmem:[%s1273 + $0xc0] sm:%s1263] %v1322
                %v1324 = vld [vmem:[%s1272 + $0xc8] sm:%s1263]
                %1325 = vst [vmem:[%s1273 + $0xc8] sm:%s1263] %v1324
                %v1326 = vld [vmem:[%s1272 + $0xd0] sm:%s1263]
                %1327 = vst [vmem:[%s1273 + $0xd0] sm:%s1263] %v1326
                %v1328 = vld [vmem:[%s1272 + $0xd8] sm:%s1263]
                %1329 = vst [vmem:[%s1273 + $0xd8] sm:%s1263] %v1328
                %v1330 = vld [vmem:[%s1272 + $0xe0] sm:%s1263]
                %1331 = vst [vmem:[%s1273 + $0xe0] sm:%s1263] %v1330
                %v1332 = vld [vmem:[%s1272 + $0xe8] sm:%s1263]
                %1333 = vst [vmem:[%s1273 + $0xe8] sm:%s1263] %v1332
                %v1334 = vld [vmem:[%s1272 + $0xf0] sm:%s1263]
                %1335 = vst [vmem:[%s1273 + $0xf0] sm:%s1263] %v1334
                %v1336 = vld [vmem:[%s1272 + $0xf8] sm:%s1263]
                %1337 = vst [vmem:[%s1273 + $0xf8] sm:%s1263] %v1336
                %s1338 = sadd.s32 1, %s1271
                %p1339 = scmp.ge.s32.totalorder %s1338, %s1264
                %s1340 = scalar_select %p1339, 0, %s1338
                %s1341 = smul.u32 %s1340, 256
                %s1342 = smul.u32 %s1340, 256
                %s1343 = scalar_lea.vmem %s1240, %s1341 [#allocation2]
                %s1344 = scalar_lea.vmem %s1254, %s1342
              $region49: #{model_forward.5} parent=43 // loop_footer
                %s1268 = sadd.s32 %s1266, 1
              $region50: #{model_forward.5} parent=43 // loop_footer_branch
                %1265 = sbr.rel target = $region46
              $region51: #{model_forward.5} parent=43 // loop_exit
                _
              %s1345 = sshrl.u32 %s1247, 5
              %s1346 = sand.u32 %s1247, 31
              %s1347 = smul.u32 %s1345, 32
              %s1348 = smul.u32 8, %s1347
              %s1349 = scalar_lea.vmem %s1240, %s1348 [#allocation2]
              %s1350 = smul.u32 8, %s1347
              %s1351 = scalar_lea.vmem %s1254, %s1350
              // While loop
              $region52: #{model_forward.5} parent=43 // loop_pre_header
                _
              $region53: #{model_forward.5} parent=43 // loop_header
                %s1353 = sphi 0, %s1355
                %p1354 = scmp.ge.s32.totalorder %s1353, %s1346
                %s1358 = sphi 0, %s1365
                %s1359 = sphi %s1349, %s1368
                %s1360 = sphi %s1351, %s1369
              $region54: #{model_forward.5} parent=43 // loop_header_branch
                %1357 = sbr.rel (%p1354) target = $region58
              $region55: #{model_forward.5} parent=43 // loop_body
                %v1361 = vld [vmem:[%s1359] sm:%s1263]
                %1362 = vst [vmem:[%s1360] sm:%s1263] %v1361
                %s1363 = sadd.s32 1, %s1358
                %p1364 = scmp.ge.s32.totalorder %s1363, %s1346
                %s1365 = scalar_select %p1364, 0, %s1363
                %s1366 = smul.u32 %s1365, 8
                %s1367 = smul.u32 %s1365, 8
                %s1368 = scalar_lea.vmem %s1349, %s1366 [#allocation2]
                %s1369 = scalar_lea.vmem %s1351, %s1367
              $region56: #{model_forward.5} parent=43 // loop_footer
                %s1355 = sadd.s32 %s1353, 1
              $region57: #{model_forward.5} parent=43 // loop_footer_branch
                %1352 = sbr.rel target = $region53
              $region58: #{model_forward.5} parent=43 // loop_exit
                _
            $region44: #{model_forward.5} parent=35 // pred_fallthru
              _
          $region36: #{model_forward.5} parent=31 // pred_fallthru
            _
          %1480 = vnop
        $region32: #{model_forward.5} parent=27 // pred_fallthru
          _
      $region28: #{model_forward.5} parent=5 // pred_fallthru
        _
      %p1481 = scmp.le.s32.totalorder 2, %s8
      // Predicated region
      $region81: #{model_forward.5} parent=5 // pred_check
        %p1482 = pneg %p1481
      $region82: #{model_forward.5} parent=5 // pred_check_branch
        %1484 = sbr.rel (%p1482) target = $region84
      $region83: #{model_forward.5} parent=5 // pred_region
        %s1485 = ssub.s32 %s8, 2
        // Predicated region
        $region85: #{model_forward.5} parent=83 // pred_check
          %p1486 = pneg %p116
        $region86: #{model_forward.5} parent=83 // pred_check_branch
          %1488 = sbr.rel (%p1486) target = $region88
        $region87: #{model_forward.5} parent=83 // pred_region
          %s1489 = sand.u32 %s101, 1
          %s1490 = sand.u32 %s101, 1
          %s1491 = smul.addr %s1490, 256
          %s1492 = scalar_lea.vmem [#allocation2], %s1491
        $region88: #{model_forward.5} parent=83 // pred_fallthru
          _
      $region84: #{model_forward.5} parent=5 // pred_fallthru
        _
    $region6: #{model_forward.5} parent=1 // loop_footer
      %s12 = sadd.s32 1, %s8
    $region7: #{model_forward.5} parent=1 // loop_footer_branch
      %7 = sbr.rel target = $region3
    $region8: #{model_forward.5} parent=1 // loop_exit
      _

// kernel: model_forward.4
$region0: #{model_forward.4}
  #allocation0 [shape = 'u32[]', space=smem, size = 0x4, offset = 0x4, fixed_abs, tag = 'smem constant byte address 0x4 - core index']
  #allocation1 [shape = 'u32[144,128]{1,0:T(1,128)}', space=vmem, size = 0x12000, scoped, tag = 'internal scratch']
  %s0 = inlined_call_operand.vmem [shape: bf16[4,900,512], index: 0, kind: input, shape index: {}]
  %s1 = inlined_call_operand.vmem [shape: bf16[4,512,1080], index: 1, kind: input, shape index: {}]
  %s2 = inlined_call_operand.vmem [shape: f32[4,900,1080], index: 2, kind: output, shape index: {}]
  %s3 = sld [smem:[#allocation0]]
  $region67: #{model_forward.4} parent=0
    _
  %s5 = ssub.s32 1, %s3
  %s6 = scalar_select 0, %s5, %s3
  $region1: #{model_forward.4} parent=0
    #allocation2 [shape = 'u8[2359296]{0}', space=vmem, size = 0x240000, scoped, tag = 'output window, operand 0']
    loop: start=0, step=1, limit=18
    $region2: #{model_forward.4} parent=1 // loop_pre_header
      _
    $region3: #{model_forward.4} parent=1 // loop_header
      %s8 = sphi 0, %s12
      %p9 = scmp.ge.s32.totalorder %s8, 18
      %s15 = sphi 0, %s34
      %s16 = sphi 0, %s30
      %s17 = sphi 0, %s26
      %s18 = sphi 0, %s15
      %s19 = sphi 0, %s16
      %s20 = sphi 0, %s17
      %s21 = sphi 0, %s18
      %s22 = sphi 0, %s19
      %s23 = sphi 0, %s20
      %s39 = sphi 0, %s41
      %s42 = sphi 0, %s39
      %s43 = sphi 0, %s42
      %s59 = sphi 0, %s43
      %s67 = sphi 0, %s69
      %s70 = sphi 0, %s67
      %s71 = sphi 0, %s70
      %s87 = sphi 0, %s71
      %s97 = sphi 0, %s99
      %s100 = sphi 0, %s97
      %s101 = sphi 0, %s100
      %s117 = sphi 0, %s101
    $region4: #{model_forward.4} parent=1 // loop_header_branch
      %11 = sbr.rel (%p9) target = $region8
    $region5: #{model_forward.4} parent=1 // loop_body
      %s13 = ssub.s32 %s8, 1
      %s14 = ssub.s32 %s8, 2
      %s24 = sadd.s32 1, %s17
      %p25 = scmp.ge.s32.totalorder %s24, 1
      %s26 = scalar_select %p25, 0, %s24
      %s27 = sadd.s32 1, %s16
      %s28 = scalar_select %p25, %s27, %s16
      %p29 = scmp.ge.s32.totalorder %s28, 4
      %s30 = scalar_select %p29, 0, %s28
      %s31 = sadd.s32 1, %s15
      %s32 = scalar_select %p29, %s31, %s15
      %p33 = scmp.ge.s32.totalorder %s32, 4
      %s34 = scalar_select %p33, 0, %s32
      %s35 = ssub.s32 %s15, %s34
      %s36 = ssub.s32 %s16, %s30
      %s37 = sor.u32 %s35, %s36
      %p38 = scmp.eq.s32.totalorder %s37, 0
      %s40 = sadd.s32 %s39, 1
      %s41 = scalar_select %p38, %s39, %s40
      %p44 = pneg %p38
      %p45 = scmp.eq.s32.totalorder %s8, 15
      %p46 = por %p44, %p45
      %p47 = scmp.ne.s32.totalorder %s39, %s42
      %p48 = scmp.eq.s32.totalorder %s8, 0
      %p49 = por %p47, %p48
      %p50 = scmp.ne.s32.totalorder %s39, %s42
      %p51 = scmp.eq.s32.totalorder %s13, 15
      %p52 = por %p50, %p51
      %p53 = scmp.ne.s32.totalorder %s42, %s43
      %p54 = scmp.eq.s32.totalorder %s13, 0
      %p55 = por %p53, %p54
      %p56 = scmp.ne.s32.totalorder %s42, %s43
      %p57 = scmp.eq.s32.totalorder %s14, 15
      %p58 = por %p56, %p57
      %p60 = scmp.ne.s32.totalorder %s43, %s59
      %p61 = scmp.eq.s32.totalorder %s14, 0
      %p62 = por %p60, %p61
      %s63 = ssub.s32 %s15, %s34
      %s64 = ssub.s32 %s17, %s26
      %s65 = sor.u32 %s63, %s64
      %p66 = scmp.eq.s32.totalorder %s65, 0
      %s68 = sadd.s32 %s67, 1
      %s69 = scalar_select %p66, %s67, %s68
      %p72 = pneg %p66
      %p73 = scmp.eq.s32.totalorder %s8, 15
      %p74 = por %p72, %p73
      %p75 = scmp.ne.s32.totalorder %s67, %s70
      %p76 = scmp.eq.s32.totalorder %s8, 0
      %p77 = por %p75, %p76
      %p78 = scmp.ne.s32.totalorder %s67, %s70
      %p79 = scmp.eq.s32.totalorder %s13, 15
      %p80 = por %p78, %p79
      %p81 = scmp.ne.s32.totalorder %s70, %s71
      %p82 = scmp.eq.s32.totalorder %s13, 0
      %p83 = por %p81, %p82
      %p84 = scmp.ne.s32.totalorder %s70, %s71
      %p85 = scmp.eq.s32.totalorder %s14, 15
      %p86 = por %p84, %p85
      %p88 = scmp.ne.s32.totalorder %s71, %s87
      %p89 = scmp.eq.s32.totalorder %s14, 0
      %p90 = por %p88, %p89
      %s91 = ssub.s32 %s15, %s34
      %s92 = ssub.s32 %s16, %s30
      %s93 = sor.u32 %s91, %s92
      %s94 = ssub.s32 %s17, %s26
      %s95 = sor.u32 %s93, %s94
      %p96 = scmp.eq.s32.totalorder %s95, 0
      %s98 = sadd.s32 %s97, 1
      %s99 = scalar_select %p96, %s97, %s98
      %p102 = pneg %p96
      %p103 = scmp.eq.s32.totalorder %s8, 15
      %p104 = por %p102, %p103
      %p105 = scmp.ne.s32.totalorder %s97, %s100
      %p106 = scmp.eq.s32.totalorder %s8, 0
      %p107 = por %p105, %p106
      %p108 = scmp.ne.s32.totalorder %s97, %s100
      %p109 = scmp.eq.s32.totalorder %s13, 15
      %p110 = por %p108, %p109
      %p111 = scmp.ne.s32.totalorder %s100, %s101
      %p112 = scmp.eq.s32.totalorder %s13, 0
      %p113 = por %p111, %p112
      %p114 = scmp.ne.s32.totalorder %s100, %s101
      %p115 = scmp.eq.s32.totalorder %s14, 15
      %p116 = por %p114, %p115
      %p118 = scmp.ne.s32.totalorder %s101, %s117
      %p119 = scmp.eq.s32.totalorder %s14, 0
      %p120 = por %p118, %p119
      %p121 = scmp.le.s32.totalorder 1, %s8
      %p122 = scmp.lt.s32.totalorder %s8, 17
      %p123 = pnand %p121, %p122
      %p124 = pneg %p123
      // Predicated region
      $region9: #{model_forward.4} parent=5 // pred_check
        _
      $region10: #{model_forward.4} parent=5 // pred_check_branch
        %126 = sbr.rel (%p123) target = $region12
      $region11: #{model_forward.4} parent=5 // pred_region
        %s127 = ssub.s32 %s8, 1
      $region12: #{model_forward.4} parent=5 // pred_fallthru
        _
      %p128 = scmp.lt.s32.totalorder %s8, 16
      // Predicated region
      $region13: #{model_forward.4} parent=5 // pred_check
        %p129 = pneg %p128
      $region14: #{model_forward.4} parent=5 // pred_check_branch
        %131 = sbr.rel (%p129) target = $region16
      $region15: #{model_forward.4} parent=5 // pred_region
        // Predicated region
        $region17: #{model_forward.4} parent=15 // pred_check
          %p132 = pneg %p49
        $region18: #{model_forward.4} parent=15 // pred_check_branch
          %134 = sbr.rel (%p132) target = $region20
        $region19: #{model_forward.4} parent=15 // pred_region
          %s135 = smul.u32 32, %s16
          %s136 = ssub.s32 113, %s135
          %p137 = scmp.lt.s32.totalorder %s136, 32
          %s138 = scalar_select %p137, %s136, 32
          %s139 = smul.u32 64, %s138
          %s140 = smul.u32 %s139, 4
          %p141 = scmp.lt.s32.totalorder %s15, 3
          %s142 = scalar_select %p141, %s15, 3
          %p143 = scmp.lt.s32.totalorder %s135, 112
          %s144 = scalar_select %p143, %s135, 112
          %s145 = smul.addr %s144, 4
          %s146 = smul.addr %s142, 452
          %s147 = sadd.s32 %s145, %s146
          %s148 = smul.addr %s147, 4
          %s149 = scalar_lea.vmem %s0, %s148
          %s150 = smul.u32 32, %s16
          %s151 = ssub.s32 113, %s150
          %p152 = scmp.lt.s32.totalorder %s151, 32
          %s153 = scalar_select %p152, %s151, 32
          %s154 = smul.u32 64, %s153
          %s155 = smul.u32 %s154, 4
        $region20: #{model_forward.4} parent=15 // pred_fallthru
          _
        // Predicated region
        $region21: #{model_forward.4} parent=15 // pred_check
          %p156 = pneg %p77
        $region22: #{model_forward.4} parent=15 // pred_check_branch
          %158 = sbr.rel (%p156) target = $region24
        $region23: #{model_forward.4} parent=15 // pred_region
          %s159 = smul.u32 9, %s17
          %p160 = scmp.lt.s32.totalorder %s15, 3
          %s161 = scalar_select %p160, %s15, 3
          %p162 = scmp.lt.s32.totalorder %s159, 8
          %s163 = scalar_select %p162, %s159, 8
          %s164 = smul.addr %s161, 576
          %s165 = sadd.s32 %s163, %s164
          %s166 = smul.addr %s165, 4
          %s167 = scalar_lea.vmem %s1, %s166
          %s168 = smul.u32 9, %s17
        $region24: #{model_forward.4} parent=15 // pred_fallthru
          _
      $region16: #{model_forward.4} parent=5 // pred_fallthru
        _
      %p169 = scmp.le.s32.totalorder 1, %s8
      %p170 = scmp.lt.s32.totalorder %s8, 17
      %p171 = pnand %p169, %p170
      %p172 = pneg %p171
      // Predicated region
      $region25: #{model_forward.4} parent=5 // pred_check
        _
      $region26: #{model_forward.4} parent=5 // pred_check_branch
        %174 = sbr.rel (%p171) target = $region28
      $region27: #{model_forward.4} parent=5 // pred_region
        %s175 = ssub.s32 %s8, 1
        %s176 = smul.u32 32, %s19
        %s177 = ssub.s32 113, %s176
        %p178 = scmp.lt.s32.totalorder %s177, 32
        %s179 = scalar_select %p178, %s177, 32
        %s180 = smul.u32 64, %s179
        %s181 = smul.u32 %s180, 4
        %p182 = scmp.lt.s32.totalorder %s18, 3
        %s183 = scalar_select %p182, %s18, 3
        %p184 = scmp.lt.s32.totalorder %s176, 112
        %s185 = scalar_select %p184, %s176, 112
        %s186 = smul.addr %s185, 4
        %s187 = smul.addr %s183, 452
        %s188 = sadd.s32 %s186, %s187
        %s189 = smul.addr %s188, 4
        %s190 = scalar_lea.vmem %s0, %s189
        %p191 = pneg %p55
        %p192 = pneg %p52
        %s193 = smul.u32 9, %s20
        %p194 = scmp.lt.s32.totalorder %s18, 3
        %s195 = scalar_select %p194, %s18, 3
        %p196 = scmp.lt.s32.totalorder %s193, 8
        %s197 = scalar_select %p196, %s193, 8
        %s198 = smul.addr %s195, 576
        %s199 = sadd.s32 %s197, %s198
        %s200 = smul.addr %s199, 4
        %s201 = scalar_lea.vmem %s1, %s200
        %p202 = pneg %p83
        %p203 = pneg %p80
        %p204 = pneg %p113
        %p205 = pneg %p110
        %s206 = sand.u32 %s100, 1
        %s207 = sand.u32 %s100, 1
        %s208 = smul.addr %s207, 2304
        %s209 = scalar_lea.vmem [#allocation2], %s208
        %s210 = smul.u32 32, %s19
        %s211 = ssub.s32 113, %s210
        %p212 = scmp.lt.s32.totalorder %s211, 32
        %s213 = scalar_select %p212, %s211, 32
        %s214 = smul.u32 64, %s213
        %s215 = smul.u32 %s214, 4
        %p216 = scmp.lt.s32.totalorder %s18, 3
        %s217 = scalar_select %p216, %s18, 3
        %p218 = scmp.lt.s32.totalorder %s210, 112
        %s219 = scalar_select %p218, %s210, 112
        %s220 = smul.addr %s219, 4
        %s221 = smul.addr %s217, 452
        %s222 = sadd.s32 %s220, %s221
        %s223 = smul.addr %s222, 4
        %s224 = scalar_lea.vmem %s0, %s223
        %s225 = smul.u32 32, %s19
        %s226 = ssub.s32 113, %s225
        %p227 = scmp.lt.s32.totalorder %s226, 32
        %s228 = scalar_select %p227, %s226, 32
        %s229 = smul.u32 64, %s228
        %s230 = smul.u32 %s229, 4
        %s231 = smul.u32 9, %s20
        %p232 = scmp.lt.s32.totalorder %s18, 3
        %s233 = scalar_select %p232, %s18, 3
        %p234 = scmp.lt.s32.totalorder %s231, 8
        %s235 = scalar_select %p234, %s231, 8
        %s236 = smul.addr %s233, 576
        %s237 = sadd.s32 %s235, %s236
        %s238 = smul.addr %s237, 4
        %s239 = scalar_lea.vmem %s1, %s238
        %s240 = smul.u32 9, %s20
        %s241 = smul.u32 32, %s19
        %s242 = smul.u32 9, %s20
        %s243 = ssub.s32 113, %s241
        %p244 = scmp.lt.s32.totalorder %s243, 32
        %s245 = scalar_select %p244, %s243, 32
        %s246 = smul.u32 128, %s245
        %s247 = smul.u32 %s246, 9
        %v249 = vld [vmem:[%s224] sm:$0xff]
        %v250 = vld [vmem:[%s224 + $0x8] sm:$0xff]
        %v251 = vld [vmem:[%s224 + $0x10] sm:$0xff]
        %v252 = vld [vmem:[%s224 + $0x18] sm:$0xff]
        %v253 = vld [vmem:[%s224 + $0x20] sm:$0xff]
        %v254 = vld [vmem:[%s224 + $0x28] sm:$0xff]
        %v255 = vld [vmem:[%s224 + $0x30] sm:$0xff]
        %v256 = vld [vmem:[%s224 + $0x38] sm:$0xff]
        %v257 = vld [vmem:[%s224 + $0x40] sm:$0xff]
        %v258 = vld [vmem:[%s224 + $0x48] sm:$0xff]
        %v259 = vld [vmem:[%s224 + $0x50] sm:$0xff]
        %v260 = vld [vmem:[%s224 + $0x58] sm:$0xff]
        %v261 = vld [vmem:[%s224 + $0x60] sm:$0xff]
        %v262 = vld [vmem:[%s224 + $0x68] sm:$0xff]
        %v263 = vld [vmem:[%s224 + $0x70] sm:$0xff]
        %v264 = vld [vmem:[%s224 + $0x78] sm:$0xff]
        %v265 = vld [vmem:[%s224 + $0x80] sm:$0xff]
        %v266 = vld [vmem:[%s224 + $0x88] sm:$0xff]
        %v267 = vld [vmem:[%s224 + $0x90] sm:$0xff]
        %v268 = vld [vmem:[%s224 + $0x98] sm:$0xff]
        %v269 = vld [vmem:[%s224 + $0xa0] sm:$0xff]
        %v270 = vld [vmem:[%s224 + $0xa8] sm:$0xff]
        %v271 = vld [vmem:[%s224 + $0xb0] sm:$0xff]
        %v272 = vld [vmem:[%s224 + $0xb8] sm:$0xff]
        %v273 = vld [vmem:[%s224 + $0xc0] sm:$0xff]
        %v274 = vld [vmem:[%s224 + $0xc8] sm:$0xff]
        %v275 = vld [vmem:[%s224 + $0xd0] sm:$0xff]
        %v276 = vld [vmem:[%s224 + $0xd8] sm:$0xff]
        %v277 = vld [vmem:[%s224 + $0xe0] sm:$0xff]
        %v278 = vld [vmem:[%s224 + $0xe8] sm:$0xff]
        %v279 = vld [vmem:[%s224 + $0xf0] sm:$0xff]
        %v280 = vld [vmem:[%s224 + $0xf8] sm:$0xff]
        %v281 = vld [vmem:[%s224 + $0x100] sm:$0xff]
        %v282 = vld [vmem:[%s224 + $0x108] sm:$0xff]
        %v283 = vld [vmem:[%s224 + $0x110] sm:$0xff]
        %v284 = vld [vmem:[%s224 + $0x118] sm:$0xff]
        %v285 = vld [vmem:[%s224 + $0x120] sm:$0xff]
        %v286 = vld [vmem:[%s224 + $0x128] sm:$0xff]
        %v287 = vld [vmem:[%s224 + $0x130] sm:$0xff]
        %v288 = vld [vmem:[%s224 + $0x138] sm:$0xff]
        %v289 = vld [vmem:[%s224 + $0x140] sm:$0xff]
        %v290 = vld [vmem:[%s224 + $0x148] sm:$0xff]
        %v291 = vld [vmem:[%s224 + $0x150] sm:$0xff]
        %v292 = vld [vmem:[%s224 + $0x158] sm:$0xff]
        %v293 = vld [vmem:[%s224 + $0x160] sm:$0xff]
        %v294 = vld [vmem:[%s224 + $0x168] sm:$0xff]
        %v295 = vld [vmem:[%s224 + $0x170] sm:$0xff]
        %v296 = vld [vmem:[%s224 + $0x178] sm:$0xff]
        %v297 = vld [vmem:[%s224 + $0x180] sm:$0xff]
        %v298 = vld [vmem:[%s224 + $0x188] sm:$0xff]
        %v299 = vld [vmem:[%s224 + $0x190] sm:$0xff]
        %v300 = vld [vmem:[%s224 + $0x198] sm:$0xff]
        %v301 = vld [vmem:[%s224 + $0x1a0] sm:$0xff]
        %v302 = vld [vmem:[%s224 + $0x1a8] sm:$0xff]
        %v303 = vld [vmem:[%s224 + $0x1b0] sm:$0xff]
        %v304 = vld [vmem:[%s224 + $0x1b8] sm:$0xff]
        %v305 = vld [vmem:[%s224 + $0x1c0] sm:$0xff]
        %v306 = vld [vmem:[%s224 + $0x1c8] sm:$0xff]
        %v307 = vld [vmem:[%s224 + $0x1d0] sm:$0xff]
        %v308 = vld [vmem:[%s224 + $0x1d8] sm:$0xff]
        %v309 = vld [vmem:[%s224 + $0x1e0] sm:$0xff]
        %v310 = vld [vmem:[%s224 + $0x1e8] sm:$0xff]
        %v311 = vld [vmem:[%s224 + $0x1f0] sm:$0xff]
        %v312 = vld [vmem:[%s224 + $0x1f8] sm:$0xff]
        %v313 = vld [vmem:[%s239] sm:$0xff]
        %v314 = vld [vmem:[%s239 + $0x8] sm:$0xff]
        %v315 = vld [vmem:[%s239 + $0x10] sm:$0xff]
        %v316 = vld [vmem:[%s239 + $0x18] sm:$0xff]
        %v317 = vld [vmem:[%s239 + $0x20] sm:$0xf]
        %v318 = vld [vmem:[%s239 + $0x24] sm:$0xff]
        %v319 = vld [vmem:[%s239 + $0x2c] sm:$0xff]
        %v320 = vld [vmem:[%s239 + $0x34] sm:$0xff]
        %v321 = vld [vmem:[%s239 + $0x3c] sm:$0xff]
        %v322 = vld [vmem:[%s239 + $0x44] sm:$0xf]
        %v323 = vld [vmem:[%s239 + $0x48] sm:$0xff]
        %v324 = vld [vmem:[%s239 + $0x50] sm:$0xff]
        %v325 = vld [vmem:[%s239 + $0x58] sm:$0xff]
        %v326 = vld [vmem:[%s239 + $0x60] sm:$0xff]
        %v327 = vld [vmem:[%s239 + $0x68] sm:$0xf]
        %v328 = vld [vmem:[%s239 + $0x6c] sm:$0xff]
        %v329 = vld [vmem:[%s239 + $0x74] sm:$0xff]
        %v330 = vld [vmem:[%s239 + $0x7c] sm:$0xff]
        %v331 = vld [vmem:[%s239 + $0x84] sm:$0xff]
        %v332 = vld [vmem:[%s239 + $0x8c] sm:$0xf]
        %v333 = vld [vmem:[%s239 + $0x90] sm:$0xff]
        %v334 = vld [vmem:[%s239 + $0x98] sm:$0xff]
        %v335 = vld [vmem:[%s239 + $0xa0] sm:$0xff]
        %v336 = vld [vmem:[%s239 + $0xa8] sm:$0xff]
        %v337 = vld [vmem:[%s239 + $0xb0] sm:$0xf]
        %v338 = vld [vmem:[%s239 + $0xb4] sm:$0xff]
        %v339 = vld [vmem:[%s239 + $0xbc] sm:$0xff]
        %v340 = vld [vmem:[%s239 + $0xc4] sm:$0xff]
        %v341 = vld [vmem:[%s239 + $0xcc] sm:$0xff]
        %v342 = vld [vmem:[%s239 + $0xd4] sm:$0xf]
        %v343 = vld [vmem:[%s239 + $0xd8] sm:$0xff]
        %v344 = vld [vmem:[%s239 + $0xe0] sm:$0xff]
        %v345 = vld [vmem:[%s239 + $0xe8] sm:$0xff]
        %v346 = vld [vmem:[%s239 + $0xf0] sm:$0xff]
        %v347 = vld [vmem:[%s239 + $0xf8] sm:$0xf]
        %v348 = vld [vmem:[%s239 + $0xfc] sm:$0xff]
        %v349 = vld [vmem:[%s239 + $0x104] sm:$0xff]
        %v350 = vld [vmem:[%s239 + $0x10c] sm:$0xff]
        %v351 = vld [vmem:[%s239 + $0x114] sm:$0xff]
        %v352 = vld [vmem:[%s239 + $0x11c] sm:$0xf]
        %v353 = vld [vmem:[%s239 + $0x120] sm:$0xff]
        %v354 = vld [vmem:[%s239 + $0x128] sm:$0xff]
        %v355 = vld [vmem:[%s239 + $0x130] sm:$0xff]
        %v356 = vld [vmem:[%s239 + $0x138] sm:$0xff]
        %v357 = vld [vmem:[%s239 + $0x140] sm:$0xf]
        %v358 = vld [vmem:[%s239 + $0x144] sm:$0xff]
        %v359 = vld [vmem:[%s239 + $0x14c] sm:$0xff]
        %v360 = vld [vmem:[%s239 + $0x154] sm:$0xff]
        %v361 = vld [vmem:[%s239 + $0x15c] sm:$0xff]
        %v362 = vld [vmem:[%s239 + $0x164] sm:$0xf]
        %v363 = vld [vmem:[%s239 + $0x168] sm:$0xff]
        %v364 = vld [vmem:[%s239 + $0x170] sm:$0xff]
        %v365 = vld [vmem:[%s239 + $0x178] sm:$0xff]
        %v366 = vld [vmem:[%s239 + $0x180] sm:$0xff]
        %v367 = vld [vmem:[%s239 + $0x188] sm:$0xf]
        %v368 = vld [vmem:[%s239 + $0x18c] sm:$0xff]
        %v369 = vld [vmem:[%s239 + $0x194] sm:$0xff]
        %v370 = vld [vmem:[%s239 + $0x19c] sm:$0xff]
        %v371 = vld [vmem:[%s239 + $0x1a4] sm:$0xff]
        %v372 = vld [vmem:[%s239 + $0x1ac] sm:$0xf]
        %v373 = vld [vmem:[%s239 + $0x1b0] sm:$0xff]
        %v374 = vld [vmem:[%s239 + $0x1b8] sm:$0xff]
        %v375 = vld [vmem:[%s239 + $0x1c0] sm:$0xff]
        %v376 = vld [vmem:[%s239 + $0x1c8] sm:$0xff]
        %v377 = vld [vmem:[%s239 + $0x1d0] sm:$0xf]
        %v378 = vld [vmem:[%s239 + $0x1d4] sm:$0xff]
        %v379 = vld [vmem:[%s239 + $0x1dc] sm:$0xff]
        %v380 = vld [vmem:[%s239 + $0x1e4] sm:$0xff]
        %v381 = vld [vmem:[%s239 + $0x1ec] sm:$0xff]
        %v382 = vld [vmem:[%s239 + $0x1f4] sm:$0xf]
        %v383 = vld [vmem:[%s239 + $0x1f8] sm:$0xff]
        %v384 = vld [vmem:[%s239 + $0x200] sm:$0xff]
        %v385 = vld [vmem:[%s239 + $0x208] sm:$0xff]
        %v386 = vld [vmem:[%s239 + $0x210] sm:$0xff]
        %v387 = vld [vmem:[%s239 + $0x218] sm:$0xf]
        %v388 = vld [vmem:[%s239 + $0x21c] sm:$0xff]
        %v389 = vld [vmem:[%s239 + $0x224] sm:$0xff]
        %v390 = vld [vmem:[%s239 + $0x22c] sm:$0xff]
        %v391 = vld [vmem:[%s239 + $0x234] sm:$0xff]
        %v392 = vld [vmem:[%s239 + $0x23c] sm:$0xf]
        %v393 = vld [vmem:[%s239 + $0x240] sm:$0xff]
        %v394 = vld [vmem:[%s239 + $0x248] sm:$0xff]
        %v395 = vld [vmem:[%s239 + $0x250] sm:$0xff]
        %v396 = vld [vmem:[%s239 + $0x258] sm:$0xff]
        %v397 = vld [vmem:[%s239 + $0x260] sm:$0xf]
        %v398 = vld [vmem:[%s239 + $0x264] sm:$0xff]
        %v399 = vld [vmem:[%s239 + $0x26c] sm:$0xff]
        %v400 = vld [vmem:[%s239 + $0x274] sm:$0xff]
        %v401 = vld [vmem:[%s239 + $0x27c] sm:$0xff]
        %v402 = vld [vmem:[%s239 + $0x284] sm:$0xf]
        %v403 = vld [vmem:[%s239 + $0x288] sm:$0xff]
        %v404 = vld [vmem:[%s239 + $0x290] sm:$0xff]
        %v405 = vld [vmem:[%s239 + $0x298] sm:$0xff]
        %v406 = vld [vmem:[%s239 + $0x2a0] sm:$0xff]
        %v407 = vld [vmem:[%s239 + $0x2a8] sm:$0xf]
        %v408 = vld [vmem:[%s239 + $0x2ac] sm:$0xff]
        %v409 = vld [vmem:[%s239 + $0x2b4] sm:$0xff]
        %v410 = vld [vmem:[%s239 + $0x2bc] sm:$0xff]
        %v411 = vld [vmem:[%s239 + $0x2c4] sm:$0xff]
        %v412 = vld [vmem:[%s239 + $0x2cc] sm:$0xf]
        %v413 = vld [vmem:[%s239 + $0x2d0] sm:$0xff]
        %v414 = vld [vmem:[%s239 + $0x2d8] sm:$0xff]
        %v415 = vld [vmem:[%s239 + $0x2e0] sm:$0xff]
        %v416 = vld [vmem:[%s239 + $0x2e8] sm:$0xff]
        %v417 = vld [vmem:[%s239 + $0x2f0] sm:$0xf]
        %v418 = vld [vmem:[%s239 + $0x2f4] sm:$0xff]
        %v419 = vld [vmem:[%s239 + $0x2fc] sm:$0xff]
        %v420 = vld [vmem:[%s239 + $0x304] sm:$0xff]
        %v421 = vld [vmem:[%s239 + $0x30c] sm:$0xff]
        %v422 = vld [vmem:[%s239 + $0x314] sm:$0xf]
        %v423 = vld [vmem:[%s239 + $0x318] sm:$0xff]
        %v424 = vld [vmem:[%s239 + $0x320] sm:$0xff]
        %v425 = vld [vmem:[%s239 + $0x328] sm:$0xff]
        %v426 = vld [vmem:[%s239 + $0x330] sm:$0xff]
        %v427 = vld [vmem:[%s239 + $0x338] sm:$0xf]
        %v428 = vld [vmem:[%s239 + $0x33c] sm:$0xff]
        %v429 = vld [vmem:[%s239 + $0x344] sm:$0xff]
        %v430 = vld [vmem:[%s239 + $0x34c] sm:$0xff]
        %v431 = vld [vmem:[%s239 + $0x354] sm:$0xff]
        %v432 = vld [vmem:[%s239 + $0x35c] sm:$0xf]
        %v433 = vld [vmem:[%s239 + $0x360] sm:$0xff]
        %v434 = vld [vmem:[%s239 + $0x368] sm:$0xff]
        %v435 = vld [vmem:[%s239 + $0x370] sm:$0xff]
        %v436 = vld [vmem:[%s239 + $0x378] sm:$0xff]
        %v437 = vld [vmem:[%s239 + $0x380] sm:$0xf]
        %v438 = vld [vmem:[%s239 + $0x384] sm:$0xff]
        %v439 = vld [vmem:[%s239 + $0x38c] sm:$0xff]
        %v440 = vld [vmem:[%s239 + $0x394] sm:$0xff]
        %v441 = vld [vmem:[%s239 + $0x39c] sm:$0xff]
        %v442 = vld [vmem:[%s239 + $0x3a4] sm:$0xf]
        %v443 = vld [vmem:[%s239 + $0x3a8] sm:$0xff]
        %v444 = vld [vmem:[%s239 + $0x3b0] sm:$0xff]
        %v445 = vld [vmem:[%s239 + $0x3b8] sm:$0xff]
        %v446 = vld [vmem:[%s239 + $0x3c0] sm:$0xff]
        %v447 = vld [vmem:[%s239 + $0x3c8] sm:$0xf]
        %v448 = vld [vmem:[%s239 + $0x3cc] sm:$0xff]
        %v449 = vld [vmem:[%s239 + $0x3d4] sm:$0xff]
        %v450 = vld [vmem:[%s239 + $0x3dc] sm:$0xff]
        %v451 = vld [vmem:[%s239 + $0x3e4] sm:$0xff]
        %v452 = vld [vmem:[%s239 + $0x3ec] sm:$0xf]
        %v453 = vld [vmem:[%s239 + $0x3f0] sm:$0xff]
        %v454 = vld [vmem:[%s239 + $0x3f8] sm:$0xff]
        %v455 = vld [vmem:[%s239 + $0x400] sm:$0xff]
        %v456 = vld [vmem:[%s239 + $0x408] sm:$0xff]
        %v457 = vld [vmem:[%s239 + $0x410] sm:$0xf]
        %v458 = vld [vmem:[%s239 + $0x414] sm:$0xff]
        %v459 = vld [vmem:[%s239 + $0x41c] sm:$0xff]
        %v460 = vld [vmem:[%s239 + $0x424] sm:$0xff]
        %v461 = vld [vmem:[%s239 + $0x42c] sm:$0xff]
        %v462 = vld [vmem:[%s239 + $0x434] sm:$0xf]
        %v463 = vld [vmem:[%s239 + $0x438] sm:$0xff]
        %v464 = vld [vmem:[%s239 + $0x440] sm:$0xff]
        %v465 = vld [vmem:[%s239 + $0x448] sm:$0xff]
        %v466 = vld [vmem:[%s239 + $0x450] sm:$0xff]
        %v467 = vld [vmem:[%s239 + $0x458] sm:$0xf]
        %v468 = vld [vmem:[%s239 + $0x45c] sm:$0xff]
        %v469 = vld [vmem:[%s239 + $0x464] sm:$0xff]
        %v470 = vld [vmem:[%s239 + $0x46c] sm:$0xff]
        %v471 = vld [vmem:[%s239 + $0x474] sm:$0xff]
        %v472 = vld [vmem:[%s239 + $0x47c] sm:$0xf]
        %v473 = vld [vmem:[%s239 + $0x480] sm:$0xff]
        %v474 = vld [vmem:[%s239 + $0x488] sm:$0xff]
        %v475 = vld [vmem:[%s239 + $0x490] sm:$0xff]
        %v476 = vld [vmem:[%s239 + $0x498] sm:$0xff]
        %v477 = vld [vmem:[%s239 + $0x4a0] sm:$0xf]
        %v478 = vld [vmem:[%s239 + $0x4a4] sm:$0xff]
        %v479 = vld [vmem:[%s239 + $0x4ac] sm:$0xff]
        %v480 = vld [vmem:[%s239 + $0x4b4] sm:$0xff]
        %v481 = vld [vmem:[%s239 + $0x4bc] sm:$0xff]
        %v482 = vld [vmem:[%s239 + $0x4c4] sm:$0xf]
        %v483 = vld [vmem:[%s239 + $0x4c8] sm:$0xff]
        %v484 = vld [vmem:[%s239 + $0x4d0] sm:$0xff]
        %v485 = vld [vmem:[%s239 + $0x4d8] sm:$0xff]
        %v486 = vld [vmem:[%s239 + $0x4e0] sm:$0xff]
        %v487 = vld [vmem:[%s239 + $0x4e8] sm:$0xf]
        %v488 = vld [vmem:[%s239 + $0x4ec] sm:$0xff]
        %v489 = vld [vmem:[%s239 + $0x4f4] sm:$0xff]
        %v490 = vld [vmem:[%s239 + $0x4fc] sm:$0xff]
        %v491 = vld [vmem:[%s239 + $0x504] sm:$0xff]
        %v492 = vld [vmem:[%s239 + $0x50c] sm:$0xf]
        %v493 = vld [vmem:[%s239 + $0x510] sm:$0xff]
        %v494 = vld [vmem:[%s239 + $0x518] sm:$0xff]
        %v495 = vld [vmem:[%s239 + $0x520] sm:$0xff]
        %v496 = vld [vmem:[%s239 + $0x528] sm:$0xff]
        %v497 = vld [vmem:[%s239 + $0x530] sm:$0xf]
        %v498 = vld [vmem:[%s239 + $0x534] sm:$0xff]
        %v499 = vld [vmem:[%s239 + $0x53c] sm:$0xff]
        %v500 = vld [vmem:[%s239 + $0x544] sm:$0xff]
        %v501 = vld [vmem:[%s239 + $0x54c] sm:$0xff]
        %v502 = vld [vmem:[%s239 + $0x554] sm:$0xf]
        %v503 = vld [vmem:[%s239 + $0x558] sm:$0xff]
        %v504 = vld [vmem:[%s239 + $0x560] sm:$0xff]
        %v505 = vld [vmem:[%s239 + $0x568] sm:$0xff]
        %v506 = vld [vmem:[%s239 + $0x570] sm:$0xff]
        %v507 = vld [vmem:[%s239 + $0x578] sm:$0xf]
        %v508 = vld [vmem:[%s239 + $0x57c] sm:$0xff]
        %v509 = vld [vmem:[%s239 + $0x584] sm:$0xff]
        %v510 = vld [vmem:[%s239 + $0x58c] sm:$0xff]
        %v511 = vld [vmem:[%s239 + $0x594] sm:$0xff]
        %v512 = vld [vmem:[%s239 + $0x59c] sm:$0xf]
        %v513 = vld [vmem:[%s239 + $0x5a0] sm:$0xff]
        %v514 = vld [vmem:[%s239 + $0x5a8] sm:$0xff]
        %v515 = vld [vmem:[%s239 + $0x5b0] sm:$0xff]
        %v516 = vld [vmem:[%s239 + $0x5b8] sm:$0xff]
        %v517 = vld [vmem:[%s239 + $0x5c0] sm:$0xf]
        %v518 = vld [vmem:[%s239 + $0x5c4] sm:$0xff]
        %v519 = vld [vmem:[%s239 + $0x5cc] sm:$0xff]
        %v520 = vld [vmem:[%s239 + $0x5d4] sm:$0xff]
        %v521 = vld [vmem:[%s239 + $0x5dc] sm:$0xff]
        %v522 = vld [vmem:[%s239 + $0x5e4] sm:$0xf]
        %v523 = vld [vmem:[%s239 + $0x5e8] sm:$0xff]
        %v524 = vld [vmem:[%s239 + $0x5f0] sm:$0xff]
        %v525 = vld [vmem:[%s239 + $0x5f8] sm:$0xff]
        %v526 = vld [vmem:[%s239 + $0x600] sm:$0xff]
        %v527 = vld [vmem:[%s239 + $0x608] sm:$0xf]
        %v528 = vld [vmem:[%s239 + $0x60c] sm:$0xff]
        %v529 = vld [vmem:[%s239 + $0x614] sm:$0xff]
        %v530 = vld [vmem:[%s239 + $0x61c] sm:$0xff]
        %v531 = vld [vmem:[%s239 + $0x624] sm:$0xff]
        %v532 = vld [vmem:[%s239 + $0x62c] sm:$0xf]
        %v533 = vld [vmem:[%s239 + $0x630] sm:$0xff]
        %v534 = vld [vmem:[%s239 + $0x638] sm:$0xff]
        %v535 = vld [vmem:[%s239 + $0x640] sm:$0xff]
        %v536 = vld [vmem:[%s239 + $0x648] sm:$0xff]
        %v537 = vld [vmem:[%s239 + $0x650] sm:$0xf]
        %v538 = vld [vmem:[%s239 + $0x654] sm:$0xff]
        %v539 = vld [vmem:[%s239 + $0x65c] sm:$0xff]
        %v540 = vld [vmem:[%s239 + $0x664] sm:$0xff]
        %v541 = vld [vmem:[%s239 + $0x66c] sm:$0xff]
        %v542 = vld [vmem:[%s239 + $0x674] sm:$0xf]
        %v543 = vld [vmem:[%s239 + $0x678] sm:$0xff]
        %v544 = vld [vmem:[%s239 + $0x680] sm:$0xff]
        %v545 = vld [vmem:[%s239 + $0x688] sm:$0xff]
        %v546 = vld [vmem:[%s239 + $0x690] sm:$0xff]
        %v547 = vld [vmem:[%s239 + $0x698] sm:$0xf]
        %v548 = vld [vmem:[%s239 + $0x69c] sm:$0xff]
        %v549 = vld [vmem:[%s239 + $0x6a4] sm:$0xff]
        %v550 = vld [vmem:[%s239 + $0x6ac] sm:$0xff]
        %v551 = vld [vmem:[%s239 + $0x6b4] sm:$0xff]
        %v552 = vld [vmem:[%s239 + $0x6bc] sm:$0xf]
        %v553 = vld [vmem:[%s239 + $0x6c0] sm:$0xff]
        %v554 = vld [vmem:[%s239 + $0x6c8] sm:$0xff]
        %v555 = vld [vmem:[%s239 + $0x6d0] sm:$0xff]
        %v556 = vld [vmem:[%s239 + $0x6d8] sm:$0xff]
        %v557 = vld [vmem:[%s239 + $0x6e0] sm:$0xf]
        %v558 = vld [vmem:[%s239 + $0x6e4] sm:$0xff]
        %v559 = vld [vmem:[%s239 + $0x6ec] sm:$0xff]
        %v560 = vld [vmem:[%s239 + $0x6f4] sm:$0xff]
        %v561 = vld [vmem:[%s239 + $0x6fc] sm:$0xff]
        %v562 = vld [vmem:[%s239 + $0x704] sm:$0xf]
        %v563 = vld [vmem:[%s239 + $0x708] sm:$0xff]
        %v564 = vld [vmem:[%s239 + $0x710] sm:$0xff]
        %v565 = vld [vmem:[%s239 + $0x718] sm:$0xff]
        %v566 = vld [vmem:[%s239 + $0x720] sm:$0xff]
        %v567 = vld [vmem:[%s239 + $0x728] sm:$0xf]
        %v568 = vld [vmem:[%s239 + $0x72c] sm:$0xff]
        %v569 = vld [vmem:[%s239 + $0x734] sm:$0xff]
        %v570 = vld [vmem:[%s239 + $0x73c] sm:$0xff]
        %v571 = vld [vmem:[%s239 + $0x744] sm:$0xff]
        %v572 = vld [vmem:[%s239 + $0x74c] sm:$0xf]
        %v573 = vld [vmem:[%s239 + $0x750] sm:$0xff]
        %v574 = vld [vmem:[%s239 + $0x758] sm:$0xff]
        %v575 = vld [vmem:[%s239 + $0x760] sm:$0xff]
        %v576 = vld [vmem:[%s239 + $0x768] sm:$0xff]
        %v577 = vld [vmem:[%s239 + $0x770] sm:$0xf]
        %v578 = vld [vmem:[%s239 + $0x774] sm:$0xff]
        %v579 = vld [vmem:[%s239 + $0x77c] sm:$0xff]
        %v580 = vld [vmem:[%s239 + $0x784] sm:$0xff]
        %v581 = vld [vmem:[%s239 + $0x78c] sm:$0xff]
        %v582 = vld [vmem:[%s239 + $0x794] sm:$0xf]
        %v583 = vld [vmem:[%s239 + $0x798] sm:$0xff]
        %v584 = vld [vmem:[%s239 + $0x7a0] sm:$0xff]
        %v585 = vld [vmem:[%s239 + $0x7a8] sm:$0xff]
        %v586 = vld [vmem:[%s239 + $0x7b0] sm:$0xff]
        %v587 = vld [vmem:[%s239 + $0x7b8] sm:$0xf]
        %v588 = vld [vmem:[%s239 + $0x7bc] sm:$0xff]
        %v589 = vld [vmem:[%s239 + $0x7c4] sm:$0xff]
        %v590 = vld [vmem:[%s239 + $0x7cc] sm:$0xff]
        %v591 = vld [vmem:[%s239 + $0x7d4] sm:$0xff]
        %v592 = vld [vmem:[%s239 + $0x7dc] sm:$0xf]
        %v593 = vld [vmem:[%s239 + $0x7e0] sm:$0xff]
        %v594 = vld [vmem:[%s239 + $0x7e8] sm:$0xff]
        %v595 = vld [vmem:[%s239 + $0x7f0] sm:$0xff]
        %v596 = vld [vmem:[%s239 + $0x7f8] sm:$0xff]
        %v597 = vld [vmem:[%s239 + $0x800] sm:$0xf]
        %v598 = vld [vmem:[%s239 + $0x804] sm:$0xff]
        %v599 = vld [vmem:[%s239 + $0x80c] sm:$0xff]
        %v600 = vld [vmem:[%s239 + $0x814] sm:$0xff]
        %v601 = vld [vmem:[%s239 + $0x81c] sm:$0xff]
        %v602 = vld [vmem:[%s239 + $0x824] sm:$0xf]
        %v603 = vld [vmem:[%s239 + $0x828] sm:$0xff]
        %v604 = vld [vmem:[%s239 + $0x830] sm:$0xff]
        %v605 = vld [vmem:[%s239 + $0x838] sm:$0xff]
        %v606 = vld [vmem:[%s239 + $0x840] sm:$0xff]
        %v607 = vld [vmem:[%s239 + $0x848] sm:$0xf]
        %v608 = vld [vmem:[%s239 + $0x84c] sm:$0xff]
        %v609 = vld [vmem:[%s239 + $0x854] sm:$0xff]
        %v610 = vld [vmem:[%s239 + $0x85c] sm:$0xff]
        %v611 = vld [vmem:[%s239 + $0x864] sm:$0xff]
        %v612 = vld [vmem:[%s239 + $0x86c] sm:$0xf]
        %v613 = vld [vmem:[%s239 + $0x870] sm:$0xff]
        %v614 = vld [vmem:[%s239 + $0x878] sm:$0xff]
        %v615 = vld [vmem:[%s239 + $0x880] sm:$0xff]
        %v616 = vld [vmem:[%s239 + $0x888] sm:$0xff]
        %v617 = vld [vmem:[%s239 + $0x890] sm:$0xf]
        %v618 = vld [vmem:[%s239 + $0x894] sm:$0xff]
        %v619 = vld [vmem:[%s239 + $0x89c] sm:$0xff]
        %v620 = vld [vmem:[%s239 + $0x8a4] sm:$0xff]
        %v621 = vld [vmem:[%s239 + $0x8ac] sm:$0xff]
        %v622 = vld [vmem:[%s239 + $0x8b4] sm:$0xf]
        %v623 = vld [vmem:[%s239 + $0x8b8] sm:$0xff]
        %v624 = vld [vmem:[%s239 + $0x8c0] sm:$0xff]
        %v625 = vld [vmem:[%s239 + $0x8c8] sm:$0xff]
        %v626 = vld [vmem:[%s239 + $0x8d0] sm:$0xff]
        %v627 = vld [vmem:[%s239 + $0x8d8] sm:$0xf]
        %v628 = vld [vmem:[%s239 + $0x8dc] sm:$0xff]
        %v629 = vld [vmem:[%s239 + $0x8e4] sm:$0xff]
        %v630 = vld [vmem:[%s239 + $0x8ec] sm:$0xff]
        %v631 = vld [vmem:[%s239 + $0x8f4] sm:$0xff]
        %v632 = vld [vmem:[%s239 + $0x8fc] sm:$0xf]
        %v697 = vunpack.c.l.b16 %v249
        %v698 = vunpack.c.h.b16 %v249
        %v699 = vunpack.c.l.b16 %v250
        %v700 = vunpack.c.h.b16 %v250
        %v701 = vunpack.c.l.b16 %v251
        %v702 = vunpack.c.h.b16 %v251
        %v703 = vunpack.c.l.b16 %v252
        %v704 = vunpack.c.h.b16 %v252
        %v705 = vunpack.c.l.b16 %v253
        %v706 = vunpack.c.h.b16 %v253
        %v707 = vunpack.c.l.b16 %v254
        %v708 = vunpack.c.h.b16 %v254
        %v709 = vunpack.c.l.b16 %v255
        %v710 = vunpack.c.h.b16 %v255
        %v711 = vunpack.c.l.b16 %v256
        %v712 = vunpack.c.h.b16 %v256
        %v713 = vunpack.c.l.b16 %v257
        %v714 = vunpack.c.h.b16 %v257
        %v715 = vunpack.c.l.b16 %v258
        %v716 = vunpack.c.h.b16 %v258
        %v717 = vunpack.c.l.b16 %v259
        %v718 = vunpack.c.h.b16 %v259
        %v719 = vunpack.c.l.b16 %v260
        %v720 = vunpack.c.h.b16 %v260
        %v721 = vunpack.c.l.b16 %v261
        %v722 = vunpack.c.h.b16 %v261
        %v723 = vunpack.c.l.b16 %v262
        %v724 = vunpack.c.h.b16 %v262
        %v725 = vunpack.c.l.b16 %v263
        %v726 = vunpack.c.h.b16 %v263
        %v727 = vunpack.c.l.b16 %v264
        %v728 = vunpack.c.h.b16 %v264
        %v729 = vunpack.c.l.b16 %v265
        %v730 = vunpack.c.h.b16 %v265
        %v731 = vunpack.c.l.b16 %v266
        %v732 = vunpack.c.h.b16 %v266
        %v733 = vunpack.c.l.b16 %v267
        %v734 = vunpack.c.h.b16 %v267
        %v735 = vunpack.c.l.b16 %v268
        %v736 = vunpack.c.h.b16 %v268
        %v737 = vunpack.c.l.b16 %v269
        %v738 = vunpack.c.h.b16 %v269
        %v739 = vunpack.c.l.b16 %v270
        %v740 = vunpack.c.h.b16 %v270
        %v741 = vunpack.c.l.b16 %v271
        %v742 = vunpack.c.h.b16 %v271
        %v743 = vunpack.c.l.b16 %v272
        %v744 = vunpack.c.h.b16 %v272
        %v745 = vunpack.c.l.b16 %v273
        %v746 = vunpack.c.h.b16 %v273
        %v747 = vunpack.c.l.b16 %v274
        %v748 = vunpack.c.h.b16 %v274
        %v749 = vunpack.c.l.b16 %v275
        %v750 = vunpack.c.h.b16 %v275
        %v751 = vunpack.c.l.b16 %v276
        %v752 = vunpack.c.h.b16 %v276
        %v753 = vunpack.c.l.b16 %v277
        %v754 = vunpack.c.h.b16 %v277
        %v755 = vunpack.c.l.b16 %v278
        %v756 = vunpack.c.h.b16 %v278
        %v757 = vunpack.c.l.b16 %v279
        %v758 = vunpack.c.h.b16 %v279
        %v759 = vunpack.c.l.b16 %v280
        %v760 = vunpack.c.h.b16 %v280
        %v761 = vunpack.c.l.b16 %v281
        %v762 = vunpack.c.h.b16 %v281
        %v763 = vunpack.c.l.b16 %v282
        %v764 = vunpack.c.h.b16 %v282
        %v765 = vunpack.c.l.b16 %v283
        %v766 = vunpack.c.h.b16 %v283
        %v767 = vunpack.c.l.b16 %v284
        %v768 = vunpack.c.h.b16 %v284
        %v769 = vunpack.c.l.b16 %v285
        %v770 = vunpack.c.h.b16 %v285
        %v771 = vunpack.c.l.b16 %v286
        %v772 = vunpack.c.h.b16 %v286
        %v773 = vunpack.c.l.b16 %v287
        %v774 = vunpack.c.h.b16 %v287
        %v775 = vunpack.c.l.b16 %v288
        %v776 = vunpack.c.h.b16 %v288
        %v777 = vunpack.c.l.b16 %v289
        %v778 = vunpack.c.h.b16 %v289
        %v779 = vunpack.c.l.b16 %v290
        %v780 = vunpack.c.h.b16 %v290
        %v781 = vunpack.c.l.b16 %v291
        %v782 = vunpack.c.h.b16 %v291
        %v783 = vunpack.c.l.b16 %v292
        %v784 = vunpack.c.h.b16 %v292
        %v785 = vunpack.c.l.b16 %v293
        %v786 = vunpack.c.h.b16 %v293
        %v787 = vunpack.c.l.b16 %v294
        %v788 = vunpack.c.h.b16 %v294
        %v789 = vunpack.c.l.b16 %v295
        %v790 = vunpack.c.h.b16 %v295
        %v791 = vunpack.c.l.b16 %v296
        %v792 = vunpack.c.h.b16 %v296
        %v793 = vunpack.c.l.b16 %v297
        %v794 = vunpack.c.h.b16 %v297
        %v795 = vunpack.c.l.b16 %v298
        %v796 = vunpack.c.h.b16 %v298
        %v797 = vunpack.c.l.b16 %v299
        %v798 = vunpack.c.h.b16 %v299
        %v799 = vunpack.c.l.b16 %v300
        %v800 = vunpack.c.h.b16 %v300
        %v801 = vunpack.c.l.b16 %v301
        %v802 = vunpack.c.h.b16 %v301
        %v803 = vunpack.c.l.b16 %v302
        %v804 = vunpack.c.h.b16 %v302
        %v805 = vunpack.c.l.b16 %v303
        %v806 = vunpack.c.h.b16 %v303
        %v807 = vunpack.c.l.b16 %v304
        %v808 = vunpack.c.h.b16 %v304
        %v809 = vunpack.c.l.b16 %v305
        %v810 = vunpack.c.h.b16 %v305
        %v811 = vunpack.c.l.b16 %v306
        %v812 = vunpack.c.h.b16 %v306
        %v813 = vunpack.c.l.b16 %v307
        %v814 = vunpack.c.h.b16 %v307
        %v815 = vunpack.c.l.b16 %v308
        %v816 = vunpack.c.h.b16 %v308
        %v817 = vunpack.c.l.b16 %v309
        %v818 = vunpack.c.h.b16 %v309
        %v819 = vunpack.c.l.b16 %v310
        %v820 = vunpack.c.h.b16 %v310
        %v821 = vunpack.c.l.b16 %v311
        %v822 = vunpack.c.h.b16 %v311
        %v823 = vunpack.c.l.b16 %v312
        %v824 = vunpack.c.h.b16 %v312
        %v825 = vpack.c.b16 %v701, %v697
        %v826 = vpack.c.b16 %v702, %v698
        %v827 = vpack.c.b16 %v703, %v699
        %v828 = vpack.c.b16 %v704, %v700
        %v829 = vpack.c.b16 %v709, %v705
        %v830 = vpack.c.b16 %v710, %v706
        %v831 = vpack.c.b16 %v711, %v707
        %v832 = vpack.c.b16 %v712, %v708
        %v833 = vpack.c.b16 %v717, %v713
        %v834 = vpack.c.b16 %v718, %v714
        %v835 = vpack.c.b16 %v719, %v715
        %v836 = vpack.c.b16 %v720, %v716
        %v837 = vpack.c.b16 %v725, %v721
        %v838 = vpack.c.b16 %v726, %v722
        %v839 = vpack.c.b16 %v727, %v723
        %v840 = vpack.c.b16 %v728, %v724
        %v841 = vpack.c.b16 %v733, %v729
        %v842 = vpack.c.b16 %v734, %v730
        %v843 = vpack.c.b16 %v735, %v731
        %v844 = vpack.c.b16 %v736, %v732
        %v845 = vpack.c.b16 %v741, %v737
        %v846 = vpack.c.b16 %v742, %v738
        %v847 = vpack.c.b16 %v743, %v739
        %v848 = vpack.c.b16 %v744, %v740
        %v849 = vpack.c.b16 %v749, %v745
        %v850 = vpack.c.b16 %v750, %v746
        %v851 = vpack.c.b16 %v751, %v747
        %v852 = vpack.c.b16 %v752, %v748
        %v853 = vpack.c.b16 %v757, %v753
        %v854 = vpack.c.b16 %v758, %v754
        %v855 = vpack.c.b16 %v759, %v755
        %v856 = vpack.c.b16 %v760, %v756
        %v857 = vpack.c.b16 %v765, %v761
        %v858 = vpack.c.b16 %v766, %v762
        %v859 = vpack.c.b16 %v767, %v763
        %v860 = vpack.c.b16 %v768, %v764
        %v861 = vpack.c.b16 %v773, %v769
        %v862 = vpack.c.b16 %v774, %v770
        %v863 = vpack.c.b16 %v775, %v771
        %v864 = vpack.c.b16 %v776, %v772
        %v865 = vpack.c.b16 %v781, %v777
        %v866 = vpack.c.b16 %v782, %v778
        %v867 = vpack.c.b16 %v783, %v779
        %v868 = vpack.c.b16 %v784, %v780
        %v869 = vpack.c.b16 %v789, %v785
        %v870 = vpack.c.b16 %v790, %v786
        %v871 = vpack.c.b16 %v791, %v787
        %v872 = vpack.c.b16 %v792, %v788
        %v873 = vpack.c.b16 %v797, %v793
        %v874 = vpack.c.b16 %v798, %v794
        %v875 = vpack.c.b16 %v799, %v795
        %v876 = vpack.c.b16 %v800, %v796
        %v877 = vpack.c.b16 %v805, %v801
        %v878 = vpack.c.b16 %v806, %v802
        %v879 = vpack.c.b16 %v807, %v803
        %v880 = vpack.c.b16 %v808, %v804
        %v881 = vpack.c.b16 %v813, %v809
        %v882 = vpack.c.b16 %v814, %v810
        %v883 = vpack.c.b16 %v815, %v811
        %v884 = vpack.c.b16 %v816, %v812
        %v885 = vpack.c.b16 %v821, %v817
        %v886 = vpack.c.b16 %v822, %v818
        %v887 = vpack.c.b16 %v823, %v819
        %v888 = vpack.c.b16 %v824, %v820
        %v1273 = vunpack.c.l.b16 %v313
        %v1274 = vunpack.c.h.b16 %v313
        %v1275 = vunpack.c.l.b16 %v314
        %v1276 = vunpack.c.h.b16 %v314
        %v1277 = vunpack.c.l.b16 %v315
        %v1278 = vunpack.c.h.b16 %v315
        %v1279 = vunpack.c.l.b16 %v316
        %v1280 = vunpack.c.h.b16 %v316
        %v1281 = vunpack.c.l.b16 %v317
        %v1282 = vunpack.c.l.b16 %v318
        %v1283 = vunpack.c.h.b16 %v318
        %v1284 = vunpack.c.l.b16 %v319
        %v1285 = vunpack.c.h.b16 %v319
        %v1286 = vunpack.c.l.b16 %v320
        %v1287 = vunpack.c.h.b16 %v320
        %v1288 = vunpack.c.l.b16 %v321
        %v1289 = vunpack.c.h.b16 %v321
        %v1290 = vunpack.c.l.b16 %v322
        %v1291 = vunpack.c.l.b16 %v323
        %v1292 = vunpack.c.h.b16 %v323
        %v1293 = vunpack.c.l.b16 %v324
        %v1294 = vunpack.c.h.b16 %v324
        %v1295 = vunpack.c.l.b16 %v325
        %v1296 = vunpack.c.h.b16 %v325
        %v1297 = vunpack.c.l.b16 %v326
        %v1298 = vunpack.c.h.b16 %v326
        %v1299 = vunpack.c.l.b16 %v327
        %v1300 = vunpack.c.l.b16 %v328
        %v1301 = vunpack.c.h.b16 %v328
        %v1302 = vunpack.c.l.b16 %v329
        %v1303 = vunpack.c.h.b16 %v329
        %v1304 = vunpack.c.l.b16 %v330
        %v1305 = vunpack.c.h.b16 %v330
        %v1306 = vunpack.c.l.b16 %v331
        %v1307 = vunpack.c.h.b16 %v331
        %v1308 = vunpack.c.l.b16 %v332
        %v1309 = vunpack.c.l.b16 %v333
        %v1310 = vunpack.c.h.b16 %v333
        %v1311 = vunpack.c.l.b16 %v334
        %v1312 = vunpack.c.h.b16 %v334
        %v1313 = vunpack.c.l.b16 %v335
        %v1314 = vunpack.c.h.b16 %v335
        %v1315 = vunpack.c.l.b16 %v336
        %v1316 = vunpack.c.h.b16 %v336
        %v1317 = vunpack.c.l.b16 %v337
        %v1318 = vunpack.c.l.b16 %v338
        %v1319 = vunpack.c.h.b16 %v338
        %v1320 = vunpack.c.l.b16 %v339
        %v1321 = vunpack.c.h.b16 %v339
        %v1322 = vunpack.c.l.b16 %v340
        %v1323 = vunpack.c.h.b16 %v340
        %v1324 = vunpack.c.l.b16 %v341
        %v1325 = vunpack.c.h.b16 %v341
        %v1326 = vunpack.c.l.b16 %v342
        %v1327 = vunpack.c.l.b16 %v343
        %v1328 = vunpack.c.h.b16 %v343
        %v1329 = vunpack.c.l.b16 %v344
        %v1330 = vunpack.c.h.b16 %v344
        %v1331 = vunpack.c.l.b16 %v345
        %v1332 = vunpack.c.h.b16 %v345
        %v1333 = vunpack.c.l.b16 %v346
        %v1334 = vunpack.c.h.b16 %v346
        %v1335 = vunpack.c.l.b16 %v347
        %v1336 = vunpack.c.l.b16 %v348
        %v1337 = vunpack.c.h.b16 %v348
        %v1338 = vunpack.c.l.b16 %v349
        %v1339 = vunpack.c.h.b16 %v349
        %v1340 = vunpack.c.l.b16 %v350
        %v1341 = vunpack.c.h.b16 %v350
        %v1342 = vunpack.c.l.b16 %v351
        %v1343 = vunpack.c.h.b16 %v351
        %v1344 = vunpack.c.l.b16 %v352
        %v1345 = vunpack.c.l.b16 %v353
        %v1346 = vunpack.c.h.b16 %v353
        %v1347 = vunpack.c.l.b16 %v354
        %v1348 = vunpack.c.h.b16 %v354
        %v1349 = vunpack.c.l.b16 %v355
        %v1350 = vunpack.c.h.b16 %v355
        %v1351 = vunpack.c.l.b16 %v356
        %v1352 = vunpack.c.h.b16 %v356
        %v1353 = vunpack.c.l.b16 %v357
        %v1354 = vunpack.c.l.b16 %v358
        %v1355 = vunpack.c.h.b16 %v358
        %v1356 = vunpack.c.l.b16 %v359
        %v1357 = vunpack.c.h.b16 %v359
        %v1358 = vunpack.c.l.b16 %v360
        %v1359 = vunpack.c.h.b16 %v360
        %v1360 = vunpack.c.l.b16 %v361
        %v1361 = vunpack.c.h.b16 %v361
        %v1362 = vunpack.c.l.b16 %v362
        %v1363 = vunpack.c.l.b16 %v363
        %v1364 = vunpack.c.h.b16 %v363
        %v1365 = vunpack.c.l.b16 %v364
        %v1366 = vunpack.c.h.b16 %v364
        %v1367 = vunpack.c.l.b16 %v365
        %v1368 = vunpack.c.h.b16 %v365
        %v1369 = vunpack.c.l.b16 %v366
        %v1370 = vunpack.c.h.b16 %v366
        %v1371 = vunpack.c.l.b16 %v367
        %v1372 = vunpack.c.l.b16 %v368
        %v1373 = vunpack.c.h.b16 %v368
        %v1374 = vunpack.c.l.b16 %v369
        %v1375 = vunpack.c.h.b16 %v369
        %v1376 = vunpack.c.l.b16 %v370
        %v1377 = vunpack.c.h.b16 %v370
        %v1378 = vunpack.c.l.b16 %v371
        %v1379 = vunpack.c.h.b16 %v371
        %v1380 = vunpack.c.l.b16 %v372
        %v1381 = vunpack.c.l.b16 %v373
        %v1382 = vunpack.c.h.b16 %v373
        %v1383 = vunpack.c.l.b16 %v374
        %v1384 = vunpack.c.h.b16 %v374
        %v1385 = vunpack.c.l.b16 %v375
        %v1386 = vunpack.c.h.b16 %v375
        %v1387 = vunpack.c.l.b16 %v376
        %v1388 = vunpack.c.h.b16 %v376
        %v1389 = vunpack.c.l.b16 %v377
        %v1390 = vunpack.c.l.b16 %v378
        %v1391 = vunpack.c.h.b16 %v378
        %v1392 = vunpack.c.l.b16 %v379
        %v1393 = vunpack.c.h.b16 %v379
        %v1394 = vunpack.c.l.b16 %v380
        %v1395 = vunpack.c.h.b16 %v380
        %v1396 = vunpack.c.l.b16 %v381
        %v1397 = vunpack.c.h.b16 %v381
        %v1398 = vunpack.c.l.b16 %v382
        %v1399 = vunpack.c.l.b16 %v383
        %v1400 = vunpack.c.h.b16 %v383
        %v1401 = vunpack.c.l.b16 %v384
        %v1402 = vunpack.c.h.b16 %v384
        %v1403 = vunpack.c.l.b16 %v385
        %v1404 = vunpack.c.h.b16 %v385
        %v1405 = vunpack.c.l.b16 %v386
        %v1406 = vunpack.c.h.b16 %v386
        %v1407 = vunpack.c.l.b16 %v387
        %v1408 = vunpack.c.l.b16 %v388
        %v1409 = vunpack.c.h.b16 %v388
        %v1410 = vunpack.c.l.b16 %v389
        %v1411 = vunpack.c.h.b16 %v389
        %v1412 = vunpack.c.l.b16 %v390
        %v1413 = vunpack.c.h.b16 %v390
        %v1414 = vunpack.c.l.b16 %v391
        %v1415 = vunpack.c.h.b16 %v391
        %v1416 = vunpack.c.l.b16 %v392
        %v1417 = vunpack.c.l.b16 %v393
        %v1418 = vunpack.c.h.b16 %v393
        %v1419 = vunpack.c.l.b16 %v394
        %v1420 = vunpack.c.h.b16 %v394
        %v1421 = vunpack.c.l.b16 %v395
        %v1422 = vunpack.c.h.b16 %v395
        %v1423 = vunpack.c.l.b16 %v396
        %v1424 = vunpack.c.h.b16 %v396
        %v1425 = vunpack.c.l.b16 %v397
        %v1426 = vunpack.c.l.b16 %v398
        %v1427 = vunpack.c.h.b16 %v398
        %v1428 = vunpack.c.l.b16 %v399
        %v1429 = vunpack.c.h.b16 %v399
        %v1430 = vunpack.c.l.b16 %v400
        %v1431 = vunpack.c.h.b16 %v400
        %v1432 = vunpack.c.l.b16 %v401
        %v1433 = vunpack.c.h.b16 %v401
        %v1434 = vunpack.c.l.b16 %v402
        %v1435 = vunpack.c.l.b16 %v403
        %v1436 = vunpack.c.h.b16 %v403
        %v1437 = vunpack.c.l.b16 %v404
        %v1438 = vunpack.c.h.b16 %v404
        %v1439 = vunpack.c.l.b16 %v405
        %v1440 = vunpack.c.h.b16 %v405
        %v1441 = vunpack.c.l.b16 %v406
        %v1442 = vunpack.c.h.b16 %v406
        %v1443 = vunpack.c.l.b16 %v407
        %v1444 = vunpack.c.l.b16 %v408
        %v1445 = vunpack.c.h.b16 %v408
        %v1446 = vunpack.c.l.b16 %v409
        %v1447 = vunpack.c.h.b16 %v409
        %v1448 = vunpack.c.l.b16 %v410
        %v1449 = vunpack.c.h.b16 %v410
        %v1450 = vunpack.c.l.b16 %v411
        %v1451 = vunpack.c.h.b16 %v411
        %v1452 = vunpack.c.l.b16 %v412
        %v1453 = vunpack.c.l.b16 %v413
        %v1454 = vunpack.c.h.b16 %v413
        %v1455 = vunpack.c.l.b16 %v414
        %v1456 = vunpack.c.h.b16 %v414
        %v1457 = vunpack.c.l.b16 %v415
        %v1458 = vunpack.c.h.b16 %v415
        %v1459 = vunpack.c.l.b16 %v416
        %v1460 = vunpack.c.h.b16 %v416
        %v1461 = vunpack.c.l.b16 %v417
        %v1462 = vunpack.c.l.b16 %v418
        %v1463 = vunpack.c.h.b16 %v418
        %v1464 = vunpack.c.l.b16 %v419
        %v1465 = vunpack.c.h.b16 %v419
        %v1466 = vunpack.c.l.b16 %v420
        %v1467 = vunpack.c.h.b16 %v420
        %v1468 = vunpack.c.l.b16 %v421
        %v1469 = vunpack.c.h.b16 %v421
        %v1470 = vunpack.c.l.b16 %v422
        %v1471 = vunpack.c.l.b16 %v423
        %v1472 = vunpack.c.h.b16 %v423
        %v1473 = vunpack.c.l.b16 %v424
        %v1474 = vunpack.c.h.b16 %v424
        %v1475 = vunpack.c.l.b16 %v425
        %v1476 = vunpack.c.h.b16 %v425
        %v1477 = vunpack.c.l.b16 %v426
        %v1478 = vunpack.c.h.b16 %v426
        %v1479 = vunpack.c.l.b16 %v427
        %v1480 = vunpack.c.l.b16 %v428
        %v1481 = vunpack.c.h.b16 %v428
        %v1482 = vunpack.c.l.b16 %v429
        %v1483 = vunpack.c.h.b16 %v429
        %v1484 = vunpack.c.l.b16 %v430
        %v1485 = vunpack.c.h.b16 %v430
        %v1486 = vunpack.c.l.b16 %v431
        %v1487 = vunpack.c.h.b16 %v431
        %v1488 = vunpack.c.l.b16 %v432
        %v1489 = vunpack.c.l.b16 %v433
        %v1490 = vunpack.c.h.b16 %v433
        %v1491 = vunpack.c.l.b16 %v434
        %v1492 = vunpack.c.h.b16 %v434
        %v1493 = vunpack.c.l.b16 %v435
        %v1494 = vunpack.c.h.b16 %v435
        %v1495 = vunpack.c.l.b16 %v436
        %v1496 = vunpack.c.h.b16 %v436
        %v1497 = vunpack.c.l.b16 %v437
        %v1498 = vunpack.c.l.b16 %v438
        %v1499 = vunpack.c.h.b16 %v438
        %v1500 = vunpack.c.l.b16 %v439
        %v1501 = vunpack.c.h.b16 %v439
        %v1502 = vunpack.c.l.b16 %v440
        %v1503 = vunpack.c.h.b16 %v440
        %v1504 = vunpack.c.l.b16 %v441
        %v1505 = vunpack.c.h.b16 %v441
        %v1506 = vunpack.c.l.b16 %v442
        %v1507 = vunpack.c.l.b16 %v443
        %v1508 = vunpack.c.h.b16 %v443
        %v1509 = vunpack.c.l.b16 %v444
        %v1510 = vunpack.c.h.b16 %v444
        %v1511 = vunpack.c.l.b16 %v445
        %v1512 = vunpack.c.h.b16 %v445
        %v1513 = vunpack.c.l.b16 %v446
        %v1514 = vunpack.c.h.b16 %v446
        %v1515 = vunpack.c.l.b16 %v447
        %v1516 = vunpack.c.l.b16 %v448
        %v1517 = vunpack.c.h.b16 %v448
        %v1518 = vunpack.c.l.b16 %v449
        %v1519 = vunpack.c.h.b16 %v449
        %v1520 = vunpack.c.l.b16 %v450
        %v1521 = vunpack.c.h.b16 %v450
        %v1522 = vunpack.c.l.b16 %v451
        %v1523 = vunpack.c.h.b16 %v451
        %v1524 = vunpack.c.l.b16 %v452
        %v1525 = vunpack.c.l.b16 %v453
        %v1526 = vunpack.c.h.b16 %v453
        %v1527 = vunpack.c.l.b16 %v454
        %v1528 = vunpack.c.h.b16 %v454
        %v1529 = vunpack.c.l.b16 %v455
        %v1530 = vunpack.c.h.b16 %v455
        %v1531 = vunpack.c.l.b16 %v456
        %v1532 = vunpack.c.h.b16 %v456
        %v1533 = vunpack.c.l.b16 %v457
        %v1534 = vunpack.c.l.b16 %v458
        %v1535 = vunpack.c.h.b16 %v458
        %v1536 = vunpack.c.l.b16 %v459
        %v1537 = vunpack.c.h.b16 %v459
        %v1538 = vunpack.c.l.b16 %v460
        %v1539 = vunpack.c.h.b16 %v460
        %v1540 = vunpack.c.l.b16 %v461
        %v1541 = vunpack.c.h.b16 %v461
        %v1542 = vunpack.c.l.b16 %v462
        %v1543 = vunpack.c.l.b16 %v463
        %v1544 = vunpack.c.h.b16 %v463
        %v1545 = vunpack.c.l.b16 %v464
        %v1546 = vunpack.c.h.b16 %v464
        %v1547 = vunpack.c.l.b16 %v465
        %v1548 = vunpack.c.h.b16 %v465
        %v1549 = vunpack.c.l.b16 %v466
        %v1550 = vunpack.c.h.b16 %v466
        %v1551 = vunpack.c.l.b16 %v467
        %v1552 = vunpack.c.l.b16 %v468
        %v1553 = vunpack.c.h.b16 %v468
        %v1554 = vunpack.c.l.b16 %v469
        %v1555 = vunpack.c.h.b16 %v469
        %v1556 = vunpack.c.l.b16 %v470
        %v1557 = vunpack.c.h.b16 %v470
        %v1558 = vunpack.c.l.b16 %v471
        %v1559 = vunpack.c.h.b16 %v471
        %v1560 = vunpack.c.l.b16 %v472
        %v1561 = vunpack.c.l.b16 %v473
        %v1562 = vunpack.c.h.b16 %v473
        %v1563 = vunpack.c.l.b16 %v474
        %v1564 = vunpack.c.h.b16 %v474
        %v1565 = vunpack.c.l.b16 %v475
        %v1566 = vunpack.c.h.b16 %v475
        %v1567 = vunpack.c.l.b16 %v476
        %v1568 = vunpack.c.h.b16 %v476
        %v1569 = vunpack.c.l.b16 %v477
        %v1570 = vunpack.c.l.b16 %v478
        %v1571 = vunpack.c.h.b16 %v478
        %v1572 = vunpack.c.l.b16 %v479
        %v1573 = vunpack.c.h.b16 %v479
        %v1574 = vunpack.c.l.b16 %v480
        %v1575 = vunpack.c.h.b16 %v480
        %v1576 = vunpack.c.l.b16 %v481
        %v1577 = vunpack.c.h.b16 %v481
        %v1578 = vunpack.c.l.b16 %v482
        %v1579 = vunpack.c.l.b16 %v483
        %v1580 = vunpack.c.h.b16 %v483
        %v1581 = vunpack.c.l.b16 %v484
        %v1582 = vunpack.c.h.b16 %v484
        %v1583 = vunpack.c.l.b16 %v485
        %v1584 = vunpack.c.h.b16 %v485
        %v1585 = vunpack.c.l.b16 %v486
        %v1586 = vunpack.c.h.b16 %v486
        %v1587 = vunpack.c.l.b16 %v487
        %v1588 = vunpack.c.l.b16 %v488
        %v1589 = vunpack.c.h.b16 %v488
        %v1590 = vunpack.c.l.b16 %v489
        %v1591 = vunpack.c.h.b16 %v489
        %v1592 = vunpack.c.l.b16 %v490
        %v1593 = vunpack.c.h.b16 %v490
        %v1594 = vunpack.c.l.b16 %v491
        %v1595 = vunpack.c.h.b16 %v491
        %v1596 = vunpack.c.l.b16 %v492
        %v1597 = vunpack.c.l.b16 %v493
        %v1598 = vunpack.c.h.b16 %v493
        %v1599 = vunpack.c.l.b16 %v494
        %v1600 = vunpack.c.h.b16 %v494
        %v1601 = vunpack.c.l.b16 %v495
        %v1602 = vunpack.c.h.b16 %v495
        %v1603 = vunpack.c.l.b16 %v496
        %v1604 = vunpack.c.h.b16 %v496
        %v1605 = vunpack.c.l.b16 %v497
        %v1606 = vunpack.c.l.b16 %v498
        %v1607 = vunpack.c.h.b16 %v498
        %v1608 = vunpack.c.l.b16 %v499
        %v1609 = vunpack.c.h.b16 %v499
        %v1610 = vunpack.c.l.b16 %v500
        %v1611 = vunpack.c.h.b16 %v500
        %v1612 = vunpack.c.l.b16 %v501
        %v1613 = vunpack.c.h.b16 %v501
        %v1614 = vunpack.c.l.b16 %v502
        %v1615 = vunpack.c.l.b16 %v503
        %v1616 = vunpack.c.h.b16 %v503
        %v1617 = vunpack.c.l.b16 %v504
        %v1618 = vunpack.c.h.b16 %v504
        %v1619 = vunpack.c.l.b16 %v505
        %v1620 = vunpack.c.h.b16 %v505
        %v1621 = vunpack.c.l.b16 %v506
        %v1622 = vunpack.c.h.b16 %v506
        %v1623 = vunpack.c.l.b16 %v507
        %v1624 = vunpack.c.l.b16 %v508
        %v1625 = vunpack.c.h.b16 %v508
        %v1626 = vunpack.c.l.b16 %v509
        %v1627 = vunpack.c.h.b16 %v509
        %v1628 = vunpack.c.l.b16 %v510
        %v1629 = vunpack.c.h.b16 %v510
        %v1630 = vunpack.c.l.b16 %v511
        %v1631 = vunpack.c.h.b16 %v511
        %v1632 = vunpack.c.l.b16 %v512
        %v1633 = vunpack.c.l.b16 %v513
        %v1634 = vunpack.c.h.b16 %v513
        %v1635 = vunpack.c.l.b16 %v514
        %v1636 = vunpack.c.h.b16 %v514
        %v1637 = vunpack.c.l.b16 %v515
        %v1638 = vunpack.c.h.b16 %v515
        %v1639 = vunpack.c.l.b16 %v516
        %v1640 = vunpack.c.h.b16 %v516
        %v1641 = vunpack.c.l.b16 %v517
        %v1642 = vunpack.c.l.b16 %v518
        %v1643 = vunpack.c.h.b16 %v518
        %v1644 = vunpack.c.l.b16 %v519
        %v1645 = vunpack.c.h.b16 %v519
        %v1646 = vunpack.c.l.b16 %v520
        %v1647 = vunpack.c.h.b16 %v520
        %v1648 = vunpack.c.l.b16 %v521
        %v1649 = vunpack.c.h.b16 %v521
        %v1650 = vunpack.c.l.b16 %v522
        %v1651 = vunpack.c.l.b16 %v523
        %v1652 = vunpack.c.h.b16 %v523
        %v1653 = vunpack.c.l.b16 %v524
        %v1654 = vunpack.c.h.b16 %v524
        %v1655 = vunpack.c.l.b16 %v525
        %v1656 = vunpack.c.h.b16 %v525
        %v1657 = vunpack.c.l.b16 %v526
        %v1658 = vunpack.c.h.b16 %v526
        %v1659 = vunpack.c.l.b16 %v527
        %v1660 = vunpack.c.l.b16 %v528
        %v1661 = vunpack.c.h.b16 %v528
        %v1662 = vunpack.c.l.b16 %v529
        %v1663 = vunpack.c.h.b16 %v529
        %v1664 = vunpack.c.l.b16 %v530
        %v1665 = vunpack.c.h.b16 %v530
        %v1666 = vunpack.c.l.b16 %v531
        %v1667 = vunpack.c.h.b16 %v531
        %v1668 = vunpack.c.l.b16 %v532
        %v1669 = vunpack.c.l.b16 %v533
        %v1670 = vunpack.c.h.b16 %v533
        %v1671 = vunpack.c.l.b16 %v534
        %v1672 = vunpack.c.h.b16 %v534
        %v1673 = vunpack.c.l.b16 %v535
        %v1674 = vunpack.c.h.b16 %v535
        %v1675 = vunpack.c.l.b16 %v536
        %v1676 = vunpack.c.h.b16 %v536
        %v1677 = vunpack.c.l.b16 %v537
        %v1678 = vunpack.c.l.b16 %v538
        %v1679 = vunpack.c.h.b16 %v538
        %v1680 = vunpack.c.l.b16 %v539
        %v1681 = vunpack.c.h.b16 %v539
        %v1682 = vunpack.c.l.b16 %v540
        %v1683 = vunpack.c.h.b16 %v540
        %v1684 = vunpack.c.l.b16 %v541
        %v1685 = vunpack.c.h.b16 %v541
        %v1686 = vunpack.c.l.b16 %v542
        %v1687 = vunpack.c.l.b16 %v543
        %v1688 = vunpack.c.h.b16 %v543
        %v1689 = vunpack.c.l.b16 %v544
        %v1690 = vunpack.c.h.b16 %v544
        %v1691 = vunpack.c.l.b16 %v545
        %v1692 = vunpack.c.h.b16 %v545
        %v1693 = vunpack.c.l.b16 %v546
        %v1694 = vunpack.c.h.b16 %v546
        %v1695 = vunpack.c.l.b16 %v547
        %v1696 = vunpack.c.l.b16 %v548
        %v1697 = vunpack.c.h.b16 %v548
        %v1698 = vunpack.c.l.b16 %v549
        %v1699 = vunpack.c.h.b16 %v549
        %v1700 = vunpack.c.l.b16 %v550
        %v1701 = vunpack.c.h.b16 %v550
        %v1702 = vunpack.c.l.b16 %v551
        %v1703 = vunpack.c.h.b16 %v551
        %v1704 = vunpack.c.l.b16 %v552
        %v1705 = vunpack.c.l.b16 %v553
        %v1706 = vunpack.c.h.b16 %v553
        %v1707 = vunpack.c.l.b16 %v554
        %v1708 = vunpack.c.h.b16 %v554
        %v1709 = vunpack.c.l.b16 %v555
        %v1710 = vunpack.c.h.b16 %v555
        %v1711 = vunpack.c.l.b16 %v556
        %v1712 = vunpack.c.h.b16 %v556
        %v1713 = vunpack.c.l.b16 %v557
        %v1714 = vunpack.c.l.b16 %v558
        %v1715 = vunpack.c.h.b16 %v558
        %v1716 = vunpack.c.l.b16 %v559
        %v1717 = vunpack.c.h.b16 %v559
        %v1718 = vunpack.c.l.b16 %v560
        %v1719 = vunpack.c.h.b16 %v560
        %v1720 = vunpack.c.l.b16 %v561
        %v1721 = vunpack.c.h.b16 %v561
        %v1722 = vunpack.c.l.b16 %v562
        %v1723 = vunpack.c.l.b16 %v563
        %v1724 = vunpack.c.h.b16 %v563
        %v1725 = vunpack.c.l.b16 %v564
        %v1726 = vunpack.c.h.b16 %v564
        %v1727 = vunpack.c.l.b16 %v565
        %v1728 = vunpack.c.h.b16 %v565
        %v1729 = vunpack.c.l.b16 %v566
        %v1730 = vunpack.c.h.b16 %v566
        %v1731 = vunpack.c.l.b16 %v567
        %v1732 = vunpack.c.l.b16 %v568
        %v1733 = vunpack.c.h.b16 %v568
        %v1734 = vunpack.c.l.b16 %v569
        %v1735 = vunpack.c.h.b16 %v569
        %v1736 = vunpack.c.l.b16 %v570
        %v1737 = vunpack.c.h.b16 %v570
        %v1738 = vunpack.c.l.b16 %v571
        %v1739 = vunpack.c.h.b16 %v571
        %v1740 = vunpack.c.l.b16 %v572
        %v1741 = vunpack.c.l.b16 %v573
        %v1742 = vunpack.c.h.b16 %v573
        %v1743 = vunpack.c.l.b16 %v574
        %v1744 = vunpack.c.h.b16 %v574
        %v1745 = vunpack.c.l.b16 %v575
        %v1746 = vunpack.c.h.b16 %v575
        %v1747 = vunpack.c.l.b16 %v576
        %v1748 = vunpack.c.h.b16 %v576
        %v1749 = vunpack.c.l.b16 %v577
        %v1750 = vunpack.c.l.b16 %v578
        %v1751 = vunpack.c.h.b16 %v578
        %v1752 = vunpack.c.l.b16 %v579
        %v1753 = vunpack.c.h.b16 %v579
        %v1754 = vunpack.c.l.b16 %v580
        %v1755 = vunpack.c.h.b16 %v580
        %v1756 = vunpack.c.l.b16 %v581
        %v1757 = vunpack.c.h.b16 %v581
        %v1758 = vunpack.c.l.b16 %v582
        %v1759 = vunpack.c.l.b16 %v583
        %v1760 = vunpack.c.h.b16 %v583
        %v1761 = vunpack.c.l.b16 %v584
        %v1762 = vunpack.c.h.b16 %v584
        %v1763 = vunpack.c.l.b16 %v585
        %v1764 = vunpack.c.h.b16 %v585
        %v1765 = vunpack.c.l.b16 %v586
        %v1766 = vunpack.c.h.b16 %v586
        %v1767 = vunpack.c.l.b16 %v587
        %v1768 = vunpack.c.l.b16 %v588
        %v1769 = vunpack.c.h.b16 %v588
        %v1770 = vunpack.c.l.b16 %v589
        %v1771 = vunpack.c.h.b16 %v589
        %v1772 = vunpack.c.l.b16 %v590
        %v1773 = vunpack.c.h.b16 %v590
        %v1774 = vunpack.c.l.b16 %v591
        %v1775 = vunpack.c.h.b16 %v591
        %v1776 = vunpack.c.l.b16 %v592
        %v1777 = vunpack.c.l.b16 %v593
        %v1778 = vunpack.c.h.b16 %v593
        %v1779 = vunpack.c.l.b16 %v594
        %v1780 = vunpack.c.h.b16 %v594
        %v1781 = vunpack.c.l.b16 %v595
        %v1782 = vunpack.c.h.b16 %v595
        %v1783 = vunpack.c.l.b16 %v596
        %v1784 = vunpack.c.h.b16 %v596
        %v1785 = vunpack.c.l.b16 %v597
        %v1786 = vunpack.c.l.b16 %v598
        %v1787 = vunpack.c.h.b16 %v598
        %v1788 = vunpack.c.l.b16 %v599
        %v1789 = vunpack.c.h.b16 %v599
        %v1790 = vunpack.c.l.b16 %v600
        %v1791 = vunpack.c.h.b16 %v600
        %v1792 = vunpack.c.l.b16 %v601
        %v1793 = vunpack.c.h.b16 %v601
        %v1794 = vunpack.c.l.b16 %v602
        %v1795 = vunpack.c.l.b16 %v603
        %v1796 = vunpack.c.h.b16 %v603
        %v1797 = vunpack.c.l.b16 %v604
        %v1798 = vunpack.c.h.b16 %v604
        %v1799 = vunpack.c.l.b16 %v605
        %v1800 = vunpack.c.h.b16 %v605
        %v1801 = vunpack.c.l.b16 %v606
        %v1802 = vunpack.c.h.b16 %v606
        %v1803 = vunpack.c.l.b16 %v607
        %v1804 = vunpack.c.l.b16 %v608
        %v1805 = vunpack.c.h.b16 %v608
        %v1806 = vunpack.c.l.b16 %v609
        %v1807 = vunpack.c.h.b16 %v609
        %v1808 = vunpack.c.l.b16 %v610
        %v1809 = vunpack.c.h.b16 %v610
        %v1810 = vunpack.c.l.b16 %v611
        %v1811 = vunpack.c.h.b16 %v611
        %v1812 = vunpack.c.l.b16 %v612
        %v1813 = vunpack.c.l.b16 %v613
        %v1814 = vunpack.c.h.b16 %v613
        %v1815 = vunpack.c.l.b16 %v614
        %v1816 = vunpack.c.h.b16 %v614
        %v1817 = vunpack.c.l.b16 %v615
        %v1818 = vunpack.c.h.b16 %v615
        %v1819 = vunpack.c.l.b16 %v616
        %v1820 = vunpack.c.h.b16 %v616
        %v1821 = vunpack.c.l.b16 %v617
        %v1822 = vunpack.c.l.b16 %v618
        %v1823 = vunpack.c.h.b16 %v618
        %v1824 = vunpack.c.l.b16 %v619
        %v1825 = vunpack.c.h.b16 %v619
        %v1826 = vunpack.c.l.b16 %v620
        %v1827 = vunpack.c.h.b16 %v620
        %v1828 = vunpack.c.l.b16 %v621
        %v1829 = vunpack.c.h.b16 %v621
        %v1830 = vunpack.c.l.b16 %v622
        %v1831 = vunpack.c.l.b16 %v623
        %v1832 = vunpack.c.h.b16 %v623
        %v1833 = vunpack.c.l.b16 %v624
        %v1834 = vunpack.c.h.b16 %v624
        %v1835 = vunpack.c.l.b16 %v625
        %v1836 = vunpack.c.h.b16 %v625
        %v1837 = vunpack.c.l.b16 %v626
        %v1838 = vunpack.c.h.b16 %v626
        %v1839 = vunpack.c.l.b16 %v627
        %v1840 = vunpack.c.l.b16 %v628
        %v1841 = vunpack.c.h.b16 %v628
        %v1842 = vunpack.c.l.b16 %v629
        %v1843 = vunpack.c.h.b16 %v629
        %v1844 = vunpack.c.l.b16 %v630
        %v1845 = vunpack.c.h.b16 %v630
        %v1846 = vunpack.c.l.b16 %v631
        %v1847 = vunpack.c.h.b16 %v631
        %v1848 = vunpack.c.l.b16 %v632
        %v1849 = vpack.c.b16 %v1282, %v1273
        %v1850 = vpack.c.b16 %v1283, %v1274
        %v1851 = vpack.c.b16 %v1284, %v1275
        %v1852 = vpack.c.b16 %v1285, %v1276
        %v1853 = vpack.c.b16 %v1286, %v1277
        %v1854 = vpack.c.b16 %v1287, %v1278
        %v1855 = vpack.c.b16 %v1288, %v1279
        %v1856 = vpack.c.b16 %v1289, %v1280
        %v1857 = vpack.c.b16 %v1290, %v1281
        %v1858 = vpack.c.b16 %v1300, %v1291
        %v1859 = vpack.c.b16 %v1301, %v1292
        %v1860 = vpack.c.b16 %v1302, %v1293
        %v1861 = vpack.c.b16 %v1303, %v1294
        %v1862 = vpack.c.b16 %v1304, %v1295
        %v1863 = vpack.c.b16 %v1305, %v1296
        %v1864 = vpack.c.b16 %v1306, %v1297
        %v1865 = vpack.c.b16 %v1307, %v1298
        %v1866 = vpack.c.b16 %v1308, %v1299
        %v1867 = vpack.c.b16 %v1318, %v1309
        %v1868 = vpack.c.b16 %v1319, %v1310
        %v1869 = vpack.c.b16 %v1320, %v1311
        %v1870 = vpack.c.b16 %v1321, %v1312
        %v1871 = vpack.c.b16 %v1322, %v1313
        %v1872 = vpack.c.b16 %v1323, %v1314
        %v1873 = vpack.c.b16 %v1324, %v1315
        %v1874 = vpack.c.b16 %v1325, %v1316
        %v1875 = vpack.c.b16 %v1326, %v1317
        %v1876 = vpack.c.b16 %v1336, %v1327
        %v1877 = vpack.c.b16 %v1337, %v1328
        %v1878 = vpack.c.b16 %v1338, %v1329
        %v1879 = vpack.c.b16 %v1339, %v1330
        %v1880 = vpack.c.b16 %v1340, %v1331
        %v1881 = vpack.c.b16 %v1341, %v1332
        %v1882 = vpack.c.b16 %v1342, %v1333
        %v1883 = vpack.c.b16 %v1343, %v1334
        %v1884 = vpack.c.b16 %v1344, %v1335
        %v1885 = vpack.c.b16 %v1354, %v1345
        %v1886 = vpack.c.b16 %v1355, %v1346
        %v1887 = vpack.c.b16 %v1356, %v1347
        %v1888 = vpack.c.b16 %v1357, %v1348
        %v1889 = vpack.c.b16 %v1358, %v1349
        %v1890 = vpack.c.b16 %v1359, %v1350
        %v1891 = vpack.c.b16 %v1360, %v1351
        %v1892 = vpack.c.b16 %v1361, %v1352
        %v1893 = vpack.c.b16 %v1362, %v1353
        %v1894 = vpack.c.b16 %v1372, %v1363
        %v1895 = vpack.c.b16 %v1373, %v1364
        %v1896 = vpack.c.b16 %v1374, %v1365
        %v1897 = vpack.c.b16 %v1375, %v1366
        %v1898 = vpack.c.b16 %v1376, %v1367
        %v1899 = vpack.c.b16 %v1377, %v1368
        %v1900 = vpack.c.b16 %v1378, %v1369
        %v1901 = vpack.c.b16 %v1379, %v1370
        %v1902 = vpack.c.b16 %v1380, %v1371
        %v1903 = vpack.c.b16 %v1390, %v1381
        %v1904 = vpack.c.b16 %v1391, %v1382
        %v1905 = vpack.c.b16 %v1392, %v1383
        %v1906 = vpack.c.b16 %v1393, %v1384
        %v1907 = vpack.c.b16 %v1394, %v1385
        %v1908 = vpack.c.b16 %v1395, %v1386
        %v1909 = vpack.c.b16 %v1396, %v1387
        %v1910 = vpack.c.b16 %v1397, %v1388
        %v1911 = vpack.c.b16 %v1398, %v1389
        %v1912 = vpack.c.b16 %v1408, %v1399
        %v1913 = vpack.c.b16 %v1409, %v1400
        %v1914 = vpack.c.b16 %v1410, %v1401
        %v1915 = vpack.c.b16 %v1411, %v1402
        %v1916 = vpack.c.b16 %v1412, %v1403
        %v1917 = vpack.c.b16 %v1413, %v1404
        %v1918 = vpack.c.b16 %v1414, %v1405
        %v1919 = vpack.c.b16 %v1415, %v1406
        %v1920 = vpack.c.b16 %v1416, %v1407
        %v1921 = vpack.c.b16 %v1426, %v1417
        %v1922 = vpack.c.b16 %v1427, %v1418
        %v1923 = vpack.c.b16 %v1428, %v1419
        %v1924 = vpack.c.b16 %v1429, %v1420
        %v1925 = vpack.c.b16 %v1430, %v1421
        %v1926 = vpack.c.b16 %v1431, %v1422
        %v1927 = vpack.c.b16 %v1432, %v1423
        %v1928 = vpack.c.b16 %v1433, %v1424
        %v1929 = vpack.c.b16 %v1434, %v1425
        %v1930 = vpack.c.b16 %v1444, %v1435
        %v1931 = vpack.c.b16 %v1445, %v1436
        %v1932 = vpack.c.b16 %v1446, %v1437
        %v1933 = vpack.c.b16 %v1447, %v1438
        %v1934 = vpack.c.b16 %v1448, %v1439
        %v1935 = vpack.c.b16 %v1449, %v1440
        %v1936 = vpack.c.b16 %v1450, %v1441
        %v1937 = vpack.c.b16 %v1451, %v1442
        %v1938 = vpack.c.b16 %v1452, %v1443
        %v1939 = vpack.c.b16 %v1462, %v1453
        %v1940 = vpack.c.b16 %v1463, %v1454
        %v1941 = vpack.c.b16 %v1464, %v1455
        %v1942 = vpack.c.b16 %v1465, %v1456
        %v1943 = vpack.c.b16 %v1466, %v1457
        %v1944 = vpack.c.b16 %v1467, %v1458
        %v1945 = vpack.c.b16 %v1468, %v1459
        %v1946 = vpack.c.b16 %v1469, %v1460
        %v1947 = vpack.c.b16 %v1470, %v1461
        %v1948 = vpack.c.b16 %v1480, %v1471
        %v1949 = vpack.c.b16 %v1481, %v1472
        %v1950 = vpack.c.b16 %v1482, %v1473
        %v1951 = vpack.c.b16 %v1483, %v1474
        %v1952 = vpack.c.b16 %v1484, %v1475
        %v1953 = vpack.c.b16 %v1485, %v1476
        %v1954 = vpack.c.b16 %v1486, %v1477
        %v1955 = vpack.c.b16 %v1487, %v1478
        %v1956 = vpack.c.b16 %v1488, %v1479
        %v1957 = vpack.c.b16 %v1498, %v1489
        %v1958 = vpack.c.b16 %v1499, %v1490
        %v1959 = vpack.c.b16 %v1500, %v1491
        %v1960 = vpack.c.b16 %v1501, %v1492
        %v1961 = vpack.c.b16 %v1502, %v1493
        %v1962 = vpack.c.b16 %v1503, %v1494
        %v1963 = vpack.c.b16 %v1504, %v1495
        %v1964 = vpack.c.b16 %v1505, %v1496
        %v1965 = vpack.c.b16 %v1506, %v1497
        %v1966 = vpack.c.b16 %v1516, %v1507
        %v1967 = vpack.c.b16 %v1517, %v1508
        %v1968 = vpack.c.b16 %v1518, %v1509
        %v1969 = vpack.c.b16 %v1519, %v1510
        %v1970 = vpack.c.b16 %v1520, %v1511
        %v1971 = vpack.c.b16 %v1521, %v1512
        %v1972 = vpack.c.b16 %v1522, %v1513
        %v1973 = vpack.c.b16 %v1523, %v1514
        %v1974 = vpack.c.b16 %v1524, %v1515
        %v1975 = vpack.c.b16 %v1534, %v1525
        %v1976 = vpack.c.b16 %v1535, %v1526
        %v1977 = vpack.c.b16 %v1536, %v1527
        %v1978 = vpack.c.b16 %v1537, %v1528
        %v1979 = vpack.c.b16 %v1538, %v1529
        %v1980 = vpack.c.b16 %v1539, %v1530
        %v1981 = vpack.c.b16 %v1540, %v1531
        %v1982 = vpack.c.b16 %v1541, %v1532
        %v1983 = vpack.c.b16 %v1542, %v1533
        %v1984 = vpack.c.b16 %v1552, %v1543
        %v1985 = vpack.c.b16 %v1553, %v1544
        %v1986 = vpack.c.b16 %v1554, %v1545
        %v1987 = vpack.c.b16 %v1555, %v1546
        %v1988 = vpack.c.b16 %v1556, %v1547
        %v1989 = vpack.c.b16 %v1557, %v1548
        %v1990 = vpack.c.b16 %v1558, %v1549
        %v1991 = vpack.c.b16 %v1559, %v1550
        %v1992 = vpack.c.b16 %v1560, %v1551
        %v1993 = vpack.c.b16 %v1570, %v1561
        %v1994 = vpack.c.b16 %v1571, %v1562
        %v1995 = vpack.c.b16 %v1572, %v1563
        %v1996 = vpack.c.b16 %v1573, %v1564
        %v1997 = vpack.c.b16 %v1574, %v1565
        %v1998 = vpack.c.b16 %v1575, %v1566
        %v1999 = vpack.c.b16 %v1576, %v1567
        %v2000 = vpack.c.b16 %v1577, %v1568
        %v2001 = vpack.c.b16 %v1578, %v1569
        %v2002 = vpack.c.b16 %v1588, %v1579
        %v2003 = vpack.c.b16 %v1589, %v1580
        %v2004 = vpack.c.b16 %v1590, %v1581
        %v2005 = vpack.c.b16 %v1591, %v1582
        %v2006 = vpack.c.b16 %v1592, %v1583
        %v2007 = vpack.c.b16 %v1593, %v1584
        %v2008 = vpack.c.b16 %v1594, %v1585
        %v2009 = vpack.c.b16 %v1595, %v1586
        %v2010 = vpack.c.b16 %v1596, %v1587
        %v2011 = vpack.c.b16 %v1606, %v1597
        %v2012 = vpack.c.b16 %v1607, %v1598
        %v2013 = vpack.c.b16 %v1608, %v1599
        %v2014 = vpack.c.b16 %v1609, %v1600
        %v2015 = vpack.c.b16 %v1610, %v1601
        %v2016 = vpack.c.b16 %v1611, %v1602
        %v2017 = vpack.c.b16 %v1612, %v1603
        %v2018 = vpack.c.b16 %v1613, %v1604
        %v2019 = vpack.c.b16 %v1614, %v1605
        %v2020 = vpack.c.b16 %v1624, %v1615
        %v2021 = vpack.c.b16 %v1625, %v1616
        %v2022 = vpack.c.b16 %v1626, %v1617
        %v2023 = vpack.c.b16 %v1627, %v1618
        %v2024 = vpack.c.b16 %v1628, %v1619
        %v2025 = vpack.c.b16 %v1629, %v1620
        %v2026 = vpack.c.b16 %v1630, %v1621
        %v2027 = vpack.c.b16 %v1631, %v1622
        %v2028 = vpack.c.b16 %v1632, %v1623
        %v2029 = vpack.c.b16 %v1642, %v1633
        %v2030 = vpack.c.b16 %v1643, %v1634
        %v2031 = vpack.c.b16 %v1644, %v1635
        %v2032 = vpack.c.b16 %v1645, %v1636
        %v2033 = vpack.c.b16 %v1646, %v1637
        %v2034 = vpack.c.b16 %v1647, %v1638
        %v2035 = vpack.c.b16 %v1648, %v1639
        %v2036 = vpack.c.b16 %v1649, %v1640
        %v2037 = vpack.c.b16 %v1650, %v1641
        %v2038 = vpack.c.b16 %v1660, %v1651
        %v2039 = vpack.c.b16 %v1661, %v1652
        %v2040 = vpack.c.b16 %v1662, %v1653
        %v2041 = vpack.c.b16 %v1663, %v1654
        %v2042 = vpack.c.b16 %v1664, %v1655
        %v2043 = vpack.c.b16 %v1665, %v1656
        %v2044 = vpack.c.b16 %v1666, %v1657
        %v2045 = vpack.c.b16 %v1667, %v1658
        %v2046 = vpack.c.b16 %v1668, %v1659
        %v2047 = vpack.c.b16 %v1678, %v1669
        %v2048 = vpack.c.b16 %v1679, %v1670
        %v2049 = vpack.c.b16 %v1680, %v1671
        %v2050 = vpack.c.b16 %v1681, %v1672
        %v2051 = vpack.c.b16 %v1682, %v1673
        %v2052 = vpack.c.b16 %v1683, %v1674
        %v2053 = vpack.c.b16 %v1684, %v1675
        %v2054 = vpack.c.b16 %v1685, %v1676
        %v2055 = vpack.c.b16 %v1686, %v1677
        %v2056 = vpack.c.b16 %v1696, %v1687
        %v2057 = vpack.c.b16 %v1697, %v1688
        %v2058 = vpack.c.b16 %v1698, %v1689
        %v2059 = vpack.c.b16 %v1699, %v1690
        %v2060 = vpack.c.b16 %v1700, %v1691
        %v2061 = vpack.c.b16 %v1701, %v1692
        %v2062 = vpack.c.b16 %v1702, %v1693
        %v2063 = vpack.c.b16 %v1703, %v1694
        %v2064 = vpack.c.b16 %v1704, %v1695
        %v2065 = vpack.c.b16 %v1714, %v1705
        %v2066 = vpack.c.b16 %v1715, %v1706
        %v2067 = vpack.c.b16 %v1716, %v1707
        %v2068 = vpack.c.b16 %v1717, %v1708
        %v2069 = vpack.c.b16 %v1718, %v1709
        %v2070 = vpack.c.b16 %v1719, %v1710
        %v2071 = vpack.c.b16 %v1720, %v1711
        %v2072 = vpack.c.b16 %v1721, %v1712
        %v2073 = vpack.c.b16 %v1722, %v1713
        %v2074 = vpack.c.b16 %v1732, %v1723
        %v2075 = vpack.c.b16 %v1733, %v1724
        %v2076 = vpack.c.b16 %v1734, %v1725
        %v2077 = vpack.c.b16 %v1735, %v1726
        %v2078 = vpack.c.b16 %v1736, %v1727
        %v2079 = vpack.c.b16 %v1737, %v1728
        %v2080 = vpack.c.b16 %v1738, %v1729
        %v2081 = vpack.c.b16 %v1739, %v1730
        %v2082 = vpack.c.b16 %v1740, %v1731
        %v2083 = vpack.c.b16 %v1750, %v1741
        %v2084 = vpack.c.b16 %v1751, %v1742
        %v2085 = vpack.c.b16 %v1752, %v1743
        %v2086 = vpack.c.b16 %v1753, %v1744
        %v2087 = vpack.c.b16 %v1754, %v1745
        %v2088 = vpack.c.b16 %v1755, %v1746
        %v2089 = vpack.c.b16 %v1756, %v1747
        %v2090 = vpack.c.b16 %v1757, %v1748
        %v2091 = vpack.c.b16 %v1758, %v1749
        %v2092 = vpack.c.b16 %v1768, %v1759
        %v2093 = vpack.c.b16 %v1769, %v1760
        %v2094 = vpack.c.b16 %v1770, %v1761
        %v2095 = vpack.c.b16 %v1771, %v1762
        %v2096 = vpack.c.b16 %v1772, %v1763
        %v2097 = vpack.c.b16 %v1773, %v1764
        %v2098 = vpack.c.b16 %v1774, %v1765
        %v2099 = vpack.c.b16 %v1775, %v1766
        %v2100 = vpack.c.b16 %v1776, %v1767
        %v2101 = vpack.c.b16 %v1786, %v1777
        %v2102 = vpack.c.b16 %v1787, %v1778
        %v2103 = vpack.c.b16 %v1788, %v1779
        %v2104 = vpack.c.b16 %v1789, %v1780
        %v2105 = vpack.c.b16 %v1790, %v1781
        %v2106 = vpack.c.b16 %v1791, %v1782
        %v2107 = vpack.c.b16 %v1792, %v1783
        %v2108 = vpack.c.b16 %v1793, %v1784
        %v2109 = vpack.c.b16 %v1794, %v1785
        %v2110 = vpack.c.b16 %v1804, %v1795
        %v2111 = vpack.c.b16 %v1805, %v1796
        %v2112 = vpack.c.b16 %v1806, %v1797
        %v2113 = vpack.c.b16 %v1807, %v1798
        %v2114 = vpack.c.b16 %v1808, %v1799
        %v2115 = vpack.c.b16 %v1809, %v1800
        %v2116 = vpack.c.b16 %v1810, %v1801
        %v2117 = vpack.c.b16 %v1811, %v1802
        %v2118 = vpack.c.b16 %v1812, %v1803
        %v2119 = vpack.c.b16 %v1822, %v1813
        %v2120 = vpack.c.b16 %v1823, %v1814
        %v2121 = vpack.c.b16 %v1824, %v1815
        %v2122 = vpack.c.b16 %v1825, %v1816
        %v2123 = vpack.c.b16 %v1826, %v1817
        %v2124 = vpack.c.b16 %v1827, %v1818
        %v2125 = vpack.c.b16 %v1828, %v1819
        %v2126 = vpack.c.b16 %v1829, %v1820
        %v2127 = vpack.c.b16 %v1830, %v1821
        %v2128 = vpack.c.b16 %v1840, %v1831
        %v2129 = vpack.c.b16 %v1841, %v1832
        %v2130 = vpack.c.b16 %v1842, %v1833
        %v2131 = vpack.c.b16 %v1843, %v1834
        %v2132 = vpack.c.b16 %v1844, %v1835
        %v2133 = vpack.c.b16 %v1845, %v1836
        %v2134 = vpack.c.b16 %v1846, %v1837
        %v2135 = vpack.c.b16 %v1847, %v1838
        %v2136 = vpack.c.b16 %v1848, %v1839
        %2425 = vmatprep.subr.bf16.mxu0 %v1913
        %2426 = vmatpush1.bf16.msra.mxu0 %v1912
        %2427 = vmatprep.subr.bf16.mxu0 %v1904
        %2428 = vmatpush1.bf16.msra.mxu0 %v1903
        %2429 = vmatprep.subr.bf16.mxu0 %v1895
        %2430 = vmatpush1.bf16.msra.mxu0 %v1894
        %2431 = vmatprep.subr.bf16.mxu0 %v1886
        %2432 = vmatpush1.bf16.msra.mxu0 %v1885
        %2433 = vmatprep.subr.bf16.mxu0 %v1877
        %2434 = vmatpush1.bf16.msra.mxu0 %v1876
        %2435 = vmatprep.subr.bf16.mxu0 %v1868
        %2436 = vmatpush1.bf16.msra.mxu0 %v1867
        %2437 = vmatprep.subr.bf16.mxu0 %v1859
        %2438 = vmatpush1.bf16.msra.mxu0 %v1858
        %2439 = vmatprep.subr.bf16.mxu0 %v1850
        %2440 = vmatpush1.bf16.msra.mxu0 %v1849
        %2441 = vmatprep.subr.bf16.mxu0 %v1985
        %2442 = vmatpush2.bf16.msra.mxu0 %v1984
        %2443 = vmatprep.subr.bf16.mxu0 %v1976
        %2444 = vmatpush2.bf16.msra.mxu0 %v1975
        %2445 = vmatprep.subr.bf16.mxu0 %v1967
        %2446 = vmatpush2.bf16.msra.mxu0 %v1966
        %2447 = vmatprep.subr.bf16.mxu0 %v1958
        %2448 = vmatpush2.bf16.msra.mxu0 %v1957
        %2449 = vmatprep.subr.bf16.mxu0 %v1949
        %2450 = vmatpush2.bf16.msra.mxu0 %v1948
        %2451 = vmatprep.subr.bf16.mxu0 %v1940
        %2452 = vmatpush2.bf16.msra.mxu0 %v1939
        %2453 = vmatprep.subr.bf16.mxu0 %v1931
        %2454 = vmatpush2.bf16.msra.mxu0 %v1930
        %2455 = vmatprep.subr.bf16.mxu0 %v1922
        %2456 = vmatpush2.bf16.msra.mxu0 %v1921
        %2457 = vmatprep.mubr.bf16.mxu0 %v826
        %2458 = vmatmul.mubr.bf16.gmra.mxu0 %v825
        %v2459 = vpop.f32.mrf.mxu0
        %v2460 = vadd.f32 0.0, %v2459
        %v2461 = vpop.f32.mrf.mxu0
        %v2462 = vadd.f32 0.0, %v2461
        %v2463 = vpop.f32.mrf.mxu0
        %v2464 = vadd.f32 0.0, %v2463
        %v2465 = vpop.f32.mrf.mxu0
        %v2466 = vadd.f32 0.0, %v2465
        %2467 = vmatprep.mubr.bf16.mxu0 %v830
        %2468 = vmatmul.mubr.bf16.gmra.mxu0 %v829
        %v2469 = vpop.f32.mrf.mxu0
        %v2470 = vadd.f32 0.0, %v2469
        %v2471 = vpop.f32.mrf.mxu0
        %v2472 = vadd.f32 0.0, %v2471
        %v2473 = vpop.f32.mrf.mxu0
        %v2474 = vadd.f32 0.0, %v2473
        %v2475 = vpop.f32.mrf.mxu0
        %v2476 = vadd.f32 0.0, %v2475
        %2477 = vmatprep.mubr.bf16.mxu0 %v834
        %2478 = vmatmul.mubr.bf16.gmra.mxu0 %v833
        %v2479 = vpop.f32.mrf.mxu0
        %v2480 = vadd.f32 0.0, %v2479
        %v2481 = vpop.f32.mrf.mxu0
        %v2482 = vadd.f32 0.0, %v2481
        %v2483 = vpop.f32.mrf.mxu0
        %v2484 = vadd.f32 0.0, %v2483
        %v2485 = vpop.f32.mrf.mxu0
        %v2486 = vadd.f32 0.0, %v2485
        %2487 = vmatprep.mubr.bf16.mxu0 %v838
        %2488 = vmatmul.mubr.bf16.gmra.mxu0 %v837
        %v2489 = vpop.f32.mrf.mxu0
        %v2490 = vadd.f32 0.0, %v2489
        %v2491 = vpop.f32.mrf.mxu0
        %v2492 = vadd.f32 0.0, %v2491
        %v2493 = vpop.f32.mrf.mxu0
        %v2494 = vadd.f32 0.0, %v2493
        %v2495 = vpop.f32.mrf.mxu0
        %v2496 = vadd.f32 0.0, %v2495
        %2497 = vmatprep.mubr.bf16.mxu0 %v842
        %2498 = vmatmul.mubr.bf16.gmra.mxu0 %v841
        %v2499 = vpop.f32.mrf.mxu0
        %v2500 = vadd.f32 0.0, %v2499
        %v2501 = vpop.f32.mrf.mxu0
        %v2502 = vadd.f32 0.0, %v2501
        %v2503 = vpop.f32.mrf.mxu0
        %v2504 = vadd.f32 0.0, %v2503
        %v2505 = vpop.f32.mrf.mxu0
        %v2506 = vadd.f32 0.0, %v2505
        %2507 = vmatprep.mubr.bf16.mxu0 %v846
        %2508 = vmatmul.mubr.bf16.gmra.mxu0 %v845
        %v2509 = vpop.f32.mrf.mxu0
        %v2510 = vadd.f32 0.0, %v2509
        %v2511 = vpop.f32.mrf.mxu0
        %v2512 = vadd.f32 0.0, %v2511
        %v2513 = vpop.f32.mrf.mxu0
        %v2514 = vadd.f32 0.0, %v2513
        %v2515 = vpop.f32.mrf.mxu0
        %v2516 = vadd.f32 0.0, %v2515
        %2517 = vmatprep.mubr.bf16.mxu0 %v850
        %2518 = vmatmul.mubr.bf16.gmra.mxu0 %v849
        %v2519 = vpop.f32.mrf.mxu0
        %v2520 = vadd.f32 0.0, %v2519
        %v2521 = vpop.f32.mrf.mxu0
        %v2522 = vadd.f32 0.0, %v2521
        %v2523 = vpop.f32.mrf.mxu0
        %v2524 = vadd.f32 0.0, %v2523
        %v2525 = vpop.f32.mrf.mxu0
        %v2526 = vadd.f32 0.0, %v2525
        %2527 = vmatprep.mubr.bf16.mxu0 %v854
        %2528 = vmatmul.mubr.bf16.gmra.mxu0 %v853
        %v2529 = vpop.f32.mrf.mxu0
        %v2530 = vadd.f32 0.0, %v2529
        %v2531 = vpop.f32.mrf.mxu0
        %v2532 = vadd.f32 0.0, %v2531
        %v2533 = vpop.f32.mrf.mxu0
        %v2534 = vadd.f32 0.0, %v2533
        %v2535 = vpop.f32.mrf.mxu0
        %v2536 = vadd.f32 0.0, %v2535
        %2537 = vmatprep.mubr.bf16.mxu0 %v858
        %2538 = vmatmul.mubr.bf16.gmra.mxu0 %v857
        %v2539 = vpop.f32.mrf.mxu0
        %v2540 = vadd.f32 0.0, %v2539
        %v2541 = vpop.f32.mrf.mxu0
        %v2542 = vadd.f32 0.0, %v2541
        %v2543 = vpop.f32.mrf.mxu0
        %v2544 = vadd.f32 0.0, %v2543
        %v2545 = vpop.f32.mrf.mxu0
        %v2546 = vadd.f32 0.0, %v2545
        %2547 = vmatprep.mubr.bf16.mxu0 %v862
        %2548 = vmatmul.mubr.bf16.gmra.mxu0 %v861
        %v2549 = vpop.f32.mrf.mxu0
        %v2550 = vadd.f32 0.0, %v2549
        %v2551 = vpop.f32.mrf.mxu0
        %v2552 = vadd.f32 0.0, %v2551
        %v2553 = vpop.f32.mrf.mxu0
        %v2554 = vadd.f32 0.0, %v2553
        %v2555 = vpop.f32.mrf.mxu0
        %v2556 = vadd.f32 0.0, %v2555
        %2557 = vmatprep.mubr.bf16.mxu0 %v866
        %2558 = vmatmul.mubr.bf16.gmra.mxu0 %v865
        %v2559 = vpop.f32.mrf.mxu0
        %v2560 = vadd.f32 0.0, %v2559
        %v2561 = vpop.f32.mrf.mxu0
        %v2562 = vadd.f32 0.0, %v2561
        %v2563 = vpop.f32.mrf.mxu0
        %v2564 = vadd.f32 0.0, %v2563
        %v2565 = vpop.f32.mrf.mxu0
        %v2566 = vadd.f32 0.0, %v2565
        %2567 = vmatprep.mubr.bf16.mxu0 %v870
        %2568 = vmatmul.mubr.bf16.gmra.mxu0 %v869
        %v2569 = vpop.f32.mrf.mxu0
        %v2570 = vadd.f32 0.0, %v2569
        %v2571 = vpop.f32.mrf.mxu0
        %v2572 = vadd.f32 0.0, %v2571
        %v2573 = vpop.f32.mrf.mxu0
        %v2574 = vadd.f32 0.0, %v2573
        %v2575 = vpop.f32.mrf.mxu0
        %v2576 = vadd.f32 0.0, %v2575
        %2577 = vmatprep.mubr.bf16.mxu0 %v874
        %2578 = vmatmul.mubr.bf16.gmra.mxu0 %v873
        %v2579 = vpop.f32.mrf.mxu0
        %v2580 = vadd.f32 0.0, %v2579
        %v2581 = vpop.f32.mrf.mxu0
        %v2582 = vadd.f32 0.0, %v2581
        %v2583 = vpop.f32.mrf.mxu0
        %v2584 = vadd.f32 0.0, %v2583
        %v2585 = vpop.f32.mrf.mxu0
        %v2586 = vadd.f32 0.0, %v2585
        %2587 = vmatprep.mubr.bf16.mxu0 %v878
        %2588 = vmatmul.mubr.bf16.gmra.mxu0 %v877
        %v2589 = vpop.f32.mrf.mxu0
        %v2590 = vadd.f32 0.0, %v2589
        %v2591 = vpop.f32.mrf.mxu0
        %v2592 = vadd.f32 0.0, %v2591
        %v2593 = vpop.f32.mrf.mxu0
        %v2594 = vadd.f32 0.0, %v2593
        %v2595 = vpop.f32.mrf.mxu0
        %v2596 = vadd.f32 0.0, %v2595
        %2597 = vmatprep.mubr.bf16.mxu0 %v882
        %2598 = vmatmul.mubr.bf16.gmra.mxu0 %v881
        %v2599 = vpop.f32.mrf.mxu0
        %v2600 = vadd.f32 0.0, %v2599
        %v2601 = vpop.f32.mrf.mxu0
        %v2602 = vadd.f32 0.0, %v2601
        %v2603 = vpop.f32.mrf.mxu0
        %v2604 = vadd.f32 0.0, %v2603
        %v2605 = vpop.f32.mrf.mxu0
        %v2606 = vadd.f32 0.0, %v2605
        %2607 = vmatprep.mubr.bf16.mxu0 %v886
        %2608 = vmatmul.mubr.bf16.gmra.mxu0 %v885
        %v2609 = vpop.f32.mrf.mxu0
        %v2610 = vadd.f32 0.0, %v2609
        %v2611 = vpop.f32.mrf.mxu0
        %v2612 = vadd.f32 0.0, %v2611
        %v2613 = vpop.f32.mrf.mxu0
        %v2614 = vadd.f32 0.0, %v2613
        %v2615 = vpop.f32.mrf.mxu0
        %v2616 = vadd.f32 0.0, %v2615
        %2617 = vdwg.mxu0
        %2618 = vmatprep.subr.bf16.mxu0 %v2057
        %2619 = vmatpush1.bf16.msra.mxu0 %v2056
        %2620 = vmatprep.subr.bf16.mxu0 %v2048
        %2621 = vmatpush1.bf16.msra.mxu0 %v2047
        %2622 = vmatprep.subr.bf16.mxu0 %v2039
        %2623 = vmatpush1.bf16.msra.mxu0 %v2038
        %2624 = vmatprep.subr.bf16.mxu0 %v2030
        %2625 = vmatpush1.bf16.msra.mxu0 %v2029
        %2626 = vmatprep.subr.bf16.mxu0 %v2021
        %2627 = vmatpush1.bf16.msra.mxu0 %v2020
        %2628 = vmatprep.subr.bf16.mxu0 %v2012
        %2629 = vmatpush1.bf16.msra.mxu0 %v2011
        %2630 = vmatprep.subr.bf16.mxu0 %v2003
        %2631 = vmatpush1.bf16.msra.mxu0 %v2002
        %2632 = vmatprep.subr.bf16.mxu0 %v1994
        %2633 = vmatpush1.bf16.msra.mxu0 %v1993
        %2634 = vmatprep.subr.bf16.mxu0 %v2129
        %2635 = vmatpush2.bf16.msra.mxu0 %v2128
        %2636 = vmatprep.subr.bf16.mxu0 %v2120
        %2637 = vmatpush2.bf16.msra.mxu0 %v2119
        %2638 = vmatprep.subr.bf16.mxu0 %v2111
        %2639 = vmatpush2.bf16.msra.mxu0 %v2110
        %2640 = vmatprep.subr.bf16.mxu0 %v2102
        %2641 = vmatpush2.bf16.msra.mxu0 %v2101
        %2642 = vmatprep.subr.bf16.mxu0 %v2093
        %2643 = vmatpush2.bf16.msra.mxu0 %v2092
        %2644 = vmatprep.subr.bf16.mxu0 %v2084
        %2645 = vmatpush2.bf16.msra.mxu0 %v2083
        %2646 = vmatprep.subr.bf16.mxu0 %v2075
        %2647 = vmatpush2.bf16.msra.mxu0 %v2074
        %2648 = vmatprep.subr.bf16.mxu0 %v2066
        %2649 = vmatpush2.bf16.msra.mxu0 %v2065
        %2650 = vmatprep.mubr.bf16.mxu0 %v828
        %2651 = vmatmul.mubr.bf16.gmra.mxu0 %v827
        %v2652 = vpop.f32.mrf.mxu0
        %v2653 = vadd.f32 %v2460, %v2652
        %v2654 = vpop.f32.mrf.mxu0
        %v2655 = vadd.f32 %v2462, %v2654
        %v2656 = vpop.f32.mrf.mxu0
        %v2657 = vadd.f32 %v2464, %v2656
        %v2658 = vpop.f32.mrf.mxu0
        %v2659 = vadd.f32 %v2466, %v2658
        %2660 = vmatprep.mubr.bf16.mxu0 %v832
        %2661 = vmatmul.mubr.bf16.gmra.mxu0 %v831
        %v2662 = vpop.f32.mrf.mxu0
        %v2663 = vadd.f32 %v2470, %v2662
        %v2664 = vpop.f32.mrf.mxu0
        %v2665 = vadd.f32 %v2472, %v2664
        %v2666 = vpop.f32.mrf.mxu0
        %v2667 = vadd.f32 %v2474, %v2666
        %v2668 = vpop.f32.mrf.mxu0
        %v2669 = vadd.f32 %v2476, %v2668
        %2670 = vmatprep.mubr.bf16.mxu0 %v836
        %2671 = vmatmul.mubr.bf16.gmra.mxu0 %v835
        %v2672 = vpop.f32.mrf.mxu0
        %v2673 = vadd.f32 %v2480, %v2672
        %v2674 = vpop.f32.mrf.mxu0
        %v2675 = vadd.f32 %v2482, %v2674
        %v2676 = vpop.f32.mrf.mxu0
        %v2677 = vadd.f32 %v2484, %v2676
        %v2678 = vpop.f32.mrf.mxu0
        %v2679 = vadd.f32 %v2486, %v2678
        %2680 = vmatprep.mubr.bf16.mxu0 %v840
        %2681 = vmatmul.mubr.bf16.gmra.mxu0 %v839
        %v2682 = vpop.f32.mrf.mxu0
        %v2683 = vadd.f32 %v2490, %v2682
        %v2684 = vpop.f32.mrf.mxu0
        %v2685 = vadd.f32 %v2492, %v2684
        %v2686 = vpop.f32.mrf.mxu0
        %v2687 = vadd.f32 %v2494, %v2686
        %v2688 = vpop.f32.mrf.mxu0
        %v2689 = vadd.f32 %v2496, %v2688
        %2690 = vmatprep.mubr.bf16.mxu0 %v844
        %2691 = vmatmul.mubr.bf16.gmra.mxu0 %v843
        %v2692 = vpop.f32.mrf.mxu0
        %v2693 = vadd.f32 %v2500, %v2692
        %v2694 = vpop.f32.mrf.mxu0
        %v2695 = vadd.f32 %v2502, %v2694
        %v2696 = vpop.f32.mrf.mxu0
        %v2697 = vadd.f32 %v2504, %v2696
        %v2698 = vpop.f32.mrf.mxu0
        %v2699 = vadd.f32 %v2506, %v2698
        %2700 = vmatprep.mubr.bf16.mxu0 %v848
        %2701 = vmatmul.mubr.bf16.gmra.mxu0 %v847
        %v2702 = vpop.f32.mrf.mxu0
        %v2703 = vadd.f32 %v2510, %v2702
        %v2704 = vpop.f32.mrf.mxu0
        %v2705 = vadd.f32 %v2512, %v2704
        %v2706 = vpop.f32.mrf.mxu0
        %v2707 = vadd.f32 %v2514, %v2706
        %v2708 = vpop.f32.mrf.mxu0
        %v2709 = vadd.f32 %v2516, %v2708
        %2710 = vmatprep.mubr.bf16.mxu0 %v852
        %2711 = vmatmul.mubr.bf16.gmra.mxu0 %v851
        %v2712 = vpop.f32.mrf.mxu0
        %v2713 = vadd.f32 %v2520, %v2712
        %v2714 = vpop.f32.mrf.mxu0
        %v2715 = vadd.f32 %v2522, %v2714
        %v2716 = vpop.f32.mrf.mxu0
        %v2717 = vadd.f32 %v2524, %v2716
        %v2718 = vpop.f32.mrf.mxu0
        %v2719 = vadd.f32 %v2526, %v2718
        %2720 = vmatprep.mubr.bf16.mxu0 %v856
        %2721 = vmatmul.mubr.bf16.gmra.mxu0 %v855
        %v2722 = vpop.f32.mrf.mxu0
        %v2723 = vadd.f32 %v2530, %v2722
        %v2724 = vpop.f32.mrf.mxu0
        %v2725 = vadd.f32 %v2532, %v2724
        %v2726 = vpop.f32.mrf.mxu0
        %v2727 = vadd.f32 %v2534, %v2726
        %v2728 = vpop.f32.mrf.mxu0
        %v2729 = vadd.f32 %v2536, %v2728
        %2730 = vmatprep.mubr.bf16.mxu0 %v860
        %2731 = vmatmul.mubr.bf16.gmra.mxu0 %v859
        %v2732 = vpop.f32.mrf.mxu0
        %v2733 = vadd.f32 %v2540, %v2732
        %v2734 = vpop.f32.mrf.mxu0
        %v2735 = vadd.f32 %v2542, %v2734
        %v2736 = vpop.f32.mrf.mxu0
        %v2737 = vadd.f32 %v2544, %v2736
        %v2738 = vpop.f32.mrf.mxu0
        %v2739 = vadd.f32 %v2546, %v2738
        %2740 = vmatprep.mubr.bf16.mxu0 %v864
        %2741 = vmatmul.mubr.bf16.gmra.mxu0 %v863
        %v2742 = vpop.f32.mrf.mxu0
        %v2743 = vadd.f32 %v2550, %v2742
        %v2744 = vpop.f32.mrf.mxu0
        %v2745 = vadd.f32 %v2552, %v2744
        %v2746 = vpop.f32.mrf.mxu0
        %v2747 = vadd.f32 %v2554, %v2746
        %v2748 = vpop.f32.mrf.mxu0
        %v2749 = vadd.f32 %v2556, %v2748
        %2750 = vmatprep.mubr.bf16.mxu0 %v868
        %2751 = vmatmul.mubr.bf16.gmra.mxu0 %v867
        %v2752 = vpop.f32.mrf.mxu0
        %v2753 = vadd.f32 %v2560, %v2752
        %v2754 = vpop.f32.mrf.mxu0
        %v2755 = vadd.f32 %v2562, %v2754
        %v2756 = vpop.f32.mrf.mxu0
        %v2757 = vadd.f32 %v2564, %v2756
        %v2758 = vpop.f32.mrf.mxu0
        %v2759 = vadd.f32 %v2566, %v2758
        %2760 = vmatprep.mubr.bf16.mxu0 %v872
        %2761 = vmatmul.mubr.bf16.gmra.mxu0 %v871
        %v2762 = vpop.f32.mrf.mxu0
        %v2763 = vadd.f32 %v2570, %v2762
        %v2764 = vpop.f32.mrf.mxu0
        %v2765 = vadd.f32 %v2572, %v2764
        %v2766 = vpop.f32.mrf.mxu0
        %v2767 = vadd.f32 %v2574, %v2766
        %v2768 = vpop.f32.mrf.mxu0
        %v2769 = vadd.f32 %v2576, %v2768
        %2770 = vmatprep.mubr.bf16.mxu0 %v876
        %2771 = vmatmul.mubr.bf16.gmra.mxu0 %v875
        %v2772 = vpop.f32.mrf.mxu0
        %v2773 = vadd.f32 %v2580, %v2772
        %v2774 = vpop.f32.mrf.mxu0
        %v2775 = vadd.f32 %v2582, %v2774
        %v2776 = vpop.f32.mrf.mxu0
        %v2777 = vadd.f32 %v2584, %v2776
        %v2778 = vpop.f32.mrf.mxu0
        %v2779 = vadd.f32 %v2586, %v2778
        %2780 = vmatprep.mubr.bf16.mxu0 %v880
        %2781 = vmatmul.mubr.bf16.gmra.mxu0 %v879
        %v2782 = vpop.f32.mrf.mxu0
        %v2783 = vadd.f32 %v2590, %v2782
        %v2784 = vpop.f32.mrf.mxu0
        %v2785 = vadd.f32 %v2592, %v2784
        %v2786 = vpop.f32.mrf.mxu0
        %v2787 = vadd.f32 %v2594, %v2786
        %v2788 = vpop.f32.mrf.mxu0
        %v2789 = vadd.f32 %v2596, %v2788
        %2790 = vmatprep.mubr.bf16.mxu0 %v884
        %2791 = vmatmul.mubr.bf16.gmra.mxu0 %v883
        %v2792 = vpop.f32.mrf.mxu0
        %v2793 = vadd.f32 %v2600, %v2792
        %v2794 = vpop.f32.mrf.mxu0
        %v2795 = vadd.f32 %v2602, %v2794
        %v2796 = vpop.f32.mrf.mxu0
        %v2797 = vadd.f32 %v2604, %v2796
        %v2798 = vpop.f32.mrf.mxu0
        %v2799 = vadd.f32 %v2606, %v2798
        %2800 = vmatprep.mubr.bf16.mxu0 %v888
        %2801 = vmatmul.mubr.bf16.gmra.mxu0 %v887
        %v2802 = vpop.f32.mrf.mxu0
        %v2803 = vadd.f32 %v2610, %v2802
        %v2804 = vpop.f32.mrf.mxu0
        %v2805 = vadd.f32 %v2612, %v2804
        %v2806 = vpop.f32.mrf.mxu0
        %v2807 = vadd.f32 %v2614, %v2806
        %v2808 = vpop.f32.mrf.mxu0
        %v2809 = vadd.f32 %v2616, %v2808
        %2810 = vdwg.mxu0
        %2811 = vmatprep.subr.bf16.mxu0 %v1915
        %2812 = vmatpush1.bf16.msra.mxu0 %v1914
        %2813 = vmatprep.subr.bf16.mxu0 %v1906
        %2814 = vmatpush1.bf16.msra.mxu0 %v1905
        %2815 = vmatprep.subr.bf16.mxu0 %v1897
        %2816 = vmatpush1.bf16.msra.mxu0 %v1896
        %2817 = vmatprep.subr.bf16.mxu0 %v1888
        %2818 = vmatpush1.bf16.msra.mxu0 %v1887
        %2819 = vmatprep.subr.bf16.mxu0 %v1879
        %2820 = vmatpush1.bf16.msra.mxu0 %v1878
        %2821 = vmatprep.subr.bf16.mxu0 %v1870
        %2822 = vmatpush1.bf16.msra.mxu0 %v1869
        %2823 = vmatprep.subr.bf16.mxu0 %v1861
        %2824 = vmatpush1.bf16.msra.mxu0 %v1860
        %2825 = vmatprep.subr.bf16.mxu0 %v1852
        %2826 = vmatpush1.bf16.msra.mxu0 %v1851
        %2827 = vmatprep.subr.bf16.mxu0 %v1987
        %2828 = vmatpush2.bf16.msra.mxu0 %v1986
        %2829 = vmatprep.subr.bf16.mxu0 %v1978
        %2830 = vmatpush2.bf16.msra.mxu0 %v1977
        %2831 = vmatprep.subr.bf16.mxu0 %v1969
        %2832 = vmatpush2.bf16.msra.mxu0 %v1968
        %2833 = vmatprep.subr.bf16.mxu0 %v1960
        %2834 = vmatpush2.bf16.msra.mxu0 %v1959
        %2835 = vmatprep.subr.bf16.mxu0 %v1951
        %2836 = vmatpush2.bf16.msra.mxu0 %v1950
        %2837 = vmatprep.subr.bf16.mxu0 %v1942
        %2838 = vmatpush2.bf16.msra.mxu0 %v1941
        %2839 = vmatprep.subr.bf16.mxu0 %v1933
        %2840 = vmatpush2.bf16.msra.mxu0 %v1932
        %2841 = vmatprep.subr.bf16.mxu0 %v1924
        %2842 = vmatpush2.bf16.msra.mxu0 %v1923
        %2843 = vmatprep.mubr.bf16.mxu0 %v826
        %2844 = vmatmul.mubr.bf16.gmra.mxu0 %v825
        %v2845 = vpop.f32.mrf.mxu0
        %v2846 = vadd.f32 0.0, %v2845
        %v2847 = vpop.f32.mrf.mxu0
        %v2848 = vadd.f32 0.0, %v2847
        %v2849 = vpop.f32.mrf.mxu0
        %v2850 = vadd.f32 0.0, %v2849
        %v2851 = vpop.f32.mrf.mxu0
        %v2852 = vadd.f32 0.0, %v2851
        %2853 = vmatprep.mubr.bf16.mxu0 %v830
        %2854 = vmatmul.mubr.bf16.gmra.mxu0 %v829
        %v2855 = vpop.f32.mrf.mxu0
        %v2856 = vadd.f32 0.0, %v2855
        %v2857 = vpop.f32.mrf.mxu0
        %v2858 = vadd.f32 0.0, %v2857
        %v2859 = vpop.f32.mrf.mxu0
        %v2860 = vadd.f32 0.0, %v2859
        %v2861 = vpop.f32.mrf.mxu0
        %v2862 = vadd.f32 0.0, %v2861
        %2863 = vmatprep.mubr.bf16.mxu0 %v834
        %2864 = vmatmul.mubr.bf16.gmra.mxu0 %v833
        %v2865 = vpop.f32.mrf.mxu0
        %v2866 = vadd.f32 0.0, %v2865
        %v2867 = vpop.f32.mrf.mxu0
        %v2868 = vadd.f32 0.0, %v2867
        %v2869 = vpop.f32.mrf.mxu0
        %v2870 = vadd.f32 0.0, %v2869
        %v2871 = vpop.f32.mrf.mxu0
        %v2872 = vadd.f32 0.0, %v2871
        %2873 = vmatprep.mubr.bf16.mxu0 %v838
        %2874 = vmatmul.mubr.bf16.gmra.mxu0 %v837
        %v2875 = vpop.f32.mrf.mxu0
        %v2876 = vadd.f32 0.0, %v2875
        %v2877 = vpop.f32.mrf.mxu0
        %v2878 = vadd.f32 0.0, %v2877
        %v2879 = vpop.f32.mrf.mxu0
        %v2880 = vadd.f32 0.0, %v2879
        %v2881 = vpop.f32.mrf.mxu0
        %v2882 = vadd.f32 0.0, %v2881
        %2883 = vmatprep.mubr.bf16.mxu0 %v842
        %2884 = vmatmul.mubr.bf16.gmra.mxu0 %v841
        %v2885 = vpop.f32.mrf.mxu0
        %v2886 = vadd.f32 0.0, %v2885
        %v2887 = vpop.f32.mrf.mxu0
        %v2888 = vadd.f32 0.0, %v2887
        %v2889 = vpop.f32.mrf.mxu0
        %v2890 = vadd.f32 0.0, %v2889
        %v2891 = vpop.f32.mrf.mxu0
        %v2892 = vadd.f32 0.0, %v2891
        %2893 = vmatprep.mubr.bf16.mxu0 %v846
        %2894 = vmatmul.mubr.bf16.gmra.mxu0 %v845
        %v2895 = vpop.f32.mrf.mxu0
        %v2896 = vadd.f32 0.0, %v2895
        %v2897 = vpop.f32.mrf.mxu0
        %v2898 = vadd.f32 0.0, %v2897
        %v2899 = vpop.f32.mrf.mxu0
        %v2900 = vadd.f32 0.0, %v2899
        %v2901 = vpop.f32.mrf.mxu0
        %v2902 = vadd.f32 0.0, %v2901
        %2903 = vmatprep.mubr.bf16.mxu0 %v850
        %2904 = vmatmul.mubr.bf16.gmra.mxu0 %v849
        %v2905 = vpop.f32.mrf.mxu0
        %v2906 = vadd.f32 0.0, %v2905
        %v2907 = vpop.f32.mrf.mxu0
        %v2908 = vadd.f32 0.0, %v2907
        %v2909 = vpop.f32.mrf.mxu0
        %v2910 = vadd.f32 0.0, %v2909
        %v2911 = vpop.f32.mrf.mxu0
        %v2912 = vadd.f32 0.0, %v2911
        %2913 = vmatprep.mubr.bf16.mxu0 %v854
        %2914 = vmatmul.mubr.bf16.gmra.mxu0 %v853
        %v2915 = vpop.f32.mrf.mxu0
        %v2916 = vadd.f32 0.0, %v2915
        %v2917 = vpop.f32.mrf.mxu0
        %v2918 = vadd.f32 0.0, %v2917
        %v2919 = vpop.f32.mrf.mxu0
        %v2920 = vadd.f32 0.0, %v2919
        %v2921 = vpop.f32.mrf.mxu0
        %v2922 = vadd.f32 0.0, %v2921
        %2923 = vmatprep.mubr.bf16.mxu0 %v858
        %2924 = vmatmul.mubr.bf16.gmra.mxu0 %v857
        %v2925 = vpop.f32.mrf.mxu0
        %v2926 = vadd.f32 0.0, %v2925
        %v2927 = vpop.f32.mrf.mxu0
        %v2928 = vadd.f32 0.0, %v2927
        %v2929 = vpop.f32.mrf.mxu0
        %v2930 = vadd.f32 0.0, %v2929
        %v2931 = vpop.f32.mrf.mxu0
        %v2932 = vadd.f32 0.0, %v2931
        %2933 = vmatprep.mubr.bf16.mxu0 %v862
        %2934 = vmatmul.mubr.bf16.gmra.mxu0 %v861
        %v2935 = vpop.f32.mrf.mxu0
        %v2936 = vadd.f32 0.0, %v2935
        %v2937 = vpop.f32.mrf.mxu0
        %v2938 = vadd.f32 0.0, %v2937
        %v2939 = vpop.f32.mrf.mxu0
        %v2940 = vadd.f32 0.0, %v2939
        %v2941 = vpop.f32.mrf.mxu0
        %v2942 = vadd.f32 0.0, %v2941
        %2943 = vmatprep.mubr.bf16.mxu0 %v866
        %2944 = vmatmul.mubr.bf16.gmra.mxu0 %v865
        %v2945 = vpop.f32.mrf.mxu0
        %v2946 = vadd.f32 0.0, %v2945
        %v2947 = vpop.f32.mrf.mxu0
        %v2948 = vadd.f32 0.0, %v2947
        %v2949 = vpop.f32.mrf.mxu0
        %v2950 = vadd.f32 0.0, %v2949
        %v2951 = vpop.f32.mrf.mxu0
        %v2952 = vadd.f32 0.0, %v2951
        %2953 = vmatprep.mubr.bf16.mxu0 %v870
        %2954 = vmatmul.mubr.bf16.gmra.mxu0 %v869
        %v2955 = vpop.f32.mrf.mxu0
        %v2956 = vadd.f32 0.0, %v2955
        %v2957 = vpop.f32.mrf.mxu0
        %v2958 = vadd.f32 0.0, %v2957
        %v2959 = vpop.f32.mrf.mxu0
        %v2960 = vadd.f32 0.0, %v2959
        %v2961 = vpop.f32.mrf.mxu0
        %v2962 = vadd.f32 0.0, %v2961
        %2963 = vmatprep.mubr.bf16.mxu0 %v874
        %2964 = vmatmul.mubr.bf16.gmra.mxu0 %v873
        %v2965 = vpop.f32.mrf.mxu0
        %v2966 = vadd.f32 0.0, %v2965
        %v2967 = vpop.f32.mrf.mxu0
        %v2968 = vadd.f32 0.0, %v2967
        %v2969 = vpop.f32.mrf.mxu0
        %v2970 = vadd.f32 0.0, %v2969
        %v2971 = vpop.f32.mrf.mxu0
        %v2972 = vadd.f32 0.0, %v2971
        %2973 = vmatprep.mubr.bf16.mxu0 %v878
        %2974 = vmatmul.mubr.bf16.gmra.mxu0 %v877
        %v2975 = vpop.f32.mrf.mxu0
        %v2976 = vadd.f32 0.0, %v2975
        %v2977 = vpop.f32.mrf.mxu0
        %v2978 = vadd.f32 0.0, %v2977
        %v2979 = vpop.f32.mrf.mxu0
        %v2980 = vadd.f32 0.0, %v2979
        %v2981 = vpop.f32.mrf.mxu0
        %v2982 = vadd.f32 0.0, %v2981
        %2983 = vmatprep.mubr.bf16.mxu0 %v882
        %2984 = vmatmul.mubr.bf16.gmra.mxu0 %v881
        %v2985 = vpop.f32.mrf.mxu0
        %v2986 = vadd.f32 0.0, %v2985
        %v2987 = vpop.f32.mrf.mxu0
        %v2988 = vadd.f32 0.0, %v2987
        %v2989 = vpop.f32.mrf.mxu0
        %v2990 = vadd.f32 0.0, %v2989
        %v2991 = vpop.f32.mrf.mxu0
        %v2992 = vadd.f32 0.0, %v2991
        %2993 = vmatprep.mubr.bf16.mxu0 %v886
        %2994 = vmatmul.mubr.bf16.gmra.mxu0 %v885
        %v2995 = vpop.f32.mrf.mxu0
        %v2996 = vadd.f32 0.0, %v2995
        %v2997 = vpop.f32.mrf.mxu0
        %v2998 = vadd.f32 0.0, %v2997
        %v2999 = vpop.f32.mrf.mxu0
        %v3000 = vadd.f32 0.0, %v2999
        %v3001 = vpop.f32.mrf.mxu0
        %v3002 = vadd.f32 0.0, %v3001
        %3003 = vdwg.mxu0
        %3004 = vmatprep.subr.bf16.mxu0 %v2059
        %3005 = vmatpush1.bf16.msra.mxu0 %v2058
        %3006 = vmatprep.subr.bf16.mxu0 %v2050
        %3007 = vmatpush1.bf16.msra.mxu0 %v2049
        %3008 = vmatprep.subr.bf16.mxu0 %v2041
        %3009 = vmatpush1.bf16.msra.mxu0 %v2040
        %3010 = vmatprep.subr.bf16.mxu0 %v2032
        %3011 = vmatpush1.bf16.msra.mxu0 %v2031
        %3012 = vmatprep.subr.bf16.mxu0 %v2023
        %3013 = vmatpush1.bf16.msra.mxu0 %v2022
        %3014 = vmatprep.subr.bf16.mxu0 %v2014
        %3015 = vmatpush1.bf16.msra.mxu0 %v2013
        %3016 = vmatprep.subr.bf16.mxu0 %v2005
        %3017 = vmatpush1.bf16.msra.mxu0 %v2004
        %3018 = vmatprep.subr.bf16.mxu0 %v1996
        %3019 = vmatpush1.bf16.msra.mxu0 %v1995
        %3020 = vmatprep.subr.bf16.mxu0 %v2131
        %3021 = vmatpush2.bf16.msra.mxu0 %v2130
        %3022 = vmatprep.subr.bf16.mxu0 %v2122
        %3023 = vmatpush2.bf16.msra.mxu0 %v2121
        %3024 = vmatprep.subr.bf16.mxu0 %v2113
        %3025 = vmatpush2.bf16.msra.mxu0 %v2112
        %3026 = vmatprep.subr.bf16.mxu0 %v2104
        %3027 = vmatpush2.bf16.msra.mxu0 %v2103
        %3028 = vmatprep.subr.bf16.mxu0 %v2095
        %3029 = vmatpush2.bf16.msra.mxu0 %v2094
        %3030 = vmatprep.subr.bf16.mxu0 %v2086
        %3031 = vmatpush2.bf16.msra.mxu0 %v2085
        %3032 = vmatprep.subr.bf16.mxu0 %v2077
        %3033 = vmatpush2.bf16.msra.mxu0 %v2076
        %3034 = vmatprep.subr.bf16.mxu0 %v2068
        %3035 = vmatpush2.bf16.msra.mxu0 %v2067
        %3036 = vmatprep.mubr.bf16.mxu0 %v828
        %3037 = vmatmul.mubr.bf16.gmra.mxu0 %v827
        %v3038 = vpop.f32.mrf.mxu0
        %v3039 = vadd.f32 %v2846, %v3038
        %v3040 = vpop.f32.mrf.mxu0
        %v3041 = vadd.f32 %v2848, %v3040
        %v3042 = vpop.f32.mrf.mxu0
        %v3043 = vadd.f32 %v2850, %v3042
        %v3044 = vpop.f32.mrf.mxu0
        %v3045 = vadd.f32 %v2852, %v3044
        %3046 = vmatprep.mubr.bf16.mxu0 %v832
        %3047 = vmatmul.mubr.bf16.gmra.mxu0 %v831
        %v3048 = vpop.f32.mrf.mxu0
        %v3049 = vadd.f32 %v2856, %v3048
        %v3050 = vpop.f32.mrf.mxu0
        %v3051 = vadd.f32 %v2858, %v3050
        %v3052 = vpop.f32.mrf.mxu0
        %v3053 = vadd.f32 %v2860, %v3052
        %v3054 = vpop.f32.mrf.mxu0
        %v3055 = vadd.f32 %v2862, %v3054
        %3056 = vmatprep.mubr.bf16.mxu0 %v836
        %3057 = vmatmul.mubr.bf16.gmra.mxu0 %v835
        %v3058 = vpop.f32.mrf.mxu0
        %v3059 = vadd.f32 %v2866, %v3058
        %v3060 = vpop.f32.mrf.mxu0
        %v3061 = vadd.f32 %v2868, %v3060
        %v3062 = vpop.f32.mrf.mxu0
        %v3063 = vadd.f32 %v2870, %v3062
        %v3064 = vpop.f32.mrf.mxu0
        %v3065 = vadd.f32 %v2872, %v3064
        %3066 = vmatprep.mubr.bf16.mxu0 %v840
        %3067 = vmatmul.mubr.bf16.gmra.mxu0 %v839
        %v3068 = vpop.f32.mrf.mxu0
        %v3069 = vadd.f32 %v2876, %v3068
        %v3070 = vpop.f32.mrf.mxu0
        %v3071 = vadd.f32 %v2878, %v3070
        %v3072 = vpop.f32.mrf.mxu0
        %v3073 = vadd.f32 %v2880, %v3072
        %v3074 = vpop.f32.mrf.mxu0
        %v3075 = vadd.f32 %v2882, %v3074
        %3076 = vmatprep.mubr.bf16.mxu0 %v844
        %3077 = vmatmul.mubr.bf16.gmra.mxu0 %v843
        %v3078 = vpop.f32.mrf.mxu0
        %v3079 = vadd.f32 %v2886, %v3078
        %v3080 = vpop.f32.mrf.mxu0
        %v3081 = vadd.f32 %v2888, %v3080
        %v3082 = vpop.f32.mrf.mxu0
        %v3083 = vadd.f32 %v2890, %v3082
        %v3084 = vpop.f32.mrf.mxu0
        %v3085 = vadd.f32 %v2892, %v3084
        %3086 = vmatprep.mubr.bf16.mxu0 %v848
        %3087 = vmatmul.mubr.bf16.gmra.mxu0 %v847
        %v3088 = vpop.f32.mrf.mxu0
        %v3089 = vadd.f32 %v2896, %v3088
        %v3090 = vpop.f32.mrf.mxu0
        %v3091 = vadd.f32 %v2898, %v3090
        %v3092 = vpop.f32.mrf.mxu0
        %v3093 = vadd.f32 %v2900, %v3092
        %v3094 = vpop.f32.mrf.mxu0
        %v3095 = vadd.f32 %v2902, %v3094
        %3096 = vmatprep.mubr.bf16.mxu0 %v852
        %3097 = vmatmul.mubr.bf16.gmra.mxu0 %v851
        %v3098 = vpop.f32.mrf.mxu0
        %v3099 = vadd.f32 %v2906, %v3098
        %v3100 = vpop.f32.mrf.mxu0
        %v3101 = vadd.f32 %v2908, %v3100
        %v3102 = vpop.f32.mrf.mxu0
        %v3103 = vadd.f32 %v2910, %v3102
        %v3104 = vpop.f32.mrf.mxu0
        %v3105 = vadd.f32 %v2912, %v3104
        %3106 = vmatprep.mubr.bf16.mxu0 %v856
        %3107 = vmatmul.mubr.bf16.gmra.mxu0 %v855
        %v3108 = vpop.f32.mrf.mxu0
        %v3109 = vadd.f32 %v2916, %v3108
        %v3110 = vpop.f32.mrf.mxu0
        %v3111 = vadd.f32 %v2918, %v3110
        %v3112 = vpop.f32.mrf.mxu0
        %v3113 = vadd.f32 %v2920, %v3112
        %v3114 = vpop.f32.mrf.mxu0
        %v3115 = vadd.f32 %v2922, %v3114
        %3116 = vmatprep.mubr.bf16.mxu0 %v860
        %3117 = vmatmul.mubr.bf16.gmra.mxu0 %v859
        %v3118 = vpop.f32.mrf.mxu0
        %v3119 = vadd.f32 %v2926, %v3118
        %v3120 = vpop.f32.mrf.mxu0
        %v3121 = vadd.f32 %v2928, %v3120
        %v3122 = vpop.f32.mrf.mxu0
        %v3123 = vadd.f32 %v2930, %v3122
        %v3124 = vpop.f32.mrf.mxu0
        %v3125 = vadd.f32 %v2932, %v3124
        %3126 = vmatprep.mubr.bf16.mxu0 %v864
        %3127 = vmatmul.mubr.bf16.gmra.mxu0 %v863
        %v3128 = vpop.f32.mrf.mxu0
        %v3129 = vadd.f32 %v2936, %v3128
        %v3130 = vpop.f32.mrf.mxu0
        %v3131 = vadd.f32 %v2938, %v3130
        %v3132 = vpop.f32.mrf.mxu0
        %v3133 = vadd.f32 %v2940, %v3132
        %v3134 = vpop.f32.mrf.mxu0
        %v3135 = vadd.f32 %v2942, %v3134
        %3136 = vmatprep.mubr.bf16.mxu0 %v868
        %3137 = vmatmul.mubr.bf16.gmra.mxu0 %v867
        %v3138 = vpop.f32.mrf.mxu0
        %v3139 = vadd.f32 %v2946, %v3138
        %v3140 = vpop.f32.mrf.mxu0
        %v3141 = vadd.f32 %v2948, %v3140
        %v3142 = vpop.f32.mrf.mxu0
        %v3143 = vadd.f32 %v2950, %v3142
        %v3144 = vpop.f32.mrf.mxu0
        %v3145 = vadd.f32 %v2952, %v3144
        %3146 = vmatprep.mubr.bf16.mxu0 %v872
        %3147 = vmatmul.mubr.bf16.gmra.mxu0 %v871
        %v3148 = vpop.f32.mrf.mxu0
        %v3149 = vadd.f32 %v2956, %v3148
        %v3150 = vpop.f32.mrf.mxu0
        %v3151 = vadd.f32 %v2958, %v3150
        %v3152 = vpop.f32.mrf.mxu0
        %v3153 = vadd.f32 %v2960, %v3152
        %v3154 = vpop.f32.mrf.mxu0
        %v3155 = vadd.f32 %v2962, %v3154
        %3156 = vmatprep.mubr.bf16.mxu0 %v876
        %3157 = vmatmul.mubr.bf16.gmra.mxu0 %v875
        %v3158 = vpop.f32.mrf.mxu0
        %v3159 = vadd.f32 %v2966, %v3158
        %v3160 = vpop.f32.mrf.mxu0
        %v3161 = vadd.f32 %v2968, %v3160
        %v3162 = vpop.f32.mrf.mxu0
        %v3163 = vadd.f32 %v2970, %v3162
        %v3164 = vpop.f32.mrf.mxu0
        %v3165 = vadd.f32 %v2972, %v3164
        %3166 = vmatprep.mubr.bf16.mxu0 %v880
        %3167 = vmatmul.mubr.bf16.gmra.mxu0 %v879
        %v3168 = vpop.f32.mrf.mxu0
        %v3169 = vadd.f32 %v2976, %v3168
        %v3170 = vpop.f32.mrf.mxu0
        %v3171 = vadd.f32 %v2978, %v3170
        %v3172 = vpop.f32.mrf.mxu0
        %v3173 = vadd.f32 %v2980, %v3172
        %v3174 = vpop.f32.mrf.mxu0
        %v3175 = vadd.f32 %v2982, %v3174
        %3176 = vmatprep.mubr.bf16.mxu0 %v884
        %3177 = vmatmul.mubr.bf16.gmra.mxu0 %v883
        %v3178 = vpop.f32.mrf.mxu0
        %v3179 = vadd.f32 %v2986, %v3178
        %v3180 = vpop.f32.mrf.mxu0
        %v3181 = vadd.f32 %v2988, %v3180
        %v3182 = vpop.f32.mrf.mxu0
        %v3183 = vadd.f32 %v2990, %v3182
        %v3184 = vpop.f32.mrf.mxu0
        %v3185 = vadd.f32 %v2992, %v3184
        %3186 = vmatprep.mubr.bf16.mxu0 %v888
        %3187 = vmatmul.mubr.bf16.gmra.mxu0 %v887
        %v3188 = vpop.f32.mrf.mxu0
        %v3189 = vadd.f32 %v2996, %v3188
        %v3190 = vpop.f32.mrf.mxu0
        %v3191 = vadd.f32 %v2998, %v3190
        %v3192 = vpop.f32.mrf.mxu0
        %v3193 = vadd.f32 %v3000, %v3192
        %v3194 = vpop.f32.mrf.mxu0
        %v3195 = vadd.f32 %v3002, %v3194
        %3196 = vdwg.mxu0
        %3197 = vmatprep.subr.bf16.mxu0 %v1917
        %3198 = vmatpush1.bf16.msra.mxu0 %v1916
        %3199 = vmatprep.subr.bf16.mxu0 %v1908
        %3200 = vmatpush1.bf16.msra.mxu0 %v1907
        %3201 = vmatprep.subr.bf16.mxu0 %v1899
        %3202 = vmatpush1.bf16.msra.mxu0 %v1898
        %3203 = vmatprep.subr.bf16.mxu0 %v1890
        %3204 = vmatpush1.bf16.msra.mxu0 %v1889
        %3205 = vmatprep.subr.bf16.mxu0 %v1881
        %3206 = vmatpush1.bf16.msra.mxu0 %v1880
        %3207 = vmatprep.subr.bf16.mxu0 %v1872
        %3208 = vmatpush1.bf16.msra.mxu0 %v1871
        %3209 = vmatprep.subr.bf16.mxu0 %v1863
        %3210 = vmatpush1.bf16.msra.mxu0 %v1862
        %3211 = vmatprep.subr.bf16.mxu0 %v1854
        %3212 = vmatpush1.bf16.msra.mxu0 %v1853
        %3213 = vmatprep.subr.bf16.mxu0 %v1989
        %3214 = vmatpush2.bf16.msra.mxu0 %v1988
        %3215 = vmatprep.subr.bf16.mxu0 %v1980
        %3216 = vmatpush2.bf16.msra.mxu0 %v1979
        %3217 = vmatprep.subr.bf16.mxu0 %v1971
        %3218 = vmatpush2.bf16.msra.mxu0 %v1970
        %3219 = vmatprep.subr.bf16.mxu0 %v1962
        %3220 = vmatpush2.bf16.msra.mxu0 %v1961
        %3221 = vmatprep.subr.bf16.mxu0 %v1953
        %3222 = vmatpush2.bf16.msra.mxu0 %v1952
        %3223 = vmatprep.subr.bf16.mxu0 %v1944
        %3224 = vmatpush2.bf16.msra.mxu0 %v1943
        %3225 = vmatprep.subr.bf16.mxu0 %v1935
        %3226 = vmatpush2.bf16.msra.mxu0 %v1934
        %3227 = vmatprep.subr.bf16.mxu0 %v1926
        %3228 = vmatpush2.bf16.msra.mxu0 %v1925
        %3229 = vmatprep.mubr.bf16.mxu0 %v826
        %3230 = vmatmul.mubr.bf16.gmra.mxu0 %v825
        %v3231 = vpop.f32.mrf.mxu0
        %v3232 = vadd.f32 0.0, %v3231
        %v3233 = vpop.f32.mrf.mxu0
        %v3234 = vadd.f32 0.0, %v3233
        %v3235 = vpop.f32.mrf.mxu0
        %v3236 = vadd.f32 0.0, %v3235
        %v3237 = vpop.f32.mrf.mxu0
        %v3238 = vadd.f32 0.0, %v3237
        %3239 = vmatprep.mubr.bf16.mxu0 %v830
        %3240 = vmatmul.mubr.bf16.gmra.mxu0 %v829
        %v3241 = vpop.f32.mrf.mxu0
        %v3242 = vadd.f32 0.0, %v3241
        %v3243 = vpop.f32.mrf.mxu0
        %v3244 = vadd.f32 0.0, %v3243
        %v3245 = vpop.f32.mrf.mxu0
        %v3246 = vadd.f32 0.0, %v3245
        %v3247 = vpop.f32.mrf.mxu0
        %v3248 = vadd.f32 0.0, %v3247
        %3249 = vmatprep.mubr.bf16.mxu0 %v834
        %3250 = vmatmul.mubr.bf16.gmra.mxu0 %v833
        %v3251 = vpop.f32.mrf.mxu0
        %v3252 = vadd.f32 0.0, %v3251
        %v3253 = vpop.f32.mrf.mxu0
        %v3254 = vadd.f32 0.0, %v3253
        %v3255 = vpop.f32.mrf.mxu0
        %v3256 = vadd.f32 0.0, %v3255
        %v3257 = vpop.f32.mrf.mxu0
        %v3258 = vadd.f32 0.0, %v3257
        %3259 = vmatprep.mubr.bf16.mxu0 %v838
        %3260 = vmatmul.mubr.bf16.gmra.mxu0 %v837
        %v3261 = vpop.f32.mrf.mxu0
        %v3262 = vadd.f32 0.0, %v3261
        %v3263 = vpop.f32.mrf.mxu0
        %v3264 = vadd.f32 0.0, %v3263
        %v3265 = vpop.f32.mrf.mxu0
        %v3266 = vadd.f32 0.0, %v3265
        %v3267 = vpop.f32.mrf.mxu0
        %v3268 = vadd.f32 0.0, %v3267
        %3269 = vmatprep.mubr.bf16.mxu0 %v842
        %3270 = vmatmul.mubr.bf16.gmra.mxu0 %v841
        %v3271 = vpop.f32.mrf.mxu0
        %v3272 = vadd.f32 0.0, %v3271
        %v3273 = vpop.f32.mrf.mxu0
        %v3274 = vadd.f32 0.0, %v3273
        %v3275 = vpop.f32.mrf.mxu0
        %v3276 = vadd.f32 0.0, %v3275
        %v3277 = vpop.f32.mrf.mxu0
        %v3278 = vadd.f32 0.0, %v3277
        %3279 = vmatprep.mubr.bf16.mxu0 %v846
        %3280 = vmatmul.mubr.bf16.gmra.mxu0 %v845
        %v3281 = vpop.f32.mrf.mxu0
        %v3282 = vadd.f32 0.0, %v3281
        %v3283 = vpop.f32.mrf.mxu0
        %v3284 = vadd.f32 0.0, %v3283
        %v3285 = vpop.f32.mrf.mxu0
        %v3286 = vadd.f32 0.0, %v3285
        %v3287 = vpop.f32.mrf.mxu0
        %v3288 = vadd.f32 0.0, %v3287
        %3289 = vmatprep.mubr.bf16.mxu0 %v850
        %3290 = vmatmul.mubr.bf16.gmra.mxu0 %v849
        %v3291 = vpop.f32.mrf.mxu0
        %v3292 = vadd.f32 0.0, %v3291
        %v3293 = vpop.f32.mrf.mxu0
        %v3294 = vadd.f32 0.0, %v3293
        %v3295 = vpop.f32.mrf.mxu0
        %v3296 = vadd.f32 0.0, %v3295
        %v3297 = vpop.f32.mrf.mxu0
        %v3298 = vadd.f32 0.0, %v3297
        %3299 = vmatprep.mubr.bf16.mxu0 %v854
        %3300 = vmatmul.mubr.bf16.gmra.mxu0 %v853
        %v3301 = vpop.f32.mrf.mxu0
        %v3302 = vadd.f32 0.0, %v3301
        %v3303 = vpop.f32.mrf.mxu0
        %v3304 = vadd.f32 0.0, %v3303
        %v3305 = vpop.f32.mrf.mxu0
        %v3306 = vadd.f32 0.0, %v3305
        %v3307 = vpop.f32.mrf.mxu0
        %v3308 = vadd.f32 0.0, %v3307
        %3309 = vmatprep.mubr.bf16.mxu0 %v858
        %3310 = vmatmul.mubr.bf16.gmra.mxu0 %v857
        %v3311 = vpop.f32.mrf.mxu0
        %v3312 = vadd.f32 0.0, %v3311
        %v3313 = vpop.f32.mrf.mxu0
        %v3314 = vadd.f32 0.0, %v3313
        %v3315 = vpop.f32.mrf.mxu0
        %v3316 = vadd.f32 0.0, %v3315
        %v3317 = vpop.f32.mrf.mxu0
        %v3318 = vadd.f32 0.0, %v3317
        %3319 = vmatprep.mubr.bf16.mxu0 %v862
        %3320 = vmatmul.mubr.bf16.gmra.mxu0 %v861
        %v3321 = vpop.f32.mrf.mxu0
        %v3322 = vadd.f32 0.0, %v3321
        %v3323 = vpop.f32.mrf.mxu0
        %v3324 = vadd.f32 0.0, %v3323
        %v3325 = vpop.f32.mrf.mxu0
        %v3326 = vadd.f32 0.0, %v3325
        %v3327 = vpop.f32.mrf.mxu0
        %v3328 = vadd.f32 0.0, %v3327
        %3329 = vmatprep.mubr.bf16.mxu0 %v866
        %3330 = vmatmul.mubr.bf16.gmra.mxu0 %v865
        %v3331 = vpop.f32.mrf.mxu0
        %v3332 = vadd.f32 0.0, %v3331
        %v3333 = vpop.f32.mrf.mxu0
        %v3334 = vadd.f32 0.0, %v3333
        %v3335 = vpop.f32.mrf.mxu0
        %v3336 = vadd.f32 0.0, %v3335
        %v3337 = vpop.f32.mrf.mxu0
        %v3338 = vadd.f32 0.0, %v3337
        %3339 = vmatprep.mubr.bf16.mxu0 %v870
        %3340 = vmatmul.mubr.bf16.gmra.mxu0 %v869
        %v3341 = vpop.f32.mrf.mxu0
        %v3342 = vadd.f32 0.0, %v3341
        %v3343 = vpop.f32.mrf.mxu0
        %v3344 = vadd.f32 0.0, %v3343
        %v3345 = vpop.f32.mrf.mxu0
        %v3346 = vadd.f32 0.0, %v3345
        %v3347 = vpop.f32.mrf.mxu0
        %v3348 = vadd.f32 0.0, %v3347
        %3349 = vmatprep.mubr.bf16.mxu0 %v874
        %3350 = vmatmul.mubr.bf16.gmra.mxu0 %v873
        %v3351 = vpop.f32.mrf.mxu0
        %v3352 = vadd.f32 0.0, %v3351
        %v3353 = vpop.f32.mrf.mxu0
        %v3354 = vadd.f32 0.0, %v3353
        %v3355 = vpop.f32.mrf.mxu0
        %v3356 = vadd.f32 0.0, %v3355
        %v3357 = vpop.f32.mrf.mxu0
        %v3358 = vadd.f32 0.0, %v3357
        %3359 = vmatprep.mubr.bf16.mxu0 %v878
        %3360 = vmatmul.mubr.bf16.gmra.mxu0 %v877
        %v3361 = vpop.f32.mrf.mxu0
        %v3362 = vadd.f32 0.0, %v3361
        %v3363 = vpop.f32.mrf.mxu0
        %v3364 = vadd.f32 0.0, %v3363
        %v3365 = vpop.f32.mrf.mxu0
        %v3366 = vadd.f32 0.0, %v3365
        %v3367 = vpop.f32.mrf.mxu0
        %v3368 = vadd.f32 0.0, %v3367
        %3369 = vmatprep.mubr.bf16.mxu0 %v882
        %3370 = vmatmul.mubr.bf16.gmra.mxu0 %v881
        %v3371 = vpop.f32.mrf.mxu0
        %v3372 = vadd.f32 0.0, %v3371
        %v3373 = vpop.f32.mrf.mxu0
        %v3374 = vadd.f32 0.0, %v3373
        %v3375 = vpop.f32.mrf.mxu0
        %v3376 = vadd.f32 0.0, %v3375
        %v3377 = vpop.f32.mrf.mxu0
        %v3378 = vadd.f32 0.0, %v3377
        %3379 = vmatprep.mubr.bf16.mxu0 %v886
        %3380 = vmatmul.mubr.bf16.gmra.mxu0 %v885
        %v3381 = vpop.f32.mrf.mxu0
        %v3382 = vadd.f32 0.0, %v3381
        %v3383 = vpop.f32.mrf.mxu0
        %v3384 = vadd.f32 0.0, %v3383
        %v3385 = vpop.f32.mrf.mxu0
        %v3386 = vadd.f32 0.0, %v3385
        %v3387 = vpop.f32.mrf.mxu0
        %v3388 = vadd.f32 0.0, %v3387
        %3389 = vdwg.mxu0
        %3390 = vmatprep.subr.bf16.mxu0 %v2061
        %3391 = vmatpush1.bf16.msra.mxu0 %v2060
        %3392 = vmatprep.subr.bf16.mxu0 %v2052
        %3393 = vmatpush1.bf16.msra.mxu0 %v2051
        %3394 = vmatprep.subr.bf16.mxu0 %v2043
        %3395 = vmatpush1.bf16.msra.mxu0 %v2042
        %3396 = vmatprep.subr.bf16.mxu0 %v2034
        %3397 = vmatpush1.bf16.msra.mxu0 %v2033
        %3398 = vmatprep.subr.bf16.mxu0 %v2025
        %3399 = vmatpush1.bf16.msra.mxu0 %v2024
        %3400 = vmatprep.subr.bf16.mxu0 %v2016
        %3401 = vmatpush1.bf16.msra.mxu0 %v2015
        %3402 = vmatprep.subr.bf16.mxu0 %v2007
        %3403 = vmatpush1.bf16.msra.mxu0 %v2006
        %3404 = vmatprep.subr.bf16.mxu0 %v1998
        %3405 = vmatpush1.bf16.msra.mxu0 %v1997
        %3406 = vmatprep.subr.bf16.mxu0 %v2133
        %3407 = vmatpush2.bf16.msra.mxu0 %v2132
        %3408 = vmatprep.subr.bf16.mxu0 %v2124
        %3409 = vmatpush2.bf16.msra.mxu0 %v2123
        %3410 = vmatprep.subr.bf16.mxu0 %v2115
        %3411 = vmatpush2.bf16.msra.mxu0 %v2114
        %3412 = vmatprep.subr.bf16.mxu0 %v2106
        %3413 = vmatpush2.bf16.msra.mxu0 %v2105
        %3414 = vmatprep.subr.bf16.mxu0 %v2097
        %3415 = vmatpush2.bf16.msra.mxu0 %v2096
        %3416 = vmatprep.subr.bf16.mxu0 %v2088
        %3417 = vmatpush2.bf16.msra.mxu0 %v2087
        %3418 = vmatprep.subr.bf16.mxu0 %v2079
        %3419 = vmatpush2.bf16.msra.mxu0 %v2078
        %3420 = vmatprep.subr.bf16.mxu0 %v2070
        %3421 = vmatpush2.bf16.msra.mxu0 %v2069
        %3422 = vmatprep.mubr.bf16.mxu0 %v828
        %3423 = vmatmul.mubr.bf16.gmra.mxu0 %v827
        %v3424 = vpop.f32.mrf.mxu0
        %v3425 = vadd.f32 %v3232, %v3424
        %v3426 = vpop.f32.mrf.mxu0
        %v3427 = vadd.f32 %v3234, %v3426
        %v3428 = vpop.f32.mrf.mxu0
        %v3429 = vadd.f32 %v3236, %v3428
        %v3430 = vpop.f32.mrf.mxu0
        %v3431 = vadd.f32 %v3238, %v3430
        %3432 = vmatprep.mubr.bf16.mxu0 %v832
        %3433 = vmatmul.mubr.bf16.gmra.mxu0 %v831
        %v3434 = vpop.f32.mrf.mxu0
        %v3435 = vadd.f32 %v3242, %v3434
        %v3436 = vpop.f32.mrf.mxu0
        %v3437 = vadd.f32 %v3244, %v3436
        %v3438 = vpop.f32.mrf.mxu0
        %v3439 = vadd.f32 %v3246, %v3438
        %v3440 = vpop.f32.mrf.mxu0
        %v3441 = vadd.f32 %v3248, %v3440
        %3442 = vmatprep.mubr.bf16.mxu0 %v836
        %3443 = vmatmul.mubr.bf16.gmra.mxu0 %v835
        %v3444 = vpop.f32.mrf.mxu0
        %v3445 = vadd.f32 %v3252, %v3444
        %v3446 = vpop.f32.mrf.mxu0
        %v3447 = vadd.f32 %v3254, %v3446
        %v3448 = vpop.f32.mrf.mxu0
        %v3449 = vadd.f32 %v3256, %v3448
        %v3450 = vpop.f32.mrf.mxu0
        %v3451 = vadd.f32 %v3258, %v3450
        %3452 = vmatprep.mubr.bf16.mxu0 %v840
        %3453 = vmatmul.mubr.bf16.gmra.mxu0 %v839
        %v3454 = vpop.f32.mrf.mxu0
        %v3455 = vadd.f32 %v3262, %v3454
        %v3456 = vpop.f32.mrf.mxu0
        %v3457 = vadd.f32 %v3264, %v3456
        %v3458 = vpop.f32.mrf.mxu0
        %v3459 = vadd.f32 %v3266, %v3458
        %v3460 = vpop.f32.mrf.mxu0
        %v3461 = vadd.f32 %v3268, %v3460
        %3462 = vmatprep.mubr.bf16.mxu0 %v844
        %3463 = vmatmul.mubr.bf16.gmra.mxu0 %v843
        %v3464 = vpop.f32.mrf.mxu0
        %v3465 = vadd.f32 %v3272, %v3464
        %v3466 = vpop.f32.mrf.mxu0
        %v3467 = vadd.f32 %v3274, %v3466
        %v3468 = vpop.f32.mrf.mxu0
        %v3469 = vadd.f32 %v3276, %v3468
        %v3470 = vpop.f32.mrf.mxu0
        %v3471 = vadd.f32 %v3278, %v3470
        %3472 = vmatprep.mubr.bf16.mxu0 %v848
        %3473 = vmatmul.mubr.bf16.gmra.mxu0 %v847
        %v3474 = vpop.f32.mrf.mxu0
        %v3475 = vadd.f32 %v3282, %v3474
        %v3476 = vpop.f32.mrf.mxu0
        %v3477 = vadd.f32 %v3284, %v3476
        %v3478 = vpop.f32.mrf.mxu0
        %v3479 = vadd.f32 %v3286, %v3478
        %v3480 = vpop.f32.mrf.mxu0
        %v3481 = vadd.f32 %v3288, %v3480
        %3482 = vmatprep.mubr.bf16.mxu0 %v852
        %3483 = vmatmul.mubr.bf16.gmra.mxu0 %v851
        %v3484 = vpop.f32.mrf.mxu0
        %v3485 = vadd.f32 %v3292, %v3484
        %v3486 = vpop.f32.mrf.mxu0
        %v3487 = vadd.f32 %v3294, %v3486
        %v3488 = vpop.f32.mrf.mxu0
        %v3489 = vadd.f32 %v3296, %v3488
        %v3490 = vpop.f32.mrf.mxu0
        %v3491 = vadd.f32 %v3298, %v3490
        %3492 = vmatprep.mubr.bf16.mxu0 %v856
        %3493 = vmatmul.mubr.bf16.gmra.mxu0 %v855
        %v3494 = vpop.f32.mrf.mxu0
        %v3495 = vadd.f32 %v3302, %v3494
        %v3496 = vpop.f32.mrf.mxu0
        %v3497 = vadd.f32 %v3304, %v3496
        %v3498 = vpop.f32.mrf.mxu0
        %v3499 = vadd.f32 %v3306, %v3498
        %v3500 = vpop.f32.mrf.mxu0
        %v3501 = vadd.f32 %v3308, %v3500
        %3502 = vmatprep.mubr.bf16.mxu0 %v860
        %3503 = vmatmul.mubr.bf16.gmra.mxu0 %v859
        %v3504 = vpop.f32.mrf.mxu0
        %v3505 = vadd.f32 %v3312, %v3504
        %v3506 = vpop.f32.mrf.mxu0
        %v3507 = vadd.f32 %v3314, %v3506
        %v3508 = vpop.f32.mrf.mxu0
        %v3509 = vadd.f32 %v3316, %v3508
        %v3510 = vpop.f32.mrf.mxu0
        %v3511 = vadd.f32 %v3318, %v3510
        %3512 = vmatprep.mubr.bf16.mxu0 %v864
        %3513 = vmatmul.mubr.bf16.gmra.mxu0 %v863
        %v3514 = vpop.f32.mrf.mxu0
        %v3515 = vadd.f32 %v3322, %v3514
        %v3516 = vpop.f32.mrf.mxu0
        %v3517 = vadd.f32 %v3324, %v3516
        %v3518 = vpop.f32.mrf.mxu0
        %v3519 = vadd.f32 %v3326, %v3518
        %v3520 = vpop.f32.mrf.mxu0
        %v3521 = vadd.f32 %v3328, %v3520
        %3522 = vmatprep.mubr.bf16.mxu0 %v868
        %3523 = vmatmul.mubr.bf16.gmra.mxu0 %v867
        %v3524 = vpop.f32.mrf.mxu0
        %v3525 = vadd.f32 %v3332, %v3524
        %v3526 = vpop.f32.mrf.mxu0
        %v3527 = vadd.f32 %v3334, %v3526
        %v3528 = vpop.f32.mrf.mxu0
        %v3529 = vadd.f32 %v3336, %v3528
        %v3530 = vpop.f32.mrf.mxu0
        %v3531 = vadd.f32 %v3338, %v3530
        %3532 = vmatprep.mubr.bf16.mxu0 %v872
        %3533 = vmatmul.mubr.bf16.gmra.mxu0 %v871
        %v3534 = vpop.f32.mrf.mxu0
        %v3535 = vadd.f32 %v3342, %v3534
        %v3536 = vpop.f32.mrf.mxu0
        %v3537 = vadd.f32 %v3344, %v3536
        %v3538 = vpop.f32.mrf.mxu0
        %v3539 = vadd.f32 %v3346, %v3538
        %v3540 = vpop.f32.mrf.mxu0
        %v3541 = vadd.f32 %v3348, %v3540
        %3542 = vmatprep.mubr.bf16.mxu0 %v876
        %3543 = vmatmul.mubr.bf16.gmra.mxu0 %v875
        %v3544 = vpop.f32.mrf.mxu0
        %v3545 = vadd.f32 %v3352, %v3544
        %v3546 = vpop.f32.mrf.mxu0
        %v3547 = vadd.f32 %v3354, %v3546
        %v3548 = vpop.f32.mrf.mxu0
        %v3549 = vadd.f32 %v3356, %v3548
        %v3550 = vpop.f32.mrf.mxu0
        %v3551 = vadd.f32 %v3358, %v3550
        %3552 = vmatprep.mubr.bf16.mxu0 %v880
        %3553 = vmatmul.mubr.bf16.gmra.mxu0 %v879
        %v3554 = vpop.f32.mrf.mxu0
        %v3555 = vadd.f32 %v3362, %v3554
        %v3556 = vpop.f32.mrf.mxu0
        %v3557 = vadd.f32 %v3364, %v3556
        %v3558 = vpop.f32.mrf.mxu0
        %v3559 = vadd.f32 %v3366, %v3558
        %v3560 = vpop.f32.mrf.mxu0
        %v3561 = vadd.f32 %v3368, %v3560
        %3562 = vmatprep.mubr.bf16.mxu0 %v884
        %3563 = vmatmul.mubr.bf16.gmra.mxu0 %v883
        %v3564 = vpop.f32.mrf.mxu0
        %v3565 = vadd.f32 %v3372, %v3564
        %v3566 = vpop.f32.mrf.mxu0
        %v3567 = vadd.f32 %v3374, %v3566
        %v3568 = vpop.f32.mrf.mxu0
        %v3569 = vadd.f32 %v3376, %v3568
        %v3570 = vpop.f32.mrf.mxu0
        %v3571 = vadd.f32 %v3378, %v3570
        %3572 = vmatprep.mubr.bf16.mxu0 %v888
        %3573 = vmatmul.mubr.bf16.gmra.mxu0 %v887
        %v3574 = vpop.f32.mrf.mxu0
        %v3575 = vadd.f32 %v3382, %v3574
        %v3576 = vpop.f32.mrf.mxu0
        %v3577 = vadd.f32 %v3384, %v3576
        %v3578 = vpop.f32.mrf.mxu0
        %v3579 = vadd.f32 %v3386, %v3578
        %v3580 = vpop.f32.mrf.mxu0
        %v3581 = vadd.f32 %v3388, %v3580
        %3582 = vdwg.mxu0
        %3583 = vmatprep.subr.bf16.mxu0 %v1919
        %3584 = vmatpush1.bf16.msra.mxu0 %v1918
        %3585 = vmatprep.subr.bf16.mxu0 %v1910
        %3586 = vmatpush1.bf16.msra.mxu0 %v1909
        %3587 = vmatprep.subr.bf16.mxu0 %v1901
        %3588 = vmatpush1.bf16.msra.mxu0 %v1900
        %3589 = vmatprep.subr.bf16.mxu0 %v1892
        %3590 = vmatpush1.bf16.msra.mxu0 %v1891
        %3591 = vmatprep.subr.bf16.mxu0 %v1883
        %3592 = vmatpush1.bf16.msra.mxu0 %v1882
        %3593 = vmatprep.subr.bf16.mxu0 %v1874
        %3594 = vmatpush1.bf16.msra.mxu0 %v1873
        %3595 = vmatprep.subr.bf16.mxu0 %v1865
        %3596 = vmatpush1.bf16.msra.mxu0 %v1864
        %3597 = vmatprep.subr.bf16.mxu0 %v1856
        %3598 = vmatpush1.bf16.msra.mxu0 %v1855
        %3599 = vmatprep.subr.bf16.mxu0 %v1991
        %3600 = vmatpush2.bf16.msra.mxu0 %v1990
        %3601 = vmatprep.subr.bf16.mxu0 %v1982
        %3602 = vmatpush2.bf16.msra.mxu0 %v1981
        %3603 = vmatprep.subr.bf16.mxu0 %v1973
        %3604 = vmatpush2.bf16.msra.mxu0 %v1972
        %3605 = vmatprep.subr.bf16.mxu0 %v1964
        %3606 = vmatpush2.bf16.msra.mxu0 %v1963
        %3607 = vmatprep.subr.bf16.mxu0 %v1955
        %3608 = vmatpush2.bf16.msra.mxu0 %v1954
        %3609 = vmatprep.subr.bf16.mxu0 %v1946
        %3610 = vmatpush2.bf16.msra.mxu0 %v1945
        %3611 = vmatprep.subr.bf16.mxu0 %v1937
        %3612 = vmatpush2.bf16.msra.mxu0 %v1936
        %3613 = vmatprep.subr.bf16.mxu0 %v1928
        %3614 = vmatpush2.bf16.msra.mxu0 %v1927
        %3615 = vmatprep.mubr.bf16.mxu0 %v826
        %3616 = vmatmul.mubr.bf16.gmra.mxu0 %v825
        %v3617 = vpop.f32.mrf.mxu0
        %v3618 = vadd.f32 0.0, %v3617
        %v3619 = vpop.f32.mrf.mxu0
        %v3620 = vadd.f32 0.0, %v3619
        %v3621 = vpop.f32.mrf.mxu0
        %v3622 = vadd.f32 0.0, %v3621
        %v3623 = vpop.f32.mrf.mxu0
        %v3624 = vadd.f32 0.0, %v3623
        %3625 = vmatprep.mubr.bf16.mxu0 %v830
        %3626 = vmatmul.mubr.bf16.gmra.mxu0 %v829
        %v3627 = vpop.f32.mrf.mxu0
        %v3628 = vadd.f32 0.0, %v3627
        %v3629 = vpop.f32.mrf.mxu0
        %v3630 = vadd.f32 0.0, %v3629
        %v3631 = vpop.f32.mrf.mxu0
        %v3632 = vadd.f32 0.0, %v3631
        %v3633 = vpop.f32.mrf.mxu0
        %v3634 = vadd.f32 0.0, %v3633
        %3635 = vmatprep.mubr.bf16.mxu0 %v834
        %3636 = vmatmul.mubr.bf16.gmra.mxu0 %v833
        %v3637 = vpop.f32.mrf.mxu0
        %v3638 = vadd.f32 0.0, %v3637
        %v3639 = vpop.f32.mrf.mxu0
        %v3640 = vadd.f32 0.0, %v3639
        %v3641 = vpop.f32.mrf.mxu0
        %v3642 = vadd.f32 0.0, %v3641
        %v3643 = vpop.f32.mrf.mxu0
        %v3644 = vadd.f32 0.0, %v3643
        %3645 = vmatprep.mubr.bf16.mxu0 %v838
        %3646 = vmatmul.mubr.bf16.gmra.mxu0 %v837
        %v3647 = vpop.f32.mrf.mxu0
        %v3648 = vadd.f32 0.0, %v3647
        %v3649 = vpop.f32.mrf.mxu0
        %v3650 = vadd.f32 0.0, %v3649
        %v3651 = vpop.f32.mrf.mxu0
        %v3652 = vadd.f32 0.0, %v3651
        %v3653 = vpop.f32.mrf.mxu0
        %v3654 = vadd.f32 0.0, %v3653
        %3655 = vmatprep.mubr.bf16.mxu0 %v842
        %3656 = vmatmul.mubr.bf16.gmra.mxu0 %v841
        %v3657 = vpop.f32.mrf.mxu0
        %v3658 = vadd.f32 0.0, %v3657
        %v3659 = vpop.f32.mrf.mxu0
        %v3660 = vadd.f32 0.0, %v3659
        %v3661 = vpop.f32.mrf.mxu0
        %v3662 = vadd.f32 0.0, %v3661
        %v3663 = vpop.f32.mrf.mxu0
        %v3664 = vadd.f32 0.0, %v3663
        %3665 = vmatprep.mubr.bf16.mxu0 %v846
        %3666 = vmatmul.mubr.bf16.gmra.mxu0 %v845
        %v3667 = vpop.f32.mrf.mxu0
        %v3668 = vadd.f32 0.0, %v3667
        %v3669 = vpop.f32.mrf.mxu0
        %v3670 = vadd.f32 0.0, %v3669
        %v3671 = vpop.f32.mrf.mxu0
        %v3672 = vadd.f32 0.0, %v3671
        %v3673 = vpop.f32.mrf.mxu0
        %v3674 = vadd.f32 0.0, %v3673
        %3675 = vmatprep.mubr.bf16.mxu0 %v850
        %3676 = vmatmul.mubr.bf16.gmra.mxu0 %v849
        %v3677 = vpop.f32.mrf.mxu0
        %v3678 = vadd.f32 0.0, %v3677
        %v3679 = vpop.f32.mrf.mxu0
        %v3680 = vadd.f32 0.0, %v3679
        %v3681 = vpop.f32.mrf.mxu0
        %v3682 = vadd.f32 0.0, %v3681
        %v3683 = vpop.f32.mrf.mxu0
        %v3684 = vadd.f32 0.0, %v3683
        %3685 = vmatprep.mubr.bf16.mxu0 %v854
        %3686 = vmatmul.mubr.bf16.gmra.mxu0 %v853
        %v3687 = vpop.f32.mrf.mxu0
        %v3688 = vadd.f32 0.0, %v3687
        %v3689 = vpop.f32.mrf.mxu0
        %v3690 = vadd.f32 0.0, %v3689
        %v3691 = vpop.f32.mrf.mxu0
        %v3692 = vadd.f32 0.0, %v3691
        %v3693 = vpop.f32.mrf.mxu0
        %v3694 = vadd.f32 0.0, %v3693
        %3695 = vmatprep.mubr.bf16.mxu0 %v858
        %3696 = vmatmul.mubr.bf16.gmra.mxu0 %v857
        %v3697 = vpop.f32.mrf.mxu0
        %v3698 = vadd.f32 0.0, %v3697
        %v3699 = vpop.f32.mrf.mxu0
        %v3700 = vadd.f32 0.0, %v3699
        %v3701 = vpop.f32.mrf.mxu0
        %v3702 = vadd.f32 0.0, %v3701
        %v3703 = vpop.f32.mrf.mxu0
        %v3704 = vadd.f32 0.0, %v3703
        %3705 = vmatprep.mubr.bf16.mxu0 %v862
        %3706 = vmatmul.mubr.bf16.gmra.mxu0 %v861
        %v3707 = vpop.f32.mrf.mxu0
        %v3708 = vadd.f32 0.0, %v3707
        %v3709 = vpop.f32.mrf.mxu0
        %v3710 = vadd.f32 0.0, %v3709
        %v3711 = vpop.f32.mrf.mxu0
        %v3712 = vadd.f32 0.0, %v3711
        %v3713 = vpop.f32.mrf.mxu0
        %v3714 = vadd.f32 0.0, %v3713
        %3715 = vmatprep.mubr.bf16.mxu0 %v866
        %3716 = vmatmul.mubr.bf16.gmra.mxu0 %v865
        %v3717 = vpop.f32.mrf.mxu0
        %v3718 = vadd.f32 0.0, %v3717
        %v3719 = vpop.f32.mrf.mxu0
        %v3720 = vadd.f32 0.0, %v3719
        %v3721 = vpop.f32.mrf.mxu0
        %v3722 = vadd.f32 0.0, %v3721
        %v3723 = vpop.f32.mrf.mxu0
        %v3724 = vadd.f32 0.0, %v3723
        %3725 = vmatprep.mubr.bf16.mxu0 %v870
        %3726 = vmatmul.mubr.bf16.gmra.mxu0 %v869
        %v3727 = vpop.f32.mrf.mxu0
        %v3728 = vadd.f32 0.0, %v3727
        %v3729 = vpop.f32.mrf.mxu0
        %v3730 = vadd.f32 0.0, %v3729
        %v3731 = vpop.f32.mrf.mxu0
        %v3732 = vadd.f32 0.0, %v3731
        %v3733 = vpop.f32.mrf.mxu0
        %v3734 = vadd.f32 0.0, %v3733
        %3735 = vmatprep.mubr.bf16.mxu0 %v874
        %3736 = vmatmul.mubr.bf16.gmra.mxu0 %v873
        %v3737 = vpop.f32.mrf.mxu0
        %v3738 = vadd.f32 0.0, %v3737
        %v3739 = vpop.f32.mrf.mxu0
        %v3740 = vadd.f32 0.0, %v3739
        %v3741 = vpop.f32.mrf.mxu0
        %v3742 = vadd.f32 0.0, %v3741
        %v3743 = vpop.f32.mrf.mxu0
        %v3744 = vadd.f32 0.0, %v3743
        %3745 = vmatprep.mubr.bf16.mxu0 %v878
        %3746 = vmatmul.mubr.bf16.gmra.mxu0 %v877
        %v3747 = vpop.f32.mrf.mxu0
        %v3748 = vadd.f32 0.0, %v3747
        %v3749 = vpop.f32.mrf.mxu0
        %v3750 = vadd.f32 0.0, %v3749
        %v3751 = vpop.f32.mrf.mxu0
        %v3752 = vadd.f32 0.0, %v3751
        %v3753 = vpop.f32.mrf.mxu0
        %v3754 = vadd.f32 0.0, %v3753
        %3755 = vmatprep.mubr.bf16.mxu0 %v882
        %3756 = vmatmul.mubr.bf16.gmra.mxu0 %v881
        %v3757 = vpop.f32.mrf.mxu0
        %v3758 = vadd.f32 0.0, %v3757
        %v3759 = vpop.f32.mrf.mxu0
        %v3760 = vadd.f32 0.0, %v3759
        %v3761 = vpop.f32.mrf.mxu0
        %v3762 = vadd.f32 0.0, %v3761
        %v3763 = vpop.f32.mrf.mxu0
        %v3764 = vadd.f32 0.0, %v3763
        %3765 = vmatprep.mubr.bf16.mxu0 %v886
        %3766 = vmatmul.mubr.bf16.gmra.mxu0 %v885
        %v3767 = vpop.f32.mrf.mxu0
        %v3768 = vadd.f32 0.0, %v3767
        %v3769 = vpop.f32.mrf.mxu0
        %v3770 = vadd.f32 0.0, %v3769
        %v3771 = vpop.f32.mrf.mxu0
        %v3772 = vadd.f32 0.0, %v3771
        %v3773 = vpop.f32.mrf.mxu0
        %v3774 = vadd.f32 0.0, %v3773
        %3775 = vdwg.mxu0
        %3776 = vmatprep.subr.bf16.mxu0 %v2063
        %3777 = vmatpush1.bf16.msra.mxu0 %v2062
        %3778 = vmatprep.subr.bf16.mxu0 %v2054
        %3779 = vmatpush1.bf16.msra.mxu0 %v2053
        %3780 = vmatprep.subr.bf16.mxu0 %v2045
        %3781 = vmatpush1.bf16.msra.mxu0 %v2044
        %3782 = vmatprep.subr.bf16.mxu0 %v2036
        %3783 = vmatpush1.bf16.msra.mxu0 %v2035
        %3784 = vmatprep.subr.bf16.mxu0 %v2027
        %3785 = vmatpush1.bf16.msra.mxu0 %v2026
        %3786 = vmatprep.subr.bf16.mxu0 %v2018
        %3787 = vmatpush1.bf16.msra.mxu0 %v2017
        %3788 = vmatprep.subr.bf16.mxu0 %v2009
        %3789 = vmatpush1.bf16.msra.mxu0 %v2008
        %3790 = vmatprep.subr.bf16.mxu0 %v2000
        %3791 = vmatpush1.bf16.msra.mxu0 %v1999
        %3792 = vmatprep.subr.bf16.mxu0 %v2135
        %3793 = vmatpush2.bf16.msra.mxu0 %v2134
        %3794 = vmatprep.subr.bf16.mxu0 %v2126
        %3795 = vmatpush2.bf16.msra.mxu0 %v2125
        %3796 = vmatprep.subr.bf16.mxu0 %v2117
        %3797 = vmatpush2.bf16.msra.mxu0 %v2116
        %3798 = vmatprep.subr.bf16.mxu0 %v2108
        %3799 = vmatpush2.bf16.msra.mxu0 %v2107
        %3800 = vmatprep.subr.bf16.mxu0 %v2099
        %3801 = vmatpush2.bf16.msra.mxu0 %v2098
        %3802 = vmatprep.subr.bf16.mxu0 %v2090
        %3803 = vmatpush2.bf16.msra.mxu0 %v2089
        %3804 = vmatprep.subr.bf16.mxu0 %v2081
        %3805 = vmatpush2.bf16.msra.mxu0 %v2080
        %3806 = vmatprep.subr.bf16.mxu0 %v2072
        %3807 = vmatpush2.bf16.msra.mxu0 %v2071
        %3808 = vmatprep.mubr.bf16.mxu0 %v828
        %3809 = vmatmul.mubr.bf16.gmra.mxu0 %v827
        %v3810 = vpop.f32.mrf.mxu0
        %v3811 = vadd.f32 %v3618, %v3810
        %v3812 = vpop.f32.mrf.mxu0
        %v3813 = vadd.f32 %v3620, %v3812
        %v3814 = vpop.f32.mrf.mxu0
        %v3815 = vadd.f32 %v3622, %v3814
        %v3816 = vpop.f32.mrf.mxu0
        %v3817 = vadd.f32 %v3624, %v3816
        %3818 = vmatprep.mubr.bf16.mxu0 %v832
        %3819 = vmatmul.mubr.bf16.gmra.mxu0 %v831
        %v3820 = vpop.f32.mrf.mxu0
        %v3821 = vadd.f32 %v3628, %v3820
        %v3822 = vpop.f32.mrf.mxu0
        %v3823 = vadd.f32 %v3630, %v3822
        %v3824 = vpop.f32.mrf.mxu0
        %v3825 = vadd.f32 %v3632, %v3824
        %v3826 = vpop.f32.mrf.mxu0
        %v3827 = vadd.f32 %v3634, %v3826
        %3828 = vmatprep.mubr.bf16.mxu0 %v836
        %3829 = vmatmul.mubr.bf16.gmra.mxu0 %v835
        %v3830 = vpop.f32.mrf.mxu0
        %v3831 = vadd.f32 %v3638, %v3830
        %v3832 = vpop.f32.mrf.mxu0
        %v3833 = vadd.f32 %v3640, %v3832
        %v3834 = vpop.f32.mrf.mxu0
        %v3835 = vadd.f32 %v3642, %v3834
        %v3836 = vpop.f32.mrf.mxu0
        %v3837 = vadd.f32 %v3644, %v3836
        %3838 = vmatprep.mubr.bf16.mxu0 %v840
        %3839 = vmatmul.mubr.bf16.gmra.mxu0 %v839
        %v3840 = vpop.f32.mrf.mxu0
        %v3841 = vadd.f32 %v3648, %v3840
        %v3842 = vpop.f32.mrf.mxu0
        %v3843 = vadd.f32 %v3650, %v3842
        %v3844 = vpop.f32.mrf.mxu0
        %v3845 = vadd.f32 %v3652, %v3844
        %v3846 = vpop.f32.mrf.mxu0
        %v3847 = vadd.f32 %v3654, %v3846
        %3848 = vmatprep.mubr.bf16.mxu0 %v844
        %3849 = vmatmul.mubr.bf16.gmra.mxu0 %v843
        %v3850 = vpop.f32.mrf.mxu0
        %v3851 = vadd.f32 %v3658, %v3850
        %v3852 = vpop.f32.mrf.mxu0
        %v3853 = vadd.f32 %v3660, %v3852
        %v3854 = vpop.f32.mrf.mxu0
        %v3855 = vadd.f32 %v3662, %v3854
        %v3856 = vpop.f32.mrf.mxu0
        %v3857 = vadd.f32 %v3664, %v3856
        %3858 = vmatprep.mubr.bf16.mxu0 %v848
        %3859 = vmatmul.mubr.bf16.gmra.mxu0 %v847
        %v3860 = vpop.f32.mrf.mxu0
        %v3861 = vadd.f32 %v3668, %v3860
        %v3862 = vpop.f32.mrf.mxu0
        %v3863 = vadd.f32 %v3670, %v3862
        %v3864 = vpop.f32.mrf.mxu0
        %v3865 = vadd.f32 %v3672, %v3864
        %v3866 = vpop.f32.mrf.mxu0
        %v3867 = vadd.f32 %v3674, %v3866
        %3868 = vmatprep.mubr.bf16.mxu0 %v852
        %3869 = vmatmul.mubr.bf16.gmra.mxu0 %v851
        %v3870 = vpop.f32.mrf.mxu0
        %v3871 = vadd.f32 %v3678, %v3870
        %v3872 = vpop.f32.mrf.mxu0
        %v3873 = vadd.f32 %v3680, %v3872
        %v3874 = vpop.f32.mrf.mxu0
        %v3875 = vadd.f32 %v3682, %v3874
        %v3876 = vpop.f32.mrf.mxu0
        %v3877 = vadd.f32 %v3684, %v3876
        %3878 = vmatprep.mubr.bf16.mxu0 %v856
        %3879 = vmatmul.mubr.bf16.gmra.mxu0 %v855
        %v3880 = vpop.f32.mrf.mxu0
        %v3881 = vadd.f32 %v3688, %v3880
        %v3882 = vpop.f32.mrf.mxu0
        %v3883 = vadd.f32 %v3690, %v3882
        %v3884 = vpop.f32.mrf.mxu0
        %v3885 = vadd.f32 %v3692, %v3884
        %v3886 = vpop.f32.mrf.mxu0
        %v3887 = vadd.f32 %v3694, %v3886
        %3888 = vmatprep.mubr.bf16.mxu0 %v860
        %3889 = vmatmul.mubr.bf16.gmra.mxu0 %v859
        %v3890 = vpop.f32.mrf.mxu0
        %v3891 = vadd.f32 %v3698, %v3890
        %v3892 = vpop.f32.mrf.mxu0
        %v3893 = vadd.f32 %v3700, %v3892
        %v3894 = vpop.f32.mrf.mxu0
        %v3895 = vadd.f32 %v3702, %v3894
        %v3896 = vpop.f32.mrf.mxu0
        %v3897 = vadd.f32 %v3704, %v3896
        %3898 = vmatprep.mubr.bf16.mxu0 %v864
        %3899 = vmatmul.mubr.bf16.gmra.mxu0 %v863
        %v3900 = vpop.f32.mrf.mxu0
        %v3901 = vadd.f32 %v3708, %v3900
        %v3902 = vpop.f32.mrf.mxu0
        %v3903 = vadd.f32 %v3710, %v3902
        %v3904 = vpop.f32.mrf.mxu0
        %v3905 = vadd.f32 %v3712, %v3904
        %v3906 = vpop.f32.mrf.mxu0
        %v3907 = vadd.f32 %v3714, %v3906
        %3908 = vmatprep.mubr.bf16.mxu0 %v868
        %3909 = vmatmul.mubr.bf16.gmra.mxu0 %v867
        %v3910 = vpop.f32.mrf.mxu0
        %v3911 = vadd.f32 %v3718, %v3910
        %v3912 = vpop.f32.mrf.mxu0
        %v3913 = vadd.f32 %v3720, %v3912
        %v3914 = vpop.f32.mrf.mxu0
        %v3915 = vadd.f32 %v3722, %v3914
        %v3916 = vpop.f32.mrf.mxu0
        %v3917 = vadd.f32 %v3724, %v3916
        %3918 = vmatprep.mubr.bf16.mxu0 %v872
        %3919 = vmatmul.mubr.bf16.gmra.mxu0 %v871
        %v3920 = vpop.f32.mrf.mxu0
        %v3921 = vadd.f32 %v3728, %v3920
        %v3922 = vpop.f32.mrf.mxu0
        %v3923 = vadd.f32 %v3730, %v3922
        %v3924 = vpop.f32.mrf.mxu0
        %v3925 = vadd.f32 %v3732, %v3924
        %v3926 = vpop.f32.mrf.mxu0
        %v3927 = vadd.f32 %v3734, %v3926
        %3928 = vmatprep.mubr.bf16.mxu0 %v876
        %3929 = vmatmul.mubr.bf16.gmra.mxu0 %v875
        %v3930 = vpop.f32.mrf.mxu0
        %v3931 = vadd.f32 %v3738, %v3930
        %v3932 = vpop.f32.mrf.mxu0
        %v3933 = vadd.f32 %v3740, %v3932
        %v3934 = vpop.f32.mrf.mxu0
        %v3935 = vadd.f32 %v3742, %v3934
        %v3936 = vpop.f32.mrf.mxu0
        %v3937 = vadd.f32 %v3744, %v3936
        %3938 = vmatprep.mubr.bf16.mxu0 %v880
        %3939 = vmatmul.mubr.bf16.gmra.mxu0 %v879
        %v3940 = vpop.f32.mrf.mxu0
        %v3941 = vadd.f32 %v3748, %v3940
        %v3942 = vpop.f32.mrf.mxu0
        %v3943 = vadd.f32 %v3750, %v3942
        %v3944 = vpop.f32.mrf.mxu0
        %v3945 = vadd.f32 %v3752, %v3944
        %v3946 = vpop.f32.mrf.mxu0
        %v3947 = vadd.f32 %v3754, %v3946
        %3948 = vmatprep.mubr.bf16.mxu0 %v884
        %3949 = vmatmul.mubr.bf16.gmra.mxu0 %v883
        %v3950 = vpop.f32.mrf.mxu0
        %v3951 = vadd.f32 %v3758, %v3950
        %v3952 = vpop.f32.mrf.mxu0
        %v3953 = vadd.f32 %v3760, %v3952
        %v3954 = vpop.f32.mrf.mxu0
        %v3955 = vadd.f32 %v3762, %v3954
        %v3956 = vpop.f32.mrf.mxu0
        %v3957 = vadd.f32 %v3764, %v3956
        %3958 = vmatprep.mubr.bf16.mxu0 %v888
        %3959 = vmatmul.mubr.bf16.gmra.mxu0 %v887
        %v3960 = vpop.f32.mrf.mxu0
        %v3961 = vadd.f32 %v3768, %v3960
        %v3962 = vpop.f32.mrf.mxu0
        %v3963 = vadd.f32 %v3770, %v3962
        %v3964 = vpop.f32.mrf.mxu0
        %v3965 = vadd.f32 %v3772, %v3964
        %v3966 = vpop.f32.mrf.mxu0
        %v3967 = vadd.f32 %v3774, %v3966
        %3968 = vdwg.mxu0
        %3969 = vmatprep.subr.bf16.mxu0 0
        %3970 = vmatpush1.bf16.msra.mxu0 %v1920
        %3971 = vmatprep.subr.bf16.mxu0 0
        %3972 = vmatpush1.bf16.msra.mxu0 %v1911
        %3973 = vmatprep.subr.bf16.mxu0 0
        %3974 = vmatpush1.bf16.msra.mxu0 %v1902
        %3975 = vmatprep.subr.bf16.mxu0 0
        %3976 = vmatpush1.bf16.msra.mxu0 %v1893
        %3977 = vmatprep.subr.bf16.mxu0 0
        %3978 = vmatpush1.bf16.msra.mxu0 %v1884
        %3979 = vmatprep.subr.bf16.mxu0 0
        %3980 = vmatpush1.bf16.msra.mxu0 %v1875
        %3981 = vmatprep.subr.bf16.mxu0 0
        %3982 = vmatpush1.bf16.msra.mxu0 %v1866
        %3983 = vmatprep.subr.bf16.mxu0 0
        %3984 = vmatpush1.bf16.msra.mxu0 %v1857
        %3985 = vmatprep.subr.bf16.mxu0 0
        %3986 = vmatpush2.bf16.msra.mxu0 %v1992
        %3987 = vmatprep.subr.bf16.mxu0 0
        %3988 = vmatpush2.bf16.msra.mxu0 %v1983
        %3989 = vmatprep.subr.bf16.mxu0 0
        %3990 = vmatpush2.bf16.msra.mxu0 %v1974
        %3991 = vmatprep.subr.bf16.mxu0 0
        %3992 = vmatpush2.bf16.msra.mxu0 %v1965
        %3993 = vmatprep.subr.bf16.mxu0 0
        %3994 = vmatpush2.bf16.msra.mxu0 %v1956
        %3995 = vmatprep.subr.bf16.mxu0 0
        %3996 = vmatpush2.bf16.msra.mxu0 %v1947
        %3997 = vmatprep.subr.bf16.mxu0 0
        %3998 = vmatpush2.bf16.msra.mxu0 %v1938
        %3999 = vmatprep.subr.bf16.mxu0 0
        %4000 = vmatpush2.bf16.msra.mxu0 %v1929
        %4001 = vmatprep.mubr.bf16.mxu0 %v826
        %4002 = vmatmul.mubr.bf16.gmra.mxu0 %v825
        %v4003 = vpop.f32.mrf.mxu0
        %v4004 = vadd.f32 0.0, %v4003
        %v4005 = vpop.f32.mrf.mxu0
        %v4006 = vpop.f32.mrf.mxu0
        %v4007 = vadd.f32 0.0, %v4006
        %v4008 = vpop.f32.mrf.mxu0
        %4009 = vmatprep.mubr.bf16.mxu0 %v830
        %4010 = vmatmul.mubr.bf16.gmra.mxu0 %v829
        %v4011 = vpop.f32.mrf.mxu0
        %v4012 = vadd.f32 0.0, %v4011
        %v4013 = vpop.f32.mrf.mxu0
        %v4014 = vpop.f32.mrf.mxu0
        %v4015 = vadd.f32 0.0, %v4014
        %v4016 = vpop.f32.mrf.mxu0
        %4017 = vmatprep.mubr.bf16.mxu0 %v834
        %4018 = vmatmul.mubr.bf16.gmra.mxu0 %v833
        %v4019 = vpop.f32.mrf.mxu0
        %v4020 = vadd.f32 0.0, %v4019
        %v4021 = vpop.f32.mrf.mxu0
        %v4022 = vpop.f32.mrf.mxu0
        %v4023 = vadd.f32 0.0, %v4022
        %v4024 = vpop.f32.mrf.mxu0
        %4025 = vmatprep.mubr.bf16.mxu0 %v838
        %4026 = vmatmul.mubr.bf16.gmra.mxu0 %v837
        %v4027 = vpop.f32.mrf.mxu0
        %v4028 = vadd.f32 0.0, %v4027
        %v4029 = vpop.f32.mrf.mxu0
        %v4030 = vpop.f32.mrf.mxu0
        %v4031 = vadd.f32 0.0, %v4030
        %v4032 = vpop.f32.mrf.mxu0
        %4033 = vmatprep.mubr.bf16.mxu0 %v842
        %4034 = vmatmul.mubr.bf16.gmra.mxu0 %v841
        %v4035 = vpop.f32.mrf.mxu0
        %v4036 = vadd.f32 0.0, %v4035
        %v4037 = vpop.f32.mrf.mxu0
        %v4038 = vpop.f32.mrf.mxu0
        %v4039 = vadd.f32 0.0, %v4038
        %v4040 = vpop.f32.mrf.mxu0
        %4041 = vmatprep.mubr.bf16.mxu0 %v846
        %4042 = vmatmul.mubr.bf16.gmra.mxu0 %v845
        %v4043 = vpop.f32.mrf.mxu0
        %v4044 = vadd.f32 0.0, %v4043
        %v4045 = vpop.f32.mrf.mxu0
        %v4046 = vpop.f32.mrf.mxu0
        %v4047 = vadd.f32 0.0, %v4046
        %v4048 = vpop.f32.mrf.mxu0
        %4049 = vmatprep.mubr.bf16.mxu0 %v850
        %4050 = vmatmul.mubr.bf16.gmra.mxu0 %v849
        %v4051 = vpop.f32.mrf.mxu0
        %v4052 = vadd.f32 0.0, %v4051
        %v4053 = vpop.f32.mrf.mxu0
        %v4054 = vpop.f32.mrf.mxu0
        %v4055 = vadd.f32 0.0, %v4054
        %v4056 = vpop.f32.mrf.mxu0
        %4057 = vmatprep.mubr.bf16.mxu0 %v854
        %4058 = vmatmul.mubr.bf16.gmra.mxu0 %v853
        %v4059 = vpop.f32.mrf.mxu0
        %v4060 = vadd.f32 0.0, %v4059
        %v4061 = vpop.f32.mrf.mxu0
        %v4062 = vpop.f32.mrf.mxu0
        %v4063 = vadd.f32 0.0, %v4062
        %v4064 = vpop.f32.mrf.mxu0
        %4065 = vmatprep.mubr.bf16.mxu0 %v858
        %4066 = vmatmul.mubr.bf16.gmra.mxu0 %v857
        %v4067 = vpop.f32.mrf.mxu0
        %v4068 = vadd.f32 0.0, %v4067
        %v4069 = vpop.f32.mrf.mxu0
        %v4070 = vpop.f32.mrf.mxu0
        %v4071 = vadd.f32 0.0, %v4070
        %v4072 = vpop.f32.mrf.mxu0
        %4073 = vmatprep.mubr.bf16.mxu0 %v862
        %4074 = vmatmul.mubr.bf16.gmra.mxu0 %v861
        %v4075 = vpop.f32.mrf.mxu0
        %v4076 = vadd.f32 0.0, %v4075
        %v4077 = vpop.f32.mrf.mxu0
        %v4078 = vpop.f32.mrf.mxu0
        %v4079 = vadd.f32 0.0, %v4078
        %v4080 = vpop.f32.mrf.mxu0
        %4081 = vmatprep.mubr.bf16.mxu0 %v866
        %4082 = vmatmul.mubr.bf16.gmra.mxu0 %v865
        %v4083 = vpop.f32.mrf.mxu0
        %v4084 = vadd.f32 0.0, %v4083
        %v4085 = vpop.f32.mrf.mxu0
        %v4086 = vpop.f32.mrf.mxu0
        %v4087 = vadd.f32 0.0, %v4086
        %v4088 = vpop.f32.mrf.mxu0
        %4089 = vmatprep.mubr.bf16.mxu0 %v870
        %4090 = vmatmul.mubr.bf16.gmra.mxu0 %v869
        %v4091 = vpop.f32.mrf.mxu0
        %v4092 = vadd.f32 0.0, %v4091
        %v4093 = vpop.f32.mrf.mxu0
        %v4094 = vpop.f32.mrf.mxu0
        %v4095 = vadd.f32 0.0, %v4094
        %v4096 = vpop.f32.mrf.mxu0
        %4097 = vmatprep.mubr.bf16.mxu0 %v874
        %4098 = vmatmul.mubr.bf16.gmra.mxu0 %v873
        %v4099 = vpop.f32.mrf.mxu0
        %v4100 = vadd.f32 0.0, %v4099
        %v4101 = vpop.f32.mrf.mxu0
        %v4102 = vpop.f32.mrf.mxu0
        %v4103 = vadd.f32 0.0, %v4102
        %v4104 = vpop.f32.mrf.mxu0
        %4105 = vmatprep.mubr.bf16.mxu0 %v878
        %4106 = vmatmul.mubr.bf16.gmra.mxu0 %v877
        %v4107 = vpop.f32.mrf.mxu0
        %v4108 = vadd.f32 0.0, %v4107
        %v4109 = vpop.f32.mrf.mxu0
        %v4110 = vpop.f32.mrf.mxu0
        %v4111 = vadd.f32 0.0, %v4110
        %v4112 = vpop.f32.mrf.mxu0
        %4113 = vmatprep.mubr.bf16.mxu0 %v882
        %4114 = vmatmul.mubr.bf16.gmra.mxu0 %v881
        %v4115 = vpop.f32.mrf.mxu0
        %v4116 = vadd.f32 0.0, %v4115
        %v4117 = vpop.f32.mrf.mxu0
        %v4118 = vpop.f32.mrf.mxu0
        %v4119 = vadd.f32 0.0, %v4118
        %v4120 = vpop.f32.mrf.mxu0
        %4121 = vmatprep.mubr.bf16.mxu0 %v886
        %4122 = vmatmul.mubr.bf16.gmra.mxu0 %v885
        %v4123 = vpop.f32.mrf.mxu0
        %v4124 = vadd.f32 0.0, %v4123
        %v4125 = vpop.f32.mrf.mxu0
        %v4126 = vpop.f32.mrf.mxu0
        %v4127 = vadd.f32 0.0, %v4126
        %v4128 = vpop.f32.mrf.mxu0
        %4129 = vdwg.mxu0
        %4130 = vmatprep.subr.bf16.mxu0 0
        %4131 = vmatpush1.bf16.msra.mxu0 %v2064
        %4132 = vmatprep.subr.bf16.mxu0 0
        %4133 = vmatpush1.bf16.msra.mxu0 %v2055
        %4134 = vmatprep.subr.bf16.mxu0 0
        %4135 = vmatpush1.bf16.msra.mxu0 %v2046
        %4136 = vmatprep.subr.bf16.mxu0 0
        %4137 = vmatpush1.bf16.msra.mxu0 %v2037
        %4138 = vmatprep.subr.bf16.mxu0 0
        %4139 = vmatpush1.bf16.msra.mxu0 %v2028
        %4140 = vmatprep.subr.bf16.mxu0 0
        %4141 = vmatpush1.bf16.msra.mxu0 %v2019
        %4142 = vmatprep.subr.bf16.mxu0 0
        %4143 = vmatpush1.bf16.msra.mxu0 %v2010
        %4144 = vmatprep.subr.bf16.mxu0 0
        %4145 = vmatpush1.bf16.msra.mxu0 %v2001
        %4146 = vmatprep.subr.bf16.mxu0 0
        %4147 = vmatpush2.bf16.msra.mxu0 %v2136
        %4148 = vmatprep.subr.bf16.mxu0 0
        %4149 = vmatpush2.bf16.msra.mxu0 %v2127
        %4150 = vmatprep.subr.bf16.mxu0 0
        %4151 = vmatpush2.bf16.msra.mxu0 %v2118
        %4152 = vmatprep.subr.bf16.mxu0 0
        %4153 = vmatpush2.bf16.msra.mxu0 %v2109
        %4154 = vmatprep.subr.bf16.mxu0 0
        %4155 = vmatpush2.bf16.msra.mxu0 %v2100
        %4156 = vmatprep.subr.bf16.mxu0 0
        %4157 = vmatpush2.bf16.msra.mxu0 %v2091
        %4158 = vmatprep.subr.bf16.mxu0 0
        %4159 = vmatpush2.bf16.msra.mxu0 %v2082
        %4160 = vmatprep.subr.bf16.mxu0 0
        %4161 = vmatpush2.bf16.msra.mxu0 %v2073
        %4162 = vmatprep.mubr.bf16.mxu0 %v828
        %4163 = vmatmul.mubr.bf16.gmra.mxu0 %v827
        %v4164 = vpop.f32.mrf.mxu0
        %v4165 = vadd.f32 %v4004, %v4164
        %v4166 = vpop.f32.mrf.mxu0
        %v4167 = vpop.f32.mrf.mxu0
        %v4168 = vadd.f32 %v4007, %v4167
        %v4169 = vpop.f32.mrf.mxu0
        %4170 = vmatprep.mubr.bf16.mxu0 %v832
        %4171 = vmatmul.mubr.bf16.gmra.mxu0 %v831
        %v4172 = vpop.f32.mrf.mxu0
        %v4173 = vadd.f32 %v4012, %v4172
        %v4174 = vpop.f32.mrf.mxu0
        %v4175 = vpop.f32.mrf.mxu0
        %v4176 = vadd.f32 %v4015, %v4175
        %v4177 = vpop.f32.mrf.mxu0
        %4178 = vmatprep.mubr.bf16.mxu0 %v836
        %4179 = vmatmul.mubr.bf16.gmra.mxu0 %v835
        %v4180 = vpop.f32.mrf.mxu0
        %v4181 = vadd.f32 %v4020, %v4180
        %v4182 = vpop.f32.mrf.mxu0
        %v4183 = vpop.f32.mrf.mxu0
        %v4184 = vadd.f32 %v4023, %v4183
        %v4185 = vpop.f32.mrf.mxu0
        %4186 = vmatprep.mubr.bf16.mxu0 %v840
        %4187 = vmatmul.mubr.bf16.gmra.mxu0 %v839
        %v4188 = vpop.f32.mrf.mxu0
        %v4189 = vadd.f32 %v4028, %v4188
        %v4190 = vpop.f32.mrf.mxu0
        %v4191 = vpop.f32.mrf.mxu0
        %v4192 = vadd.f32 %v4031, %v4191
        %v4193 = vpop.f32.mrf.mxu0
        %4194 = vmatprep.mubr.bf16.mxu0 %v844
        %4195 = vmatmul.mubr.bf16.gmra.mxu0 %v843
        %v4196 = vpop.f32.mrf.mxu0
        %v4197 = vadd.f32 %v4036, %v4196
        %v4198 = vpop.f32.mrf.mxu0
        %v4199 = vpop.f32.mrf.mxu0
        %v4200 = vadd.f32 %v4039, %v4199
        %v4201 = vpop.f32.mrf.mxu0
        %4202 = vmatprep.mubr.bf16.mxu0 %v848
        %4203 = vmatmul.mubr.bf16.gmra.mxu0 %v847
        %v4204 = vpop.f32.mrf.mxu0
        %v4205 = vadd.f32 %v4044, %v4204
        %v4206 = vpop.f32.mrf.mxu0
        %v4207 = vpop.f32.mrf.mxu0
        %v4208 = vadd.f32 %v4047, %v4207
        %v4209 = vpop.f32.mrf.mxu0
        %4210 = vmatprep.mubr.bf16.mxu0 %v852
        %4211 = vmatmul.mubr.bf16.gmra.mxu0 %v851
        %v4212 = vpop.f32.mrf.mxu0
        %v4213 = vadd.f32 %v4052, %v4212
        %v4214 = vpop.f32.mrf.mxu0
        %v4215 = vpop.f32.mrf.mxu0
        %v4216 = vadd.f32 %v4055, %v4215
        %v4217 = vpop.f32.mrf.mxu0
        %4218 = vmatprep.mubr.bf16.mxu0 %v856
        %4219 = vmatmul.mubr.bf16.gmra.mxu0 %v855
        %v4220 = vpop.f32.mrf.mxu0
        %v4221 = vadd.f32 %v4060, %v4220
        %v4222 = vpop.f32.mrf.mxu0
        %v4223 = vpop.f32.mrf.mxu0
        %v4224 = vadd.f32 %v4063, %v4223
        %v4225 = vpop.f32.mrf.mxu0
        %4226 = vmatprep.mubr.bf16.mxu0 %v860
        %4227 = vmatmul.mubr.bf16.gmra.mxu0 %v859
        %v4228 = vpop.f32.mrf.mxu0
        %v4229 = vadd.f32 %v4068, %v4228
        %v4230 = vpop.f32.mrf.mxu0
        %v4231 = vpop.f32.mrf.mxu0
        %v4232 = vadd.f32 %v4071, %v4231
        %v4233 = vpop.f32.mrf.mxu0
        %4234 = vmatprep.mubr.bf16.mxu0 %v864
        %4235 = vmatmul.mubr.bf16.gmra.mxu0 %v863
        %v4236 = vpop.f32.mrf.mxu0
        %v4237 = vadd.f32 %v4076, %v4236
        %v4238 = vpop.f32.mrf.mxu0
        %v4239 = vpop.f32.mrf.mxu0
        %v4240 = vadd.f32 %v4079, %v4239
        %v4241 = vpop.f32.mrf.mxu0
        %4242 = vmatprep.mubr.bf16.mxu0 %v868
        %4243 = vmatmul.mubr.bf16.gmra.mxu0 %v867
        %v4244 = vpop.f32.mrf.mxu0
        %v4245 = vadd.f32 %v4084, %v4244
        %v4246 = vpop.f32.mrf.mxu0
        %v4247 = vpop.f32.mrf.mxu0
        %v4248 = vadd.f32 %v4087, %v4247
        %v4249 = vpop.f32.mrf.mxu0
        %4250 = vmatprep.mubr.bf16.mxu0 %v872
        %4251 = vmatmul.mubr.bf16.gmra.mxu0 %v871
        %v4252 = vpop.f32.mrf.mxu0
        %v4253 = vadd.f32 %v4092, %v4252
        %v4254 = vpop.f32.mrf.mxu0
        %v4255 = vpop.f32.mrf.mxu0
        %v4256 = vadd.f32 %v4095, %v4255
        %v4257 = vpop.f32.mrf.mxu0
        %4258 = vmatprep.mubr.bf16.mxu0 %v876
        %4259 = vmatmul.mubr.bf16.gmra.mxu0 %v875
        %v4260 = vpop.f32.mrf.mxu0
        %v4261 = vadd.f32 %v4100, %v4260
        %v4262 = vpop.f32.mrf.mxu0
        %v4263 = vpop.f32.mrf.mxu0
        %v4264 = vadd.f32 %v4103, %v4263
        %v4265 = vpop.f32.mrf.mxu0
        %4266 = vmatprep.mubr.bf16.mxu0 %v880
        %4267 = vmatmul.mubr.bf16.gmra.mxu0 %v879
        %v4268 = vpop.f32.mrf.mxu0
        %v4269 = vadd.f32 %v4108, %v4268
        %v4270 = vpop.f32.mrf.mxu0
        %v4271 = vpop.f32.mrf.mxu0
        %v4272 = vadd.f32 %v4111, %v4271
        %v4273 = vpop.f32.mrf.mxu0
        %4274 = vmatprep.mubr.bf16.mxu0 %v884
        %4275 = vmatmul.mubr.bf16.gmra.mxu0 %v883
        %v4276 = vpop.f32.mrf.mxu0
        %v4277 = vadd.f32 %v4116, %v4276
        %v4278 = vpop.f32.mrf.mxu0
        %v4279 = vpop.f32.mrf.mxu0
        %v4280 = vadd.f32 %v4119, %v4279
        %v4281 = vpop.f32.mrf.mxu0
        %4282 = vmatprep.mubr.bf16.mxu0 %v888
        %4283 = vmatmul.mubr.bf16.gmra.mxu0 %v887
        %v4284 = vpop.f32.mrf.mxu0
        %v4285 = vadd.f32 %v4124, %v4284
        %v4286 = vpop.f32.mrf.mxu0
        %v4287 = vpop.f32.mrf.mxu0
        %v4288 = vadd.f32 %v4127, %v4287
        %v4289 = vpop.f32.mrf.mxu0
        %4290 = vdwg.mxu0
        %4291 = vst [vmem:[%s209] sm:$0xff] %v2653
        %4292 = vst [vmem:[%s209 + $0x8] sm:$0xff] %v2655
        %4293 = vst [vmem:[%s209 + $0x10] sm:$0xff] %v3039
        %4294 = vst [vmem:[%s209 + $0x18] sm:$0xff] %v3041
        %4295 = vst [vmem:[%s209 + $0x20] sm:$0xff] %v3425
        %4296 = vst [vmem:[%s209 + $0x28] sm:$0xff] %v3427
        %4297 = vst [vmem:[%s209 + $0x30] sm:$0xff] %v3811
        %4298 = vst [vmem:[%s209 + $0x38] sm:$0xff] %v3813
        %vm4299 = vcmask 457728
        %4300 = vst.msk [vmem:[%s209 + $0x40] sm:$0xff] %vm4299, %v4165
        %4301 = vst [vmem:[%s209 + $0x48] sm:$0xff] %v2657
        %4302 = vst [vmem:[%s209 + $0x50] sm:$0xff] %v2659
        %4303 = vst [vmem:[%s209 + $0x58] sm:$0xff] %v3043
        %4304 = vst [vmem:[%s209 + $0x60] sm:$0xff] %v3045
        %4305 = vst [vmem:[%s209 + $0x68] sm:$0xff] %v3429
        %4306 = vst [vmem:[%s209 + $0x70] sm:$0xff] %v3431
        %4307 = vst [vmem:[%s209 + $0x78] sm:$0xff] %v3815
        %4308 = vst [vmem:[%s209 + $0x80] sm:$0xff] %v3817
        %4309 = vst.msk [vmem:[%s209 + $0x88] sm:$0xff] %vm4299, %v4168
        %4310 = vst [vmem:[%s209 + $0x90] sm:$0xff] %v2663
        %4311 = vst [vmem:[%s209 + $0x98] sm:$0xff] %v2665
        %4312 = vst [vmem:[%s209 + $0xa0] sm:$0xff] %v3049
        %4313 = vst [vmem:[%s209 + $0xa8] sm:$0xff] %v3051
        %4314 = vst [vmem:[%s209 + $0xb0] sm:$0xff] %v3435
        %4315 = vst [vmem:[%s209 + $0xb8] sm:$0xff] %v3437
        %4316 = vst [vmem:[%s209 + $0xc0] sm:$0xff] %v3821
        %4317 = vst [vmem:[%s209 + $0xc8] sm:$0xff] %v3823
        %4318 = vst.msk [vmem:[%s209 + $0xd0] sm:$0xff] %vm4299, %v4173
        %4319 = vst [vmem:[%s209 + $0xd8] sm:$0xff] %v2667
        %4320 = vst [vmem:[%s209 + $0xe0] sm:$0xff] %v2669
        %4321 = vst [vmem:[%s209 + $0xe8] sm:$0xff] %v3053
        %4322 = vst [vmem:[%s209 + $0xf0] sm:$0xff] %v3055
        %4323 = vst [vmem:[%s209 + $0xf8] sm:$0xff] %v3439
        %4324 = vst [vmem:[%s209 + $0x100] sm:$0xff] %v3441
        %4325 = vst [vmem:[%s209 + $0x108] sm:$0xff] %v3825
        %4326 = vst [vmem:[%s209 + $0x110] sm:$0xff] %v3827
        %4327 = vst.msk [vmem:[%s209 + $0x118] sm:$0xff] %vm4299, %v4176
        %4328 = vst [vmem:[%s209 + $0x120] sm:$0xff] %v2673
        %4329 = vst [vmem:[%s209 + $0x128] sm:$0xff] %v2675
        %4330 = vst [vmem:[%s209 + $0x130] sm:$0xff] %v3059
        %4331 = vst [vmem:[%s209 + $0x138] sm:$0xff] %v3061
        %4332 = vst [vmem:[%s209 + $0x140] sm:$0xff] %v3445
        %4333 = vst [vmem:[%s209 + $0x148] sm:$0xff] %v3447
        %4334 = vst [vmem:[%s209 + $0x150] sm:$0xff] %v3831
        %4335 = vst [vmem:[%s209 + $0x158] sm:$0xff] %v3833
        %4336 = vst.msk [vmem:[%s209 + $0x160] sm:$0xff] %vm4299, %v4181
        %4337 = vst [vmem:[%s209 + $0x168] sm:$0xff] %v2677
        %4338 = vst [vmem:[%s209 + $0x170] sm:$0xff] %v2679
        %4339 = vst [vmem:[%s209 + $0x178] sm:$0xff] %v3063
        %4340 = vst [vmem:[%s209 + $0x180] sm:$0xff] %v3065
        %4341 = vst [vmem:[%s209 + $0x188] sm:$0xff] %v3449
        %4342 = vst [vmem:[%s209 + $0x190] sm:$0xff] %v3451
        %4343 = vst [vmem:[%s209 + $0x198] sm:$0xff] %v3835
        %4344 = vst [vmem:[%s209 + $0x1a0] sm:$0xff] %v3837
        %4345 = vst.msk [vmem:[%s209 + $0x1a8] sm:$0xff] %vm4299, %v4184
        %4346 = vst [vmem:[%s209 + $0x1b0] sm:$0xff] %v2683
        %4347 = vst [vmem:[%s209 + $0x1b8] sm:$0xff] %v2685
        %4348 = vst [vmem:[%s209 + $0x1c0] sm:$0xff] %v3069
        %4349 = vst [vmem:[%s209 + $0x1c8] sm:$0xff] %v3071
        %4350 = vst [vmem:[%s209 + $0x1d0] sm:$0xff] %v3455
        %4351 = vst [vmem:[%s209 + $0x1d8] sm:$0xff] %v3457
        %4352 = vst [vmem:[%s209 + $0x1e0] sm:$0xff] %v3841
        %4353 = vst [vmem:[%s209 + $0x1e8] sm:$0xff] %v3843
        %4354 = vst.msk [vmem:[%s209 + $0x1f0] sm:$0xff] %vm4299, %v4189
        %4355 = vst [vmem:[%s209 + $0x1f8] sm:$0xff] %v2687
        %4356 = vst [vmem:[%s209 + $0x200] sm:$0xff] %v2689
        %4357 = vst [vmem:[%s209 + $0x208] sm:$0xff] %v3073
        %4358 = vst [vmem:[%s209 + $0x210] sm:$0xff] %v3075
        %4359 = vst [vmem:[%s209 + $0x218] sm:$0xff] %v3459
        %4360 = vst [vmem:[%s209 + $0x220] sm:$0xff] %v3461
        %4361 = vst [vmem:[%s209 + $0x228] sm:$0xff] %v3845
        %4362 = vst [vmem:[%s209 + $0x230] sm:$0xff] %v3847
        %4363 = vst.msk [vmem:[%s209 + $0x238] sm:$0xff] %vm4299, %v4192
        %4364 = vst [vmem:[%s209 + $0x240] sm:$0xff] %v2693
        %4365 = vst [vmem:[%s209 + $0x248] sm:$0xff] %v2695
        %4366 = vst [vmem:[%s209 + $0x250] sm:$0xff] %v3079
        %4367 = vst [vmem:[%s209 + $0x258] sm:$0xff] %v3081
        %4368 = vst [vmem:[%s209 + $0x260] sm:$0xff] %v3465
        %4369 = vst [vmem:[%s209 + $0x268] sm:$0xff] %v3467
        %4370 = vst [vmem:[%s209 + $0x270] sm:$0xff] %v3851
        %4371 = vst [vmem:[%s209 + $0x278] sm:$0xff] %v3853
        %4372 = vst.msk [vmem:[%s209 + $0x280] sm:$0xff] %vm4299, %v4197
        %4373 = vst [vmem:[%s209 + $0x288] sm:$0xff] %v2697
        %4374 = vst [vmem:[%s209 + $0x290] sm:$0xff] %v2699
        %4375 = vst [vmem:[%s209 + $0x298] sm:$0xff] %v3083
        %4376 = vst [vmem:[%s209 + $0x2a0] sm:$0xff] %v3085
        %4377 = vst [vmem:[%s209 + $0x2a8] sm:$0xff] %v3469
        %4378 = vst [vmem:[%s209 + $0x2b0] sm:$0xff] %v3471
        %4379 = vst [vmem:[%s209 + $0x2b8] sm:$0xff] %v3855
        %4380 = vst [vmem:[%s209 + $0x2c0] sm:$0xff] %v3857
        %4381 = vst.msk [vmem:[%s209 + $0x2c8] sm:$0xff] %vm4299, %v4200
        %4382 = vst [vmem:[%s209 + $0x2d0] sm:$0xff] %v2703
        %4383 = vst [vmem:[%s209 + $0x2d8] sm:$0xff] %v2705
        %4384 = vst [vmem:[%s209 + $0x2e0] sm:$0xff] %v3089
        %4385 = vst [vmem:[%s209 + $0x2e8] sm:$0xff] %v3091
        %4386 = vst [vmem:[%s209 + $0x2f0] sm:$0xff] %v3475
        %4387 = vst [vmem:[%s209 + $0x2f8] sm:$0xff] %v3477
        %4388 = vst [vmem:[%s209 + $0x300] sm:$0xff] %v3861
        %4389 = vst [vmem:[%s209 + $0x308] sm:$0xff] %v3863
        %4390 = vst.msk [vmem:[%s209 + $0x310] sm:$0xff] %vm4299, %v4205
        %4391 = vst [vmem:[%s209 + $0x318] sm:$0xff] %v2707
        %4392 = vst [vmem:[%s209 + $0x320] sm:$0xff] %v2709
        %4393 = vst [vmem:[%s209 + $0x328] sm:$0xff] %v3093
        %4394 = vst [vmem:[%s209 + $0x330] sm:$0xff] %v3095
        %4395 = vst [vmem:[%s209 + $0x338] sm:$0xff] %v3479
        %4396 = vst [vmem:[%s209 + $0x340] sm:$0xff] %v3481
        %4397 = vst [vmem:[%s209 + $0x348] sm:$0xff] %v3865
        %4398 = vst [vmem:[%s209 + $0x350] sm:$0xff] %v3867
        %4399 = vst.msk [vmem:[%s209 + $0x358] sm:$0xff] %vm4299, %v4208
        %4400 = vst [vmem:[%s209 + $0x360] sm:$0xff] %v2713
        %4401 = vst [vmem:[%s209 + $0x368] sm:$0xff] %v2715
        %4402 = vst [vmem:[%s209 + $0x370] sm:$0xff] %v3099
        %4403 = vst [vmem:[%s209 + $0x378] sm:$0xff] %v3101
        %4404 = vst [vmem:[%s209 + $0x380] sm:$0xff] %v3485
        %4405 = vst [vmem:[%s209 + $0x388] sm:$0xff] %v3487
        %4406 = vst [vmem:[%s209 + $0x390] sm:$0xff] %v3871
        %4407 = vst [vmem:[%s209 + $0x398] sm:$0xff] %v3873
        %4408 = vst.msk [vmem:[%s209 + $0x3a0] sm:$0xff] %vm4299, %v4213
        %4409 = vst [vmem:[%s209 + $0x3a8] sm:$0xff] %v2717
        %4410 = vst [vmem:[%s209 + $0x3b0] sm:$0xff] %v2719
        %4411 = vst [vmem:[%s209 + $0x3b8] sm:$0xff] %v3103
        %4412 = vst [vmem:[%s209 + $0x3c0] sm:$0xff] %v3105
        %4413 = vst [vmem:[%s209 + $0x3c8] sm:$0xff] %v3489
        %4414 = vst [vmem:[%s209 + $0x3d0] sm:$0xff] %v3491
        %4415 = vst [vmem:[%s209 + $0x3d8] sm:$0xff] %v3875
        %4416 = vst [vmem:[%s209 + $0x3e0] sm:$0xff] %v3877
        %4417 = vst.msk [vmem:[%s209 + $0x3e8] sm:$0xff] %vm4299, %v4216
        %4418 = vst [vmem:[%s209 + $0x3f0] sm:$0xff] %v2723
        %4419 = vst [vmem:[%s209 + $0x3f8] sm:$0xff] %v2725
        %4420 = vst [vmem:[%s209 + $0x400] sm:$0xff] %v3109
        %4421 = vst [vmem:[%s209 + $0x408] sm:$0xff] %v3111
        %4422 = vst [vmem:[%s209 + $0x410] sm:$0xff] %v3495
        %4423 = vst [vmem:[%s209 + $0x418] sm:$0xff] %v3497
        %4424 = vst [vmem:[%s209 + $0x420] sm:$0xff] %v3881
        %4425 = vst [vmem:[%s209 + $0x428] sm:$0xff] %v3883
        %4426 = vst.msk [vmem:[%s209 + $0x430] sm:$0xff] %vm4299, %v4221
        %4427 = vst [vmem:[%s209 + $0x438] sm:$0xff] %v2727
        %4428 = vst [vmem:[%s209 + $0x440] sm:$0xff] %v2729
        %4429 = vst [vmem:[%s209 + $0x448] sm:$0xff] %v3113
        %4430 = vst [vmem:[%s209 + $0x450] sm:$0xff] %v3115
        %4431 = vst [vmem:[%s209 + $0x458] sm:$0xff] %v3499
        %4432 = vst [vmem:[%s209 + $0x460] sm:$0xff] %v3501
        %4433 = vst [vmem:[%s209 + $0x468] sm:$0xff] %v3885
        %4434 = vst [vmem:[%s209 + $0x470] sm:$0xff] %v3887
        %4435 = vst.msk [vmem:[%s209 + $0x478] sm:$0xff] %vm4299, %v4224
        %4436 = vst [vmem:[%s209 + $0x480] sm:$0xff] %v2733
        %4437 = vst [vmem:[%s209 + $0x488] sm:$0xff] %v2735
        %4438 = vst [vmem:[%s209 + $0x490] sm:$0xff] %v3119
        %4439 = vst [vmem:[%s209 + $0x498] sm:$0xff] %v3121
        %4440 = vst [vmem:[%s209 + $0x4a0] sm:$0xff] %v3505
        %4441 = vst [vmem:[%s209 + $0x4a8] sm:$0xff] %v3507
        %4442 = vst [vmem:[%s209 + $0x4b0] sm:$0xff] %v3891
        %4443 = vst [vmem:[%s209 + $0x4b8] sm:$0xff] %v3893
        %4444 = vst.msk [vmem:[%s209 + $0x4c0] sm:$0xff] %vm4299, %v4229
        %4445 = vst [vmem:[%s209 + $0x4c8] sm:$0xff] %v2737
        %4446 = vst [vmem:[%s209 + $0x4d0] sm:$0xff] %v2739
        %4447 = vst [vmem:[%s209 + $0x4d8] sm:$0xff] %v3123
        %4448 = vst [vmem:[%s209 + $0x4e0] sm:$0xff] %v3125
        %4449 = vst [vmem:[%s209 + $0x4e8] sm:$0xff] %v3509
        %4450 = vst [vmem:[%s209 + $0x4f0] sm:$0xff] %v3511
        %4451 = vst [vmem:[%s209 + $0x4f8] sm:$0xff] %v3895
        %4452 = vst [vmem:[%s209 + $0x500] sm:$0xff] %v3897
        %4453 = vst.msk [vmem:[%s209 + $0x508] sm:$0xff] %vm4299, %v4232
        %4454 = vst [vmem:[%s209 + $0x510] sm:$0xff] %v2743
        %4455 = vst [vmem:[%s209 + $0x518] sm:$0xff] %v2745
        %4456 = vst [vmem:[%s209 + $0x520] sm:$0xff] %v3129
        %4457 = vst [vmem:[%s209 + $0x528] sm:$0xff] %v3131
        %4458 = vst [vmem:[%s209 + $0x530] sm:$0xff] %v3515
        %4459 = vst [vmem:[%s209 + $0x538] sm:$0xff] %v3517
        %4460 = vst [vmem:[%s209 + $0x540] sm:$0xff] %v3901
        %4461 = vst [vmem:[%s209 + $0x548] sm:$0xff] %v3903
        %4462 = vst.msk [vmem:[%s209 + $0x550] sm:$0xff] %vm4299, %v4237
        %4463 = vst [vmem:[%s209 + $0x558] sm:$0xff] %v2747
        %4464 = vst [vmem:[%s209 + $0x560] sm:$0xff] %v2749
        %4465 = vst [vmem:[%s209 + $0x568] sm:$0xff] %v3133
        %4466 = vst [vmem:[%s209 + $0x570] sm:$0xff] %v3135
        %4467 = vst [vmem:[%s209 + $0x578] sm:$0xff] %v3519
        %4468 = vst [vmem:[%s209 + $0x580] sm:$0xff] %v3521
        %4469 = vst [vmem:[%s209 + $0x588] sm:$0xff] %v3905
        %4470 = vst [vmem:[%s209 + $0x590] sm:$0xff] %v3907
        %4471 = vst.msk [vmem:[%s209 + $0x598] sm:$0xff] %vm4299, %v4240
        %4472 = vst [vmem:[%s209 + $0x5a0] sm:$0xff] %v2753
        %4473 = vst [vmem:[%s209 + $0x5a8] sm:$0xff] %v2755
        %4474 = vst [vmem:[%s209 + $0x5b0] sm:$0xff] %v3139
        %4475 = vst [vmem:[%s209 + $0x5b8] sm:$0xff] %v3141
        %4476 = vst [vmem:[%s209 + $0x5c0] sm:$0xff] %v3525
        %4477 = vst [vmem:[%s209 + $0x5c8] sm:$0xff] %v3527
        %4478 = vst [vmem:[%s209 + $0x5d0] sm:$0xff] %v3911
        %4479 = vst [vmem:[%s209 + $0x5d8] sm:$0xff] %v3913
        %4480 = vst.msk [vmem:[%s209 + $0x5e0] sm:$0xff] %vm4299, %v4245
        %4481 = vst [vmem:[%s209 + $0x5e8] sm:$0xff] %v2757
        %4482 = vst [vmem:[%s209 + $0x5f0] sm:$0xff] %v2759
        %4483 = vst [vmem:[%s209 + $0x5f8] sm:$0xff] %v3143
        %4484 = vst [vmem:[%s209 + $0x600] sm:$0xff] %v3145
        %4485 = vst [vmem:[%s209 + $0x608] sm:$0xff] %v3529
        %4486 = vst [vmem:[%s209 + $0x610] sm:$0xff] %v3531
        %4487 = vst [vmem:[%s209 + $0x618] sm:$0xff] %v3915
        %4488 = vst [vmem:[%s209 + $0x620] sm:$0xff] %v3917
        %4489 = vst.msk [vmem:[%s209 + $0x628] sm:$0xff] %vm4299, %v4248
        %4490 = vst [vmem:[%s209 + $0x630] sm:$0xff] %v2763
        %4491 = vst [vmem:[%s209 + $0x638] sm:$0xff] %v2765
        %4492 = vst [vmem:[%s209 + $0x640] sm:$0xff] %v3149
        %4493 = vst [vmem:[%s209 + $0x648] sm:$0xff] %v3151
        %4494 = vst [vmem:[%s209 + $0x650] sm:$0xff] %v3535
        %4495 = vst [vmem:[%s209 + $0x658] sm:$0xff] %v3537
        %4496 = vst [vmem:[%s209 + $0x660] sm:$0xff] %v3921
        %4497 = vst [vmem:[%s209 + $0x668] sm:$0xff] %v3923
        %4498 = vst.msk [vmem:[%s209 + $0x670] sm:$0xff] %vm4299, %v4253
        %4499 = vst [vmem:[%s209 + $0x678] sm:$0xff] %v2767
        %4500 = vst [vmem:[%s209 + $0x680] sm:$0xff] %v2769
        %4501 = vst [vmem:[%s209 + $0x688] sm:$0xff] %v3153
        %4502 = vst [vmem:[%s209 + $0x690] sm:$0xff] %v3155
        %4503 = vst [vmem:[%s209 + $0x698] sm:$0xff] %v3539
        %4504 = vst [vmem:[%s209 + $0x6a0] sm:$0xff] %v3541
        %4505 = vst [vmem:[%s209 + $0x6a8] sm:$0xff] %v3925
        %4506 = vst [vmem:[%s209 + $0x6b0] sm:$0xff] %v3927
        %4507 = vst.msk [vmem:[%s209 + $0x6b8] sm:$0xff] %vm4299, %v4256
        %4508 = vst [vmem:[%s209 + $0x6c0] sm:$0xff] %v2773
        %4509 = vst [vmem:[%s209 + $0x6c8] sm:$0xff] %v2775
        %4510 = vst [vmem:[%s209 + $0x6d0] sm:$0xff] %v3159
        %4511 = vst [vmem:[%s209 + $0x6d8] sm:$0xff] %v3161
        %4512 = vst [vmem:[%s209 + $0x6e0] sm:$0xff] %v3545
        %4513 = vst [vmem:[%s209 + $0x6e8] sm:$0xff] %v3547
        %4514 = vst [vmem:[%s209 + $0x6f0] sm:$0xff] %v3931
        %4515 = vst [vmem:[%s209 + $0x6f8] sm:$0xff] %v3933
        %4516 = vst.msk [vmem:[%s209 + $0x700] sm:$0xff] %vm4299, %v4261
        %4517 = vst [vmem:[%s209 + $0x708] sm:$0xff] %v2777
        %4518 = vst [vmem:[%s209 + $0x710] sm:$0xff] %v2779
        %4519 = vst [vmem:[%s209 + $0x718] sm:$0xff] %v3163
        %4520 = vst [vmem:[%s209 + $0x720] sm:$0xff] %v3165
        %4521 = vst [vmem:[%s209 + $0x728] sm:$0xff] %v3549
        %4522 = vst [vmem:[%s209 + $0x730] sm:$0xff] %v3551
        %4523 = vst [vmem:[%s209 + $0x738] sm:$0xff] %v3935
        %4524 = vst [vmem:[%s209 + $0x740] sm:$0xff] %v3937
        %4525 = vst.msk [vmem:[%s209 + $0x748] sm:$0xff] %vm4299, %v4264
        %4526 = vst [vmem:[%s209 + $0x750] sm:$0xff] %v2783
        %4527 = vst [vmem:[%s209 + $0x758] sm:$0xff] %v2785
        %4528 = vst [vmem:[%s209 + $0x760] sm:$0xff] %v3169
        %4529 = vst [vmem:[%s209 + $0x768] sm:$0xff] %v3171
        %4530 = vst [vmem:[%s209 + $0x770] sm:$0xff] %v3555
        %4531 = vst [vmem:[%s209 + $0x778] sm:$0xff] %v3557
        %4532 = vst [vmem:[%s209 + $0x780] sm:$0xff] %v3941
        %4533 = vst [vmem:[%s209 + $0x788] sm:$0xff] %v3943
        %4534 = vst.msk [vmem:[%s209 + $0x790] sm:$0xff] %vm4299, %v4269
        %4535 = vst [vmem:[%s209 + $0x798] sm:$0xff] %v2787
        %4536 = vst [vmem:[%s209 + $0x7a0] sm:$0xff] %v2789
        %4537 = vst [vmem:[%s209 + $0x7a8] sm:$0xff] %v3173
        %4538 = vst [vmem:[%s209 + $0x7b0] sm:$0xff] %v3175
        %4539 = vst [vmem:[%s209 + $0x7b8] sm:$0xff] %v3559
        %4540 = vst [vmem:[%s209 + $0x7c0] sm:$0xff] %v3561
        %4541 = vst [vmem:[%s209 + $0x7c8] sm:$0xff] %v3945
        %4542 = vst [vmem:[%s209 + $0x7d0] sm:$0xff] %v3947
        %4543 = vst.msk [vmem:[%s209 + $0x7d8] sm:$0xff] %vm4299, %v4272
        %4544 = vst [vmem:[%s209 + $0x7e0] sm:$0xff] %v2793
        %4545 = vst [vmem:[%s209 + $0x7e8] sm:$0xff] %v2795
        %4546 = vst [vmem:[%s209 + $0x7f0] sm:$0xff] %v3179
        %4547 = vst [vmem:[%s209 + $0x7f8] sm:$0xff] %v3181
        %4548 = vst [vmem:[%s209 + $0x800] sm:$0xff] %v3565
        %4549 = vst [vmem:[%s209 + $0x808] sm:$0xff] %v3567
        %4550 = vst [vmem:[%s209 + $0x810] sm:$0xff] %v3951
        %4551 = vst [vmem:[%s209 + $0x818] sm:$0xff] %v3953
        %4552 = vst.msk [vmem:[%s209 + $0x820] sm:$0xff] %vm4299, %v4277
        %4553 = vst [vmem:[%s209 + $0x828] sm:$0xff] %v2797
        %4554 = vst [vmem:[%s209 + $0x830] sm:$0xff] %v2799
        %4555 = vst [vmem:[%s209 + $0x838] sm:$0xff] %v3183
        %4556 = vst [vmem:[%s209 + $0x840] sm:$0xff] %v3185
        %4557 = vst [vmem:[%s209 + $0x848] sm:$0xff] %v3569
        %4558 = vst [vmem:[%s209 + $0x850] sm:$0xff] %v3571
        %4559 = vst [vmem:[%s209 + $0x858] sm:$0xff] %v3955
        %4560 = vst [vmem:[%s209 + $0x860] sm:$0xff] %v3957
        %4561 = vst.msk [vmem:[%s209 + $0x868] sm:$0xff] %vm4299, %v4280
        %4562 = vst [vmem:[%s209 + $0x870] sm:$0xff] %v2803
        %4563 = vst [vmem:[%s209 + $0x878] sm:$0xff] %v2805
        %4564 = vst [vmem:[%s209 + $0x880] sm:$0xff] %v3189
        %4565 = vst [vmem:[%s209 + $0x888] sm:$0xff] %v3191
        %4566 = vst [vmem:[%s209 + $0x890] sm:$0xff] %v3575
        %4567 = vst [vmem:[%s209 + $0x898] sm:$0xff] %v3577
        %4568 = vst [vmem:[%s209 + $0x8a0] sm:$0xff] %v3961
        %4569 = vst [vmem:[%s209 + $0x8a8] sm:$0xff] %v3963
        %4570 = vst.msk [vmem:[%s209 + $0x8b0] sm:$0xff] %vm4299, %v4285
        %4571 = vst [vmem:[%s209 + $0x8b8] sm:$0xff] %v2807
        %4572 = vst [vmem:[%s209 + $0x8c0] sm:$0xff] %v2809
        %4573 = vst [vmem:[%s209 + $0x8c8] sm:$0xff] %v3193
        %4574 = vst [vmem:[%s209 + $0x8d0] sm:$0xff] %v3195
        %4575 = vst [vmem:[%s209 + $0x8d8] sm:$0xff] %v3579
        %4576 = vst [vmem:[%s209 + $0x8e0] sm:$0xff] %v3581
        %4577 = vst [vmem:[%s209 + $0x8e8] sm:$0xff] %v3965
        %4578 = vst [vmem:[%s209 + $0x8f0] sm:$0xff] %v3967
        %4579 = vst.msk [vmem:[%s209 + $0x8f8] sm:$0xff] %vm4299, %v4288
        %s4580 = sand.u32 %s100, 1
        %s4581 = sand.u32 %s100, 1
        %s4582 = smul.addr %s4581, 2304
        %s4583 = scalar_lea.vmem [#allocation2], %s4582
        // Predicated region
        $region29: #{model_forward.4} parent=27 // pred_check
          %p4584 = pneg %p110
        $region30: #{model_forward.4} parent=27 // pred_check_branch
          %4586 = sbr.rel (%p4584) target = $region32
        $region31: #{model_forward.4} parent=27 // pred_region
          %s4587 = smul.u32 32, %s19
          %s4588 = smul.u32 9, %s20
          %s4589 = ssub.s32 113, %s4587
          %p4590 = scmp.lt.s32.totalorder %s4589, 32
          %s4591 = scalar_select %p4590, %s4589, 32
          %s4592 = smul.u32 128, %s4591
          %s4593 = smul.u32 %s4592, 9
          %p4594 = scmp.ne.s32.totalorder 0, %s4593
          %s4595 = smul.addr %s4587, 9
          %s4596 = sadd.s32 %s4588, %s4595
          %s4597 = smul.addr %s18, 1017
          %s4598 = sadd.s32 %s4596, %s4597
          %s4599 = smul.addr %s4598, 8
          %s4600 = scalar_lea.vmem %s2, %s4599
          // Predicated region
          $region33: #{model_forward.4} parent=31 // pred_check
            %p4601 = pneg %p4594
          $region34: #{model_forward.4} parent=31 // pred_check_branch
            %4603 = sbr.rel (%p4601) target = $region36
          $region35: #{model_forward.4} parent=31 // pred_region
            // Predicated region
            $region37: #{model_forward.4} parent=35 // pred_check
              _
            $region38: #{model_forward.4} parent=35 // pred_check_branch
              %4605 = sbr.rel (0) target = $region40
            $region39: #{model_forward.4} parent=35 // pred_region
              %s4606 = sshrl.u32 %s4591, 3
              // While loop
              $region41: #{model_forward.4} parent=39 // loop_pre_header
                _
              $region42: #{model_forward.4} parent=39 // loop_header
                %s4608 = sphi 0, %s4610
                %p4609 = scmp.ge.s32.totalorder %s4608, %s4606
                %s4613 = sphi 0, %s4762
                %s4614 = sphi %s4583, %s4765
                %s4615 = sphi %s4600, %s4766
              $region43: #{model_forward.4} parent=39 // loop_header_branch
                %4612 = sbr.rel (%p4609) target = $region47
              $region44: #{model_forward.4} parent=39 // loop_body
                %v4616 = vld [vmem:[%s4614] sm:$0xff]
                %4617 = vst [vmem:[%s4615] sm:$0xff] %v4616
                %v4618 = vld [vmem:[%s4614 + $0x48] sm:$0xff]
                %4619 = vst [vmem:[%s4615 + $0x48] sm:$0xff] %v4618
                %v4620 = vld [vmem:[%s4614 + $0x90] sm:$0xff]
                %4621 = vst [vmem:[%s4615 + $0x90] sm:$0xff] %v4620
                %v4622 = vld [vmem:[%s4614 + $0xd8] sm:$0xff]
                %4623 = vst [vmem:[%s4615 + $0xd8] sm:$0xff] %v4622
                %v4624 = vld [vmem:[%s4614 + $0x120] sm:$0xff]
                %4625 = vst [vmem:[%s4615 + $0x120] sm:$0xff] %v4624
                %v4626 = vld [vmem:[%s4614 + $0x168] sm:$0xff]
                %4627 = vst [vmem:[%s4615 + $0x168] sm:$0xff] %v4626
                %v4628 = vld [vmem:[%s4614 + $0x1b0] sm:$0xff]
                %4629 = vst [vmem:[%s4615 + $0x1b0] sm:$0xff] %v4628
                %v4630 = vld [vmem:[%s4614 + $0x1f8] sm:$0xff]
                %4631 = vst [vmem:[%s4615 + $0x1f8] sm:$0xff] %v4630
                %v4632 = vld [vmem:[%s4614 + $0x8] sm:$0xff]
                %4633 = vst [vmem:[%s4615 + $0x8] sm:$0xff] %v4632
                %v4634 = vld [vmem:[%s4614 + $0x50] sm:$0xff]
                %4635 = vst [vmem:[%s4615 + $0x50] sm:$0xff] %v4634
                %v4636 = vld [vmem:[%s4614 + $0x98] sm:$0xff]
                %4637 = vst [vmem:[%s4615 + $0x98] sm:$0xff] %v4636
                %v4638 = vld [vmem:[%s4614 + $0xe0] sm:$0xff]
                %4639 = vst [vmem:[%s4615 + $0xe0] sm:$0xff] %v4638
                %v4640 = vld [vmem:[%s4614 + $0x128] sm:$0xff]
                %4641 = vst [vmem:[%s4615 + $0x128] sm:$0xff] %v4640
                %v4642 = vld [vmem:[%s4614 + $0x170] sm:$0xff]
                %4643 = vst [vmem:[%s4615 + $0x170] sm:$0xff] %v4642
                %v4644 = vld [vmem:[%s4614 + $0x1b8] sm:$0xff]
                %4645 = vst [vmem:[%s4615 + $0x1b8] sm:$0xff] %v4644
                %v4646 = vld [vmem:[%s4614 + $0x200] sm:$0xff]
                %4647 = vst [vmem:[%s4615 + $0x200] sm:$0xff] %v4646
                %v4648 = vld [vmem:[%s4614 + $0x10] sm:$0xff]
                %4649 = vst [vmem:[%s4615 + $0x10] sm:$0xff] %v4648
                %v4650 = vld [vmem:[%s4614 + $0x58] sm:$0xff]
                %4651 = vst [vmem:[%s4615 + $0x58] sm:$0xff] %v4650
                %v4652 = vld [vmem:[%s4614 + $0xa0] sm:$0xff]
                %4653 = vst [vmem:[%s4615 + $0xa0] sm:$0xff] %v4652
                %v4654 = vld [vmem:[%s4614 + $0xe8] sm:$0xff]
                %4655 = vst [vmem:[%s4615 + $0xe8] sm:$0xff] %v4654
                %v4656 = vld [vmem:[%s4614 + $0x130] sm:$0xff]
                %4657 = vst [vmem:[%s4615 + $0x130] sm:$0xff] %v4656
                %v4658 = vld [vmem:[%s4614 + $0x178] sm:$0xff]
                %4659 = vst [vmem:[%s4615 + $0x178] sm:$0xff] %v4658
                %v4660 = vld [vmem:[%s4614 + $0x1c0] sm:$0xff]
                %4661 = vst [vmem:[%s4615 + $0x1c0] sm:$0xff] %v4660
                %v4662 = vld [vmem:[%s4614 + $0x208] sm:$0xff]
                %4663 = vst [vmem:[%s4615 + $0x208] sm:$0xff] %v4662
                %v4664 = vld [vmem:[%s4614 + $0x18] sm:$0xff]
                %4665 = vst [vmem:[%s4615 + $0x18] sm:$0xff] %v4664
                %v4666 = vld [vmem:[%s4614 + $0x60] sm:$0xff]
                %4667 = vst [vmem:[%s4615 + $0x60] sm:$0xff] %v4666
                %v4668 = vld [vmem:[%s4614 + $0xa8] sm:$0xff]
                %4669 = vst [vmem:[%s4615 + $0xa8] sm:$0xff] %v4668
                %v4670 = vld [vmem:[%s4614 + $0xf0] sm:$0xff]
                %4671 = vst [vmem:[%s4615 + $0xf0] sm:$0xff] %v4670
                %v4672 = vld [vmem:[%s4614 + $0x138] sm:$0xff]
                %4673 = vst [vmem:[%s4615 + $0x138] sm:$0xff] %v4672
                %v4674 = vld [vmem:[%s4614 + $0x180] sm:$0xff]
                %4675 = vst [vmem:[%s4615 + $0x180] sm:$0xff] %v4674
                %v4676 = vld [vmem:[%s4614 + $0x1c8] sm:$0xff]
                %4677 = vst [vmem:[%s4615 + $0x1c8] sm:$0xff] %v4676
                %v4678 = vld [vmem:[%s4614 + $0x210] sm:$0xff]
                %4679 = vst [vmem:[%s4615 + $0x210] sm:$0xff] %v4678
                %v4680 = vld [vmem:[%s4614 + $0x20] sm:$0xff]
                %4681 = vst [vmem:[%s4615 + $0x20] sm:$0xff] %v4680
                %v4682 = vld [vmem:[%s4614 + $0x68] sm:$0xff]
                %4683 = vst [vmem:[%s4615 + $0x68] sm:$0xff] %v4682
                %v4684 = vld [vmem:[%s4614 + $0xb0] sm:$0xff]
                %4685 = vst [vmem:[%s4615 + $0xb0] sm:$0xff] %v4684
                %v4686 = vld [vmem:[%s4614 + $0xf8] sm:$0xff]
                %4687 = vst [vmem:[%s4615 + $0xf8] sm:$0xff] %v4686
                %v4688 = vld [vmem:[%s4614 + $0x140] sm:$0xff]
                %4689 = vst [vmem:[%s4615 + $0x140] sm:$0xff] %v4688
                %v4690 = vld [vmem:[%s4614 + $0x188] sm:$0xff]
                %4691 = vst [vmem:[%s4615 + $0x188] sm:$0xff] %v4690
                %v4692 = vld [vmem:[%s4614 + $0x1d0] sm:$0xff]
                %4693 = vst [vmem:[%s4615 + $0x1d0] sm:$0xff] %v4692
                %v4694 = vld [vmem:[%s4614 + $0x218] sm:$0xff]
                %4695 = vst [vmem:[%s4615 + $0x218] sm:$0xff] %v4694
                %v4696 = vld [vmem:[%s4614 + $0x28] sm:$0xff]
                %4697 = vst [vmem:[%s4615 + $0x28] sm:$0xff] %v4696
                %v4698 = vld [vmem:[%s4614 + $0x70] sm:$0xff]
                %4699 = vst [vmem:[%s4615 + $0x70] sm:$0xff] %v4698
                %v4700 = vld [vmem:[%s4614 + $0xb8] sm:$0xff]
                %4701 = vst [vmem:[%s4615 + $0xb8] sm:$0xff] %v4700
                %v4702 = vld [vmem:[%s4614 + $0x100] sm:$0xff]
                %4703 = vst [vmem:[%s4615 + $0x100] sm:$0xff] %v4702
                %v4704 = vld [vmem:[%s4614 + $0x148] sm:$0xff]
                %4705 = vst [vmem:[%s4615 + $0x148] sm:$0xff] %v4704
                %v4706 = vld [vmem:[%s4614 + $0x190] sm:$0xff]
                %4707 = vst [vmem:[%s4615 + $0x190] sm:$0xff] %v4706
                %v4708 = vld [vmem:[%s4614 + $0x1d8] sm:$0xff]
                %4709 = vst [vmem:[%s4615 + $0x1d8] sm:$0xff] %v4708
                %v4710 = vld [vmem:[%s4614 + $0x220] sm:$0xff]
                %4711 = vst [vmem:[%s4615 + $0x220] sm:$0xff] %v4710
                %v4712 = vld [vmem:[%s4614 + $0x30] sm:$0xff]
                %4713 = vst [vmem:[%s4615 + $0x30] sm:$0xff] %v4712
                %v4714 = vld [vmem:[%s4614 + $0x78] sm:$0xff]
                %4715 = vst [vmem:[%s4615 + $0x78] sm:$0xff] %v4714
                %v4716 = vld [vmem:[%s4614 + $0xc0] sm:$0xff]
                %4717 = vst [vmem:[%s4615 + $0xc0] sm:$0xff] %v4716
                %v4718 = vld [vmem:[%s4614 + $0x108] sm:$0xff]
                %4719 = vst [vmem:[%s4615 + $0x108] sm:$0xff] %v4718
                %v4720 = vld [vmem:[%s4614 + $0x150] sm:$0xff]
                %4721 = vst [vmem:[%s4615 + $0x150] sm:$0xff] %v4720
                %v4722 = vld [vmem:[%s4614 + $0x198] sm:$0xff]
                %4723 = vst [vmem:[%s4615 + $0x198] sm:$0xff] %v4722
                %v4724 = vld [vmem:[%s4614 + $0x1e0] sm:$0xff]
                %4725 = vst [vmem:[%s4615 + $0x1e0] sm:$0xff] %v4724
                %v4726 = vld [vmem:[%s4614 + $0x228] sm:$0xff]
                %4727 = vst [vmem:[%s4615 + $0x228] sm:$0xff] %v4726
                %v4728 = vld [vmem:[%s4614 + $0x38] sm:$0xff]
                %4729 = vst [vmem:[%s4615 + $0x38] sm:$0xff] %v4728
                %v4730 = vld [vmem:[%s4614 + $0x80] sm:$0xff]
                %4731 = vst [vmem:[%s4615 + $0x80] sm:$0xff] %v4730
                %v4732 = vld [vmem:[%s4614 + $0xc8] sm:$0xff]
                %4733 = vst [vmem:[%s4615 + $0xc8] sm:$0xff] %v4732
                %v4734 = vld [vmem:[%s4614 + $0x110] sm:$0xff]
                %4735 = vst [vmem:[%s4615 + $0x110] sm:$0xff] %v4734
                %v4736 = vld [vmem:[%s4614 + $0x158] sm:$0xff]
                %4737 = vst [vmem:[%s4615 + $0x158] sm:$0xff] %v4736
                %v4738 = vld [vmem:[%s4614 + $0x1a0] sm:$0xff]
                %4739 = vst [vmem:[%s4615 + $0x1a0] sm:$0xff] %v4738
                %v4740 = vld [vmem:[%s4614 + $0x1e8] sm:$0xff]
                %4741 = vst [vmem:[%s4615 + $0x1e8] sm:$0xff] %v4740
                %v4742 = vld [vmem:[%s4614 + $0x230] sm:$0xff]
                %4743 = vst [vmem:[%s4615 + $0x230] sm:$0xff] %v4742
                %v4744 = vld [vmem:[%s4614 + $0x40] sm:$0xff]
                %4745 = vst [vmem:[%s4615 + $0x40] sm:$0xff] %v4744
                %v4746 = vld [vmem:[%s4614 + $0x88] sm:$0xff]
                %4747 = vst [vmem:[%s4615 + $0x88] sm:$0xff] %v4746
                %v4748 = vld [vmem:[%s4614 + $0xd0] sm:$0xff]
                %4749 = vst [vmem:[%s4615 + $0xd0] sm:$0xff] %v4748
                %v4750 = vld [vmem:[%s4614 + $0x118] sm:$0xff]
                %4751 = vst [vmem:[%s4615 + $0x118] sm:$0xff] %v4750
                %v4752 = vld [vmem:[%s4614 + $0x160] sm:$0xff]
                %4753 = vst [vmem:[%s4615 + $0x160] sm:$0xff] %v4752
                %v4754 = vld [vmem:[%s4614 + $0x1a8] sm:$0xff]
                %4755 = vst [vmem:[%s4615 + $0x1a8] sm:$0xff] %v4754
                %v4756 = vld [vmem:[%s4614 + $0x1f0] sm:$0xff]
                %4757 = vst [vmem:[%s4615 + $0x1f0] sm:$0xff] %v4756
                %v4758 = vld [vmem:[%s4614 + $0x238] sm:$0xff]
                %4759 = vst [vmem:[%s4615 + $0x238] sm:$0xff] %v4758
                %s4760 = sadd.s32 1, %s4613
                %p4761 = scmp.ge.s32.totalorder %s4760, %s4606
                %s4762 = scalar_select %p4761, 0, %s4760
                %s4763 = smul.u32 %s4762, 576
                %s4764 = smul.u32 %s4762, 576
                %s4765 = scalar_lea.vmem %s4583, %s4763 [#allocation2]
                %s4766 = scalar_lea.vmem %s4600, %s4764
              $region45: #{model_forward.4} parent=39 // loop_footer
                %s4610 = sadd.s32 %s4608, 1
              $region46: #{model_forward.4} parent=39 // loop_footer_branch
                %4607 = sbr.rel target = $region42
              $region47: #{model_forward.4} parent=39 // loop_exit
                _
              %s4767 = sshrl.u32 %s4591, 3
              %s4768 = sand.u32 %s4591, 7
              %s4769 = smul.u32 %s4767, 8
              %s4770 = smul.u32 72, %s4769
              %s4771 = scalar_lea.vmem %s4583, %s4770 [#allocation2]
              %s4772 = smul.u32 72, %s4769
              %s4773 = scalar_lea.vmem %s4600, %s4772
              // While loop
              $region48: #{model_forward.4} parent=39 // loop_pre_header
                _
              $region49: #{model_forward.4} parent=39 // loop_header
                %s4775 = sphi 0, %s4777
                %p4776 = scmp.ge.s32.totalorder %s4775, %s4768
                %s4780 = sphi 0, %s4803
                %s4781 = sphi %s4771, %s4806
                %s4782 = sphi %s4773, %s4807
              $region50: #{model_forward.4} parent=39 // loop_header_branch
                %4779 = sbr.rel (%p4776) target = $region54
              $region51: #{model_forward.4} parent=39 // loop_body
                %v4783 = vld [vmem:[%s4781] sm:$0xff]
                %4784 = vst [vmem:[%s4782] sm:$0xff] %v4783
                %v4785 = vld [vmem:[%s4781 + $0x8] sm:$0xff]
                %4786 = vst [vmem:[%s4782 + $0x8] sm:$0xff] %v4785
                %v4787 = vld [vmem:[%s4781 + $0x10] sm:$0xff]
                %4788 = vst [vmem:[%s4782 + $0x10] sm:$0xff] %v4787
                %v4789 = vld [vmem:[%s4781 + $0x18] sm:$0xff]
                %4790 = vst [vmem:[%s4782 + $0x18] sm:$0xff] %v4789
                %v4791 = vld [vmem:[%s4781 + $0x20] sm:$0xff]
                %4792 = vst [vmem:[%s4782 + $0x20] sm:$0xff] %v4791
                %v4793 = vld [vmem:[%s4781 + $0x28] sm:$0xff]
                %4794 = vst [vmem:[%s4782 + $0x28] sm:$0xff] %v4793
                %v4795 = vld [vmem:[%s4781 + $0x30] sm:$0xff]
                %4796 = vst [vmem:[%s4782 + $0x30] sm:$0xff] %v4795
                %v4797 = vld [vmem:[%s4781 + $0x38] sm:$0xff]
                %4798 = vst [vmem:[%s4782 + $0x38] sm:$0xff] %v4797
                %v4799 = vld [vmem:[%s4781 + $0x40] sm:$0xff]
                %4800 = vst [vmem:[%s4782 + $0x40] sm:$0xff] %v4799
                %s4801 = sadd.s32 1, %s4780
                %p4802 = scmp.ge.s32.totalorder %s4801, %s4768
                %s4803 = scalar_select %p4802, 0, %s4801
                %s4804 = smul.u32 %s4803, 72
                %s4805 = smul.u32 %s4803, 72
                %s4806 = scalar_lea.vmem %s4771, %s4804 [#allocation2]
                %s4807 = scalar_lea.vmem %s4773, %s4805
              $region52: #{model_forward.4} parent=39 // loop_footer
                %s4777 = sadd.s32 %s4775, 1
              $region53: #{model_forward.4} parent=39 // loop_footer_branch
                %4774 = sbr.rel target = $region49
              $region54: #{model_forward.4} parent=39 // loop_exit
                _
            $region40: #{model_forward.4} parent=35 // pred_fallthru
              _
            // Predicated region
            $region55: #{model_forward.4} parent=35 // pred_check
              _
            $region56: #{model_forward.4} parent=35 // pred_check_branch
              %4809 = sbr.rel target = $region58
            $region57: #{model_forward.4} parent=35 // pred_region
              _
            $region58: #{model_forward.4} parent=35 // pred_fallthru
              _
          $region36: #{model_forward.4} parent=31 // pred_fallthru
            _
          %4810 = vnop
        $region32: #{model_forward.4} parent=27 // pred_fallthru
          _
      $region28: #{model_forward.4} parent=5 // pred_fallthru
        _
      %p4811 = scmp.le.s32.totalorder 2, %s8
      // Predicated region
      $region59: #{model_forward.4} parent=5 // pred_check
        %p4812 = pneg %p4811
      $region60: #{model_forward.4} parent=5 // pred_check_branch
        %4814 = sbr.rel (%p4812) target = $region62
      $region61: #{model_forward.4} parent=5 // pred_region
        %s4815 = ssub.s32 %s8, 2
        // Predicated region
        $region63: #{model_forward.4} parent=61 // pred_check
          %p4816 = pneg %p116
        $region64: #{model_forward.4} parent=61 // pred_check_branch
          %4818 = sbr.rel (%p4816) target = $region66
        $region65: #{model_forward.4} parent=61 // pred_region
          %s4819 = sand.u32 %s101, 1
          %s4820 = sand.u32 %s101, 1
          %s4821 = smul.addr %s4820, 2304
          %s4822 = scalar_lea.vmem [#allocation2], %s4821
        $region66: #{model_forward.4} parent=61 // pred_fallthru
          _
      $region62: #{model_forward.4} parent=5 // pred_fallthru
        _
    $region6: #{model_forward.4} parent=1 // loop_footer
      %s12 = sadd.s32 1, %s8
    $region7: #{model_forward.4} parent=1 // loop_footer_branch
      %7 = sbr.rel target = $region3
    $region8: #{model_forward.4} parent=1 // loop_exit
      _

</llo_original>
